<compile_context>
chip_gen: v5e
topology: v5e:2x2
jax: 0.10.0
libtpu: 0.0.40
codegen_flags: <defaults>
</compile_context>

<pallas_src>
import functools

import jax
import jax.numpy as jnp
from jax.experimental import pallas as pl
from jax.experimental.pallas import tpu as pltpu

LRELU_SLOPE = 0.1

# (in_ch, out_ch, kernel, stride, groups, padding) -- matches the PyTorch module.
CONV_CFGS = [
    (1, 8, 17, 1, 1, 8),
    (8, 16, 11, 2, 4, 5),
    (16, 32, 7, 2, 4, 3),
    (32, 64, 5, 2, 16, 2),
    (64, 128, 3, 4, 16, 1),
]

# MXU operand dtype.  bf16 is native on all three generations (f32 operands
# cost extra MXU passes); accumulation stays f32 via preferred_element_type.
# Flip to jnp.float32 to match PyTorch's f32 Conv1d numerics bit-for-bit.
MATMUL_DTYPE = jnp.bfloat16
# Inter-layer activation scratch dtype.  Kept f32 so the odd-offset sublane
# border/interior stores stay on the plain 32-bit masked-store path; bf16
# would halve scratch VMEM once the length axis is tiled (see TODO below).
ACT_DTYPE = jnp.float32


# ---------------------------------------------------------------------------
# Static geometry
# ---------------------------------------------------------------------------
def _geometry(L):
    """Per-layer geometry for input length L.

    Each entry: (C_in, C_out, K, stride, L_out, rows, pad_next) where
      rows     = allocated rows of this layer's zero-padded input buffer
                 (= L_in + 2*pad + stride - 1; the stride-1 slack rows keep the
                  conservative `start + size*stride <= rows` bound of the
                  strided tap slices in range),
      pad_next = zero padding the NEXT layer applies to this layer's output.
    """
    specs = []
    L_in = L
    n = len(CONV_CFGS)
    for li, (cin, cout, K, s, _g, p) in enumerate(CONV_CFGS):
        Lp = L_in + 2 * p
        L_out = (Lp - K) // s + 1
        rows = Lp + (s - 1)
        pad_next = CONV_CFGS[li + 1][5] if li + 1 < n else 0
        specs.append((cin, cout, K, s, L_out, rows, pad_next))
        L_in = L_out
    return tuple(specs)


# ---------------------------------------------------------------------------
# Kernel: full DiscriminatorS forward for one batch element per grid step
# ---------------------------------------------------------------------------
def _disc_s_kernel(x_ref, *refs, specs):
    """5 x (grouped Conv1d + LeakyReLU(0.1)) fused in one kernel body.

    Ref order:
      x_ref      : (W1, 1) zero-padded input, length on sublanes        (VMEM)
      refs[0:10] : w_1, b_1, ..., w_5, b_5
                   w_l : (K_l*C_in_l, C_out_l) block-diagonal dense weights,
                         row k*C_in + c_in  <->  tap k, input channel c_in
                   b_l : (1, C_out_l)
      refs[10]   : output (L_final, 128)
      refs[11]   : shared im2col scratch (max L_out, max K*C_in)        (VMEM)
      refs[12:]  : zero-padded input buffers of layers 2..5             (VMEM)
    """
    n = len(specs)
    w_refs = refs[0:2 * n:2]
    b_refs = refs[1:2 * n:2]
    o_ref = refs[2 * n]
    im2col = refs[2 * n + 1]
    bufs = (x_ref,) + tuple(refs[2 * n + 2:])

    for li in range(n):
        C_in, C_out, K, s, L_out, _rows, pad_next = specs[li]
        src = bufs[li]

        if C_in == 1:
            # Layer 1: single input channel -> K shifted VPU outer products.
            # (A contraction-17 matmul would underfeed the MXU; the f32 VPU
            #  path also keeps the raw audio at full precision on v5e.)
            w = w_refs[li][...].astype(jnp.float32)            # (K, C_out)
            acc = jnp.zeros((L_out, C_out), jnp.float32)
            for k in range(K):                                 # static, small K
                tap = src[pl.ds(k, L_out), :]                  # (L_out, 1) f32
                acc = acc + tap * w[k:k + 1, :]
        else:
            # Strided conv at output rate: tap k of output j reads padded-input
            # row j*stride + k, i.e. one sublane-strided slice per tap.  Pack
            # all K taps into the im2col scratch and contract C_in*K with ONE
            # MXU matmul (contraction 88..192).
            for k in range(K):                                 # static, small K
                idx = (pl.ds(k, L_out, s) if (s > 1 and L_out > 1)
                       else pl.ds(k, L_out))
                im2col[pl.ds(0, L_out), pl.ds(k * C_in, C_in)] = src[idx, :]
            patches = im2col[pl.ds(0, L_out), pl.ds(0, K * C_in)]
            acc = jnp.dot(patches.astype(MATMUL_DTYPE),
                          w_refs[li][...].astype(MATMUL_DTYPE),
                          preferred_element_type=jnp.float32)

        y = acc + b_refs[li][...]                              # f32 bias add
        y = jnp.where(y >= 0, y, LRELU_SLOPE * y)              # LeakyReLU(0.1)

        if li + 1 < n:
            rows_next = specs[li + 1][5]
            nxt = bufs[li + 1]
            # Interior rows get the activation; the pad border (plus the
            # strided-slice slack rows) is zeroed explicitly because the
            # scratch is uninitialized and the next layer's taps read it.
            nxt[pl.ds(0, pad_next), :] = jnp.zeros((pad_next, C_out), ACT_DTYPE)
            nxt[pl.ds(pad_next, L_out), :] = y.astype(ACT_DTYPE)
            tail = rows_next - (pad_next + L_out)
            nxt[pl.ds(pad_next + L_out, tail), :] = jnp.zeros((tail, C_out),
                                                              ACT_DTYPE)
        else:
            o_ref[...] = y.astype(o_ref.dtype)


# ---------------------------------------------------------------------------
# Per-scale wrapper
# ---------------------------------------------------------------------------
def discriminator_s_forward(packed_params, x):
    """x: (B, 1, L) f32 -> (B, 128, L_final) f32, one pallas_call per scale."""
    B, C0, L = x.shape
    assert C0 == 1
    specs = _geometry(L)
    n = len(CONV_CFGS)
    pad0 = CONV_CFGS[0][5]
    W1 = L + 2 * pad0
    C_final = CONV_CFGS[-1][1]
    L_final = specs[-1][4]

    # (B, 1, L) -> (B, L, 1): length on sublanes, channel on lanes, zero-padded
    # for layer 1 (the conv-stride tap reads need sublane strides in-kernel).
    x_rows = jnp.pad(jnp.transpose(x, (0, 2, 1)), ((0, 0), (pad0, pad0), (0, 0)))

    flat = []
    for w_packed, b_row in packed_params:
        flat += [w_packed, b_row]

    in_specs = [pl.BlockSpec((None, W1, 1), lambda b: (b, 0, 0))]
    in_specs += [pl.BlockSpec(p.shape, lambda b: (0, 0)) for p in flat]
    out_spec = pl.BlockSpec((None, L_final, C_final), lambda b: (b, 0, 0))

    # VMEM scratch: shared im2col buffer + zero-padded inputs of layers 2..5.
    max_rows = max(specs[li][4] for li in range(1, n))
    max_cols = max(specs[li][0] * specs[li][2] for li in range(1, n))
    scratch = [pltpu.VMEM((max_rows, max_cols), ACT_DTYPE)]
    scratch += [pltpu.VMEM((specs[li][5], specs[li][0]), ACT_DTYPE)
                for li in range(1, n)]

    # TODO(synk): for real audio lengths (L ~ 2^15+) add a leading length-tile
    # grid axis (per-step tile + receptive-field halo, per-tile scratch) so the
    # VMEM footprint is bounded and HBM traffic double-buffers; the budget must
    # be re-derived for v7x's 64 MiB VMEM.
    out = pl.pallas_call(
        functools.partial(_disc_s_kernel, specs=specs),
        grid=(B,),
        out_shape=jax.ShapeDtypeStruct((B, L_final, C_final), jnp.float32),
        in_specs=in_specs,
        out_specs=out_spec,
        scratch_shapes=scratch,
        compiler_params=pltpu.CompilerParams(
            dimension_semantics=("parallel",)),
    )(x_rows, *flat)
    # Back to the PyTorch (B, C, L) layout (cheap XLA transpose outside kernel).
    return jnp.transpose(out, (0, 2, 1))


# ---------------------------------------------------------------------------
# Parameters (weight_norm / spectral_norm folded; groups -> block-diag dense)
# ---------------------------------------------------------------------------
def _pack_weight(w, groups):
    """Grouped Conv1d weight (C_out, C_in//G, K) -> dense (K*C_in, C_out).

    Row k*C_in + c_in holds the block-diagonal (ungrouped) weight
    w_dense[c_out, c_in, k], matching the kernel's im2col column order.
    """
    C_out, Cin_g, K = w.shape
    G = groups
    Cout_g = C_out // G
    C_in = Cin_g * G
    dense = jnp.zeros((C_out, C_in, K), jnp.float32)
    w_r = w.reshape(G, Cout_g, Cin_g, K)
    for g in range(G):
        dense = dense.at[g * Cout_g:(g + 1) * Cout_g,
                         g * Cin_g:(g + 1) * Cin_g, :].set(w_r[g])
    return jnp.transpose(dense, (2, 1, 0)).reshape(K * C_in, C_out)


def pack_params(raw_params):
    """[(w (C_out, C_in//G, K), b (C_out,)), ...] -> kernel-ready params."""
    packed = []
    for (w, b), (_cin, cout, _k, _s, g, _p) in zip(raw_params, CONV_CFGS):
        packed.append((_pack_weight(w, g),
                       b.reshape(1, cout).astype(jnp.float32)))
    return packed


def init_discriminator(key):
    """Random-init raw parameters for one DiscriminatorS."""
    # TODO(synk): weight_norm / spectral_norm are reparameterizations of the
    # conv weight; at deterministic init they equal the plain weight and are
    # used as-is here (trained checkpoints must be re-normalized before pack).
    params = []
    for (cin, cout, k, _s, g, _p) in CONV_CFGS:
        key, kw, kb = jax.random.split(key, 3)
        w = 0.1 * jax.random.normal(kw, (cout, cin // g, k), dtype=jnp.float32)
        b = 0.01 * jax.random.normal(kb, (cout,), dtype=jnp.float32)
        params.append((w, b))
    return params


# ---------------------------------------------------------------------------
# MultiScaleDiscriminator
# ---------------------------------------------------------------------------
def avg_pool1d_4_2_p2(x):
    """AvgPool1d(kernel=4, stride=2, padding=2), count_include_pad=True."""
    B, C, L = x.shape
    L_out = L // 2 + 1
    xp = jnp.pad(x, ((0, 0), (0, 0), (2, 2)))
    acc = xp[:, :, 0::2][:, :, :L_out]
    for k in range(1, 4):
        acc = acc + xp[:, :, k::2][:, :, :L_out]
    return 0.25 * acc


def multi_scale_discriminator_forward(all_packed, y):
    y_d_rs = []
    for i, packed in enumerate(all_packed):
        if i != 0:
            y = avg_pool1d_4_2_p2(y)
        y_d_rs.append(discriminator_s_forward(packed, y))
    return y_d_rs


# ---------------------------------------------------------------------------
# Pure-JAX reference (for correctness checking only)
# ---------------------------------------------------------------------------
def _reference_disc_s(raw_params, x):
    h = x
    for (w, b), (_cin, cout, _k, s, g, p) in zip(raw_params, CONV_CFGS):
        h = jax.lax.conv_general_dilated(
            h, w, window_strides=(s,), padding=[(p, p)],
            dimension_numbers=("NCH", "OIH", "NCH"),
            feature_group_count=g, precision=jax.lax.Precision.HIGHEST)
        h = h + b.reshape(1, cout, 1)
        h = jnp.where(h >= 0, h, LRELU_SLOPE * h)
    return h


def _reference_msd(all_raw, y):
    outs = []
    for i, raw in enumerate(all_raw):
        if i != 0:
            y = avg_pool1d_4_2_p2(y)
        outs.append(_reference_disc_s(raw, y))
    return outs


# ---------------------------------------------------------------------------
# Main
# ---------------------------------------------------------------------------
if __name__ == "__main__":
    key = jax.random.PRNGKey(0)
    key, k_in, k_d0, k_d1, k_d2 = jax.random.split(key, 5)

    # 3 independently-initialized discriminators (norms folded at init).
    raw_all = [init_discriminator(k_d0),
               init_discriminator(k_d1),
               init_discriminator(k_d2)]
    packed_all = [pack_params(r) for r in raw_all]

    # input: (batch=2, channels=1, length=64)
    y = jax.random.normal(k_in, (2, 1, 64), dtype=jnp.float32)

    msd = jax.jit(multi_scale_discriminator_forward)
    outs = jax.block_until_ready(msd(packed_all, y))

    refs = _reference_msd(raw_all, y)

    # expected output shapes for L=64 (scales see L = 64, 33, 17)
    expected_shapes = [(2, 128, 2), (2, 128, 2), (2, 128, 1)]
    for o, r, es in zip(outs, refs, expected_shapes):
        assert o.shape == es, (o.shape, es)
        assert o.dtype == jnp.float32
        assert bool(jnp.all(jnp.isfinite(o)))
        err = float(jnp.max(jnp.abs(o - r)))
        tol = 5e-2 * float(jnp.max(jnp.abs(r))) + 1e-5   # bf16 MXU operands
        assert err <= tol, (err, tol)

    print("KERNEL_OK")
</pallas_src>

<mosaic_0001>
module attributes {stable_mosaic.version = 11 : i64} {
  func.func @_disc_s_kernel(%arg0: i32, %arg1: memref<1x80x1xf32, #tpu.memory_space<vmem>>, %arg2: memref<17x8xf32, #tpu.memory_space<vmem>>, %arg3: memref<1x8xf32, #tpu.memory_space<vmem>>, %arg4: memref<88x16xf32, #tpu.memory_space<vmem>>, %arg5: memref<1x16xf32, #tpu.memory_space<vmem>>, %arg6: memref<112x32xf32, #tpu.memory_space<vmem>>, %arg7: memref<1x32xf32, #tpu.memory_space<vmem>>, %arg8: memref<160x64xf32, #tpu.memory_space<vmem>>, %arg9: memref<1x64xf32, #tpu.memory_space<vmem>>, %arg10: memref<192x128xf32, #tpu.memory_space<vmem>>, %arg11: memref<1x128xf32, #tpu.memory_space<vmem>>, %arg12: memref<1x2x128xf32, #tpu.memory_space<vmem>>, %arg13: memref<32x192xf32, #tpu.memory_space<vmem>>, %arg14: memref<75x8xf32, #tpu.memory_space<vmem>>, %arg15: memref<39x16xf32, #tpu.memory_space<vmem>>, %arg16: memref<21x32xf32, #tpu.memory_space<vmem>>, %arg17: memref<13x64xf32, #tpu.memory_space<vmem>>) attributes {dimension_semantics = [#tpu.dimension_semantics<parallel>], iteration_bounds = array<i64: 2>, scalar_prefetch = 0 : i64, scratch_operands = 5 : i64, tpu.core_type = #tpu.core_type<tc>, window_params = [{transform_indices = @transform_0, window_bounds = array<i64: 1, 80, 1>}, {pipeline_mode = #tpu.pipeline_mode<synchronous>, transform_indices = @transform_1, window_bounds = array<i64: 17, 8>}, {pipeline_mode = #tpu.pipeline_mode<synchronous>, transform_indices = @transform_2, window_bounds = array<i64: 1, 8>}, {pipeline_mode = #tpu.pipeline_mode<synchronous>, transform_indices = @transform_3, window_bounds = array<i64: 88, 16>}, {pipeline_mode = #tpu.pipeline_mode<synchronous>, transform_indices = @transform_4, window_bounds = array<i64: 1, 16>}, {pipeline_mode = #tpu.pipeline_mode<synchronous>, transform_indices = @transform_5, window_bounds = array<i64: 112, 32>}, {pipeline_mode = #tpu.pipeline_mode<synchronous>, transform_indices = @transform_6, window_bounds = array<i64: 1, 32>}, {pipeline_mode = #tpu.pipeline_mode<synchronous>, transform_indices = @transform_7, window_bounds = array<i64: 160, 64>}, {pipeline_mode = #tpu.pipeline_mode<synchronous>, transform_indices = @transform_8, window_bounds = array<i64: 1, 64>}, {pipeline_mode = #tpu.pipeline_mode<synchronous>, transform_indices = @transform_9, window_bounds = array<i64: 192, 128>}, {pipeline_mode = #tpu.pipeline_mode<synchronous>, transform_indices = @transform_10, window_bounds = array<i64: 1, 128>}, {transform_indices = @transform_11, window_bounds = array<i64: 1, 2, 128>}]} {
    %c0 = arith.constant 0 : index
    %c0_0 = arith.constant 0 : index
    %0 = vector.load %arg2[%c0, %c0_0] : memref<17x8xf32, #tpu.memory_space<vmem>>, vector<17x8xf32>
    %cst = arith.constant 0.000000e+00 : f32
    %1 = vector.broadcast %cst : f32 to vector<64x8xf32>
    %c0_1 = arith.constant 0 : index
    %c0_2 = arith.constant 0 : index
    %c0_3 = arith.constant 0 : index
    %2 = vector.load %arg1[%c0_1, %c0_2, %c0_3] : memref<1x80x1xf32, #tpu.memory_space<vmem>>, vector<1x64x1xf32>
    %3 = vector.shape_cast %2 : vector<1x64x1xf32> to vector<64x1xf32>
    %4 = vector.extract_strided_slice %0 {offsets = [0, 0], sizes = [1, 8], strides = [1, 1]} : vector<17x8xf32> to vector<1x8xf32>
    %5 = vector.broadcast %3 : vector<64x1xf32> to vector<64x8xf32>
    %6 = vector.broadcast %4 : vector<1x8xf32> to vector<64x8xf32>
    %7 = arith.mulf %5, %6 : vector<64x8xf32>
    %8 = arith.addf %1, %7 : vector<64x8xf32>
    %c0_4 = arith.constant 0 : index
    %c1 = arith.constant 1 : index
    %c0_5 = arith.constant 0 : index
    %9 = vector.load %arg1[%c0_4, %c1, %c0_5] : memref<1x80x1xf32, #tpu.memory_space<vmem>>, vector<1x64x1xf32>
    %10 = vector.shape_cast %9 : vector<1x64x1xf32> to vector<64x1xf32>
    %11 = vector.extract_strided_slice %0 {offsets = [1, 0], sizes = [1, 8], strides = [1, 1]} : vector<17x8xf32> to vector<1x8xf32>
    %12 = vector.broadcast %10 : vector<64x1xf32> to vector<64x8xf32>
    %13 = vector.broadcast %11 : vector<1x8xf32> to vector<64x8xf32>
    %14 = arith.mulf %12, %13 : vector<64x8xf32>
    %15 = arith.addf %8, %14 : vector<64x8xf32>
    %c0_6 = arith.constant 0 : index
    %c2 = arith.constant 2 : index
    %c0_7 = arith.constant 0 : index
    %16 = vector.load %arg1[%c0_6, %c2, %c0_7] : memref<1x80x1xf32, #tpu.memory_space<vmem>>, vector<1x64x1xf32>
    %17 = vector.shape_cast %16 : vector<1x64x1xf32> to vector<64x1xf32>
    %18 = vector.extract_strided_slice %0 {offsets = [2, 0], sizes = [1, 8], strides = [1, 1]} : vector<17x8xf32> to vector<1x8xf32>
    %19 = vector.broadcast %17 : vector<64x1xf32> to vector<64x8xf32>
    %20 = vector.broadcast %18 : vector<1x8xf32> to vector<64x8xf32>
    %21 = arith.mulf %19, %20 : vector<64x8xf32>
    %22 = arith.addf %15, %21 : vector<64x8xf32>
    %c0_8 = arith.constant 0 : index
    %c3 = arith.constant 3 : index
    %c0_9 = arith.constant 0 : index
    %23 = vector.load %arg1[%c0_8, %c3, %c0_9] : memref<1x80x1xf32, #tpu.memory_space<vmem>>, vector<1x64x1xf32>
    %24 = vector.shape_cast %23 : vector<1x64x1xf32> to vector<64x1xf32>
    %25 = vector.extract_strided_slice %0 {offsets = [3, 0], sizes = [1, 8], strides = [1, 1]} : vector<17x8xf32> to vector<1x8xf32>
    %26 = vector.broadcast %24 : vector<64x1xf32> to vector<64x8xf32>
    %27 = vector.broadcast %25 : vector<1x8xf32> to vector<64x8xf32>
    %28 = arith.mulf %26, %27 : vector<64x8xf32>
    %29 = arith.addf %22, %28 : vector<64x8xf32>
    %c0_10 = arith.constant 0 : index
    %c4 = arith.constant 4 : index
    %c0_11 = arith.constant 0 : index
    %30 = vector.load %arg1[%c0_10, %c4, %c0_11] : memref<1x80x1xf32, #tpu.memory_space<vmem>>, vector<1x64x1xf32>
    %31 = vector.shape_cast %30 : vector<1x64x1xf32> to vector<64x1xf32>
    %32 = vector.extract_strided_slice %0 {offsets = [4, 0], sizes = [1, 8], strides = [1, 1]} : vector<17x8xf32> to vector<1x8xf32>
    %33 = vector.broadcast %31 : vector<64x1xf32> to vector<64x8xf32>
    %34 = vector.broadcast %32 : vector<1x8xf32> to vector<64x8xf32>
    %35 = arith.mulf %33, %34 : vector<64x8xf32>
    %36 = arith.addf %29, %35 : vector<64x8xf32>
    %c0_12 = arith.constant 0 : index
    %c5 = arith.constant 5 : index
    %c0_13 = arith.constant 0 : index
    %37 = vector.load %arg1[%c0_12, %c5, %c0_13] : memref<1x80x1xf32, #tpu.memory_space<vmem>>, vector<1x64x1xf32>
    %38 = vector.shape_cast %37 : vector<1x64x1xf32> to vector<64x1xf32>
    %39 = vector.extract_strided_slice %0 {offsets = [5, 0], sizes = [1, 8], strides = [1, 1]} : vector<17x8xf32> to vector<1x8xf32>
    %40 = vector.broadcast %38 : vector<64x1xf32> to vector<64x8xf32>
    %41 = vector.broadcast %39 : vector<1x8xf32> to vector<64x8xf32>
    %42 = arith.mulf %40, %41 : vector<64x8xf32>
    %43 = arith.addf %36, %42 : vector<64x8xf32>
    %c0_14 = arith.constant 0 : index
    %c6 = arith.constant 6 : index
    %c0_15 = arith.constant 0 : index
    %44 = vector.load %arg1[%c0_14, %c6, %c0_15] : memref<1x80x1xf32, #tpu.memory_space<vmem>>, vector<1x64x1xf32>
    %45 = vector.shape_cast %44 : vector<1x64x1xf32> to vector<64x1xf32>
    %46 = vector.extract_strided_slice %0 {offsets = [6, 0], sizes = [1, 8], strides = [1, 1]} : vector<17x8xf32> to vector<1x8xf32>
    %47 = vector.broadcast %45 : vector<64x1xf32> to vector<64x8xf32>
    %48 = vector.broadcast %46 : vector<1x8xf32> to vector<64x8xf32>
    %49 = arith.mulf %47, %48 : vector<64x8xf32>
    %50 = arith.addf %43, %49 : vector<64x8xf32>
    %c0_16 = arith.constant 0 : index
    %c7 = arith.constant 7 : index
    %c0_17 = arith.constant 0 : index
    %51 = vector.load %arg1[%c0_16, %c7, %c0_17] : memref<1x80x1xf32, #tpu.memory_space<vmem>>, vector<1x64x1xf32>
    %52 = vector.shape_cast %51 : vector<1x64x1xf32> to vector<64x1xf32>
    %53 = vector.extract_strided_slice %0 {offsets = [7, 0], sizes = [1, 8], strides = [1, 1]} : vector<17x8xf32> to vector<1x8xf32>
    %54 = vector.broadcast %52 : vector<64x1xf32> to vector<64x8xf32>
    %55 = vector.broadcast %53 : vector<1x8xf32> to vector<64x8xf32>
    %56 = arith.mulf %54, %55 : vector<64x8xf32>
    %57 = arith.addf %50, %56 : vector<64x8xf32>
    %c0_18 = arith.constant 0 : index
    %c8 = arith.constant 8 : index
    %c0_19 = arith.constant 0 : index
    %58 = vector.load %arg1[%c0_18, %c8, %c0_19] : memref<1x80x1xf32, #tpu.memory_space<vmem>>, vector<1x64x1xf32>
    %59 = vector.shape_cast %58 : vector<1x64x1xf32> to vector<64x1xf32>
    %60 = vector.extract_strided_slice %0 {offsets = [8, 0], sizes = [1, 8], strides = [1, 1]} : vector<17x8xf32> to vector<1x8xf32>
    %61 = vector.broadcast %59 : vector<64x1xf32> to vector<64x8xf32>
    %62 = vector.broadcast %60 : vector<1x8xf32> to vector<64x8xf32>
    %63 = arith.mulf %61, %62 : vector<64x8xf32>
    %64 = arith.addf %57, %63 : vector<64x8xf32>
    %c0_20 = arith.constant 0 : index
    %c9 = arith.constant 9 : index
    %c0_21 = arith.constant 0 : index
    %65 = vector.load %arg1[%c0_20, %c9, %c0_21] : memref<1x80x1xf32, #tpu.memory_space<vmem>>, vector<1x64x1xf32>
    %66 = vector.shape_cast %65 : vector<1x64x1xf32> to vector<64x1xf32>
    %67 = vector.extract_strided_slice %0 {offsets = [9, 0], sizes = [1, 8], strides = [1, 1]} : vector<17x8xf32> to vector<1x8xf32>
    %68 = vector.broadcast %66 : vector<64x1xf32> to vector<64x8xf32>
    %69 = vector.broadcast %67 : vector<1x8xf32> to vector<64x8xf32>
    %70 = arith.mulf %68, %69 : vector<64x8xf32>
    %71 = arith.addf %64, %70 : vector<64x8xf32>
    %c0_22 = arith.constant 0 : index
    %c10 = arith.constant 10 : index
    %c0_23 = arith.constant 0 : index
    %72 = vector.load %arg1[%c0_22, %c10, %c0_23] : memref<1x80x1xf32, #tpu.memory_space<vmem>>, vector<1x64x1xf32>
    %73 = vector.shape_cast %72 : vector<1x64x1xf32> to vector<64x1xf32>
    %74 = vector.extract_strided_slice %0 {offsets = [10, 0], sizes = [1, 8], strides = [1, 1]} : vector<17x8xf32> to vector<1x8xf32>
    %75 = vector.broadcast %73 : vector<64x1xf32> to vector<64x8xf32>
    %76 = vector.broadcast %74 : vector<1x8xf32> to vector<64x8xf32>
    %77 = arith.mulf %75, %76 : vector<64x8xf32>
    %78 = arith.addf %71, %77 : vector<64x8xf32>
    %c0_24 = arith.constant 0 : index
    %c11 = arith.constant 11 : index
    %c0_25 = arith.constant 0 : index
    %79 = vector.load %arg1[%c0_24, %c11, %c0_25] : memref<1x80x1xf32, #tpu.memory_space<vmem>>, vector<1x64x1xf32>
    %80 = vector.shape_cast %79 : vector<1x64x1xf32> to vector<64x1xf32>
    %81 = vector.extract_strided_slice %0 {offsets = [11, 0], sizes = [1, 8], strides = [1, 1]} : vector<17x8xf32> to vector<1x8xf32>
    %82 = vector.broadcast %80 : vector<64x1xf32> to vector<64x8xf32>
    %83 = vector.broadcast %81 : vector<1x8xf32> to vector<64x8xf32>
    %84 = arith.mulf %82, %83 : vector<64x8xf32>
    %85 = arith.addf %78, %84 : vector<64x8xf32>
    %c0_26 = arith.constant 0 : index
    %c12 = arith.constant 12 : index
    %c0_27 = arith.constant 0 : index
    %86 = vector.load %arg1[%c0_26, %c12, %c0_27] : memref<1x80x1xf32, #tpu.memory_space<vmem>>, vector<1x64x1xf32>
    %87 = vector.shape_cast %86 : vector<1x64x1xf32> to vector<64x1xf32>
    %88 = vector.extract_strided_slice %0 {offsets = [12, 0], sizes = [1, 8], strides = [1, 1]} : vector<17x8xf32> to vector<1x8xf32>
    %89 = vector.broadcast %87 : vector<64x1xf32> to vector<64x8xf32>
    %90 = vector.broadcast %88 : vector<1x8xf32> to vector<64x8xf32>
    %91 = arith.mulf %89, %90 : vector<64x8xf32>
    %92 = arith.addf %85, %91 : vector<64x8xf32>
    %c0_28 = arith.constant 0 : index
    %c13 = arith.constant 13 : index
    %c0_29 = arith.constant 0 : index
    %93 = vector.load %arg1[%c0_28, %c13, %c0_29] : memref<1x80x1xf32, #tpu.memory_space<vmem>>, vector<1x64x1xf32>
    %94 = vector.shape_cast %93 : vector<1x64x1xf32> to vector<64x1xf32>
    %95 = vector.extract_strided_slice %0 {offsets = [13, 0], sizes = [1, 8], strides = [1, 1]} : vector<17x8xf32> to vector<1x8xf32>
    %96 = vector.broadcast %94 : vector<64x1xf32> to vector<64x8xf32>
    %97 = vector.broadcast %95 : vector<1x8xf32> to vector<64x8xf32>
    %98 = arith.mulf %96, %97 : vector<64x8xf32>
    %99 = arith.addf %92, %98 : vector<64x8xf32>
    %c0_30 = arith.constant 0 : index
    %c14 = arith.constant 14 : index
    %c0_31 = arith.constant 0 : index
    %100 = vector.load %arg1[%c0_30, %c14, %c0_31] : memref<1x80x1xf32, #tpu.memory_space<vmem>>, vector<1x64x1xf32>
    %101 = vector.shape_cast %100 : vector<1x64x1xf32> to vector<64x1xf32>
    %102 = vector.extract_strided_slice %0 {offsets = [14, 0], sizes = [1, 8], strides = [1, 1]} : vector<17x8xf32> to vector<1x8xf32>
    %103 = vector.broadcast %101 : vector<64x1xf32> to vector<64x8xf32>
    %104 = vector.broadcast %102 : vector<1x8xf32> to vector<64x8xf32>
    %105 = arith.mulf %103, %104 : vector<64x8xf32>
    %106 = arith.addf %99, %105 : vector<64x8xf32>
    %c0_32 = arith.constant 0 : index
    %c15 = arith.constant 15 : index
    %c0_33 = arith.constant 0 : index
    %107 = vector.load %arg1[%c0_32, %c15, %c0_33] : memref<1x80x1xf32, #tpu.memory_space<vmem>>, vector<1x64x1xf32>
    %108 = vector.shape_cast %107 : vector<1x64x1xf32> to vector<64x1xf32>
    %109 = vector.extract_strided_slice %0 {offsets = [15, 0], sizes = [1, 8], strides = [1, 1]} : vector<17x8xf32> to vector<1x8xf32>
    %110 = vector.broadcast %108 : vector<64x1xf32> to vector<64x8xf32>
    %111 = vector.broadcast %109 : vector<1x8xf32> to vector<64x8xf32>
    %112 = arith.mulf %110, %111 : vector<64x8xf32>
    %113 = arith.addf %106, %112 : vector<64x8xf32>
    %c0_34 = arith.constant 0 : index
    %c16 = arith.constant 16 : index
    %c0_35 = arith.constant 0 : index
    %114 = vector.load %arg1[%c0_34, %c16, %c0_35] : memref<1x80x1xf32, #tpu.memory_space<vmem>>, vector<1x64x1xf32>
    %115 = vector.shape_cast %114 : vector<1x64x1xf32> to vector<64x1xf32>
    %116 = vector.extract_strided_slice %0 {offsets = [16, 0], sizes = [1, 8], strides = [1, 1]} : vector<17x8xf32> to vector<1x8xf32>
    %117 = vector.broadcast %115 : vector<64x1xf32> to vector<64x8xf32>
    %118 = vector.broadcast %116 : vector<1x8xf32> to vector<64x8xf32>
    %119 = arith.mulf %117, %118 : vector<64x8xf32>
    %120 = arith.addf %113, %119 : vector<64x8xf32>
    %c0_36 = arith.constant 0 : index
    %c0_37 = arith.constant 0 : index
    %121 = vector.load %arg3[%c0_36, %c0_37] : memref<1x8xf32, #tpu.memory_space<vmem>>, vector<1x8xf32>
    %122 = vector.broadcast %121 : vector<1x8xf32> to vector<64x8xf32>
    %123 = arith.addf %120, %122 : vector<64x8xf32>
    %cst_38 = arith.constant 0.000000e+00 : f32
    %124 = vector.broadcast %cst_38 : f32 to vector<64x8xf32>
    %125 = arith.cmpf oge, %123, %124 : vector<64x8xf32>
    %cst_39 = arith.constant 1.000000e-01 : f32
    %126 = vector.broadcast %cst_39 : f32 to vector<64x8xf32>
    %127 = arith.mulf %126, %123 : vector<64x8xf32>
    %128 = arith.select %125, %123, %127 : vector<64x8xi1>, vector<64x8xf32>
    %cst_40 = arith.constant 0.000000e+00 : f32
    %129 = vector.broadcast %cst_40 : f32 to vector<5x8xf32>
    %c0_41 = arith.constant 0 : index
    %c0_42 = arith.constant 0 : index
    %130 = vector.load %arg14[%c0_41, %c0_42] : memref<75x8xf32, #tpu.memory_space<vmem>>, vector<5x8xf32>
    tpu.vector_store %arg14[%c0_41, %c0_42], %129 {strides = array<i32>} : memref<75x8xf32, #tpu.memory_space<vmem>>, vector<5x8xf32>,
    %c5_43 = arith.constant 5 : index
    %c0_44 = arith.constant 0 : index
    %131 = vector.load %arg14[%c5_43, %c0_44] : memref<75x8xf32, #tpu.memory_space<vmem>>, vector<64x8xf32>
    tpu.vector_store %arg14[%c5_43, %c0_44], %128 {strides = array<i32>} : memref<75x8xf32, #tpu.memory_space<vmem>>, vector<64x8xf32>,
    %cst_45 = arith.constant 0.000000e+00 : f32
    %132 = vector.broadcast %cst_45 : f32 to vector<6x8xf32>
    %c69 = arith.constant 69 : index
    %c0_46 = arith.constant 0 : index
    %133 = vector.load %arg14[%c69, %c0_46] : memref<75x8xf32, #tpu.memory_space<vmem>>, vector<6x8xf32>
    tpu.vector_store %arg14[%c69, %c0_46], %132 {strides = array<i32>} : memref<75x8xf32, #tpu.memory_space<vmem>>, vector<6x8xf32>,
    %c0_47 = arith.constant 0 : index
    %c0_48 = arith.constant 0 : index
    %134 = tpu.strided_load %arg14[%c0_47, %c0_48] {strides = array<i32: 2, 1>} : memref<75x8xf32, #tpu.memory_space<vmem>>, vector<32x8xf32>
    %c0_49 = arith.constant 0 : index
    %c0_50 = arith.constant 0 : index
    %135 = vector.load %arg13[%c0_49, %c0_50] : memref<32x192xf32, #tpu.memory_space<vmem>>, vector<32x8xf32>
    tpu.vector_store %arg13[%c0_49, %c0_50], %134 {strides = array<i32>} : memref<32x192xf32, #tpu.memory_space<vmem>>, vector<32x8xf32>,
    %c1_51 = arith.constant 1 : index
    %c0_52 = arith.constant 0 : index
    %136 = tpu.strided_load %arg14[%c1_51, %c0_52] {strides = array<i32: 2, 1>} : memref<75x8xf32, #tpu.memory_space<vmem>>, vector<32x8xf32>
    %c0_53 = arith.constant 0 : index
    %c8_54 = arith.constant 8 : index
    %137 = vector.load %arg13[%c0_53, %c8_54] : memref<32x192xf32, #tpu.memory_space<vmem>>, vector<32x8xf32>
    tpu.vector_store %arg13[%c0_53, %c8_54], %136 {strides = array<i32>} : memref<32x192xf32, #tpu.memory_space<vmem>>, vector<32x8xf32>,
    %c2_55 = arith.constant 2 : index
    %c0_56 = arith.constant 0 : index
    %138 = tpu.strided_load %arg14[%c2_55, %c0_56] {strides = array<i32: 2, 1>} : memref<75x8xf32, #tpu.memory_space<vmem>>, vector<32x8xf32>
    %c0_57 = arith.constant 0 : index
    %c16_58 = arith.constant 16 : index
    %139 = vector.load %arg13[%c0_57, %c16_58] : memref<32x192xf32, #tpu.memory_space<vmem>>, vector<32x8xf32>
    tpu.vector_store %arg13[%c0_57, %c16_58], %138 {strides = array<i32>} : memref<32x192xf32, #tpu.memory_space<vmem>>, vector<32x8xf32>,
    %c3_59 = arith.constant 3 : index
    %c0_60 = arith.constant 0 : index
    %140 = tpu.strided_load %arg14[%c3_59, %c0_60] {strides = array<i32: 2, 1>} : memref<75x8xf32, #tpu.memory_space<vmem>>, vector<32x8xf32>
    %c0_61 = arith.constant 0 : index
    %c24 = arith.constant 24 : index
    %141 = vector.load %arg13[%c0_61, %c24] : memref<32x192xf32, #tpu.memory_space<vmem>>, vector<32x8xf32>
    tpu.vector_store %arg13[%c0_61, %c24], %140 {strides = array<i32>} : memref<32x192xf32, #tpu.memory_space<vmem>>, vector<32x8xf32>,
    %c4_62 = arith.constant 4 : index
    %c0_63 = arith.constant 0 : index
    %142 = tpu.strided_load %arg14[%c4_62, %c0_63] {strides = array<i32: 2, 1>} : memref<75x8xf32, #tpu.memory_space<vmem>>, vector<32x8xf32>
    %c0_64 = arith.constant 0 : index
    %c32 = arith.constant 32 : index
    %143 = vector.load %arg13[%c0_64, %c32] : memref<32x192xf32, #tpu.memory_space<vmem>>, vector<32x8xf32>
    tpu.vector_store %arg13[%c0_64, %c32], %142 {strides = array<i32>} : memref<32x192xf32, #tpu.memory_space<vmem>>, vector<32x8xf32>,
    %c5_65 = arith.constant 5 : index
    %c0_66 = arith.constant 0 : index
    %144 = tpu.strided_load %arg14[%c5_65, %c0_66] {strides = array<i32: 2, 1>} : memref<75x8xf32, #tpu.memory_space<vmem>>, vector<32x8xf32>
    %c0_67 = arith.constant 0 : index
    %c40 = arith.constant 40 : index
    %145 = vector.load %arg13[%c0_67, %c40] : memref<32x192xf32, #tpu.memory_space<vmem>>, vector<32x8xf32>
    tpu.vector_store %arg13[%c0_67, %c40], %144 {strides = array<i32>} : memref<32x192xf32, #tpu.memory_space<vmem>>, vector<32x8xf32>,
    %c6_68 = arith.constant 6 : index
    %c0_69 = arith.constant 0 : index
    %146 = tpu.strided_load %arg14[%c6_68, %c0_69] {strides = array<i32: 2, 1>} : memref<75x8xf32, #tpu.memory_space<vmem>>, vector<32x8xf32>
    %c0_70 = arith.constant 0 : index
    %c48 = arith.constant 48 : index
    %147 = vector.load %arg13[%c0_70, %c48] : memref<32x192xf32, #tpu.memory_space<vmem>>, vector<32x8xf32>
    tpu.vector_store %arg13[%c0_70, %c48], %146 {strides = array<i32>} : memref<32x192xf32, #tpu.memory_space<vmem>>, vector<32x8xf32>,
    %c7_71 = arith.constant 7 : index
    %c0_72 = arith.constant 0 : index
    %148 = tpu.strided_load %arg14[%c7_71, %c0_72] {strides = array<i32: 2, 1>} : memref<75x8xf32, #tpu.memory_space<vmem>>, vector<32x8xf32>
    %c0_73 = arith.constant 0 : index
    %c56 = arith.constant 56 : index
    %149 = vector.load %arg13[%c0_73, %c56] : memref<32x192xf32, #tpu.memory_space<vmem>>, vector<32x8xf32>
    tpu.vector_store %arg13[%c0_73, %c56], %148 {strides = array<i32>} : memref<32x192xf32, #tpu.memory_space<vmem>>, vector<32x8xf32>,
    %c8_74 = arith.constant 8 : index
    %c0_75 = arith.constant 0 : index
    %150 = tpu.strided_load %arg14[%c8_74, %c0_75] {strides = array<i32: 2, 1>} : memref<75x8xf32, #tpu.memory_space<vmem>>, vector<32x8xf32>
    %c0_76 = arith.constant 0 : index
    %c64 = arith.constant 64 : index
    %151 = vector.load %arg13[%c0_76, %c64] : memref<32x192xf32, #tpu.memory_space<vmem>>, vector<32x8xf32>
    tpu.vector_store %arg13[%c0_76, %c64], %150 {strides = array<i32>} : memref<32x192xf32, #tpu.memory_space<vmem>>, vector<32x8xf32>,
    %c9_77 = arith.constant 9 : index
    %c0_78 = arith.constant 0 : index
    %152 = tpu.strided_load %arg14[%c9_77, %c0_78] {strides = array<i32: 2, 1>} : memref<75x8xf32, #tpu.memory_space<vmem>>, vector<32x8xf32>
    %c0_79 = arith.constant 0 : index
    %c72 = arith.constant 72 : index
    %153 = vector.load %arg13[%c0_79, %c72] : memref<32x192xf32, #tpu.memory_space<vmem>>, vector<32x8xf32>
    tpu.vector_store %arg13[%c0_79, %c72], %152 {strides = array<i32>} : memref<32x192xf32, #tpu.memory_space<vmem>>, vector<32x8xf32>,
    %c10_80 = arith.constant 10 : index
    %c0_81 = arith.constant 0 : index
    %154 = tpu.strided_load %arg14[%c10_80, %c0_81] {strides = array<i32: 2, 1>} : memref<75x8xf32, #tpu.memory_space<vmem>>, vector<32x8xf32>
    %c0_82 = arith.constant 0 : index
    %c80 = arith.constant 80 : index
    %155 = vector.load %arg13[%c0_82, %c80] : memref<32x192xf32, #tpu.memory_space<vmem>>, vector<32x8xf32>
    tpu.vector_store %arg13[%c0_82, %c80], %154 {strides = array<i32>} : memref<32x192xf32, #tpu.memory_space<vmem>>, vector<32x8xf32>,
    %c0_83 = arith.constant 0 : index
    %c0_84 = arith.constant 0 : index
    %156 = vector.load %arg13[%c0_83, %c0_84] : memref<32x192xf32, #tpu.memory_space<vmem>>, vector<32x88xf32>
    %157 = arith.truncf %156 : vector<32x88xf32> to vector<32x88xbf16>
    %c0_85 = arith.constant 0 : index
    %c0_86 = arith.constant 0 : index
    %158 = vector.load %arg4[%c0_85, %c0_86] : memref<88x16xf32, #tpu.memory_space<vmem>>, vector<88x16xf32>
    %159 = arith.truncf %158 : vector<88x16xf32> to vector<88x16xbf16>
    %cst_87 = arith.constant dense<0.000000e+00> : vector<32x16xf32>
    %160 = tpu.matmul %157, %159, %cst_87 {dimension_numbers = #tpu.dot_dimension_numbers<[1], [0], [0], [1], [0, 0, 1, 1], [], []>} : vector<32x88xbf16>, vector<88x16xbf16>, vector<32x16xf32> -> vector<32x16xf32>
    %c0_88 = arith.constant 0 : index
    %c0_89 = arith.constant 0 : index
    %161 = vector.load %arg5[%c0_88, %c0_89] : memref<1x16xf32, #tpu.memory_space<vmem>>, vector<1x16xf32>
    %162 = vector.broadcast %161 : vector<1x16xf32> to vector<32x16xf32>
    %163 = arith.addf %160, %162 : vector<32x16xf32>
    %cst_90 = arith.constant 0.000000e+00 : f32
    %164 = vector.broadcast %cst_90 : f32 to vector<32x16xf32>
    %165 = arith.cmpf oge, %163, %164 : vector<32x16xf32>
    %cst_91 = arith.constant 1.000000e-01 : f32
    %166 = vector.broadcast %cst_91 : f32 to vector<32x16xf32>
    %167 = arith.mulf %166, %163 : vector<32x16xf32>
    %168 = arith.select %165, %163, %167 : vector<32x16xi1>, vector<32x16xf32>
    %cst_92 = arith.constant 0.000000e+00 : f32
    %169 = vector.broadcast %cst_92 : f32 to vector<3x16xf32>
    %c0_93 = arith.constant 0 : index
    %c0_94 = arith.constant 0 : index
    %170 = vector.load %arg15[%c0_93, %c0_94] : memref<39x16xf32, #tpu.memory_space<vmem>>, vector<3x16xf32>
    tpu.vector_store %arg15[%c0_93, %c0_94], %169 {strides = array<i32>} : memref<39x16xf32, #tpu.memory_space<vmem>>, vector<3x16xf32>,
    %c3_95 = arith.constant 3 : index
    %c0_96 = arith.constant 0 : index
    %171 = vector.load %arg15[%c3_95, %c0_96] : memref<39x16xf32, #tpu.memory_space<vmem>>, vector<32x16xf32>
    tpu.vector_store %arg15[%c3_95, %c0_96], %168 {strides = array<i32>} : memref<39x16xf32, #tpu.memory_space<vmem>>, vector<32x16xf32>,
    %cst_97 = arith.constant 0.000000e+00 : f32
    %172 = vector.broadcast %cst_97 : f32 to vector<4x16xf32>
    %c35 = arith.constant 35 : index
    %c0_98 = arith.constant 0 : index
    %173 = vector.load %arg15[%c35, %c0_98] : memref<39x16xf32, #tpu.memory_space<vmem>>, vector<4x16xf32>
    tpu.vector_store %arg15[%c35, %c0_98], %172 {strides = array<i32>} : memref<39x16xf32, #tpu.memory_space<vmem>>, vector<4x16xf32>,
    %c0_99 = arith.constant 0 : index
    %c0_100 = arith.constant 0 : index
    %174 = tpu.strided_load %arg15[%c0_99, %c0_100] {strides = array<i32: 2, 1>} : memref<39x16xf32, #tpu.memory_space<vmem>>, vector<16x16xf32>
    %c0_101 = arith.constant 0 : index
    %c0_102 = arith.constant 0 : index
    %175 = vector.load %arg13[%c0_101, %c0_102] : memref<32x192xf32, #tpu.memory_space<vmem>>, vector<16x16xf32>
    tpu.vector_store %arg13[%c0_101, %c0_102], %174 {strides = array<i32>} : memref<32x192xf32, #tpu.memory_space<vmem>>, vector<16x16xf32>,
    %c1_103 = arith.constant 1 : index
    %c0_104 = arith.constant 0 : index
    %176 = tpu.strided_load %arg15[%c1_103, %c0_104] {strides = array<i32: 2, 1>} : memref<39x16xf32, #tpu.memory_space<vmem>>, vector<16x16xf32>
    %c0_105 = arith.constant 0 : index
    %c16_106 = arith.constant 16 : index
    %177 = vector.load %arg13[%c0_105, %c16_106] : memref<32x192xf32, #tpu.memory_space<vmem>>, vector<16x16xf32>
    tpu.vector_store %arg13[%c0_105, %c16_106], %176 {strides = array<i32>} : memref<32x192xf32, #tpu.memory_space<vmem>>, vector<16x16xf32>,
    %c2_107 = arith.constant 2 : index
    %c0_108 = arith.constant 0 : index
    %178 = tpu.strided_load %arg15[%c2_107, %c0_108] {strides = array<i32: 2, 1>} : memref<39x16xf32, #tpu.memory_space<vmem>>, vector<16x16xf32>
    %c0_109 = arith.constant 0 : index
    %c32_110 = arith.constant 32 : index
    %179 = vector.load %arg13[%c0_109, %c32_110] : memref<32x192xf32, #tpu.memory_space<vmem>>, vector<16x16xf32>
    tpu.vector_store %arg13[%c0_109, %c32_110], %178 {strides = array<i32>} : memref<32x192xf32, #tpu.memory_space<vmem>>, vector<16x16xf32>,
    %c3_111 = arith.constant 3 : index
    %c0_112 = arith.constant 0 : index
    %180 = tpu.strided_load %arg15[%c3_111, %c0_112] {strides = array<i32: 2, 1>} : memref<39x16xf32, #tpu.memory_space<vmem>>, vector<16x16xf32>
    %c0_113 = arith.constant 0 : index
    %c48_114 = arith.constant 48 : index
    %181 = vector.load %arg13[%c0_113, %c48_114] : memref<32x192xf32, #tpu.memory_space<vmem>>, vector<16x16xf32>
    tpu.vector_store %arg13[%c0_113, %c48_114], %180 {strides = array<i32>} : memref<32x192xf32, #tpu.memory_space<vmem>>, vector<16x16xf32>,
    %c4_115 = arith.constant 4 : index
    %c0_116 = arith.constant 0 : index
    %182 = tpu.strided_load %arg15[%c4_115, %c0_116] {strides = array<i32: 2, 1>} : memref<39x16xf32, #tpu.memory_space<vmem>>, vector<16x16xf32>
    %c0_117 = arith.constant 0 : index
    %c64_118 = arith.constant 64 : index
    %183 = vector.load %arg13[%c0_117, %c64_118] : memref<32x192xf32, #tpu.memory_space<vmem>>, vector<16x16xf32>
    tpu.vector_store %arg13[%c0_117, %c64_118], %182 {strides = array<i32>} : memref<32x192xf32, #tpu.memory_space<vmem>>, vector<16x16xf32>,
    %c5_119 = arith.constant 5 : index
    %c0_120 = arith.constant 0 : index
    %184 = tpu.strided_load %arg15[%c5_119, %c0_120] {strides = array<i32: 2, 1>} : memref<39x16xf32, #tpu.memory_space<vmem>>, vector<16x16xf32>
    %c0_121 = arith.constant 0 : index
    %c80_122 = arith.constant 80 : index
    %185 = vector.load %arg13[%c0_121, %c80_122] : memref<32x192xf32, #tpu.memory_space<vmem>>, vector<16x16xf32>
    tpu.vector_store %arg13[%c0_121, %c80_122], %184 {strides = array<i32>} : memref<32x192xf32, #tpu.memory_space<vmem>>, vector<16x16xf32>,
    %c6_123 = arith.constant 6 : index
    %c0_124 = arith.constant 0 : index
    %186 = tpu.strided_load %arg15[%c6_123, %c0_124] {strides = array<i32: 2, 1>} : memref<39x16xf32, #tpu.memory_space<vmem>>, vector<16x16xf32>
    %c0_125 = arith.constant 0 : index
    %c96 = arith.constant 96 : index
    %187 = vector.load %arg13[%c0_125, %c96] : memref<32x192xf32, #tpu.memory_space<vmem>>, vector<16x16xf32>
    tpu.vector_store %arg13[%c0_125, %c96], %186 {strides = array<i32>} : memref<32x192xf32, #tpu.memory_space<vmem>>, vector<16x16xf32>,
    %c0_126 = arith.constant 0 : index
    %c0_127 = arith.constant 0 : index
    %188 = vector.load %arg13[%c0_126, %c0_127] : memref<32x192xf32, #tpu.memory_space<vmem>>, vector<16x112xf32>
    %189 = arith.truncf %188 : vector<16x112xf32> to vector<16x112xbf16>
    %c0_128 = arith.constant 0 : index
    %c0_129 = arith.constant 0 : index
    %190 = vector.load %arg6[%c0_128, %c0_129] : memref<112x32xf32, #tpu.memory_space<vmem>>, vector<112x32xf32>
    %191 = arith.truncf %190 : vector<112x32xf32> to vector<112x32xbf16>
    %cst_130 = arith.constant dense<0.000000e+00> : vector<16x32xf32>
    %192 = tpu.matmul %189, %191, %cst_130 {dimension_numbers = #tpu.dot_dimension_numbers<[1], [0], [0], [1], [0, 0, 1, 1], [], []>} : vector<16x112xbf16>, vector<112x32xbf16>, vector<16x32xf32> -> vector<16x32xf32>
    %c0_131 = arith.constant 0 : index
    %c0_132 = arith.constant 0 : index
    %193 = vector.load %arg7[%c0_131, %c0_132] : memref<1x32xf32, #tpu.memory_space<vmem>>, vector<1x32xf32>
    %194 = vector.broadcast %193 : vector<1x32xf32> to vector<16x32xf32>
    %195 = arith.addf %192, %194 : vector<16x32xf32>
    %cst_133 = arith.constant 0.000000e+00 : f32
    %196 = vector.broadcast %cst_133 : f32 to vector<16x32xf32>
    %197 = arith.cmpf oge, %195, %196 : vector<16x32xf32>
    %cst_134 = arith.constant 1.000000e-01 : f32
    %198 = vector.broadcast %cst_134 : f32 to vector<16x32xf32>
    %199 = arith.mulf %198, %195 : vector<16x32xf32>
    %200 = arith.select %197, %195, %199 : vector<16x32xi1>, vector<16x32xf32>
    %cst_135 = arith.constant 0.000000e+00 : f32
    %201 = vector.broadcast %cst_135 : f32 to vector<2x32xf32>
    %c0_136 = arith.constant 0 : index
    %c0_137 = arith.constant 0 : index
    %202 = vector.load %arg16[%c0_136, %c0_137] : memref<21x32xf32, #tpu.memory_space<vmem>>, vector<2x32xf32>
    tpu.vector_store %arg16[%c0_136, %c0_137], %201 {strides = array<i32>} : memref<21x32xf32, #tpu.memory_space<vmem>>, vector<2x32xf32>,
    %c2_138 = arith.constant 2 : index
    %c0_139 = arith.constant 0 : index
    %203 = vector.load %arg16[%c2_138, %c0_139] : memref<21x32xf32, #tpu.memory_space<vmem>>, vector<16x32xf32>
    tpu.vector_store %arg16[%c2_138, %c0_139], %200 {strides = array<i32>} : memref<21x32xf32, #tpu.memory_space<vmem>>, vector<16x32xf32>,
    %cst_140 = arith.constant 0.000000e+00 : f32
    %204 = vector.broadcast %cst_140 : f32 to vector<3x32xf32>
    %c18 = arith.constant 18 : index
    %c0_141 = arith.constant 0 : index
    %205 = vector.load %arg16[%c18, %c0_141] : memref<21x32xf32, #tpu.memory_space<vmem>>, vector<3x32xf32>
    tpu.vector_store %arg16[%c18, %c0_141], %204 {strides = array<i32>} : memref<21x32xf32, #tpu.memory_space<vmem>>, vector<3x32xf32>,
    %c0_142 = arith.constant 0 : index
    %c0_143 = arith.constant 0 : index
    %206 = tpu.strided_load %arg16[%c0_142, %c0_143] {strides = array<i32: 2, 1>} : memref<21x32xf32, #tpu.memory_space<vmem>>, vector<8x32xf32>
    %c0_144 = arith.constant 0 : index
    %c0_145 = arith.constant 0 : index
    %207 = vector.load %arg13[%c0_144, %c0_145] : memref<32x192xf32, #tpu.memory_space<vmem>>, vector<8x32xf32>
    tpu.vector_store %arg13[%c0_144, %c0_145], %206 {strides = array<i32>} : memref<32x192xf32, #tpu.memory_space<vmem>>, vector<8x32xf32>,
    %c1_146 = arith.constant 1 : index
    %c0_147 = arith.constant 0 : index
    %208 = tpu.strided_load %arg16[%c1_146, %c0_147] {strides = array<i32: 2, 1>} : memref<21x32xf32, #tpu.memory_space<vmem>>, vector<8x32xf32>
    %c0_148 = arith.constant 0 : index
    %c32_149 = arith.constant 32 : index
    %209 = vector.load %arg13[%c0_148, %c32_149] : memref<32x192xf32, #tpu.memory_space<vmem>>, vector<8x32xf32>
    tpu.vector_store %arg13[%c0_148, %c32_149], %208 {strides = array<i32>} : memref<32x192xf32, #tpu.memory_space<vmem>>, vector<8x32xf32>,
    %c2_150 = arith.constant 2 : index
    %c0_151 = arith.constant 0 : index
    %210 = tpu.strided_load %arg16[%c2_150, %c0_151] {strides = array<i32: 2, 1>} : memref<21x32xf32, #tpu.memory_space<vmem>>, vector<8x32xf32>
    %c0_152 = arith.constant 0 : index
    %c64_153 = arith.constant 64 : index
    %211 = vector.load %arg13[%c0_152, %c64_153] : memref<32x192xf32, #tpu.memory_space<vmem>>, vector<8x32xf32>
    tpu.vector_store %arg13[%c0_152, %c64_153], %210 {strides = array<i32>} : memref<32x192xf32, #tpu.memory_space<vmem>>, vector<8x32xf32>,
    %c3_154 = arith.constant 3 : index
    %c0_155 = arith.constant 0 : index
    %212 = tpu.strided_load %arg16[%c3_154, %c0_155] {strides = array<i32: 2, 1>} : memref<21x32xf32, #tpu.memory_space<vmem>>, vector<8x32xf32>
    %c0_156 = arith.constant 0 : index
    %c96_157 = arith.constant 96 : index
    %213 = vector.load %arg13[%c0_156, %c96_157] : memref<32x192xf32, #tpu.memory_space<vmem>>, vector<8x32xf32>
    tpu.vector_store %arg13[%c0_156, %c96_157], %212 {strides = array<i32>} : memref<32x192xf32, #tpu.memory_space<vmem>>, vector<8x32xf32>,
    %c4_158 = arith.constant 4 : index
    %c0_159 = arith.constant 0 : index
    %214 = tpu.strided_load %arg16[%c4_158, %c0_159] {strides = array<i32: 2, 1>} : memref<21x32xf32, #tpu.memory_space<vmem>>, vector<8x32xf32>
    %c0_160 = arith.constant 0 : index
    %c128 = arith.constant 128 : index
    %215 = vector.load %arg13[%c0_160, %c128] : memref<32x192xf32, #tpu.memory_space<vmem>>, vector<8x32xf32>
    tpu.vector_store %arg13[%c0_160, %c128], %214 {strides = array<i32>} : memref<32x192xf32, #tpu.memory_space<vmem>>, vector<8x32xf32>,
    %c0_161 = arith.constant 0 : index
    %c0_162 = arith.constant 0 : index
    %216 = vector.load %arg13[%c0_161, %c0_162] : memref<32x192xf32, #tpu.memory_space<vmem>>, vector<8x160xf32>
    %217 = arith.truncf %216 : vector<8x160xf32> to vector<8x160xbf16>
    %c0_163 = arith.constant 0 : index
    %c0_164 = arith.constant 0 : index
    %218 = vector.load %arg8[%c0_163, %c0_164] : memref<160x64xf32, #tpu.memory_space<vmem>>, vector<160x64xf32>
    %219 = arith.truncf %218 : vector<160x64xf32> to vector<160x64xbf16>
    %cst_165 = arith.constant dense<0.000000e+00> : vector<8x64xf32>
    %220 = tpu.matmul %217, %219, %cst_165 {dimension_numbers = #tpu.dot_dimension_numbers<[1], [0], [0], [1], [0, 0, 1, 1], [], []>} : vector<8x160xbf16>, vector<160x64xbf16>, vector<8x64xf32> -> vector<8x64xf32>
    %c0_166 = arith.constant 0 : index
    %c0_167 = arith.constant 0 : index
    %221 = vector.load %arg9[%c0_166, %c0_167] : memref<1x64xf32, #tpu.memory_space<vmem>>, vector<1x64xf32>
    %222 = vector.broadcast %221 : vector<1x64xf32> to vector<8x64xf32>
    %223 = arith.addf %220, %222 : vector<8x64xf32>
    %cst_168 = arith.constant 0.000000e+00 : f32
    %224 = vector.broadcast %cst_168 : f32 to vector<8x64xf32>
    %225 = arith.cmpf oge, %223, %224 : vector<8x64xf32>
    %cst_169 = arith.constant 1.000000e-01 : f32
    %226 = vector.broadcast %cst_169 : f32 to vector<8x64xf32>
    %227 = arith.mulf %226, %223 : vector<8x64xf32>
    %228 = arith.select %225, %223, %227 : vector<8x64xi1>, vector<8x64xf32>
    %cst_170 = arith.constant 0.000000e+00 : f32
    %229 = vector.broadcast %cst_170 : f32 to vector<1x64xf32>
    %c0_171 = arith.constant 0 : index
    %c0_172 = arith.constant 0 : index
    %230 = vector.load %arg17[%c0_171, %c0_172] : memref<13x64xf32, #tpu.memory_space<vmem>>, vector<1x64xf32>
    tpu.vector_store %arg17[%c0_171, %c0_172], %229 {strides = array<i32>} : memref<13x64xf32, #tpu.memory_space<vmem>>, vector<1x64xf32>,
    %c1_173 = arith.constant 1 : index
    %c0_174 = arith.constant 0 : index
    %231 = vector.load %arg17[%c1_173, %c0_174] : memref<13x64xf32, #tpu.memory_space<vmem>>, vector<8x64xf32>
    tpu.vector_store %arg17[%c1_173, %c0_174], %228 {strides = array<i32>} : memref<13x64xf32, #tpu.memory_space<vmem>>, vector<8x64xf32>,
    %cst_175 = arith.constant 0.000000e+00 : f32
    %232 = vector.broadcast %cst_175 : f32 to vector<4x64xf32>
    %c9_176 = arith.constant 9 : index
    %c0_177 = arith.constant 0 : index
    %233 = vector.load %arg17[%c9_176, %c0_177] : memref<13x64xf32, #tpu.memory_space<vmem>>, vector<4x64xf32>
    tpu.vector_store %arg17[%c9_176, %c0_177], %232 {strides = array<i32>} : memref<13x64xf32, #tpu.memory_space<vmem>>, vector<4x64xf32>,
    %c0_178 = arith.constant 0 : index
    %c0_179 = arith.constant 0 : index
    %234 = tpu.strided_load %arg17[%c0_178, %c0_179] {strides = array<i32: 4, 1>} : memref<13x64xf32, #tpu.memory_space<vmem>>, vector<2x64xf32>
    %c0_180 = arith.constant 0 : index
    %c0_181 = arith.constant 0 : index
    %235 = vector.load %arg13[%c0_180, %c0_181] : memref<32x192xf32, #tpu.memory_space<vmem>>, vector<2x64xf32>
    tpu.vector_store %arg13[%c0_180, %c0_181], %234 {strides = array<i32>} : memref<32x192xf32, #tpu.memory_space<vmem>>, vector<2x64xf32>,
    %c1_182 = arith.constant 1 : index
    %c0_183 = arith.constant 0 : index
    %236 = tpu.strided_load %arg17[%c1_182, %c0_183] {strides = array<i32: 4, 1>} : memref<13x64xf32, #tpu.memory_space<vmem>>, vector<2x64xf32>
    %c0_184 = arith.constant 0 : index
    %c64_185 = arith.constant 64 : index
    %237 = vector.load %arg13[%c0_184, %c64_185] : memref<32x192xf32, #tpu.memory_space<vmem>>, vector<2x64xf32>
    tpu.vector_store %arg13[%c0_184, %c64_185], %236 {strides = array<i32>} : memref<32x192xf32, #tpu.memory_space<vmem>>, vector<2x64xf32>,
    %c2_186 = arith.constant 2 : index
    %c0_187 = arith.constant 0 : index
    %238 = tpu.strided_load %arg17[%c2_186, %c0_187] {strides = array<i32: 4, 1>} : memref<13x64xf32, #tpu.memory_space<vmem>>, vector<2x64xf32>
    %c0_188 = arith.constant 0 : index
    %c128_189 = arith.constant 128 : index
    %239 = vector.load %arg13[%c0_188, %c128_189] : memref<32x192xf32, #tpu.memory_space<vmem>>, vector<2x64xf32>
    tpu.vector_store %arg13[%c0_188, %c128_189], %238 {strides = array<i32>} : memref<32x192xf32, #tpu.memory_space<vmem>>, vector<2x64xf32>,
    %c0_190 = arith.constant 0 : index
    %c0_191 = arith.constant 0 : index
    %240 = vector.load %arg13[%c0_190, %c0_191] : memref<32x192xf32, #tpu.memory_space<vmem>>, vector<2x192xf32>
    %241 = arith.truncf %240 : vector<2x192xf32> to vector<2x192xbf16>
    %c0_192 = arith.constant 0 : index
    %c0_193 = arith.constant 0 : index
    %242 = vector.load %arg10[%c0_192, %c0_193] : memref<192x128xf32, #tpu.memory_space<vmem>>, vector<192x128xf32>
    %243 = arith.truncf %242 : vector<192x128xf32> to vector<192x128xbf16>
    %cst_194 = arith.constant dense<0.000000e+00> : vector<2x128xf32>
    %244 = tpu.matmul %241, %243, %cst_194 {dimension_numbers = #tpu.dot_dimension_numbers<[1], [0], [0], [1], [0, 0, 1, 1], [], []>} : vector<2x192xbf16>, vector<192x128xbf16>, vector<2x128xf32> -> vector<2x128xf32>
    %c0_195 = arith.constant 0 : index
    %c0_196 = arith.constant 0 : index
    %245 = vector.load %arg11[%c0_195, %c0_196] : memref<1x128xf32, #tpu.memory_space<vmem>>, vector<1x128xf32>
    %246 = vector.broadcast %245 : vector<1x128xf32> to vector<2x128xf32>
    %247 = arith.addf %244, %246 : vector<2x128xf32>
    %cst_197 = arith.constant 0.000000e+00 : f32
    %248 = vector.broadcast %cst_197 : f32 to vector<2x128xf32>
    %249 = arith.cmpf oge, %247, %248 : vector<2x128xf32>
    %cst_198 = arith.constant 1.000000e-01 : f32
    %250 = vector.broadcast %cst_198 : f32 to vector<2x128xf32>
    %251 = arith.mulf %250, %247 : vector<2x128xf32>
    %252 = arith.select %249, %247, %251 : vector<2x128xi1>, vector<2x128xf32>
    %c0_199 = arith.constant 0 : index
    %c0_200 = arith.constant 0 : index
    %c0_201 = arith.constant 0 : index
    %253 = vector.load %arg12[%c0_199, %c0_200, %c0_201] : memref<1x2x128xf32, #tpu.memory_space<vmem>>, vector<1x2x128xf32>
    %254 = vector.shape_cast %253 : vector<1x2x128xf32> to vector<2x128xf32>
    %255 = vector.shape_cast %252 : vector<2x128xf32> to vector<1x2x128xf32>
    tpu.vector_store %arg12[%c0_199, %c0_200, %c0_201], %255 {strides = array<i32>} : memref<1x2x128xf32, #tpu.memory_space<vmem>>, vector<1x2x128xf32>,
    return
  }
  func.func @transform_0(%arg0: i32) -> (i32, i32, i32) {
    %c0_i32 = arith.constant 0 : i32
    %c0_i32_0 = arith.constant 0 : i32
    %c0_i32_1 = arith.constant 0 : i32
    return %arg0, %c0_i32, %c0_i32_0 : i32, i32, i32
  }
  func.func @transform_1(%arg0: i32) -> (i32, i32) {
    %c0_i32 = arith.constant 0 : i32
    %c0_i32_0 = arith.constant 0 : i32
    %c0_i32_1 = arith.constant 0 : i32
    return %c0_i32, %c0_i32_0 : i32, i32
  }
  func.func @transform_2(%arg0: i32) -> (i32, i32) {
    %c0_i32 = arith.constant 0 : i32
    %c0_i32_0 = arith.constant 0 : i32
    %c0_i32_1 = arith.constant 0 : i32
    return %c0_i32, %c0_i32_0 : i32, i32
  }
  func.func @transform_3(%arg0: i32) -> (i32, i32) {
    %c0_i32 = arith.constant 0 : i32
    %c0_i32_0 = arith.constant 0 : i32
    %c0_i32_1 = arith.constant 0 : i32
    return %c0_i32, %c0_i32_0 : i32, i32
  }
  func.func @transform_4(%arg0: i32) -> (i32, i32) {
    %c0_i32 = arith.constant 0 : i32
    %c0_i32_0 = arith.constant 0 : i32
    %c0_i32_1 = arith.constant 0 : i32
    return %c0_i32, %c0_i32_0 : i32, i32
  }
  func.func @transform_5(%arg0: i32) -> (i32, i32) {
    %c0_i32 = arith.constant 0 : i32
    %c0_i32_0 = arith.constant 0 : i32
    %c0_i32_1 = arith.constant 0 : i32
    return %c0_i32, %c0_i32_0 : i32, i32
  }
  func.func @transform_6(%arg0: i32) -> (i32, i32) {
    %c0_i32 = arith.constant 0 : i32
    %c0_i32_0 = arith.constant 0 : i32
    %c0_i32_1 = arith.constant 0 : i32
    return %c0_i32, %c0_i32_0 : i32, i32
  }
  func.func @transform_7(%arg0: i32) -> (i32, i32) {
    %c0_i32 = arith.constant 0 : i32
    %c0_i32_0 = arith.constant 0 : i32
    %c0_i32_1 = arith.constant 0 : i32
    return %c0_i32, %c0_i32_0 : i32, i32
  }
  func.func @transform_8(%arg0: i32) -> (i32, i32) {
    %c0_i32 = arith.constant 0 : i32
    %c0_i32_0 = arith.constant 0 : i32
    %c0_i32_1 = arith.constant 0 : i32
    return %c0_i32, %c0_i32_0 : i32, i32
  }
  func.func @transform_9(%arg0: i32) -> (i32, i32) {
    %c0_i32 = arith.constant 0 : i32
    %c0_i32_0 = arith.constant 0 : i32
    %c0_i32_1 = arith.constant 0 : i32
    return %c0_i32, %c0_i32_0 : i32, i32
  }
  func.func @transform_10(%arg0: i32) -> (i32, i32) {
    %c0_i32 = arith.constant 0 : i32
    %c0_i32_0 = arith.constant 0 : i32
    %c0_i32_1 = arith.constant 0 : i32
    return %c0_i32, %c0_i32_0 : i32, i32
  }
  func.func @transform_11(%arg0: i32) -> (i32, i32, i32) {
    %c0_i32 = arith.constant 0 : i32
    %c0_i32_0 = arith.constant 0 : i32
    %c0_i32_1 = arith.constant 0 : i32
    return %arg0, %c0_i32, %c0_i32_0 : i32, i32, i32
  }
}

module attributes {stable_mosaic.version = 11 : i64} {
  func.func @_disc_s_kernel(%arg0: i32, %arg1: memref<1x49x1xf32, #tpu.memory_space<vmem>>, %arg2: memref<17x8xf32, #tpu.memory_space<vmem>>, %arg3: memref<1x8xf32, #tpu.memory_space<vmem>>, %arg4: memref<88x16xf32, #tpu.memory_space<vmem>>, %arg5: memref<1x16xf32, #tpu.memory_space<vmem>>, %arg6: memref<112x32xf32, #tpu.memory_space<vmem>>, %arg7: memref<1x32xf32, #tpu.memory_space<vmem>>, %arg8: memref<160x64xf32, #tpu.memory_space<vmem>>, %arg9: memref<1x64xf32, #tpu.memory_space<vmem>>, %arg10: memref<192x128xf32, #tpu.memory_space<vmem>>, %arg11: memref<1x128xf32, #tpu.memory_space<vmem>>, %arg12: memref<1x2x128xf32, #tpu.memory_space<vmem>>, %arg13: memref<17x192xf32, #tpu.memory_space<vmem>>, %arg14: memref<44x8xf32, #tpu.memory_space<vmem>>, %arg15: memref<24x16xf32, #tpu.memory_space<vmem>>, %arg16: memref<14x32xf32, #tpu.memory_space<vmem>>, %arg17: memref<10x64xf32, #tpu.memory_space<vmem>>) attributes {dimension_semantics = [#tpu.dimension_semantics<parallel>], iteration_bounds = array<i64: 2>, scalar_prefetch = 0 : i64, scratch_operands = 5 : i64, tpu.core_type = #tpu.core_type<tc>, window_params = [{transform_indices = @transform_0, window_bounds = array<i64: 1, 49, 1>}, {pipeline_mode = #tpu.pipeline_mode<synchronous>, transform_indices = @transform_1, window_bounds = array<i64: 17, 8>}, {pipeline_mode = #tpu.pipeline_mode<synchronous>, transform_indices = @transform_2, window_bounds = array<i64: 1, 8>}, {pipeline_mode = #tpu.pipeline_mode<synchronous>, transform_indices = @transform_3, window_bounds = array<i64: 88, 16>}, {pipeline_mode = #tpu.pipeline_mode<synchronous>, transform_indices = @transform_4, window_bounds = array<i64: 1, 16>}, {pipeline_mode = #tpu.pipeline_mode<synchronous>, transform_indices = @transform_5, window_bounds = array<i64: 112, 32>}, {pipeline_mode = #tpu.pipeline_mode<synchronous>, transform_indices = @transform_6, window_bounds = array<i64: 1, 32>}, {pipeline_mode = #tpu.pipeline_mode<synchronous>, transform_indices = @transform_7, window_bounds = array<i64: 160, 64>}, {pipeline_mode = #tpu.pipeline_mode<synchronous>, transform_indices = @transform_8, window_bounds = array<i64: 1, 64>}, {pipeline_mode = #tpu.pipeline_mode<synchronous>, transform_indices = @transform_9, window_bounds = array<i64: 192, 128>}, {pipeline_mode = #tpu.pipeline_mode<synchronous>, transform_indices = @transform_10, window_bounds = array<i64: 1, 128>}, {transform_indices = @transform_11, window_bounds = array<i64: 1, 2, 128>}]} {
    %c0 = arith.constant 0 : index
    %c0_0 = arith.constant 0 : index
    %0 = vector.load %arg2[%c0, %c0_0] : memref<17x8xf32, #tpu.memory_space<vmem>>, vector<17x8xf32>
    %cst = arith.constant 0.000000e+00 : f32
    %1 = vector.broadcast %cst : f32 to vector<33x8xf32>
    %c0_1 = arith.constant 0 : index
    %c0_2 = arith.constant 0 : index
    %c0_3 = arith.constant 0 : index
    %2 = vector.load %arg1[%c0_1, %c0_2, %c0_3] : memref<1x49x1xf32, #tpu.memory_space<vmem>>, vector<1x33x1xf32>
    %3 = vector.shape_cast %2 : vector<1x33x1xf32> to vector<33x1xf32>
    %4 = vector.extract_strided_slice %0 {offsets = [0, 0], sizes = [1, 8], strides = [1, 1]} : vector<17x8xf32> to vector<1x8xf32>
    %5 = vector.broadcast %3 : vector<33x1xf32> to vector<33x8xf32>
    %6 = vector.broadcast %4 : vector<1x8xf32> to vector<33x8xf32>
    %7 = arith.mulf %5, %6 : vector<33x8xf32>
    %8 = arith.addf %1, %7 : vector<33x8xf32>
    %c0_4 = arith.constant 0 : index
    %c1 = arith.constant 1 : index
    %c0_5 = arith.constant 0 : index
    %9 = vector.load %arg1[%c0_4, %c1, %c0_5] : memref<1x49x1xf32, #tpu.memory_space<vmem>>, vector<1x33x1xf32>
    %10 = vector.shape_cast %9 : vector<1x33x1xf32> to vector<33x1xf32>
    %11 = vector.extract_strided_slice %0 {offsets = [1, 0], sizes = [1, 8], strides = [1, 1]} : vector<17x8xf32> to vector<1x8xf32>
    %12 = vector.broadcast %10 : vector<33x1xf32> to vector<33x8xf32>
    %13 = vector.broadcast %11 : vector<1x8xf32> to vector<33x8xf32>
    %14 = arith.mulf %12, %13 : vector<33x8xf32>
    %15 = arith.addf %8, %14 : vector<33x8xf32>
    %c0_6 = arith.constant 0 : index
    %c2 = arith.constant 2 : index
    %c0_7 = arith.constant 0 : index
    %16 = vector.load %arg1[%c0_6, %c2, %c0_7] : memref<1x49x1xf32, #tpu.memory_space<vmem>>, vector<1x33x1xf32>
    %17 = vector.shape_cast %16 : vector<1x33x1xf32> to vector<33x1xf32>
    %18 = vector.extract_strided_slice %0 {offsets = [2, 0], sizes = [1, 8], strides = [1, 1]} : vector<17x8xf32> to vector<1x8xf32>
    %19 = vector.broadcast %17 : vector<33x1xf32> to vector<33x8xf32>
    %20 = vector.broadcast %18 : vector<1x8xf32> to vector<33x8xf32>
    %21 = arith.mulf %19, %20 : vector<33x8xf32>
    %22 = arith.addf %15, %21 : vector<33x8xf32>
    %c0_8 = arith.constant 0 : index
    %c3 = arith.constant 3 : index
    %c0_9 = arith.constant 0 : index
    %23 = vector.load %arg1[%c0_8, %c3, %c0_9] : memref<1x49x1xf32, #tpu.memory_space<vmem>>, vector<1x33x1xf32>
    %24 = vector.shape_cast %23 : vector<1x33x1xf32> to vector<33x1xf32>
    %25 = vector.extract_strided_slice %0 {offsets = [3, 0], sizes = [1, 8], strides = [1, 1]} : vector<17x8xf32> to vector<1x8xf32>
    %26 = vector.broadcast %24 : vector<33x1xf32> to vector<33x8xf32>
    %27 = vector.broadcast %25 : vector<1x8xf32> to vector<33x8xf32>
    %28 = arith.mulf %26, %27 : vector<33x8xf32>
    %29 = arith.addf %22, %28 : vector<33x8xf32>
    %c0_10 = arith.constant 0 : index
    %c4 = arith.constant 4 : index
    %c0_11 = arith.constant 0 : index
    %30 = vector.load %arg1[%c0_10, %c4, %c0_11] : memref<1x49x1xf32, #tpu.memory_space<vmem>>, vector<1x33x1xf32>
    %31 = vector.shape_cast %30 : vector<1x33x1xf32> to vector<33x1xf32>
    %32 = vector.extract_strided_slice %0 {offsets = [4, 0], sizes = [1, 8], strides = [1, 1]} : vector<17x8xf32> to vector<1x8xf32>
    %33 = vector.broadcast %31 : vector<33x1xf32> to vector<33x8xf32>
    %34 = vector.broadcast %32 : vector<1x8xf32> to vector<33x8xf32>
    %35 = arith.mulf %33, %34 : vector<33x8xf32>
    %36 = arith.addf %29, %35 : vector<33x8xf32>
    %c0_12 = arith.constant 0 : index
    %c5 = arith.constant 5 : index
    %c0_13 = arith.constant 0 : index
    %37 = vector.load %arg1[%c0_12, %c5, %c0_13] : memref<1x49x1xf32, #tpu.memory_space<vmem>>, vector<1x33x1xf32>
    %38 = vector.shape_cast %37 : vector<1x33x1xf32> to vector<33x1xf32>
    %39 = vector.extract_strided_slice %0 {offsets = [5, 0], sizes = [1, 8], strides = [1, 1]} : vector<17x8xf32> to vector<1x8xf32>
    %40 = vector.broadcast %38 : vector<33x1xf32> to vector<33x8xf32>
    %41 = vector.broadcast %39 : vector<1x8xf32> to vector<33x8xf32>
    %42 = arith.mulf %40, %41 : vector<33x8xf32>
    %43 = arith.addf %36, %42 : vector<33x8xf32>
    %c0_14 = arith.constant 0 : index
    %c6 = arith.constant 6 : index
    %c0_15 = arith.constant 0 : index
    %44 = vector.load %arg1[%c0_14, %c6, %c0_15] : memref<1x49x1xf32, #tpu.memory_space<vmem>>, vector<1x33x1xf32>
    %45 = vector.shape_cast %44 : vector<1x33x1xf32> to vector<33x1xf32>
    %46 = vector.extract_strided_slice %0 {offsets = [6, 0], sizes = [1, 8], strides = [1, 1]} : vector<17x8xf32> to vector<1x8xf32>
    %47 = vector.broadcast %45 : vector<33x1xf32> to vector<33x8xf32>
    %48 = vector.broadcast %46 : vector<1x8xf32> to vector<33x8xf32>
    %49 = arith.mulf %47, %48 : vector<33x8xf32>
    %50 = arith.addf %43, %49 : vector<33x8xf32>
    %c0_16 = arith.constant 0 : index
    %c7 = arith.constant 7 : index
    %c0_17 = arith.constant 0 : index
    %51 = vector.load %arg1[%c0_16, %c7, %c0_17] : memref<1x49x1xf32, #tpu.memory_space<vmem>>, vector<1x33x1xf32>
    %52 = vector.shape_cast %51 : vector<1x33x1xf32> to vector<33x1xf32>
    %53 = vector.extract_strided_slice %0 {offsets = [7, 0], sizes = [1, 8], strides = [1, 1]} : vector<17x8xf32> to vector<1x8xf32>
    %54 = vector.broadcast %52 : vector<33x1xf32> to vector<33x8xf32>
    %55 = vector.broadcast %53 : vector<1x8xf32> to vector<33x8xf32>
    %56 = arith.mulf %54, %55 : vector<33x8xf32>
    %57 = arith.addf %50, %56 : vector<33x8xf32>
    %c0_18 = arith.constant 0 : index
    %c8 = arith.constant 8 : index
    %c0_19 = arith.constant 0 : index
    %58 = vector.load %arg1[%c0_18, %c8, %c0_19] : memref<1x49x1xf32, #tpu.memory_space<vmem>>, vector<1x33x1xf32>
    %59 = vector.shape_cast %58 : vector<1x33x1xf32> to vector<33x1xf32>
    %60 = vector.extract_strided_slice %0 {offsets = [8, 0], sizes = [1, 8], strides = [1, 1]} : vector<17x8xf32> to vector<1x8xf32>
    %61 = vector.broadcast %59 : vector<33x1xf32> to vector<33x8xf32>
    %62 = vector.broadcast %60 : vector<1x8xf32> to vector<33x8xf32>
    %63 = arith.mulf %61, %62 : vector<33x8xf32>
    %64 = arith.addf %57, %63 : vector<33x8xf32>
    %c0_20 = arith.constant 0 : index
    %c9 = arith.constant 9 : index
    %c0_21 = arith.constant 0 : index
    %65 = vector.load %arg1[%c0_20, %c9, %c0_21] : memref<1x49x1xf32, #tpu.memory_space<vmem>>, vector<1x33x1xf32>
    %66 = vector.shape_cast %65 : vector<1x33x1xf32> to vector<33x1xf32>
    %67 = vector.extract_strided_slice %0 {offsets = [9, 0], sizes = [1, 8], strides = [1, 1]} : vector<17x8xf32> to vector<1x8xf32>
    %68 = vector.broadcast %66 : vector<33x1xf32> to vector<33x8xf32>
    %69 = vector.broadcast %67 : vector<1x8xf32> to vector<33x8xf32>
    %70 = arith.mulf %68, %69 : vector<33x8xf32>
    %71 = arith.addf %64, %70 : vector<33x8xf32>
    %c0_22 = arith.constant 0 : index
    %c10 = arith.constant 10 : index
    %c0_23 = arith.constant 0 : index
    %72 = vector.load %arg1[%c0_22, %c10, %c0_23] : memref<1x49x1xf32, #tpu.memory_space<vmem>>, vector<1x33x1xf32>
    %73 = vector.shape_cast %72 : vector<1x33x1xf32> to vector<33x1xf32>
    %74 = vector.extract_strided_slice %0 {offsets = [10, 0], sizes = [1, 8], strides = [1, 1]} : vector<17x8xf32> to vector<1x8xf32>
    %75 = vector.broadcast %73 : vector<33x1xf32> to vector<33x8xf32>
    %76 = vector.broadcast %74 : vector<1x8xf32> to vector<33x8xf32>
    %77 = arith.mulf %75, %76 : vector<33x8xf32>
    %78 = arith.addf %71, %77 : vector<33x8xf32>
    %c0_24 = arith.constant 0 : index
    %c11 = arith.constant 11 : index
    %c0_25 = arith.constant 0 : index
    %79 = vector.load %arg1[%c0_24, %c11, %c0_25] : memref<1x49x1xf32, #tpu.memory_space<vmem>>, vector<1x33x1xf32>
    %80 = vector.shape_cast %79 : vector<1x33x1xf32> to vector<33x1xf32>
    %81 = vector.extract_strided_slice %0 {offsets = [11, 0], sizes = [1, 8], strides = [1, 1]} : vector<17x8xf32> to vector<1x8xf32>
    %82 = vector.broadcast %80 : vector<33x1xf32> to vector<33x8xf32>
    %83 = vector.broadcast %81 : vector<1x8xf32> to vector<33x8xf32>
    %84 = arith.mulf %82, %83 : vector<33x8xf32>
    %85 = arith.addf %78, %84 : vector<33x8xf32>
    %c0_26 = arith.constant 0 : index
    %c12 = arith.constant 12 : index
    %c0_27 = arith.constant 0 : index
    %86 = vector.load %arg1[%c0_26, %c12, %c0_27] : memref<1x49x1xf32, #tpu.memory_space<vmem>>, vector<1x33x1xf32>
    %87 = vector.shape_cast %86 : vector<1x33x1xf32> to vector<33x1xf32>
    %88 = vector.extract_strided_slice %0 {offsets = [12, 0], sizes = [1, 8], strides = [1, 1]} : vector<17x8xf32> to vector<1x8xf32>
    %89 = vector.broadcast %87 : vector<33x1xf32> to vector<33x8xf32>
    %90 = vector.broadcast %88 : vector<1x8xf32> to vector<33x8xf32>
    %91 = arith.mulf %89, %90 : vector<33x8xf32>
    %92 = arith.addf %85, %91 : vector<33x8xf32>
    %c0_28 = arith.constant 0 : index
    %c13 = arith.constant 13 : index
    %c0_29 = arith.constant 0 : index
    %93 = vector.load %arg1[%c0_28, %c13, %c0_29] : memref<1x49x1xf32, #tpu.memory_space<vmem>>, vector<1x33x1xf32>
    %94 = vector.shape_cast %93 : vector<1x33x1xf32> to vector<33x1xf32>
    %95 = vector.extract_strided_slice %0 {offsets = [13, 0], sizes = [1, 8], strides = [1, 1]} : vector<17x8xf32> to vector<1x8xf32>
    %96 = vector.broadcast %94 : vector<33x1xf32> to vector<33x8xf32>
    %97 = vector.broadcast %95 : vector<1x8xf32> to vector<33x8xf32>
    %98 = arith.mulf %96, %97 : vector<33x8xf32>
    %99 = arith.addf %92, %98 : vector<33x8xf32>
    %c0_30 = arith.constant 0 : index
    %c14 = arith.constant 14 : index
    %c0_31 = arith.constant 0 : index
    %100 = vector.load %arg1[%c0_30, %c14, %c0_31] : memref<1x49x1xf32, #tpu.memory_space<vmem>>, vector<1x33x1xf32>
    %101 = vector.shape_cast %100 : vector<1x33x1xf32> to vector<33x1xf32>
    %102 = vector.extract_strided_slice %0 {offsets = [14, 0], sizes = [1, 8], strides = [1, 1]} : vector<17x8xf32> to vector<1x8xf32>
    %103 = vector.broadcast %101 : vector<33x1xf32> to vector<33x8xf32>
    %104 = vector.broadcast %102 : vector<1x8xf32> to vector<33x8xf32>
    %105 = arith.mulf %103, %104 : vector<33x8xf32>
    %106 = arith.addf %99, %105 : vector<33x8xf32>
    %c0_32 = arith.constant 0 : index
    %c15 = arith.constant 15 : index
    %c0_33 = arith.constant 0 : index
    %107 = vector.load %arg1[%c0_32, %c15, %c0_33] : memref<1x49x1xf32, #tpu.memory_space<vmem>>, vector<1x33x1xf32>
    %108 = vector.shape_cast %107 : vector<1x33x1xf32> to vector<33x1xf32>
    %109 = vector.extract_strided_slice %0 {offsets = [15, 0], sizes = [1, 8], strides = [1, 1]} : vector<17x8xf32> to vector<1x8xf32>
    %110 = vector.broadcast %108 : vector<33x1xf32> to vector<33x8xf32>
    %111 = vector.broadcast %109 : vector<1x8xf32> to vector<33x8xf32>
    %112 = arith.mulf %110, %111 : vector<33x8xf32>
    %113 = arith.addf %106, %112 : vector<33x8xf32>
    %c0_34 = arith.constant 0 : index
    %c16 = arith.constant 16 : index
    %c0_35 = arith.constant 0 : index
    %114 = vector.load %arg1[%c0_34, %c16, %c0_35] : memref<1x49x1xf32, #tpu.memory_space<vmem>>, vector<1x33x1xf32>
    %115 = vector.shape_cast %114 : vector<1x33x1xf32> to vector<33x1xf32>
    %116 = vector.extract_strided_slice %0 {offsets = [16, 0], sizes = [1, 8], strides = [1, 1]} : vector<17x8xf32> to vector<1x8xf32>
    %117 = vector.broadcast %115 : vector<33x1xf32> to vector<33x8xf32>
    %118 = vector.broadcast %116 : vector<1x8xf32> to vector<33x8xf32>
    %119 = arith.mulf %117, %118 : vector<33x8xf32>
    %120 = arith.addf %113, %119 : vector<33x8xf32>
    %c0_36 = arith.constant 0 : index
    %c0_37 = arith.constant 0 : index
    %121 = vector.load %arg3[%c0_36, %c0_37] : memref<1x8xf32, #tpu.memory_space<vmem>>, vector<1x8xf32>
    %122 = vector.broadcast %121 : vector<1x8xf32> to vector<33x8xf32>
    %123 = arith.addf %120, %122 : vector<33x8xf32>
    %cst_38 = arith.constant 0.000000e+00 : f32
    %124 = vector.broadcast %cst_38 : f32 to vector<33x8xf32>
    %125 = arith.cmpf oge, %123, %124 : vector<33x8xf32>
    %cst_39 = arith.constant 1.000000e-01 : f32
    %126 = vector.broadcast %cst_39 : f32 to vector<33x8xf32>
    %127 = arith.mulf %126, %123 : vector<33x8xf32>
    %128 = arith.select %125, %123, %127 : vector<33x8xi1>, vector<33x8xf32>
    %cst_40 = arith.constant 0.000000e+00 : f32
    %129 = vector.broadcast %cst_40 : f32 to vector<5x8xf32>
    %c0_41 = arith.constant 0 : index
    %c0_42 = arith.constant 0 : index
    %130 = vector.load %arg14[%c0_41, %c0_42] : memref<44x8xf32, #tpu.memory_space<vmem>>, vector<5x8xf32>
    tpu.vector_store %arg14[%c0_41, %c0_42], %129 {strides = array<i32>} : memref<44x8xf32, #tpu.memory_space<vmem>>, vector<5x8xf32>,
    %c5_43 = arith.constant 5 : index
    %c0_44 = arith.constant 0 : index
    %131 = vector.load %arg14[%c5_43, %c0_44] : memref<44x8xf32, #tpu.memory_space<vmem>>, vector<33x8xf32>
    tpu.vector_store %arg14[%c5_43, %c0_44], %128 {strides = array<i32>} : memref<44x8xf32, #tpu.memory_space<vmem>>, vector<33x8xf32>,
    %cst_45 = arith.constant 0.000000e+00 : f32
    %132 = vector.broadcast %cst_45 : f32 to vector<6x8xf32>
    %c38 = arith.constant 38 : index
    %c0_46 = arith.constant 0 : index
    %133 = vector.load %arg14[%c38, %c0_46] : memref<44x8xf32, #tpu.memory_space<vmem>>, vector<6x8xf32>
    tpu.vector_store %arg14[%c38, %c0_46], %132 {strides = array<i32>} : memref<44x8xf32, #tpu.memory_space<vmem>>, vector<6x8xf32>,
    %c0_47 = arith.constant 0 : index
    %c0_48 = arith.constant 0 : index
    %134 = tpu.strided_load %arg14[%c0_47, %c0_48] {strides = array<i32: 2, 1>} : memref<44x8xf32, #tpu.memory_space<vmem>>, vector<17x8xf32>
    %c0_49 = arith.constant 0 : index
    %c0_50 = arith.constant 0 : index
    %135 = vector.load %arg13[%c0_49, %c0_50] : memref<17x192xf32, #tpu.memory_space<vmem>>, vector<17x8xf32>
    tpu.vector_store %arg13[%c0_49, %c0_50], %134 {strides = array<i32>} : memref<17x192xf32, #tpu.memory_space<vmem>>, vector<17x8xf32>,
    %c1_51 = arith.constant 1 : index
    %c0_52 = arith.constant 0 : index
    %136 = tpu.strided_load %arg14[%c1_51, %c0_52] {strides = array<i32: 2, 1>} : memref<44x8xf32, #tpu.memory_space<vmem>>, vector<17x8xf32>
    %c0_53 = arith.constant 0 : index
    %c8_54 = arith.constant 8 : index
    %137 = vector.load %arg13[%c0_53, %c8_54] : memref<17x192xf32, #tpu.memory_space<vmem>>, vector<17x8xf32>
    tpu.vector_store %arg13[%c0_53, %c8_54], %136 {strides = array<i32>} : memref<17x192xf32, #tpu.memory_space<vmem>>, vector<17x8xf32>,
    %c2_55 = arith.constant 2 : index
    %c0_56 = arith.constant 0 : index
    %138 = tpu.strided_load %arg14[%c2_55, %c0_56] {strides = array<i32: 2, 1>} : memref<44x8xf32, #tpu.memory_space<vmem>>, vector<17x8xf32>
    %c0_57 = arith.constant 0 : index
    %c16_58 = arith.constant 16 : index
    %139 = vector.load %arg13[%c0_57, %c16_58] : memref<17x192xf32, #tpu.memory_space<vmem>>, vector<17x8xf32>
    tpu.vector_store %arg13[%c0_57, %c16_58], %138 {strides = array<i32>} : memref<17x192xf32, #tpu.memory_space<vmem>>, vector<17x8xf32>,
    %c3_59 = arith.constant 3 : index
    %c0_60 = arith.constant 0 : index
    %140 = tpu.strided_load %arg14[%c3_59, %c0_60] {strides = array<i32: 2, 1>} : memref<44x8xf32, #tpu.memory_space<vmem>>, vector<17x8xf32>
    %c0_61 = arith.constant 0 : index
    %c24 = arith.constant 24 : index
    %141 = vector.load %arg13[%c0_61, %c24] : memref<17x192xf32, #tpu.memory_space<vmem>>, vector<17x8xf32>
    tpu.vector_store %arg13[%c0_61, %c24], %140 {strides = array<i32>} : memref<17x192xf32, #tpu.memory_space<vmem>>, vector<17x8xf32>,
    %c4_62 = arith.constant 4 : index
    %c0_63 = arith.constant 0 : index
    %142 = tpu.strided_load %arg14[%c4_62, %c0_63] {strides = array<i32: 2, 1>} : memref<44x8xf32, #tpu.memory_space<vmem>>, vector<17x8xf32>
    %c0_64 = arith.constant 0 : index
    %c32 = arith.constant 32 : index
    %143 = vector.load %arg13[%c0_64, %c32] : memref<17x192xf32, #tpu.memory_space<vmem>>, vector<17x8xf32>
    tpu.vector_store %arg13[%c0_64, %c32], %142 {strides = array<i32>} : memref<17x192xf32, #tpu.memory_space<vmem>>, vector<17x8xf32>,
    %c5_65 = arith.constant 5 : index
    %c0_66 = arith.constant 0 : index
    %144 = tpu.strided_load %arg14[%c5_65, %c0_66] {strides = array<i32: 2, 1>} : memref<44x8xf32, #tpu.memory_space<vmem>>, vector<17x8xf32>
    %c0_67 = arith.constant 0 : index
    %c40 = arith.constant 40 : index
    %145 = vector.load %arg13[%c0_67, %c40] : memref<17x192xf32, #tpu.memory_space<vmem>>, vector<17x8xf32>
    tpu.vector_store %arg13[%c0_67, %c40], %144 {strides = array<i32>} : memref<17x192xf32, #tpu.memory_space<vmem>>, vector<17x8xf32>,
    %c6_68 = arith.constant 6 : index
    %c0_69 = arith.constant 0 : index
    %146 = tpu.strided_load %arg14[%c6_68, %c0_69] {strides = array<i32: 2, 1>} : memref<44x8xf32, #tpu.memory_space<vmem>>, vector<17x8xf32>
    %c0_70 = arith.constant 0 : index
    %c48 = arith.constant 48 : index
    %147 = vector.load %arg13[%c0_70, %c48] : memref<17x192xf32, #tpu.memory_space<vmem>>, vector<17x8xf32>
    tpu.vector_store %arg13[%c0_70, %c48], %146 {strides = array<i32>} : memref<17x192xf32, #tpu.memory_space<vmem>>, vector<17x8xf32>,
    %c7_71 = arith.constant 7 : index
    %c0_72 = arith.constant 0 : index
    %148 = tpu.strided_load %arg14[%c7_71, %c0_72] {strides = array<i32: 2, 1>} : memref<44x8xf32, #tpu.memory_space<vmem>>, vector<17x8xf32>
    %c0_73 = arith.constant 0 : index
    %c56 = arith.constant 56 : index
    %149 = vector.load %arg13[%c0_73, %c56] : memref<17x192xf32, #tpu.memory_space<vmem>>, vector<17x8xf32>
    tpu.vector_store %arg13[%c0_73, %c56], %148 {strides = array<i32>} : memref<17x192xf32, #tpu.memory_space<vmem>>, vector<17x8xf32>,
    %c8_74 = arith.constant 8 : index
    %c0_75 = arith.constant 0 : index
    %150 = tpu.strided_load %arg14[%c8_74, %c0_75] {strides = array<i32: 2, 1>} : memref<44x8xf32, #tpu.memory_space<vmem>>, vector<17x8xf32>
    %c0_76 = arith.constant 0 : index
    %c64 = arith.constant 64 : index
    %151 = vector.load %arg13[%c0_76, %c64] : memref<17x192xf32, #tpu.memory_space<vmem>>, vector<17x8xf32>
    tpu.vector_store %arg13[%c0_76, %c64], %150 {strides = array<i32>} : memref<17x192xf32, #tpu.memory_space<vmem>>, vector<17x8xf32>,
    %c9_77 = arith.constant 9 : index
    %c0_78 = arith.constant 0 : index
    %152 = tpu.strided_load %arg14[%c9_77, %c0_78] {strides = array<i32: 2, 1>} : memref<44x8xf32, #tpu.memory_space<vmem>>, vector<17x8xf32>
    %c0_79 = arith.constant 0 : index
    %c72 = arith.constant 72 : index
    %153 = vector.load %arg13[%c0_79, %c72] : memref<17x192xf32, #tpu.memory_space<vmem>>, vector<17x8xf32>
    tpu.vector_store %arg13[%c0_79, %c72], %152 {strides = array<i32>} : memref<17x192xf32, #tpu.memory_space<vmem>>, vector<17x8xf32>,
    %c10_80 = arith.constant 10 : index
    %c0_81 = arith.constant 0 : index
    %154 = tpu.strided_load %arg14[%c10_80, %c0_81] {strides = array<i32: 2, 1>} : memref<44x8xf32, #tpu.memory_space<vmem>>, vector<17x8xf32>
    %c0_82 = arith.constant 0 : index
    %c80 = arith.constant 80 : index
    %155 = vector.load %arg13[%c0_82, %c80] : memref<17x192xf32, #tpu.memory_space<vmem>>, vector<17x8xf32>
    tpu.vector_store %arg13[%c0_82, %c80], %154 {strides = array<i32>} : memref<17x192xf32, #tpu.memory_space<vmem>>, vector<17x8xf32>,
    %c0_83 = arith.constant 0 : index
    %c0_84 = arith.constant 0 : index
    %156 = vector.load %arg13[%c0_83, %c0_84] : memref<17x192xf32, #tpu.memory_space<vmem>>, vector<17x88xf32>
    %157 = arith.truncf %156 : vector<17x88xf32> to vector<17x88xbf16>
    %c0_85 = arith.constant 0 : index
    %c0_86 = arith.constant 0 : index
    %158 = vector.load %arg4[%c0_85, %c0_86] : memref<88x16xf32, #tpu.memory_space<vmem>>, vector<88x16xf32>
    %159 = arith.truncf %158 : vector<88x16xf32> to vector<88x16xbf16>
    %cst_87 = arith.constant dense<0.000000e+00> : vector<17x16xf32>
    %160 = tpu.matmul %157, %159, %cst_87 {dimension_numbers = #tpu.dot_dimension_numbers<[1], [0], [0], [1], [0, 0, 1, 1], [], []>} : vector<17x88xbf16>, vector<88x16xbf16>, vector<17x16xf32> -> vector<17x16xf32>
    %c0_88 = arith.constant 0 : index
    %c0_89 = arith.constant 0 : index
    %161 = vector.load %arg5[%c0_88, %c0_89] : memref<1x16xf32, #tpu.memory_space<vmem>>, vector<1x16xf32>
    %162 = vector.broadcast %161 : vector<1x16xf32> to vector<17x16xf32>
    %163 = arith.addf %160, %162 : vector<17x16xf32>
    %cst_90 = arith.constant 0.000000e+00 : f32
    %164 = vector.broadcast %cst_90 : f32 to vector<17x16xf32>
    %165 = arith.cmpf oge, %163, %164 : vector<17x16xf32>
    %cst_91 = arith.constant 1.000000e-01 : f32
    %166 = vector.broadcast %cst_91 : f32 to vector<17x16xf32>
    %167 = arith.mulf %166, %163 : vector<17x16xf32>
    %168 = arith.select %165, %163, %167 : vector<17x16xi1>, vector<17x16xf32>
    %cst_92 = arith.constant 0.000000e+00 : f32
    %169 = vector.broadcast %cst_92 : f32 to vector<3x16xf32>
    %c0_93 = arith.constant 0 : index
    %c0_94 = arith.constant 0 : index
    %170 = vector.load %arg15[%c0_93, %c0_94] : memref<24x16xf32, #tpu.memory_space<vmem>>, vector<3x16xf32>
    tpu.vector_store %arg15[%c0_93, %c0_94], %169 {strides = array<i32>} : memref<24x16xf32, #tpu.memory_space<vmem>>, vector<3x16xf32>,
    %c3_95 = arith.constant 3 : index
    %c0_96 = arith.constant 0 : index
    %171 = vector.load %arg15[%c3_95, %c0_96] : memref<24x16xf32, #tpu.memory_space<vmem>>, vector<17x16xf32>
    tpu.vector_store %arg15[%c3_95, %c0_96], %168 {strides = array<i32>} : memref<24x16xf32, #tpu.memory_space<vmem>>, vector<17x16xf32>,
    %cst_97 = arith.constant 0.000000e+00 : f32
    %172 = vector.broadcast %cst_97 : f32 to vector<4x16xf32>
    %c20 = arith.constant 20 : index
    %c0_98 = arith.constant 0 : index
    %173 = vector.load %arg15[%c20, %c0_98] : memref<24x16xf32, #tpu.memory_space<vmem>>, vector<4x16xf32>
    tpu.vector_store %arg15[%c20, %c0_98], %172 {strides = array<i32>} : memref<24x16xf32, #tpu.memory_space<vmem>>, vector<4x16xf32>,
    %c0_99 = arith.constant 0 : index
    %c0_100 = arith.constant 0 : index
    %174 = tpu.strided_load %arg15[%c0_99, %c0_100] {strides = array<i32: 2, 1>} : memref<24x16xf32, #tpu.memory_space<vmem>>, vector<9x16xf32>
    %c0_101 = arith.constant 0 : index
    %c0_102 = arith.constant 0 : index
    %175 = vector.load %arg13[%c0_101, %c0_102] : memref<17x192xf32, #tpu.memory_space<vmem>>, vector<9x16xf32>
    tpu.vector_store %arg13[%c0_101, %c0_102], %174 {strides = array<i32>} : memref<17x192xf32, #tpu.memory_space<vmem>>, vector<9x16xf32>,
    %c1_103 = arith.constant 1 : index
    %c0_104 = arith.constant 0 : index
    %176 = tpu.strided_load %arg15[%c1_103, %c0_104] {strides = array<i32: 2, 1>} : memref<24x16xf32, #tpu.memory_space<vmem>>, vector<9x16xf32>
    %c0_105 = arith.constant 0 : index
    %c16_106 = arith.constant 16 : index
    %177 = vector.load %arg13[%c0_105, %c16_106] : memref<17x192xf32, #tpu.memory_space<vmem>>, vector<9x16xf32>
    tpu.vector_store %arg13[%c0_105, %c16_106], %176 {strides = array<i32>} : memref<17x192xf32, #tpu.memory_space<vmem>>, vector<9x16xf32>,
    %c2_107 = arith.constant 2 : index
    %c0_108 = arith.constant 0 : index
    %178 = tpu.strided_load %arg15[%c2_107, %c0_108] {strides = array<i32: 2, 1>} : memref<24x16xf32, #tpu.memory_space<vmem>>, vector<9x16xf32>
    %c0_109 = arith.constant 0 : index
    %c32_110 = arith.constant 32 : index
    %179 = vector.load %arg13[%c0_109, %c32_110] : memref<17x192xf32, #tpu.memory_space<vmem>>, vector<9x16xf32>
    tpu.vector_store %arg13[%c0_109, %c32_110], %178 {strides = array<i32>} : memref<17x192xf32, #tpu.memory_space<vmem>>, vector<9x16xf32>,
    %c3_111 = arith.constant 3 : index
    %c0_112 = arith.constant 0 : index
    %180 = tpu.strided_load %arg15[%c3_111, %c0_112] {strides = array<i32: 2, 1>} : memref<24x16xf32, #tpu.memory_space<vmem>>, vector<9x16xf32>
    %c0_113 = arith.constant 0 : index
    %c48_114 = arith.constant 48 : index
    %181 = vector.load %arg13[%c0_113, %c48_114] : memref<17x192xf32, #tpu.memory_space<vmem>>, vector<9x16xf32>
    tpu.vector_store %arg13[%c0_113, %c48_114], %180 {strides = array<i32>} : memref<17x192xf32, #tpu.memory_space<vmem>>, vector<9x16xf32>,
    %c4_115 = arith.constant 4 : index
    %c0_116 = arith.constant 0 : index
    %182 = tpu.strided_load %arg15[%c4_115, %c0_116] {strides = array<i32: 2, 1>} : memref<24x16xf32, #tpu.memory_space<vmem>>, vector<9x16xf32>
    %c0_117 = arith.constant 0 : index
    %c64_118 = arith.constant 64 : index
    %183 = vector.load %arg13[%c0_117, %c64_118] : memref<17x192xf32, #tpu.memory_space<vmem>>, vector<9x16xf32>
    tpu.vector_store %arg13[%c0_117, %c64_118], %182 {strides = array<i32>} : memref<17x192xf32, #tpu.memory_space<vmem>>, vector<9x16xf32>,
    %c5_119 = arith.constant 5 : index
    %c0_120 = arith.constant 0 : index
    %184 = tpu.strided_load %arg15[%c5_119, %c0_120] {strides = array<i32: 2, 1>} : memref<24x16xf32, #tpu.memory_space<vmem>>, vector<9x16xf32>
    %c0_121 = arith.constant 0 : index
    %c80_122 = arith.constant 80 : index
    %185 = vector.load %arg13[%c0_121, %c80_122] : memref<17x192xf32, #tpu.memory_space<vmem>>, vector<9x16xf32>
    tpu.vector_store %arg13[%c0_121, %c80_122], %184 {strides = array<i32>} : memref<17x192xf32, #tpu.memory_space<vmem>>, vector<9x16xf32>,
    %c6_123 = arith.constant 6 : index
    %c0_124 = arith.constant 0 : index
    %186 = tpu.strided_load %arg15[%c6_123, %c0_124] {strides = array<i32: 2, 1>} : memref<24x16xf32, #tpu.memory_space<vmem>>, vector<9x16xf32>
    %c0_125 = arith.constant 0 : index
    %c96 = arith.constant 96 : index
    %187 = vector.load %arg13[%c0_125, %c96] : memref<17x192xf32, #tpu.memory_space<vmem>>, vector<9x16xf32>
    tpu.vector_store %arg13[%c0_125, %c96], %186 {strides = array<i32>} : memref<17x192xf32, #tpu.memory_space<vmem>>, vector<9x16xf32>,
    %c0_126 = arith.constant 0 : index
    %c0_127 = arith.constant 0 : index
    %188 = vector.load %arg13[%c0_126, %c0_127] : memref<17x192xf32, #tpu.memory_space<vmem>>, vector<9x112xf32>
    %189 = arith.truncf %188 : vector<9x112xf32> to vector<9x112xbf16>
    %c0_128 = arith.constant 0 : index
    %c0_129 = arith.constant 0 : index
    %190 = vector.load %arg6[%c0_128, %c0_129] : memref<112x32xf32, #tpu.memory_space<vmem>>, vector<112x32xf32>
    %191 = arith.truncf %190 : vector<112x32xf32> to vector<112x32xbf16>
    %cst_130 = arith.constant dense<0.000000e+00> : vector<9x32xf32>
    %192 = tpu.matmul %189, %191, %cst_130 {dimension_numbers = #tpu.dot_dimension_numbers<[1], [0], [0], [1], [0, 0, 1, 1], [], []>} : vector<9x112xbf16>, vector<112x32xbf16>, vector<9x32xf32> -> vector<9x32xf32>
    %c0_131 = arith.constant 0 : index
    %c0_132 = arith.constant 0 : index
    %193 = vector.load %arg7[%c0_131, %c0_132] : memref<1x32xf32, #tpu.memory_space<vmem>>, vector<1x32xf32>
    %194 = vector.broadcast %193 : vector<1x32xf32> to vector<9x32xf32>
    %195 = arith.addf %192, %194 : vector<9x32xf32>
    %cst_133 = arith.constant 0.000000e+00 : f32
    %196 = vector.broadcast %cst_133 : f32 to vector<9x32xf32>
    %197 = arith.cmpf oge, %195, %196 : vector<9x32xf32>
    %cst_134 = arith.constant 1.000000e-01 : f32
    %198 = vector.broadcast %cst_134 : f32 to vector<9x32xf32>
    %199 = arith.mulf %198, %195 : vector<9x32xf32>
    %200 = arith.select %197, %195, %199 : vector<9x32xi1>, vector<9x32xf32>
    %cst_135 = arith.constant 0.000000e+00 : f32
    %201 = vector.broadcast %cst_135 : f32 to vector<2x32xf32>
    %c0_136 = arith.constant 0 : index
    %c0_137 = arith.constant 0 : index
    %202 = vector.load %arg16[%c0_136, %c0_137] : memref<14x32xf32, #tpu.memory_space<vmem>>, vector<2x32xf32>
    tpu.vector_store %arg16[%c0_136, %c0_137], %201 {strides = array<i32>} : memref<14x32xf32, #tpu.memory_space<vmem>>, vector<2x32xf32>,
    %c2_138 = arith.constant 2 : index
    %c0_139 = arith.constant 0 : index
    %203 = vector.load %arg16[%c2_138, %c0_139] : memref<14x32xf32, #tpu.memory_space<vmem>>, vector<9x32xf32>
    tpu.vector_store %arg16[%c2_138, %c0_139], %200 {strides = array<i32>} : memref<14x32xf32, #tpu.memory_space<vmem>>, vector<9x32xf32>,
    %cst_140 = arith.constant 0.000000e+00 : f32
    %204 = vector.broadcast %cst_140 : f32 to vector<3x32xf32>
    %c11_141 = arith.constant 11 : index
    %c0_142 = arith.constant 0 : index
    %205 = vector.load %arg16[%c11_141, %c0_142] : memref<14x32xf32, #tpu.memory_space<vmem>>, vector<3x32xf32>
    tpu.vector_store %arg16[%c11_141, %c0_142], %204 {strides = array<i32>} : memref<14x32xf32, #tpu.memory_space<vmem>>, vector<3x32xf32>,
    %c0_143 = arith.constant 0 : index
    %c0_144 = arith.constant 0 : index
    %206 = tpu.strided_load %arg16[%c0_143, %c0_144] {strides = array<i32: 2, 1>} : memref<14x32xf32, #tpu.memory_space<vmem>>, vector<5x32xf32>
    %c0_145 = arith.constant 0 : index
    %c0_146 = arith.constant 0 : index
    %207 = vector.load %arg13[%c0_145, %c0_146] : memref<17x192xf32, #tpu.memory_space<vmem>>, vector<5x32xf32>
    tpu.vector_store %arg13[%c0_145, %c0_146], %206 {strides = array<i32>} : memref<17x192xf32, #tpu.memory_space<vmem>>, vector<5x32xf32>,
    %c1_147 = arith.constant 1 : index
    %c0_148 = arith.constant 0 : index
    %208 = tpu.strided_load %arg16[%c1_147, %c0_148] {strides = array<i32: 2, 1>} : memref<14x32xf32, #tpu.memory_space<vmem>>, vector<5x32xf32>
    %c0_149 = arith.constant 0 : index
    %c32_150 = arith.constant 32 : index
    %209 = vector.load %arg13[%c0_149, %c32_150] : memref<17x192xf32, #tpu.memory_space<vmem>>, vector<5x32xf32>
    tpu.vector_store %arg13[%c0_149, %c32_150], %208 {strides = array<i32>} : memref<17x192xf32, #tpu.memory_space<vmem>>, vector<5x32xf32>,
    %c2_151 = arith.constant 2 : index
    %c0_152 = arith.constant 0 : index
    %210 = tpu.strided_load %arg16[%c2_151, %c0_152] {strides = array<i32: 2, 1>} : memref<14x32xf32, #tpu.memory_space<vmem>>, vector<5x32xf32>
    %c0_153 = arith.constant 0 : index
    %c64_154 = arith.constant 64 : index
    %211 = vector.load %arg13[%c0_153, %c64_154] : memref<17x192xf32, #tpu.memory_space<vmem>>, vector<5x32xf32>
    tpu.vector_store %arg13[%c0_153, %c64_154], %210 {strides = array<i32>} : memref<17x192xf32, #tpu.memory_space<vmem>>, vector<5x32xf32>,
    %c3_155 = arith.constant 3 : index
    %c0_156 = arith.constant 0 : index
    %212 = tpu.strided_load %arg16[%c3_155, %c0_156] {strides = array<i32: 2, 1>} : memref<14x32xf32, #tpu.memory_space<vmem>>, vector<5x32xf32>
    %c0_157 = arith.constant 0 : index
    %c96_158 = arith.constant 96 : index
    %213 = vector.load %arg13[%c0_157, %c96_158] : memref<17x192xf32, #tpu.memory_space<vmem>>, vector<5x32xf32>
    tpu.vector_store %arg13[%c0_157, %c96_158], %212 {strides = array<i32>} : memref<17x192xf32, #tpu.memory_space<vmem>>, vector<5x32xf32>,
    %c4_159 = arith.constant 4 : index
    %c0_160 = arith.constant 0 : index
    %214 = tpu.strided_load %arg16[%c4_159, %c0_160] {strides = array<i32: 2, 1>} : memref<14x32xf32, #tpu.memory_space<vmem>>, vector<5x32xf32>
    %c0_161 = arith.constant 0 : index
    %c128 = arith.constant 128 : index
    %215 = vector.load %arg13[%c0_161, %c128] : memref<17x192xf32, #tpu.memory_space<vmem>>, vector<5x32xf32>
    tpu.vector_store %arg13[%c0_161, %c128], %214 {strides = array<i32>} : memref<17x192xf32, #tpu.memory_space<vmem>>, vector<5x32xf32>,
    %c0_162 = arith.constant 0 : index
    %c0_163 = arith.constant 0 : index
    %216 = vector.load %arg13[%c0_162, %c0_163] : memref<17x192xf32, #tpu.memory_space<vmem>>, vector<5x160xf32>
    %217 = arith.truncf %216 : vector<5x160xf32> to vector<5x160xbf16>
    %c0_164 = arith.constant 0 : index
    %c0_165 = arith.constant 0 : index
    %218 = vector.load %arg8[%c0_164, %c0_165] : memref<160x64xf32, #tpu.memory_space<vmem>>, vector<160x64xf32>
    %219 = arith.truncf %218 : vector<160x64xf32> to vector<160x64xbf16>
    %cst_166 = arith.constant dense<0.000000e+00> : vector<5x64xf32>
    %220 = tpu.matmul %217, %219, %cst_166 {dimension_numbers = #tpu.dot_dimension_numbers<[1], [0], [0], [1], [0, 0, 1, 1], [], []>} : vector<5x160xbf16>, vector<160x64xbf16>, vector<5x64xf32> -> vector<5x64xf32>
    %c0_167 = arith.constant 0 : index
    %c0_168 = arith.constant 0 : index
    %221 = vector.load %arg9[%c0_167, %c0_168] : memref<1x64xf32, #tpu.memory_space<vmem>>, vector<1x64xf32>
    %222 = vector.broadcast %221 : vector<1x64xf32> to vector<5x64xf32>
    %223 = arith.addf %220, %222 : vector<5x64xf32>
    %cst_169 = arith.constant 0.000000e+00 : f32
    %224 = vector.broadcast %cst_169 : f32 to vector<5x64xf32>
    %225 = arith.cmpf oge, %223, %224 : vector<5x64xf32>
    %cst_170 = arith.constant 1.000000e-01 : f32
    %226 = vector.broadcast %cst_170 : f32 to vector<5x64xf32>
    %227 = arith.mulf %226, %223 : vector<5x64xf32>
    %228 = arith.select %225, %223, %227 : vector<5x64xi1>, vector<5x64xf32>
    %cst_171 = arith.constant 0.000000e+00 : f32
    %229 = vector.broadcast %cst_171 : f32 to vector<1x64xf32>
    %c0_172 = arith.constant 0 : index
    %c0_173 = arith.constant 0 : index
    %230 = vector.load %arg17[%c0_172, %c0_173] : memref<10x64xf32, #tpu.memory_space<vmem>>, vector<1x64xf32>
    tpu.vector_store %arg17[%c0_172, %c0_173], %229 {strides = array<i32>} : memref<10x64xf32, #tpu.memory_space<vmem>>, vector<1x64xf32>,
    %c1_174 = arith.constant 1 : index
    %c0_175 = arith.constant 0 : index
    %231 = vector.load %arg17[%c1_174, %c0_175] : memref<10x64xf32, #tpu.memory_space<vmem>>, vector<5x64xf32>
    tpu.vector_store %arg17[%c1_174, %c0_175], %228 {strides = array<i32>} : memref<10x64xf32, #tpu.memory_space<vmem>>, vector<5x64xf32>,
    %cst_176 = arith.constant 0.000000e+00 : f32
    %232 = vector.broadcast %cst_176 : f32 to vector<4x64xf32>
    %c6_177 = arith.constant 6 : index
    %c0_178 = arith.constant 0 : index
    %233 = vector.load %arg17[%c6_177, %c0_178] : memref<10x64xf32, #tpu.memory_space<vmem>>, vector<4x64xf32>
    tpu.vector_store %arg17[%c6_177, %c0_178], %232 {strides = array<i32>} : memref<10x64xf32, #tpu.memory_space<vmem>>, vector<4x64xf32>,
    %c0_179 = arith.constant 0 : index
    %c0_180 = arith.constant 0 : index
    %234 = tpu.strided_load %arg17[%c0_179, %c0_180] {strides = array<i32: 4, 1>} : memref<10x64xf32, #tpu.memory_space<vmem>>, vector<2x64xf32>
    %c0_181 = arith.constant 0 : index
    %c0_182 = arith.constant 0 : index
    %235 = vector.load %arg13[%c0_181, %c0_182] : memref<17x192xf32, #tpu.memory_space<vmem>>, vector<2x64xf32>
    tpu.vector_store %arg13[%c0_181, %c0_182], %234 {strides = array<i32>} : memref<17x192xf32, #tpu.memory_space<vmem>>, vector<2x64xf32>,
    %c1_183 = arith.constant 1 : index
    %c0_184 = arith.constant 0 : index
    %236 = tpu.strided_load %arg17[%c1_183, %c0_184] {strides = array<i32: 4, 1>} : memref<10x64xf32, #tpu.memory_space<vmem>>, vector<2x64xf32>
    %c0_185 = arith.constant 0 : index
    %c64_186 = arith.constant 64 : index
    %237 = vector.load %arg13[%c0_185, %c64_186] : memref<17x192xf32, #tpu.memory_space<vmem>>, vector<2x64xf32>
    tpu.vector_store %arg13[%c0_185, %c64_186], %236 {strides = array<i32>} : memref<17x192xf32, #tpu.memory_space<vmem>>, vector<2x64xf32>,
    %c2_187 = arith.constant 2 : index
    %c0_188 = arith.constant 0 : index
    %238 = tpu.strided_load %arg17[%c2_187, %c0_188] {strides = array<i32: 4, 1>} : memref<10x64xf32, #tpu.memory_space<vmem>>, vector<2x64xf32>
    %c0_189 = arith.constant 0 : index
    %c128_190 = arith.constant 128 : index
    %239 = vector.load %arg13[%c0_189, %c128_190] : memref<17x192xf32, #tpu.memory_space<vmem>>, vector<2x64xf32>
    tpu.vector_store %arg13[%c0_189, %c128_190], %238 {strides = array<i32>} : memref<17x192xf32, #tpu.memory_space<vmem>>, vector<2x64xf32>,
    %c0_191 = arith.constant 0 : index
    %c0_192 = arith.constant 0 : index
    %240 = vector.load %arg13[%c0_191, %c0_192] : memref<17x192xf32, #tpu.memory_space<vmem>>, vector<2x192xf32>
    %241 = arith.truncf %240 : vector<2x192xf32> to vector<2x192xbf16>
    %c0_193 = arith.constant 0 : index
    %c0_194 = arith.constant 0 : index
    %242 = vector.load %arg10[%c0_193, %c0_194] : memref<192x128xf32, #tpu.memory_space<vmem>>, vector<192x128xf32>
    %243 = arith.truncf %242 : vector<192x128xf32> to vector<192x128xbf16>
    %cst_195 = arith.constant dense<0.000000e+00> : vector<2x128xf32>
    %244 = tpu.matmul %241, %243, %cst_195 {dimension_numbers = #tpu.dot_dimension_numbers<[1], [0], [0], [1], [0, 0, 1, 1], [], []>} : vector<2x192xbf16>, vector<192x128xbf16>, vector<2x128xf32> -> vector<2x128xf32>
    %c0_196 = arith.constant 0 : index
    %c0_197 = arith.constant 0 : index
    %245 = vector.load %arg11[%c0_196, %c0_197] : memref<1x128xf32, #tpu.memory_space<vmem>>, vector<1x128xf32>
    %246 = vector.broadcast %245 : vector<1x128xf32> to vector<2x128xf32>
    %247 = arith.addf %244, %246 : vector<2x128xf32>
    %cst_198 = arith.constant 0.000000e+00 : f32
    %248 = vector.broadcast %cst_198 : f32 to vector<2x128xf32>
    %249 = arith.cmpf oge, %247, %248 : vector<2x128xf32>
    %cst_199 = arith.constant 1.000000e-01 : f32
    %250 = vector.broadcast %cst_199 : f32 to vector<2x128xf32>
    %251 = arith.mulf %250, %247 : vector<2x128xf32>
    %252 = arith.select %249, %247, %251 : vector<2x128xi1>, vector<2x128xf32>
    %c0_200 = arith.constant 0 : index
    %c0_201 = arith.constant 0 : index
    %c0_202 = arith.constant 0 : index
    %253 = vector.load %arg12[%c0_200, %c0_201, %c0_202] : memref<1x2x128xf32, #tpu.memory_space<vmem>>, vector<1x2x128xf32>
    %254 = vector.shape_cast %253 : vector<1x2x128xf32> to vector<2x128xf32>
    %255 = vector.shape_cast %252 : vector<2x128xf32> to vector<1x2x128xf32>
    tpu.vector_store %arg12[%c0_200, %c0_201, %c0_202], %255 {strides = array<i32>} : memref<1x2x128xf32, #tpu.memory_space<vmem>>, vector<1x2x128xf32>,
    return
  }
  func.func @transform_0(%arg0: i32) -> (i32, i32, i32) {
    %c0_i32 = arith.constant 0 : i32
    %c0_i32_0 = arith.constant 0 : i32
    %c0_i32_1 = arith.constant 0 : i32
    return %arg0, %c0_i32, %c0_i32_0 : i32, i32, i32
  }
  func.func @transform_1(%arg0: i32) -> (i32, i32) {
    %c0_i32 = arith.constant 0 : i32
    %c0_i32_0 = arith.constant 0 : i32
    %c0_i32_1 = arith.constant 0 : i32
    return %c0_i32, %c0_i32_0 : i32, i32
  }
  func.func @transform_2(%arg0: i32) -> (i32, i32) {
    %c0_i32 = arith.constant 0 : i32
    %c0_i32_0 = arith.constant 0 : i32
    %c0_i32_1 = arith.constant 0 : i32
    return %c0_i32, %c0_i32_0 : i32, i32
  }
  func.func @transform_3(%arg0: i32) -> (i32, i32) {
    %c0_i32 = arith.constant 0 : i32
    %c0_i32_0 = arith.constant 0 : i32
    %c0_i32_1 = arith.constant 0 : i32
    return %c0_i32, %c0_i32_0 : i32, i32
  }
  func.func @transform_4(%arg0: i32) -> (i32, i32) {
    %c0_i32 = arith.constant 0 : i32
    %c0_i32_0 = arith.constant 0 : i32
    %c0_i32_1 = arith.constant 0 : i32
    return %c0_i32, %c0_i32_0 : i32, i32
  }
  func.func @transform_5(%arg0: i32) -> (i32, i32) {
    %c0_i32 = arith.constant 0 : i32
    %c0_i32_0 = arith.constant 0 : i32
    %c0_i32_1 = arith.constant 0 : i32
    return %c0_i32, %c0_i32_0 : i32, i32
  }
  func.func @transform_6(%arg0: i32) -> (i32, i32) {
    %c0_i32 = arith.constant 0 : i32
    %c0_i32_0 = arith.constant 0 : i32
    %c0_i32_1 = arith.constant 0 : i32
    return %c0_i32, %c0_i32_0 : i32, i32
  }
  func.func @transform_7(%arg0: i32) -> (i32, i32) {
    %c0_i32 = arith.constant 0 : i32
    %c0_i32_0 = arith.constant 0 : i32
    %c0_i32_1 = arith.constant 0 : i32
    return %c0_i32, %c0_i32_0 : i32, i32
  }
  func.func @transform_8(%arg0: i32) -> (i32, i32) {
    %c0_i32 = arith.constant 0 : i32
    %c0_i32_0 = arith.constant 0 : i32
    %c0_i32_1 = arith.constant 0 : i32
    return %c0_i32, %c0_i32_0 : i32, i32
  }
  func.func @transform_9(%arg0: i32) -> (i32, i32) {
    %c0_i32 = arith.constant 0 : i32
    %c0_i32_0 = arith.constant 0 : i32
    %c0_i32_1 = arith.constant 0 : i32
    return %c0_i32, %c0_i32_0 : i32, i32
  }
  func.func @transform_10(%arg0: i32) -> (i32, i32) {
    %c0_i32 = arith.constant 0 : i32
    %c0_i32_0 = arith.constant 0 : i32
    %c0_i32_1 = arith.constant 0 : i32
    return %c0_i32, %c0_i32_0 : i32, i32
  }
  func.func @transform_11(%arg0: i32) -> (i32, i32, i32) {
    %c0_i32 = arith.constant 0 : i32
    %c0_i32_0 = arith.constant 0 : i32
    %c0_i32_1 = arith.constant 0 : i32
    return %arg0, %c0_i32, %c0_i32_0 : i32, i32, i32
  }
}

module attributes {stable_mosaic.version = 11 : i64} {
  func.func @_disc_s_kernel(%arg0: i32, %arg1: memref<1x33x1xf32, #tpu.memory_space<vmem>>, %arg2: memref<17x8xf32, #tpu.memory_space<vmem>>, %arg3: memref<1x8xf32, #tpu.memory_space<vmem>>, %arg4: memref<88x16xf32, #tpu.memory_space<vmem>>, %arg5: memref<1x16xf32, #tpu.memory_space<vmem>>, %arg6: memref<112x32xf32, #tpu.memory_space<vmem>>, %arg7: memref<1x32xf32, #tpu.memory_space<vmem>>, %arg8: memref<160x64xf32, #tpu.memory_space<vmem>>, %arg9: memref<1x64xf32, #tpu.memory_space<vmem>>, %arg10: memref<192x128xf32, #tpu.memory_space<vmem>>, %arg11: memref<1x128xf32, #tpu.memory_space<vmem>>, %arg12: memref<1x1x128xf32, #tpu.memory_space<vmem>>, %arg13: memref<9x192xf32, #tpu.memory_space<vmem>>, %arg14: memref<28x8xf32, #tpu.memory_space<vmem>>, %arg15: memref<16x16xf32, #tpu.memory_space<vmem>>, %arg16: memref<10x32xf32, #tpu.memory_space<vmem>>, %arg17: memref<8x64xf32, #tpu.memory_space<vmem>>) attributes {dimension_semantics = [#tpu.dimension_semantics<parallel>], iteration_bounds = array<i64: 2>, scalar_prefetch = 0 : i64, scratch_operands = 5 : i64, tpu.core_type = #tpu.core_type<tc>, window_params = [{transform_indices = @transform_0, window_bounds = array<i64: 1, 33, 1>}, {pipeline_mode = #tpu.pipeline_mode<synchronous>, transform_indices = @transform_1, window_bounds = array<i64: 17, 8>}, {pipeline_mode = #tpu.pipeline_mode<synchronous>, transform_indices = @transform_2, window_bounds = array<i64: 1, 8>}, {pipeline_mode = #tpu.pipeline_mode<synchronous>, transform_indices = @transform_3, window_bounds = array<i64: 88, 16>}, {pipeline_mode = #tpu.pipeline_mode<synchronous>, transform_indices = @transform_4, window_bounds = array<i64: 1, 16>}, {pipeline_mode = #tpu.pipeline_mode<synchronous>, transform_indices = @transform_5, window_bounds = array<i64: 112, 32>}, {pipeline_mode = #tpu.pipeline_mode<synchronous>, transform_indices = @transform_6, window_bounds = array<i64: 1, 32>}, {pipeline_mode = #tpu.pipeline_mode<synchronous>, transform_indices = @transform_7, window_bounds = array<i64: 160, 64>}, {pipeline_mode = #tpu.pipeline_mode<synchronous>, transform_indices = @transform_8, window_bounds = array<i64: 1, 64>}, {pipeline_mode = #tpu.pipeline_mode<synchronous>, transform_indices = @transform_9, window_bounds = array<i64: 192, 128>}, {pipeline_mode = #tpu.pipeline_mode<synchronous>, transform_indices = @transform_10, window_bounds = array<i64: 1, 128>}, {transform_indices = @transform_11, window_bounds = array<i64: 1, 1, 128>}]} {
    %c0 = arith.constant 0 : index
    %c0_0 = arith.constant 0 : index
    %0 = vector.load %arg2[%c0, %c0_0] : memref<17x8xf32, #tpu.memory_space<vmem>>, vector<17x8xf32>
    %cst = arith.constant 0.000000e+00 : f32
    %1 = vector.broadcast %cst : f32 to vector<17x8xf32>
    %c0_1 = arith.constant 0 : index
    %c0_2 = arith.constant 0 : index
    %c0_3 = arith.constant 0 : index
    %2 = vector.load %arg1[%c0_1, %c0_2, %c0_3] : memref<1x33x1xf32, #tpu.memory_space<vmem>>, vector<1x17x1xf32>
    %3 = vector.shape_cast %2 : vector<1x17x1xf32> to vector<17x1xf32>
    %4 = vector.extract_strided_slice %0 {offsets = [0, 0], sizes = [1, 8], strides = [1, 1]} : vector<17x8xf32> to vector<1x8xf32>
    %5 = vector.broadcast %3 : vector<17x1xf32> to vector<17x8xf32>
    %6 = vector.broadcast %4 : vector<1x8xf32> to vector<17x8xf32>
    %7 = arith.mulf %5, %6 : vector<17x8xf32>
    %8 = arith.addf %1, %7 : vector<17x8xf32>
    %c0_4 = arith.constant 0 : index
    %c1 = arith.constant 1 : index
    %c0_5 = arith.constant 0 : index
    %9 = vector.load %arg1[%c0_4, %c1, %c0_5] : memref<1x33x1xf32, #tpu.memory_space<vmem>>, vector<1x17x1xf32>
    %10 = vector.shape_cast %9 : vector<1x17x1xf32> to vector<17x1xf32>
    %11 = vector.extract_strided_slice %0 {offsets = [1, 0], sizes = [1, 8], strides = [1, 1]} : vector<17x8xf32> to vector<1x8xf32>
    %12 = vector.broadcast %10 : vector<17x1xf32> to vector<17x8xf32>
    %13 = vector.broadcast %11 : vector<1x8xf32> to vector<17x8xf32>
    %14 = arith.mulf %12, %13 : vector<17x8xf32>
    %15 = arith.addf %8, %14 : vector<17x8xf32>
    %c0_6 = arith.constant 0 : index
    %c2 = arith.constant 2 : index
    %c0_7 = arith.constant 0 : index
    %16 = vector.load %arg1[%c0_6, %c2, %c0_7] : memref<1x33x1xf32, #tpu.memory_space<vmem>>, vector<1x17x1xf32>
    %17 = vector.shape_cast %16 : vector<1x17x1xf32> to vector<17x1xf32>
    %18 = vector.extract_strided_slice %0 {offsets = [2, 0], sizes = [1, 8], strides = [1, 1]} : vector<17x8xf32> to vector<1x8xf32>
    %19 = vector.broadcast %17 : vector<17x1xf32> to vector<17x8xf32>
    %20 = vector.broadcast %18 : vector<1x8xf32> to vector<17x8xf32>
    %21 = arith.mulf %19, %20 : vector<17x8xf32>
    %22 = arith.addf %15, %21 : vector<17x8xf32>
    %c0_8 = arith.constant 0 : index
    %c3 = arith.constant 3 : index
    %c0_9 = arith.constant 0 : index
    %23 = vector.load %arg1[%c0_8, %c3, %c0_9] : memref<1x33x1xf32, #tpu.memory_space<vmem>>, vector<1x17x1xf32>
    %24 = vector.shape_cast %23 : vector<1x17x1xf32> to vector<17x1xf32>
    %25 = vector.extract_strided_slice %0 {offsets = [3, 0], sizes = [1, 8], strides = [1, 1]} : vector<17x8xf32> to vector<1x8xf32>
    %26 = vector.broadcast %24 : vector<17x1xf32> to vector<17x8xf32>
    %27 = vector.broadcast %25 : vector<1x8xf32> to vector<17x8xf32>
    %28 = arith.mulf %26, %27 : vector<17x8xf32>
    %29 = arith.addf %22, %28 : vector<17x8xf32>
    %c0_10 = arith.constant 0 : index
    %c4 = arith.constant 4 : index
    %c0_11 = arith.constant 0 : index
    %30 = vector.load %arg1[%c0_10, %c4, %c0_11] : memref<1x33x1xf32, #tpu.memory_space<vmem>>, vector<1x17x1xf32>
    %31 = vector.shape_cast %30 : vector<1x17x1xf32> to vector<17x1xf32>
    %32 = vector.extract_strided_slice %0 {offsets = [4, 0], sizes = [1, 8], strides = [1, 1]} : vector<17x8xf32> to vector<1x8xf32>
    %33 = vector.broadcast %31 : vector<17x1xf32> to vector<17x8xf32>
    %34 = vector.broadcast %32 : vector<1x8xf32> to vector<17x8xf32>
    %35 = arith.mulf %33, %34 : vector<17x8xf32>
    %36 = arith.addf %29, %35 : vector<17x8xf32>
    %c0_12 = arith.constant 0 : index
    %c5 = arith.constant 5 : index
    %c0_13 = arith.constant 0 : index
    %37 = vector.load %arg1[%c0_12, %c5, %c0_13] : memref<1x33x1xf32, #tpu.memory_space<vmem>>, vector<1x17x1xf32>
    %38 = vector.shape_cast %37 : vector<1x17x1xf32> to vector<17x1xf32>
    %39 = vector.extract_strided_slice %0 {offsets = [5, 0], sizes = [1, 8], strides = [1, 1]} : vector<17x8xf32> to vector<1x8xf32>
    %40 = vector.broadcast %38 : vector<17x1xf32> to vector<17x8xf32>
    %41 = vector.broadcast %39 : vector<1x8xf32> to vector<17x8xf32>
    %42 = arith.mulf %40, %41 : vector<17x8xf32>
    %43 = arith.addf %36, %42 : vector<17x8xf32>
    %c0_14 = arith.constant 0 : index
    %c6 = arith.constant 6 : index
    %c0_15 = arith.constant 0 : index
    %44 = vector.load %arg1[%c0_14, %c6, %c0_15] : memref<1x33x1xf32, #tpu.memory_space<vmem>>, vector<1x17x1xf32>
    %45 = vector.shape_cast %44 : vector<1x17x1xf32> to vector<17x1xf32>
    %46 = vector.extract_strided_slice %0 {offsets = [6, 0], sizes = [1, 8], strides = [1, 1]} : vector<17x8xf32> to vector<1x8xf32>
    %47 = vector.broadcast %45 : vector<17x1xf32> to vector<17x8xf32>
    %48 = vector.broadcast %46 : vector<1x8xf32> to vector<17x8xf32>
    %49 = arith.mulf %47, %48 : vector<17x8xf32>
    %50 = arith.addf %43, %49 : vector<17x8xf32>
    %c0_16 = arith.constant 0 : index
    %c7 = arith.constant 7 : index
    %c0_17 = arith.constant 0 : index
    %51 = vector.load %arg1[%c0_16, %c7, %c0_17] : memref<1x33x1xf32, #tpu.memory_space<vmem>>, vector<1x17x1xf32>
    %52 = vector.shape_cast %51 : vector<1x17x1xf32> to vector<17x1xf32>
    %53 = vector.extract_strided_slice %0 {offsets = [7, 0], sizes = [1, 8], strides = [1, 1]} : vector<17x8xf32> to vector<1x8xf32>
    %54 = vector.broadcast %52 : vector<17x1xf32> to vector<17x8xf32>
    %55 = vector.broadcast %53 : vector<1x8xf32> to vector<17x8xf32>
    %56 = arith.mulf %54, %55 : vector<17x8xf32>
    %57 = arith.addf %50, %56 : vector<17x8xf32>
    %c0_18 = arith.constant 0 : index
    %c8 = arith.constant 8 : index
    %c0_19 = arith.constant 0 : index
    %58 = vector.load %arg1[%c0_18, %c8, %c0_19] : memref<1x33x1xf32, #tpu.memory_space<vmem>>, vector<1x17x1xf32>
    %59 = vector.shape_cast %58 : vector<1x17x1xf32> to vector<17x1xf32>
    %60 = vector.extract_strided_slice %0 {offsets = [8, 0], sizes = [1, 8], strides = [1, 1]} : vector<17x8xf32> to vector<1x8xf32>
    %61 = vector.broadcast %59 : vector<17x1xf32> to vector<17x8xf32>
    %62 = vector.broadcast %60 : vector<1x8xf32> to vector<17x8xf32>
    %63 = arith.mulf %61, %62 : vector<17x8xf32>
    %64 = arith.addf %57, %63 : vector<17x8xf32>
    %c0_20 = arith.constant 0 : index
    %c9 = arith.constant 9 : index
    %c0_21 = arith.constant 0 : index
    %65 = vector.load %arg1[%c0_20, %c9, %c0_21] : memref<1x33x1xf32, #tpu.memory_space<vmem>>, vector<1x17x1xf32>
    %66 = vector.shape_cast %65 : vector<1x17x1xf32> to vector<17x1xf32>
    %67 = vector.extract_strided_slice %0 {offsets = [9, 0], sizes = [1, 8], strides = [1, 1]} : vector<17x8xf32> to vector<1x8xf32>
    %68 = vector.broadcast %66 : vector<17x1xf32> to vector<17x8xf32>
    %69 = vector.broadcast %67 : vector<1x8xf32> to vector<17x8xf32>
    %70 = arith.mulf %68, %69 : vector<17x8xf32>
    %71 = arith.addf %64, %70 : vector<17x8xf32>
    %c0_22 = arith.constant 0 : index
    %c10 = arith.constant 10 : index
    %c0_23 = arith.constant 0 : index
    %72 = vector.load %arg1[%c0_22, %c10, %c0_23] : memref<1x33x1xf32, #tpu.memory_space<vmem>>, vector<1x17x1xf32>
    %73 = vector.shape_cast %72 : vector<1x17x1xf32> to vector<17x1xf32>
    %74 = vector.extract_strided_slice %0 {offsets = [10, 0], sizes = [1, 8], strides = [1, 1]} : vector<17x8xf32> to vector<1x8xf32>
    %75 = vector.broadcast %73 : vector<17x1xf32> to vector<17x8xf32>
    %76 = vector.broadcast %74 : vector<1x8xf32> to vector<17x8xf32>
    %77 = arith.mulf %75, %76 : vector<17x8xf32>
    %78 = arith.addf %71, %77 : vector<17x8xf32>
    %c0_24 = arith.constant 0 : index
    %c11 = arith.constant 11 : index
    %c0_25 = arith.constant 0 : index
    %79 = vector.load %arg1[%c0_24, %c11, %c0_25] : memref<1x33x1xf32, #tpu.memory_space<vmem>>, vector<1x17x1xf32>
    %80 = vector.shape_cast %79 : vector<1x17x1xf32> to vector<17x1xf32>
    %81 = vector.extract_strided_slice %0 {offsets = [11, 0], sizes = [1, 8], strides = [1, 1]} : vector<17x8xf32> to vector<1x8xf32>
    %82 = vector.broadcast %80 : vector<17x1xf32> to vector<17x8xf32>
    %83 = vector.broadcast %81 : vector<1x8xf32> to vector<17x8xf32>
    %84 = arith.mulf %82, %83 : vector<17x8xf32>
    %85 = arith.addf %78, %84 : vector<17x8xf32>
    %c0_26 = arith.constant 0 : index
    %c12 = arith.constant 12 : index
    %c0_27 = arith.constant 0 : index
    %86 = vector.load %arg1[%c0_26, %c12, %c0_27] : memref<1x33x1xf32, #tpu.memory_space<vmem>>, vector<1x17x1xf32>
    %87 = vector.shape_cast %86 : vector<1x17x1xf32> to vector<17x1xf32>
    %88 = vector.extract_strided_slice %0 {offsets = [12, 0], sizes = [1, 8], strides = [1, 1]} : vector<17x8xf32> to vector<1x8xf32>
    %89 = vector.broadcast %87 : vector<17x1xf32> to vector<17x8xf32>
    %90 = vector.broadcast %88 : vector<1x8xf32> to vector<17x8xf32>
    %91 = arith.mulf %89, %90 : vector<17x8xf32>
    %92 = arith.addf %85, %91 : vector<17x8xf32>
    %c0_28 = arith.constant 0 : index
    %c13 = arith.constant 13 : index
    %c0_29 = arith.constant 0 : index
    %93 = vector.load %arg1[%c0_28, %c13, %c0_29] : memref<1x33x1xf32, #tpu.memory_space<vmem>>, vector<1x17x1xf32>
    %94 = vector.shape_cast %93 : vector<1x17x1xf32> to vector<17x1xf32>
    %95 = vector.extract_strided_slice %0 {offsets = [13, 0], sizes = [1, 8], strides = [1, 1]} : vector<17x8xf32> to vector<1x8xf32>
    %96 = vector.broadcast %94 : vector<17x1xf32> to vector<17x8xf32>
    %97 = vector.broadcast %95 : vector<1x8xf32> to vector<17x8xf32>
    %98 = arith.mulf %96, %97 : vector<17x8xf32>
    %99 = arith.addf %92, %98 : vector<17x8xf32>
    %c0_30 = arith.constant 0 : index
    %c14 = arith.constant 14 : index
    %c0_31 = arith.constant 0 : index
    %100 = vector.load %arg1[%c0_30, %c14, %c0_31] : memref<1x33x1xf32, #tpu.memory_space<vmem>>, vector<1x17x1xf32>
    %101 = vector.shape_cast %100 : vector<1x17x1xf32> to vector<17x1xf32>
    %102 = vector.extract_strided_slice %0 {offsets = [14, 0], sizes = [1, 8], strides = [1, 1]} : vector<17x8xf32> to vector<1x8xf32>
    %103 = vector.broadcast %101 : vector<17x1xf32> to vector<17x8xf32>
    %104 = vector.broadcast %102 : vector<1x8xf32> to vector<17x8xf32>
    %105 = arith.mulf %103, %104 : vector<17x8xf32>
    %106 = arith.addf %99, %105 : vector<17x8xf32>
    %c0_32 = arith.constant 0 : index
    %c15 = arith.constant 15 : index
    %c0_33 = arith.constant 0 : index
    %107 = vector.load %arg1[%c0_32, %c15, %c0_33] : memref<1x33x1xf32, #tpu.memory_space<vmem>>, vector<1x17x1xf32>
    %108 = vector.shape_cast %107 : vector<1x17x1xf32> to vector<17x1xf32>
    %109 = vector.extract_strided_slice %0 {offsets = [15, 0], sizes = [1, 8], strides = [1, 1]} : vector<17x8xf32> to vector<1x8xf32>
    %110 = vector.broadcast %108 : vector<17x1xf32> to vector<17x8xf32>
    %111 = vector.broadcast %109 : vector<1x8xf32> to vector<17x8xf32>
    %112 = arith.mulf %110, %111 : vector<17x8xf32>
    %113 = arith.addf %106, %112 : vector<17x8xf32>
    %c0_34 = arith.constant 0 : index
    %c16 = arith.constant 16 : index
    %c0_35 = arith.constant 0 : index
    %114 = vector.load %arg1[%c0_34, %c16, %c0_35] : memref<1x33x1xf32, #tpu.memory_space<vmem>>, vector<1x17x1xf32>
    %115 = vector.shape_cast %114 : vector<1x17x1xf32> to vector<17x1xf32>
    %116 = vector.extract_strided_slice %0 {offsets = [16, 0], sizes = [1, 8], strides = [1, 1]} : vector<17x8xf32> to vector<1x8xf32>
    %117 = vector.broadcast %115 : vector<17x1xf32> to vector<17x8xf32>
    %118 = vector.broadcast %116 : vector<1x8xf32> to vector<17x8xf32>
    %119 = arith.mulf %117, %118 : vector<17x8xf32>
    %120 = arith.addf %113, %119 : vector<17x8xf32>
    %c0_36 = arith.constant 0 : index
    %c0_37 = arith.constant 0 : index
    %121 = vector.load %arg3[%c0_36, %c0_37] : memref<1x8xf32, #tpu.memory_space<vmem>>, vector<1x8xf32>
    %122 = vector.broadcast %121 : vector<1x8xf32> to vector<17x8xf32>
    %123 = arith.addf %120, %122 : vector<17x8xf32>
    %cst_38 = arith.constant 0.000000e+00 : f32
    %124 = vector.broadcast %cst_38 : f32 to vector<17x8xf32>
    %125 = arith.cmpf oge, %123, %124 : vector<17x8xf32>
    %cst_39 = arith.constant 1.000000e-01 : f32
    %126 = vector.broadcast %cst_39 : f32 to vector<17x8xf32>
    %127 = arith.mulf %126, %123 : vector<17x8xf32>
    %128 = arith.select %125, %123, %127 : vector<17x8xi1>, vector<17x8xf32>
    %cst_40 = arith.constant 0.000000e+00 : f32
    %129 = vector.broadcast %cst_40 : f32 to vector<5x8xf32>
    %c0_41 = arith.constant 0 : index
    %c0_42 = arith.constant 0 : index
    %130 = vector.load %arg14[%c0_41, %c0_42] : memref<28x8xf32, #tpu.memory_space<vmem>>, vector<5x8xf32>
    tpu.vector_store %arg14[%c0_41, %c0_42], %129 {strides = array<i32>} : memref<28x8xf32, #tpu.memory_space<vmem>>, vector<5x8xf32>,
    %c5_43 = arith.constant 5 : index
    %c0_44 = arith.constant 0 : index
    %131 = vector.load %arg14[%c5_43, %c0_44] : memref<28x8xf32, #tpu.memory_space<vmem>>, vector<17x8xf32>
    tpu.vector_store %arg14[%c5_43, %c0_44], %128 {strides = array<i32>} : memref<28x8xf32, #tpu.memory_space<vmem>>, vector<17x8xf32>,
    %cst_45 = arith.constant 0.000000e+00 : f32
    %132 = vector.broadcast %cst_45 : f32 to vector<6x8xf32>
    %c22 = arith.constant 22 : index
    %c0_46 = arith.constant 0 : index
    %133 = vector.load %arg14[%c22, %c0_46] : memref<28x8xf32, #tpu.memory_space<vmem>>, vector<6x8xf32>
    tpu.vector_store %arg14[%c22, %c0_46], %132 {strides = array<i32>} : memref<28x8xf32, #tpu.memory_space<vmem>>, vector<6x8xf32>,
    %c0_47 = arith.constant 0 : index
    %c0_48 = arith.constant 0 : index
    %134 = tpu.strided_load %arg14[%c0_47, %c0_48] {strides = array<i32: 2, 1>} : memref<28x8xf32, #tpu.memory_space<vmem>>, vector<9x8xf32>
    %c0_49 = arith.constant 0 : index
    %c0_50 = arith.constant 0 : index
    %135 = vector.load %arg13[%c0_49, %c0_50] : memref<9x192xf32, #tpu.memory_space<vmem>>, vector<9x8xf32>
    tpu.vector_store %arg13[%c0_49, %c0_50], %134 {strides = array<i32>} : memref<9x192xf32, #tpu.memory_space<vmem>>, vector<9x8xf32>,
    %c1_51 = arith.constant 1 : index
    %c0_52 = arith.constant 0 : index
    %136 = tpu.strided_load %arg14[%c1_51, %c0_52] {strides = array<i32: 2, 1>} : memref<28x8xf32, #tpu.memory_space<vmem>>, vector<9x8xf32>
    %c0_53 = arith.constant 0 : index
    %c8_54 = arith.constant 8 : index
    %137 = vector.load %arg13[%c0_53, %c8_54] : memref<9x192xf32, #tpu.memory_space<vmem>>, vector<9x8xf32>
    tpu.vector_store %arg13[%c0_53, %c8_54], %136 {strides = array<i32>} : memref<9x192xf32, #tpu.memory_space<vmem>>, vector<9x8xf32>,
    %c2_55 = arith.constant 2 : index
    %c0_56 = arith.constant 0 : index
    %138 = tpu.strided_load %arg14[%c2_55, %c0_56] {strides = array<i32: 2, 1>} : memref<28x8xf32, #tpu.memory_space<vmem>>, vector<9x8xf32>
    %c0_57 = arith.constant 0 : index
    %c16_58 = arith.constant 16 : index
    %139 = vector.load %arg13[%c0_57, %c16_58] : memref<9x192xf32, #tpu.memory_space<vmem>>, vector<9x8xf32>
    tpu.vector_store %arg13[%c0_57, %c16_58], %138 {strides = array<i32>} : memref<9x192xf32, #tpu.memory_space<vmem>>, vector<9x8xf32>,
    %c3_59 = arith.constant 3 : index
    %c0_60 = arith.constant 0 : index
    %140 = tpu.strided_load %arg14[%c3_59, %c0_60] {strides = array<i32: 2, 1>} : memref<28x8xf32, #tpu.memory_space<vmem>>, vector<9x8xf32>
    %c0_61 = arith.constant 0 : index
    %c24 = arith.constant 24 : index
    %141 = vector.load %arg13[%c0_61, %c24] : memref<9x192xf32, #tpu.memory_space<vmem>>, vector<9x8xf32>
    tpu.vector_store %arg13[%c0_61, %c24], %140 {strides = array<i32>} : memref<9x192xf32, #tpu.memory_space<vmem>>, vector<9x8xf32>,
    %c4_62 = arith.constant 4 : index
    %c0_63 = arith.constant 0 : index
    %142 = tpu.strided_load %arg14[%c4_62, %c0_63] {strides = array<i32: 2, 1>} : memref<28x8xf32, #tpu.memory_space<vmem>>, vector<9x8xf32>
    %c0_64 = arith.constant 0 : index
    %c32 = arith.constant 32 : index
    %143 = vector.load %arg13[%c0_64, %c32] : memref<9x192xf32, #tpu.memory_space<vmem>>, vector<9x8xf32>
    tpu.vector_store %arg13[%c0_64, %c32], %142 {strides = array<i32>} : memref<9x192xf32, #tpu.memory_space<vmem>>, vector<9x8xf32>,
    %c5_65 = arith.constant 5 : index
    %c0_66 = arith.constant 0 : index
    %144 = tpu.strided_load %arg14[%c5_65, %c0_66] {strides = array<i32: 2, 1>} : memref<28x8xf32, #tpu.memory_space<vmem>>, vector<9x8xf32>
    %c0_67 = arith.constant 0 : index
    %c40 = arith.constant 40 : index
    %145 = vector.load %arg13[%c0_67, %c40] : memref<9x192xf32, #tpu.memory_space<vmem>>, vector<9x8xf32>
    tpu.vector_store %arg13[%c0_67, %c40], %144 {strides = array<i32>} : memref<9x192xf32, #tpu.memory_space<vmem>>, vector<9x8xf32>,
    %c6_68 = arith.constant 6 : index
    %c0_69 = arith.constant 0 : index
    %146 = tpu.strided_load %arg14[%c6_68, %c0_69] {strides = array<i32: 2, 1>} : memref<28x8xf32, #tpu.memory_space<vmem>>, vector<9x8xf32>
    %c0_70 = arith.constant 0 : index
    %c48 = arith.constant 48 : index
    %147 = vector.load %arg13[%c0_70, %c48] : memref<9x192xf32, #tpu.memory_space<vmem>>, vector<9x8xf32>
    tpu.vector_store %arg13[%c0_70, %c48], %146 {strides = array<i32>} : memref<9x192xf32, #tpu.memory_space<vmem>>, vector<9x8xf32>,
    %c7_71 = arith.constant 7 : index
    %c0_72 = arith.constant 0 : index
    %148 = tpu.strided_load %arg14[%c7_71, %c0_72] {strides = array<i32: 2, 1>} : memref<28x8xf32, #tpu.memory_space<vmem>>, vector<9x8xf32>
    %c0_73 = arith.constant 0 : index
    %c56 = arith.constant 56 : index
    %149 = vector.load %arg13[%c0_73, %c56] : memref<9x192xf32, #tpu.memory_space<vmem>>, vector<9x8xf32>
    tpu.vector_store %arg13[%c0_73, %c56], %148 {strides = array<i32>} : memref<9x192xf32, #tpu.memory_space<vmem>>, vector<9x8xf32>,
    %c8_74 = arith.constant 8 : index
    %c0_75 = arith.constant 0 : index
    %150 = tpu.strided_load %arg14[%c8_74, %c0_75] {strides = array<i32: 2, 1>} : memref<28x8xf32, #tpu.memory_space<vmem>>, vector<9x8xf32>
    %c0_76 = arith.constant 0 : index
    %c64 = arith.constant 64 : index
    %151 = vector.load %arg13[%c0_76, %c64] : memref<9x192xf32, #tpu.memory_space<vmem>>, vector<9x8xf32>
    tpu.vector_store %arg13[%c0_76, %c64], %150 {strides = array<i32>} : memref<9x192xf32, #tpu.memory_space<vmem>>, vector<9x8xf32>,
    %c9_77 = arith.constant 9 : index
    %c0_78 = arith.constant 0 : index
    %152 = tpu.strided_load %arg14[%c9_77, %c0_78] {strides = array<i32: 2, 1>} : memref<28x8xf32, #tpu.memory_space<vmem>>, vector<9x8xf32>
    %c0_79 = arith.constant 0 : index
    %c72 = arith.constant 72 : index
    %153 = vector.load %arg13[%c0_79, %c72] : memref<9x192xf32, #tpu.memory_space<vmem>>, vector<9x8xf32>
    tpu.vector_store %arg13[%c0_79, %c72], %152 {strides = array<i32>} : memref<9x192xf32, #tpu.memory_space<vmem>>, vector<9x8xf32>,
    %c10_80 = arith.constant 10 : index
    %c0_81 = arith.constant 0 : index
    %154 = tpu.strided_load %arg14[%c10_80, %c0_81] {strides = array<i32: 2, 1>} : memref<28x8xf32, #tpu.memory_space<vmem>>, vector<9x8xf32>
    %c0_82 = arith.constant 0 : index
    %c80 = arith.constant 80 : index
    %155 = vector.load %arg13[%c0_82, %c80] : memref<9x192xf32, #tpu.memory_space<vmem>>, vector<9x8xf32>
    tpu.vector_store %arg13[%c0_82, %c80], %154 {strides = array<i32>} : memref<9x192xf32, #tpu.memory_space<vmem>>, vector<9x8xf32>,
    %c0_83 = arith.constant 0 : index
    %c0_84 = arith.constant 0 : index
    %156 = vector.load %arg13[%c0_83, %c0_84] : memref<9x192xf32, #tpu.memory_space<vmem>>, vector<9x88xf32>
    %157 = arith.truncf %156 : vector<9x88xf32> to vector<9x88xbf16>
    %c0_85 = arith.constant 0 : index
    %c0_86 = arith.constant 0 : index
    %158 = vector.load %arg4[%c0_85, %c0_86] : memref<88x16xf32, #tpu.memory_space<vmem>>, vector<88x16xf32>
    %159 = arith.truncf %158 : vector<88x16xf32> to vector<88x16xbf16>
    %cst_87 = arith.constant dense<0.000000e+00> : vector<9x16xf32>
    %160 = tpu.matmul %157, %159, %cst_87 {dimension_numbers = #tpu.dot_dimension_numbers<[1], [0], [0], [1], [0, 0, 1, 1], [], []>} : vector<9x88xbf16>, vector<88x16xbf16>, vector<9x16xf32> -> vector<9x16xf32>
    %c0_88 = arith.constant 0 : index
    %c0_89 = arith.constant 0 : index
    %161 = vector.load %arg5[%c0_88, %c0_89] : memref<1x16xf32, #tpu.memory_space<vmem>>, vector<1x16xf32>
    %162 = vector.broadcast %161 : vector<1x16xf32> to vector<9x16xf32>
    %163 = arith.addf %160, %162 : vector<9x16xf32>
    %cst_90 = arith.constant 0.000000e+00 : f32
    %164 = vector.broadcast %cst_90 : f32 to vector<9x16xf32>
    %165 = arith.cmpf oge, %163, %164 : vector<9x16xf32>
    %cst_91 = arith.constant 1.000000e-01 : f32
    %166 = vector.broadcast %cst_91 : f32 to vector<9x16xf32>
    %167 = arith.mulf %166, %163 : vector<9x16xf32>
    %168 = arith.select %165, %163, %167 : vector<9x16xi1>, vector<9x16xf32>
    %cst_92 = arith.constant 0.000000e+00 : f32
    %169 = vector.broadcast %cst_92 : f32 to vector<3x16xf32>
    %c0_93 = arith.constant 0 : index
    %c0_94 = arith.constant 0 : index
    %170 = vector.load %arg15[%c0_93, %c0_94] : memref<16x16xf32, #tpu.memory_space<vmem>>, vector<3x16xf32>
    tpu.vector_store %arg15[%c0_93, %c0_94], %169 {strides = array<i32>} : memref<16x16xf32, #tpu.memory_space<vmem>>, vector<3x16xf32>,
    %c3_95 = arith.constant 3 : index
    %c0_96 = arith.constant 0 : index
    %171 = vector.load %arg15[%c3_95, %c0_96] : memref<16x16xf32, #tpu.memory_space<vmem>>, vector<9x16xf32>
    tpu.vector_store %arg15[%c3_95, %c0_96], %168 {strides = array<i32>} : memref<16x16xf32, #tpu.memory_space<vmem>>, vector<9x16xf32>,
    %cst_97 = arith.constant 0.000000e+00 : f32
    %172 = vector.broadcast %cst_97 : f32 to vector<4x16xf32>
    %c12_98 = arith.constant 12 : index
    %c0_99 = arith.constant 0 : index
    %173 = vector.load %arg15[%c12_98, %c0_99] : memref<16x16xf32, #tpu.memory_space<vmem>>, vector<4x16xf32>
    tpu.vector_store %arg15[%c12_98, %c0_99], %172 {strides = array<i32>} : memref<16x16xf32, #tpu.memory_space<vmem>>, vector<4x16xf32>,
    %c0_100 = arith.constant 0 : index
    %c0_101 = arith.constant 0 : index
    %174 = tpu.strided_load %arg15[%c0_100, %c0_101] {strides = array<i32: 2, 1>} : memref<16x16xf32, #tpu.memory_space<vmem>>, vector<5x16xf32>
    %c0_102 = arith.constant 0 : index
    %c0_103 = arith.constant 0 : index
    %175 = vector.load %arg13[%c0_102, %c0_103] : memref<9x192xf32, #tpu.memory_space<vmem>>, vector<5x16xf32>
    tpu.vector_store %arg13[%c0_102, %c0_103], %174 {strides = array<i32>} : memref<9x192xf32, #tpu.memory_space<vmem>>, vector<5x16xf32>,
    %c1_104 = arith.constant 1 : index
    %c0_105 = arith.constant 0 : index
    %176 = tpu.strided_load %arg15[%c1_104, %c0_105] {strides = array<i32: 2, 1>} : memref<16x16xf32, #tpu.memory_space<vmem>>, vector<5x16xf32>
    %c0_106 = arith.constant 0 : index
    %c16_107 = arith.constant 16 : index
    %177 = vector.load %arg13[%c0_106, %c16_107] : memref<9x192xf32, #tpu.memory_space<vmem>>, vector<5x16xf32>
    tpu.vector_store %arg13[%c0_106, %c16_107], %176 {strides = array<i32>} : memref<9x192xf32, #tpu.memory_space<vmem>>, vector<5x16xf32>,
    %c2_108 = arith.constant 2 : index
    %c0_109 = arith.constant 0 : index
    %178 = tpu.strided_load %arg15[%c2_108, %c0_109] {strides = array<i32: 2, 1>} : memref<16x16xf32, #tpu.memory_space<vmem>>, vector<5x16xf32>
    %c0_110 = arith.constant 0 : index
    %c32_111 = arith.constant 32 : index
    %179 = vector.load %arg13[%c0_110, %c32_111] : memref<9x192xf32, #tpu.memory_space<vmem>>, vector<5x16xf32>
    tpu.vector_store %arg13[%c0_110, %c32_111], %178 {strides = array<i32>} : memref<9x192xf32, #tpu.memory_space<vmem>>, vector<5x16xf32>,
    %c3_112 = arith.constant 3 : index
    %c0_113 = arith.constant 0 : index
    %180 = tpu.strided_load %arg15[%c3_112, %c0_113] {strides = array<i32: 2, 1>} : memref<16x16xf32, #tpu.memory_space<vmem>>, vector<5x16xf32>
    %c0_114 = arith.constant 0 : index
    %c48_115 = arith.constant 48 : index
    %181 = vector.load %arg13[%c0_114, %c48_115] : memref<9x192xf32, #tpu.memory_space<vmem>>, vector<5x16xf32>
    tpu.vector_store %arg13[%c0_114, %c48_115], %180 {strides = array<i32>} : memref<9x192xf32, #tpu.memory_space<vmem>>, vector<5x16xf32>,
    %c4_116 = arith.constant 4 : index
    %c0_117 = arith.constant 0 : index
    %182 = tpu.strided_load %arg15[%c4_116, %c0_117] {strides = array<i32: 2, 1>} : memref<16x16xf32, #tpu.memory_space<vmem>>, vector<5x16xf32>
    %c0_118 = arith.constant 0 : index
    %c64_119 = arith.constant 64 : index
    %183 = vector.load %arg13[%c0_118, %c64_119] : memref<9x192xf32, #tpu.memory_space<vmem>>, vector<5x16xf32>
    tpu.vector_store %arg13[%c0_118, %c64_119], %182 {strides = array<i32>} : memref<9x192xf32, #tpu.memory_space<vmem>>, vector<5x16xf32>,
    %c5_120 = arith.constant 5 : index
    %c0_121 = arith.constant 0 : index
    %184 = tpu.strided_load %arg15[%c5_120, %c0_121] {strides = array<i32: 2, 1>} : memref<16x16xf32, #tpu.memory_space<vmem>>, vector<5x16xf32>
    %c0_122 = arith.constant 0 : index
    %c80_123 = arith.constant 80 : index
    %185 = vector.load %arg13[%c0_122, %c80_123] : memref<9x192xf32, #tpu.memory_space<vmem>>, vector<5x16xf32>
    tpu.vector_store %arg13[%c0_122, %c80_123], %184 {strides = array<i32>} : memref<9x192xf32, #tpu.memory_space<vmem>>, vector<5x16xf32>,
    %c6_124 = arith.constant 6 : index
    %c0_125 = arith.constant 0 : index
    %186 = tpu.strided_load %arg15[%c6_124, %c0_125] {strides = array<i32: 2, 1>} : memref<16x16xf32, #tpu.memory_space<vmem>>, vector<5x16xf32>
    %c0_126 = arith.constant 0 : index
    %c96 = arith.constant 96 : index
    %187 = vector.load %arg13[%c0_126, %c96] : memref<9x192xf32, #tpu.memory_space<vmem>>, vector<5x16xf32>
    tpu.vector_store %arg13[%c0_126, %c96], %186 {strides = array<i32>} : memref<9x192xf32, #tpu.memory_space<vmem>>, vector<5x16xf32>,
    %c0_127 = arith.constant 0 : index
    %c0_128 = arith.constant 0 : index
    %188 = vector.load %arg13[%c0_127, %c0_128] : memref<9x192xf32, #tpu.memory_space<vmem>>, vector<5x112xf32>
    %189 = arith.truncf %188 : vector<5x112xf32> to vector<5x112xbf16>
    %c0_129 = arith.constant 0 : index
    %c0_130 = arith.constant 0 : index
    %190 = vector.load %arg6[%c0_129, %c0_130] : memref<112x32xf32, #tpu.memory_space<vmem>>, vector<112x32xf32>
    %191 = arith.truncf %190 : vector<112x32xf32> to vector<112x32xbf16>
    %cst_131 = arith.constant dense<0.000000e+00> : vector<5x32xf32>
    %192 = tpu.matmul %189, %191, %cst_131 {dimension_numbers = #tpu.dot_dimension_numbers<[1], [0], [0], [1], [0, 0, 1, 1], [], []>} : vector<5x112xbf16>, vector<112x32xbf16>, vector<5x32xf32> -> vector<5x32xf32>
    %c0_132 = arith.constant 0 : index
    %c0_133 = arith.constant 0 : index
    %193 = vector.load %arg7[%c0_132, %c0_133] : memref<1x32xf32, #tpu.memory_space<vmem>>, vector<1x32xf32>
    %194 = vector.broadcast %193 : vector<1x32xf32> to vector<5x32xf32>
    %195 = arith.addf %192, %194 : vector<5x32xf32>
    %cst_134 = arith.constant 0.000000e+00 : f32
    %196 = vector.broadcast %cst_134 : f32 to vector<5x32xf32>
    %197 = arith.cmpf oge, %195, %196 : vector<5x32xf32>
    %cst_135 = arith.constant 1.000000e-01 : f32
    %198 = vector.broadcast %cst_135 : f32 to vector<5x32xf32>
    %199 = arith.mulf %198, %195 : vector<5x32xf32>
    %200 = arith.select %197, %195, %199 : vector<5x32xi1>, vector<5x32xf32>
    %cst_136 = arith.constant 0.000000e+00 : f32
    %201 = vector.broadcast %cst_136 : f32 to vector<2x32xf32>
    %c0_137 = arith.constant 0 : index
    %c0_138 = arith.constant 0 : index
    %202 = vector.load %arg16[%c0_137, %c0_138] : memref<10x32xf32, #tpu.memory_space<vmem>>, vector<2x32xf32>
    tpu.vector_store %arg16[%c0_137, %c0_138], %201 {strides = array<i32>} : memref<10x32xf32, #tpu.memory_space<vmem>>, vector<2x32xf32>,
    %c2_139 = arith.constant 2 : index
    %c0_140 = arith.constant 0 : index
    %203 = vector.load %arg16[%c2_139, %c0_140] : memref<10x32xf32, #tpu.memory_space<vmem>>, vector<5x32xf32>
    tpu.vector_store %arg16[%c2_139, %c0_140], %200 {strides = array<i32>} : memref<10x32xf32, #tpu.memory_space<vmem>>, vector<5x32xf32>,
    %cst_141 = arith.constant 0.000000e+00 : f32
    %204 = vector.broadcast %cst_141 : f32 to vector<3x32xf32>
    %c7_142 = arith.constant 7 : index
    %c0_143 = arith.constant 0 : index
    %205 = vector.load %arg16[%c7_142, %c0_143] : memref<10x32xf32, #tpu.memory_space<vmem>>, vector<3x32xf32>
    tpu.vector_store %arg16[%c7_142, %c0_143], %204 {strides = array<i32>} : memref<10x32xf32, #tpu.memory_space<vmem>>, vector<3x32xf32>,
    %c0_144 = arith.constant 0 : index
    %c0_145 = arith.constant 0 : index
    %206 = tpu.strided_load %arg16[%c0_144, %c0_145] {strides = array<i32: 2, 1>} : memref<10x32xf32, #tpu.memory_space<vmem>>, vector<3x32xf32>
    %c0_146 = arith.constant 0 : index
    %c0_147 = arith.constant 0 : index
    %207 = vector.load %arg13[%c0_146, %c0_147] : memref<9x192xf32, #tpu.memory_space<vmem>>, vector<3x32xf32>
    tpu.vector_store %arg13[%c0_146, %c0_147], %206 {strides = array<i32>} : memref<9x192xf32, #tpu.memory_space<vmem>>, vector<3x32xf32>,
    %c1_148 = arith.constant 1 : index
    %c0_149 = arith.constant 0 : index
    %208 = tpu.strided_load %arg16[%c1_148, %c0_149] {strides = array<i32: 2, 1>} : memref<10x32xf32, #tpu.memory_space<vmem>>, vector<3x32xf32>
    %c0_150 = arith.constant 0 : index
    %c32_151 = arith.constant 32 : index
    %209 = vector.load %arg13[%c0_150, %c32_151] : memref<9x192xf32, #tpu.memory_space<vmem>>, vector<3x32xf32>
    tpu.vector_store %arg13[%c0_150, %c32_151], %208 {strides = array<i32>} : memref<9x192xf32, #tpu.memory_space<vmem>>, vector<3x32xf32>,
    %c2_152 = arith.constant 2 : index
    %c0_153 = arith.constant 0 : index
    %210 = tpu.strided_load %arg16[%c2_152, %c0_153] {strides = array<i32: 2, 1>} : memref<10x32xf32, #tpu.memory_space<vmem>>, vector<3x32xf32>
    %c0_154 = arith.constant 0 : index
    %c64_155 = arith.constant 64 : index
    %211 = vector.load %arg13[%c0_154, %c64_155] : memref<9x192xf32, #tpu.memory_space<vmem>>, vector<3x32xf32>
    tpu.vector_store %arg13[%c0_154, %c64_155], %210 {strides = array<i32>} : memref<9x192xf32, #tpu.memory_space<vmem>>, vector<3x32xf32>,
    %c3_156 = arith.constant 3 : index
    %c0_157 = arith.constant 0 : index
    %212 = tpu.strided_load %arg16[%c3_156, %c0_157] {strides = array<i32: 2, 1>} : memref<10x32xf32, #tpu.memory_space<vmem>>, vector<3x32xf32>
    %c0_158 = arith.constant 0 : index
    %c96_159 = arith.constant 96 : index
    %213 = vector.load %arg13[%c0_158, %c96_159] : memref<9x192xf32, #tpu.memory_space<vmem>>, vector<3x32xf32>
    tpu.vector_store %arg13[%c0_158, %c96_159], %212 {strides = array<i32>} : memref<9x192xf32, #tpu.memory_space<vmem>>, vector<3x32xf32>,
    %c4_160 = arith.constant 4 : index
    %c0_161 = arith.constant 0 : index
    %214 = tpu.strided_load %arg16[%c4_160, %c0_161] {strides = array<i32: 2, 1>} : memref<10x32xf32, #tpu.memory_space<vmem>>, vector<3x32xf32>
    %c0_162 = arith.constant 0 : index
    %c128 = arith.constant 128 : index
    %215 = vector.load %arg13[%c0_162, %c128] : memref<9x192xf32, #tpu.memory_space<vmem>>, vector<3x32xf32>
    tpu.vector_store %arg13[%c0_162, %c128], %214 {strides = array<i32>} : memref<9x192xf32, #tpu.memory_space<vmem>>, vector<3x32xf32>,
    %c0_163 = arith.constant 0 : index
    %c0_164 = arith.constant 0 : index
    %216 = vector.load %arg13[%c0_163, %c0_164] : memref<9x192xf32, #tpu.memory_space<vmem>>, vector<3x160xf32>
    %217 = arith.truncf %216 : vector<3x160xf32> to vector<3x160xbf16>
    %c0_165 = arith.constant 0 : index
    %c0_166 = arith.constant 0 : index
    %218 = vector.load %arg8[%c0_165, %c0_166] : memref<160x64xf32, #tpu.memory_space<vmem>>, vector<160x64xf32>
    %219 = arith.truncf %218 : vector<160x64xf32> to vector<160x64xbf16>
    %cst_167 = arith.constant dense<0.000000e+00> : vector<3x64xf32>
    %220 = tpu.matmul %217, %219, %cst_167 {dimension_numbers = #tpu.dot_dimension_numbers<[1], [0], [0], [1], [0, 0, 1, 1], [], []>} : vector<3x160xbf16>, vector<160x64xbf16>, vector<3x64xf32> -> vector<3x64xf32>
    %c0_168 = arith.constant 0 : index
    %c0_169 = arith.constant 0 : index
    %221 = vector.load %arg9[%c0_168, %c0_169] : memref<1x64xf32, #tpu.memory_space<vmem>>, vector<1x64xf32>
    %222 = vector.broadcast %221 : vector<1x64xf32> to vector<3x64xf32>
    %223 = arith.addf %220, %222 : vector<3x64xf32>
    %cst_170 = arith.constant 0.000000e+00 : f32
    %224 = vector.broadcast %cst_170 : f32 to vector<3x64xf32>
    %225 = arith.cmpf oge, %223, %224 : vector<3x64xf32>
    %cst_171 = arith.constant 1.000000e-01 : f32
    %226 = vector.broadcast %cst_171 : f32 to vector<3x64xf32>
    %227 = arith.mulf %226, %223 : vector<3x64xf32>
    %228 = arith.select %225, %223, %227 : vector<3x64xi1>, vector<3x64xf32>
    %cst_172 = arith.constant 0.000000e+00 : f32
    %229 = vector.broadcast %cst_172 : f32 to vector<1x64xf32>
    %c0_173 = arith.constant 0 : index
    %c0_174 = arith.constant 0 : index
    %230 = vector.load %arg17[%c0_173, %c0_174] : memref<8x64xf32, #tpu.memory_space<vmem>>, vector<1x64xf32>
    tpu.vector_store %arg17[%c0_173, %c0_174], %229 {strides = array<i32>} : memref<8x64xf32, #tpu.memory_space<vmem>>, vector<1x64xf32>,
    %c1_175 = arith.constant 1 : index
    %c0_176 = arith.constant 0 : index
    %231 = vector.load %arg17[%c1_175, %c0_176] : memref<8x64xf32, #tpu.memory_space<vmem>>, vector<3x64xf32>
    tpu.vector_store %arg17[%c1_175, %c0_176], %228 {strides = array<i32>} : memref<8x64xf32, #tpu.memory_space<vmem>>, vector<3x64xf32>,
    %cst_177 = arith.constant 0.000000e+00 : f32
    %232 = vector.broadcast %cst_177 : f32 to vector<4x64xf32>
    %c4_178 = arith.constant 4 : index
    %c0_179 = arith.constant 0 : index
    %233 = vector.load %arg17[%c4_178, %c0_179] : memref<8x64xf32, #tpu.memory_space<vmem>>, vector<4x64xf32>
    tpu.vector_store %arg17[%c4_178, %c0_179], %232 {strides = array<i32>} : memref<8x64xf32, #tpu.memory_space<vmem>>, vector<4x64xf32>,
    %c0_180 = arith.constant 0 : index
    %c0_181 = arith.constant 0 : index
    %234 = vector.load %arg17[%c0_180, %c0_181] : memref<8x64xf32, #tpu.memory_space<vmem>>, vector<1x64xf32>
    %c0_182 = arith.constant 0 : index
    %c0_183 = arith.constant 0 : index
    %235 = vector.load %arg13[%c0_182, %c0_183] : memref<9x192xf32, #tpu.memory_space<vmem>>, vector<1x64xf32>
    tpu.vector_store %arg13[%c0_182, %c0_183], %234 {strides = array<i32>} : memref<9x192xf32, #tpu.memory_space<vmem>>, vector<1x64xf32>,
    %c1_184 = arith.constant 1 : index
    %c0_185 = arith.constant 0 : index
    %236 = vector.load %arg17[%c1_184, %c0_185] : memref<8x64xf32, #tpu.memory_space<vmem>>, vector<1x64xf32>
    %c0_186 = arith.constant 0 : index
    %c64_187 = arith.constant 64 : index
    %237 = vector.load %arg13[%c0_186, %c64_187] : memref<9x192xf32, #tpu.memory_space<vmem>>, vector<1x64xf32>
    tpu.vector_store %arg13[%c0_186, %c64_187], %236 {strides = array<i32>} : memref<9x192xf32, #tpu.memory_space<vmem>>, vector<1x64xf32>,
    %c2_188 = arith.constant 2 : index
    %c0_189 = arith.constant 0 : index
    %238 = vector.load %arg17[%c2_188, %c0_189] : memref<8x64xf32, #tpu.memory_space<vmem>>, vector<1x64xf32>
    %c0_190 = arith.constant 0 : index
    %c128_191 = arith.constant 128 : index
    %239 = vector.load %arg13[%c0_190, %c128_191] : memref<9x192xf32, #tpu.memory_space<vmem>>, vector<1x64xf32>
    tpu.vector_store %arg13[%c0_190, %c128_191], %238 {strides = array<i32>} : memref<9x192xf32, #tpu.memory_space<vmem>>, vector<1x64xf32>,
    %c0_192 = arith.constant 0 : index
    %c0_193 = arith.constant 0 : index
    %240 = vector.load %arg13[%c0_192, %c0_193] : memref<9x192xf32, #tpu.memory_space<vmem>>, vector<1x192xf32>
    %241 = arith.truncf %240 : vector<1x192xf32> to vector<1x192xbf16>
    %c0_194 = arith.constant 0 : index
    %c0_195 = arith.constant 0 : index
    %242 = vector.load %arg10[%c0_194, %c0_195] : memref<192x128xf32, #tpu.memory_space<vmem>>, vector<192x128xf32>
    %243 = arith.truncf %242 : vector<192x128xf32> to vector<192x128xbf16>
    %cst_196 = arith.constant dense<0.000000e+00> : vector<1x128xf32>
    %244 = tpu.matmul %241, %243, %cst_196 {dimension_numbers = #tpu.dot_dimension_numbers<[1], [0], [0], [1], [0, 0, 1, 1], [], []>} : vector<1x192xbf16>, vector<192x128xbf16>, vector<1x128xf32> -> vector<1x128xf32>
    %c0_197 = arith.constant 0 : index
    %c0_198 = arith.constant 0 : index
    %245 = vector.load %arg11[%c0_197, %c0_198] : memref<1x128xf32, #tpu.memory_space<vmem>>, vector<1x128xf32>
    %246 = arith.addf %244, %245 : vector<1x128xf32>
    %cst_199 = arith.constant 0.000000e+00 : f32
    %247 = vector.broadcast %cst_199 : f32 to vector<1x128xf32>
    %248 = arith.cmpf oge, %246, %247 : vector<1x128xf32>
    %cst_200 = arith.constant 1.000000e-01 : f32
    %249 = vector.broadcast %cst_200 : f32 to vector<1x128xf32>
    %250 = arith.mulf %249, %246 : vector<1x128xf32>
    %251 = arith.select %248, %246, %250 : vector<1x128xi1>, vector<1x128xf32>
    %c0_201 = arith.constant 0 : index
    %c0_202 = arith.constant 0 : index
    %c0_203 = arith.constant 0 : index
    %252 = vector.load %arg12[%c0_201, %c0_202, %c0_203] : memref<1x1x128xf32, #tpu.memory_space<vmem>>, vector<1x1x128xf32>
    %253 = vector.shape_cast %252 : vector<1x1x128xf32> to vector<1x128xf32>
    %254 = vector.shape_cast %251 : vector<1x128xf32> to vector<1x1x128xf32>
    tpu.vector_store %arg12[%c0_201, %c0_202, %c0_203], %254 {strides = array<i32>} : memref<1x1x128xf32, #tpu.memory_space<vmem>>, vector<1x1x128xf32>,
    return
  }
  func.func @transform_0(%arg0: i32) -> (i32, i32, i32) {
    %c0_i32 = arith.constant 0 : i32
    %c0_i32_0 = arith.constant 0 : i32
    %c0_i32_1 = arith.constant 0 : i32
    return %arg0, %c0_i32, %c0_i32_0 : i32, i32, i32
  }
  func.func @transform_1(%arg0: i32) -> (i32, i32) {
    %c0_i32 = arith.constant 0 : i32
    %c0_i32_0 = arith.constant 0 : i32
    %c0_i32_1 = arith.constant 0 : i32
    return %c0_i32, %c0_i32_0 : i32, i32
  }
  func.func @transform_2(%arg0: i32) -> (i32, i32) {
    %c0_i32 = arith.constant 0 : i32
    %c0_i32_0 = arith.constant 0 : i32
    %c0_i32_1 = arith.constant 0 : i32
    return %c0_i32, %c0_i32_0 : i32, i32
  }
  func.func @transform_3(%arg0: i32) -> (i32, i32) {
    %c0_i32 = arith.constant 0 : i32
    %c0_i32_0 = arith.constant 0 : i32
    %c0_i32_1 = arith.constant 0 : i32
    return %c0_i32, %c0_i32_0 : i32, i32
  }
  func.func @transform_4(%arg0: i32) -> (i32, i32) {
    %c0_i32 = arith.constant 0 : i32
    %c0_i32_0 = arith.constant 0 : i32
    %c0_i32_1 = arith.constant 0 : i32
    return %c0_i32, %c0_i32_0 : i32, i32
  }
  func.func @transform_5(%arg0: i32) -> (i32, i32) {
    %c0_i32 = arith.constant 0 : i32
    %c0_i32_0 = arith.constant 0 : i32
    %c0_i32_1 = arith.constant 0 : i32
    return %c0_i32, %c0_i32_0 : i32, i32
  }
  func.func @transform_6(%arg0: i32) -> (i32, i32) {
    %c0_i32 = arith.constant 0 : i32
    %c0_i32_0 = arith.constant 0 : i32
    %c0_i32_1 = arith.constant 0 : i32
    return %c0_i32, %c0_i32_0 : i32, i32
  }
  func.func @transform_7(%arg0: i32) -> (i32, i32) {
    %c0_i32 = arith.constant 0 : i32
    %c0_i32_0 = arith.constant 0 : i32
    %c0_i32_1 = arith.constant 0 : i32
    return %c0_i32, %c0_i32_0 : i32, i32
  }
  func.func @transform_8(%arg0: i32) -> (i32, i32) {
    %c0_i32 = arith.constant 0 : i32
    %c0_i32_0 = arith.constant 0 : i32
    %c0_i32_1 = arith.constant 0 : i32
    return %c0_i32, %c0_i32_0 : i32, i32
  }
  func.func @transform_9(%arg0: i32) -> (i32, i32) {
    %c0_i32 = arith.constant 0 : i32
    %c0_i32_0 = arith.constant 0 : i32
    %c0_i32_1 = arith.constant 0 : i32
    return %c0_i32, %c0_i32_0 : i32, i32
  }
  func.func @transform_10(%arg0: i32) -> (i32, i32) {
    %c0_i32 = arith.constant 0 : i32
    %c0_i32_0 = arith.constant 0 : i32
    %c0_i32_1 = arith.constant 0 : i32
    return %c0_i32, %c0_i32_0 : i32, i32
  }
  func.func @transform_11(%arg0: i32) -> (i32, i32, i32) {
    %c0_i32 = arith.constant 0 : i32
    %c0_i32_0 = arith.constant 0 : i32
    %c0_i32_1 = arith.constant 0 : i32
    return %arg0, %c0_i32, %c0_i32_0 : i32, i32, i32
  }
}

</mosaic_0001>

<llo_original>
// kernel: multi_scale_discriminator_forward.4
$region0: #{multi_scale_discriminator_forward.4}
  #allocation0 [shape = 'u32[]', space=smem, size = 0x4, offset = 0x4, fixed_abs, tag = 'smem constant byte address 0x4 - core index']
  #allocation1 [shape = 'u32[72,128]{1,0:T(1,128)}', space=vmem, size = 0x9000, scoped, tag = 'internal scratch']
  #allocation2 [shape = 'f32[17,192]{1,0:T(8,128)}', space=vmem, size = 0x6000, scoped, tag = 'scratch operand']
  #allocation3 [shape = 'f32[44,8]{1,0:T(8,128)}', space=vmem, size = 0x6000, scoped, tag = 'scratch operand']
  #allocation4 [shape = 'f32[24,16]{1,0:T(8,128)}', space=vmem, size = 0x3000, scoped, tag = 'scratch operand']
  #allocation5 [shape = 'f32[14,32]{1,0:T(8,128)}', space=vmem, size = 0x2000, scoped, tag = 'scratch operand']
  #allocation6 [shape = 'f32[10,64]{1,0:T(8,128)}', space=vmem, size = 0x2000, scoped, tag = 'scratch operand']
  %s0 = inlined_call_operand.vmem [shape: f32[2,49,1], index: 0, kind: input, shape index: {}]
  %s1 = inlined_call_operand.vmem [shape: f32[17,8], index: 1, kind: input, shape index: {}]
  %s2 = inlined_call_operand.vmem [shape: f32[1,8], index: 2, kind: input, shape index: {}]
  %s3 = inlined_call_operand.vmem [shape: f32[88,16], index: 3, kind: input, shape index: {}]
  %s4 = inlined_call_operand.vmem [shape: f32[1,16], index: 4, kind: input, shape index: {}]
  %s5 = inlined_call_operand.vmem [shape: f32[112,32], index: 5, kind: input, shape index: {}]
  %s6 = inlined_call_operand.vmem [shape: f32[1,32], index: 6, kind: input, shape index: {}]
  %s7 = inlined_call_operand.vmem [shape: f32[160,64], index: 7, kind: input, shape index: {}]
  %s8 = inlined_call_operand.vmem [shape: f32[1,64], index: 8, kind: input, shape index: {}]
  %s9 = inlined_call_operand.vmem [shape: f32[192,128], index: 9, kind: input, shape index: {}]
  %s10 = inlined_call_operand.vmem [shape: f32[1,128], index: 10, kind: input, shape index: {}]
  %s11 = inlined_call_operand.hbm [shape: f32[2,2,128], index: 11, kind: output, shape index: {}]
  %s12 = sld [smem:[#allocation0]]
  $region77: #{multi_scale_discriminator_forward.4} parent=0
    _
  %s14 = ssub.s32 1, %s12
  %s15 = scalar_select 0, %s14, %s12
  $region1: #{multi_scale_discriminator_forward.4} parent=0
    #allocation7 [shape = 'u8[2048]{0}', space=vmem, size = 0x800, scoped, tag = 'output window, operand 0']
    #allocation8 [shape = 's32[2]{0}', space=sflag, size = 0x8, scoped, tag = 'scoped memory for multi_scale_discriminator_forward.4']
    %16 = vsyncpa [#allocation8], 0
    %s17 = scalar_lea.sflag [#allocation8], 1
    %18 = vsyncpa %s17, 0
    loop: start=0, step=1, limit=4
    $region2: #{multi_scale_discriminator_forward.4} parent=1 // loop_pre_header
      _
    $region3: #{multi_scale_discriminator_forward.4} parent=1 // loop_header
      %s20 = sphi 0, %s24
      %p21 = scmp.ge.s32.totalorder %s20, 4
      %s30 = sphi 0, %s32
      %s33 = sphi 0, %s30
      %s34 = sphi 0, %s33
      %s50 = sphi 0, %s34
      %s54 = sphi 0, %s54
      %s56 = sphi 0, %s54
      %s57 = sphi 0, %s56
      %s71 = sphi 0, %s57
      %s75 = sphi 0, %s75
      %s77 = sphi 0, %s75
      %s78 = sphi 0, %s77
      %s92 = sphi 0, %s78
      %s96 = sphi 0, %s96
      %s98 = sphi 0, %s96
      %s99 = sphi 0, %s98
      %s113 = sphi 0, %s99
      %s117 = sphi 0, %s117
      %s119 = sphi 0, %s117
      %s120 = sphi 0, %s119
      %s134 = sphi 0, %s120
      %s138 = sphi 0, %s138
      %s140 = sphi 0, %s138
      %s141 = sphi 0, %s140
      %s155 = sphi 0, %s141
      %s159 = sphi 0, %s159
      %s161 = sphi 0, %s159
      %s162 = sphi 0, %s161
      %s176 = sphi 0, %s162
      %s180 = sphi 0, %s180
      %s182 = sphi 0, %s180
      %s183 = sphi 0, %s182
      %s197 = sphi 0, %s183
      %s201 = sphi 0, %s201
      %s203 = sphi 0, %s201
      %s204 = sphi 0, %s203
      %s218 = sphi 0, %s204
      %s222 = sphi 0, %s222
      %s224 = sphi 0, %s222
      %s225 = sphi 0, %s224
      %s239 = sphi 0, %s225
      %s243 = sphi 0, %s243
      %s245 = sphi 0, %s243
      %s246 = sphi 0, %s245
      %s260 = sphi 0, %s246
      %s266 = sphi 0, %s268
      %s269 = sphi 0, %s266
      %s270 = sphi 0, %s269
      %s286 = sphi 0, %s270
    $region4: #{multi_scale_discriminator_forward.4} parent=1 // loop_header_branch
      %23 = sbr.rel (%p21) target = $region8
    $region5: #{multi_scale_discriminator_forward.4} parent=1 // loop_body
      %s25 = ssub.s32 %s20, 1
      %s26 = ssub.s32 %s20, 2
      %s27 = sadd.s32 %s20, 1
      %s28 = ssub.s32 %s20, %s27
      %p29 = scmp.eq.s32.totalorder %s28, 0
      %s31 = sadd.s32 %s30, 1
      %s32 = scalar_select %p29, %s30, %s31
      %p35 = pneg %p29
      %p36 = scmp.eq.s32.totalorder %s20, 1
      %p37 = por %p35, %p36
      %p38 = scmp.ne.s32.totalorder %s30, %s33
      %p39 = scmp.eq.s32.totalorder %s20, 0
      %p40 = por %p38, %p39
      %p41 = scmp.ne.s32.totalorder %s30, %s33
      %p42 = scmp.eq.s32.totalorder %s25, 1
      %p43 = por %p41, %p42
      %p44 = scmp.ne.s32.totalorder %s33, %s34
      %p45 = scmp.eq.s32.totalorder %s25, 0
      %p46 = por %p44, %p45
      %p47 = scmp.ne.s32.totalorder %s33, %s34
      %p48 = scmp.eq.s32.totalorder %s26, 1
      %p49 = por %p47, %p48
      %p51 = scmp.ne.s32.totalorder %s34, %s50
      %p52 = scmp.eq.s32.totalorder %s26, 0
      %p53 = por %p51, %p52
      %s55 = sadd.s32 %s54, 1
      %p58 = scmp.eq.s32.totalorder %s20, 1
      %p59 = scmp.ne.s32.totalorder %s54, %s56
      %p60 = scmp.eq.s32.totalorder %s20, 0
      %p61 = por %p59, %p60
      %p62 = scmp.ne.s32.totalorder %s54, %s56
      %p63 = scmp.eq.s32.totalorder %s25, 1
      %p64 = por %p62, %p63
      %p65 = scmp.ne.s32.totalorder %s56, %s57
      %p66 = scmp.eq.s32.totalorder %s25, 0
      %p67 = por %p65, %p66
      %p68 = scmp.ne.s32.totalorder %s56, %s57
      %p69 = scmp.eq.s32.totalorder %s26, 1
      %p70 = por %p68, %p69
      %p72 = scmp.ne.s32.totalorder %s57, %s71
      %p73 = scmp.eq.s32.totalorder %s26, 0
      %p74 = por %p72, %p73
      %s76 = sadd.s32 %s75, 1
      %p79 = scmp.eq.s32.totalorder %s20, 1
      %p80 = scmp.ne.s32.totalorder %s75, %s77
      %p81 = scmp.eq.s32.totalorder %s20, 0
      %p82 = por %p80, %p81
      %p83 = scmp.ne.s32.totalorder %s75, %s77
      %p84 = scmp.eq.s32.totalorder %s25, 1
      %p85 = por %p83, %p84
      %p86 = scmp.ne.s32.totalorder %s77, %s78
      %p87 = scmp.eq.s32.totalorder %s25, 0
      %p88 = por %p86, %p87
      %p89 = scmp.ne.s32.totalorder %s77, %s78
      %p90 = scmp.eq.s32.totalorder %s26, 1
      %p91 = por %p89, %p90
      %p93 = scmp.ne.s32.totalorder %s78, %s92
      %p94 = scmp.eq.s32.totalorder %s26, 0
      %p95 = por %p93, %p94
      %s97 = sadd.s32 %s96, 1
      %p100 = scmp.eq.s32.totalorder %s20, 1
      %p101 = scmp.ne.s32.totalorder %s96, %s98
      %p102 = scmp.eq.s32.totalorder %s20, 0
      %p103 = por %p101, %p102
      %p104 = scmp.ne.s32.totalorder %s96, %s98
      %p105 = scmp.eq.s32.totalorder %s25, 1
      %p106 = por %p104, %p105
      %p107 = scmp.ne.s32.totalorder %s98, %s99
      %p108 = scmp.eq.s32.totalorder %s25, 0
      %p109 = por %p107, %p108
      %p110 = scmp.ne.s32.totalorder %s98, %s99
      %p111 = scmp.eq.s32.totalorder %s26, 1
      %p112 = por %p110, %p111
      %p114 = scmp.ne.s32.totalorder %s99, %s113
      %p115 = scmp.eq.s32.totalorder %s26, 0
      %p116 = por %p114, %p115
      %s118 = sadd.s32 %s117, 1
      %p121 = scmp.eq.s32.totalorder %s20, 1
      %p122 = scmp.ne.s32.totalorder %s117, %s119
      %p123 = scmp.eq.s32.totalorder %s20, 0
      %p124 = por %p122, %p123
      %p125 = scmp.ne.s32.totalorder %s117, %s119
      %p126 = scmp.eq.s32.totalorder %s25, 1
      %p127 = por %p125, %p126
      %p128 = scmp.ne.s32.totalorder %s119, %s120
      %p129 = scmp.eq.s32.totalorder %s25, 0
      %p130 = por %p128, %p129
      %p131 = scmp.ne.s32.totalorder %s119, %s120
      %p132 = scmp.eq.s32.totalorder %s26, 1
      %p133 = por %p131, %p132
      %p135 = scmp.ne.s32.totalorder %s120, %s134
      %p136 = scmp.eq.s32.totalorder %s26, 0
      %p137 = por %p135, %p136
      %s139 = sadd.s32 %s138, 1
      %p142 = scmp.eq.s32.totalorder %s20, 1
      %p143 = scmp.ne.s32.totalorder %s138, %s140
      %p144 = scmp.eq.s32.totalorder %s20, 0
      %p145 = por %p143, %p144
      %p146 = scmp.ne.s32.totalorder %s138, %s140
      %p147 = scmp.eq.s32.totalorder %s25, 1
      %p148 = por %p146, %p147
      %p149 = scmp.ne.s32.totalorder %s140, %s141
      %p150 = scmp.eq.s32.totalorder %s25, 0
      %p151 = por %p149, %p150
      %p152 = scmp.ne.s32.totalorder %s140, %s141
      %p153 = scmp.eq.s32.totalorder %s26, 1
      %p154 = por %p152, %p153
      %p156 = scmp.ne.s32.totalorder %s141, %s155
      %p157 = scmp.eq.s32.totalorder %s26, 0
      %p158 = por %p156, %p157
      %s160 = sadd.s32 %s159, 1
      %p163 = scmp.eq.s32.totalorder %s20, 1
      %p164 = scmp.ne.s32.totalorder %s159, %s161
      %p165 = scmp.eq.s32.totalorder %s20, 0
      %p166 = por %p164, %p165
      %p167 = scmp.ne.s32.totalorder %s159, %s161
      %p168 = scmp.eq.s32.totalorder %s25, 1
      %p169 = por %p167, %p168
      %p170 = scmp.ne.s32.totalorder %s161, %s162
      %p171 = scmp.eq.s32.totalorder %s25, 0
      %p172 = por %p170, %p171
      %p173 = scmp.ne.s32.totalorder %s161, %s162
      %p174 = scmp.eq.s32.totalorder %s26, 1
      %p175 = por %p173, %p174
      %p177 = scmp.ne.s32.totalorder %s162, %s176
      %p178 = scmp.eq.s32.totalorder %s26, 0
      %p179 = por %p177, %p178
      %s181 = sadd.s32 %s180, 1
      %p184 = scmp.eq.s32.totalorder %s20, 1
      %p185 = scmp.ne.s32.totalorder %s180, %s182
      %p186 = scmp.eq.s32.totalorder %s20, 0
      %p187 = por %p185, %p186
      %p188 = scmp.ne.s32.totalorder %s180, %s182
      %p189 = scmp.eq.s32.totalorder %s25, 1
      %p190 = por %p188, %p189
      %p191 = scmp.ne.s32.totalorder %s182, %s183
      %p192 = scmp.eq.s32.totalorder %s25, 0
      %p193 = por %p191, %p192
      %p194 = scmp.ne.s32.totalorder %s182, %s183
      %p195 = scmp.eq.s32.totalorder %s26, 1
      %p196 = por %p194, %p195
      %p198 = scmp.ne.s32.totalorder %s183, %s197
      %p199 = scmp.eq.s32.totalorder %s26, 0
      %p200 = por %p198, %p199
      %s202 = sadd.s32 %s201, 1
      %p205 = scmp.eq.s32.totalorder %s20, 1
      %p206 = scmp.ne.s32.totalorder %s201, %s203
      %p207 = scmp.eq.s32.totalorder %s20, 0
      %p208 = por %p206, %p207
      %p209 = scmp.ne.s32.totalorder %s201, %s203
      %p210 = scmp.eq.s32.totalorder %s25, 1
      %p211 = por %p209, %p210
      %p212 = scmp.ne.s32.totalorder %s203, %s204
      %p213 = scmp.eq.s32.totalorder %s25, 0
      %p214 = por %p212, %p213
      %p215 = scmp.ne.s32.totalorder %s203, %s204
      %p216 = scmp.eq.s32.totalorder %s26, 1
      %p217 = por %p215, %p216
      %p219 = scmp.ne.s32.totalorder %s204, %s218
      %p220 = scmp.eq.s32.totalorder %s26, 0
      %p221 = por %p219, %p220
      %s223 = sadd.s32 %s222, 1
      %p226 = scmp.eq.s32.totalorder %s20, 1
      %p227 = scmp.ne.s32.totalorder %s222, %s224
      %p228 = scmp.eq.s32.totalorder %s20, 0
      %p229 = por %p227, %p228
      %p230 = scmp.ne.s32.totalorder %s222, %s224
      %p231 = scmp.eq.s32.totalorder %s25, 1
      %p232 = por %p230, %p231
      %p233 = scmp.ne.s32.totalorder %s224, %s225
      %p234 = scmp.eq.s32.totalorder %s25, 0
      %p235 = por %p233, %p234
      %p236 = scmp.ne.s32.totalorder %s224, %s225
      %p237 = scmp.eq.s32.totalorder %s26, 1
      %p238 = por %p236, %p237
      %p240 = scmp.ne.s32.totalorder %s225, %s239
      %p241 = scmp.eq.s32.totalorder %s26, 0
      %p242 = por %p240, %p241
      %s244 = sadd.s32 %s243, 1
      %p247 = scmp.eq.s32.totalorder %s20, 1
      %p248 = scmp.ne.s32.totalorder %s243, %s245
      %p249 = scmp.eq.s32.totalorder %s20, 0
      %p250 = por %p248, %p249
      %p251 = scmp.ne.s32.totalorder %s243, %s245
      %p252 = scmp.eq.s32.totalorder %s25, 1
      %p253 = por %p251, %p252
      %p254 = scmp.ne.s32.totalorder %s245, %s246
      %p255 = scmp.eq.s32.totalorder %s25, 0
      %p256 = por %p254, %p255
      %p257 = scmp.ne.s32.totalorder %s245, %s246
      %p258 = scmp.eq.s32.totalorder %s26, 1
      %p259 = por %p257, %p258
      %p261 = scmp.ne.s32.totalorder %s246, %s260
      %p262 = scmp.eq.s32.totalorder %s26, 0
      %p263 = por %p261, %p262
      %s264 = ssub.s32 %s20, %s27
      %p265 = scmp.eq.s32.totalorder %s264, 0
      %s267 = sadd.s32 %s266, 1
      %s268 = scalar_select %p265, %s266, %s267
      %p271 = pneg %p265
      %p272 = scmp.eq.s32.totalorder %s20, 1
      %p273 = por %p271, %p272
      %p274 = scmp.ne.s32.totalorder %s266, %s269
      %p275 = scmp.eq.s32.totalorder %s20, 0
      %p276 = por %p274, %p275
      %p277 = scmp.ne.s32.totalorder %s266, %s269
      %p278 = scmp.eq.s32.totalorder %s25, 1
      %p279 = por %p277, %p278
      %p280 = scmp.ne.s32.totalorder %s269, %s270
      %p281 = scmp.eq.s32.totalorder %s25, 0
      %p282 = por %p280, %p281
      %p283 = scmp.ne.s32.totalorder %s269, %s270
      %p284 = scmp.eq.s32.totalorder %s26, 1
      %p285 = por %p283, %p284
      %p287 = scmp.ne.s32.totalorder %s270, %s286
      %p288 = scmp.eq.s32.totalorder %s26, 0
      %p289 = por %p287, %p288
      %p290 = scmp.le.s32.totalorder 1, %s20
      %p291 = scmp.lt.s32.totalorder %s20, 3
      %p292 = pnand %p290, %p291
      %p293 = pneg %p292
      // Predicated region
      $region9: #{multi_scale_discriminator_forward.4} parent=5 // pred_check
        _
      $region10: #{multi_scale_discriminator_forward.4} parent=5 // pred_check_branch
        %295 = sbr.rel (%p292) target = $region12
      $region11: #{multi_scale_discriminator_forward.4} parent=5 // pred_region
        %s296 = ssub.s32 %s20, 1
        // Predicated region
        $region13: #{multi_scale_discriminator_forward.4} parent=11 // pred_check
          %p297 = pneg %p67
        $region14: #{multi_scale_discriminator_forward.4} parent=11 // pred_check_branch
          %299 = sbr.rel (%p297) target = $region16
        $region15: #{multi_scale_discriminator_forward.4} parent=11 // pred_region
          _
        $region16: #{multi_scale_discriminator_forward.4} parent=11 // pred_fallthru
          _
        // Predicated region
        $region17: #{multi_scale_discriminator_forward.4} parent=11 // pred_check
          %p300 = pneg %p88
        $region18: #{multi_scale_discriminator_forward.4} parent=11 // pred_check_branch
          %302 = sbr.rel (%p300) target = $region20
        $region19: #{multi_scale_discriminator_forward.4} parent=11 // pred_region
          _
        $region20: #{multi_scale_discriminator_forward.4} parent=11 // pred_fallthru
          _
        // Predicated region
        $region21: #{multi_scale_discriminator_forward.4} parent=11 // pred_check
          %p303 = pneg %p109
        $region22: #{multi_scale_discriminator_forward.4} parent=11 // pred_check_branch
          %305 = sbr.rel (%p303) target = $region24
        $region23: #{multi_scale_discriminator_forward.4} parent=11 // pred_region
          _
        $region24: #{multi_scale_discriminator_forward.4} parent=11 // pred_fallthru
          _
        // Predicated region
        $region25: #{multi_scale_discriminator_forward.4} parent=11 // pred_check
          %p306 = pneg %p130
        $region26: #{multi_scale_discriminator_forward.4} parent=11 // pred_check_branch
          %308 = sbr.rel (%p306) target = $region28
        $region27: #{multi_scale_discriminator_forward.4} parent=11 // pred_region
          _
        $region28: #{multi_scale_discriminator_forward.4} parent=11 // pred_fallthru
          _
        // Predicated region
        $region29: #{multi_scale_discriminator_forward.4} parent=11 // pred_check
          %p309 = pneg %p151
        $region30: #{multi_scale_discriminator_forward.4} parent=11 // pred_check_branch
          %311 = sbr.rel (%p309) target = $region32
        $region31: #{multi_scale_discriminator_forward.4} parent=11 // pred_region
          _
        $region32: #{multi_scale_discriminator_forward.4} parent=11 // pred_fallthru
          _
        // Predicated region
        $region33: #{multi_scale_discriminator_forward.4} parent=11 // pred_check
          %p312 = pneg %p172
        $region34: #{multi_scale_discriminator_forward.4} parent=11 // pred_check_branch
          %314 = sbr.rel (%p312) target = $region36
        $region35: #{multi_scale_discriminator_forward.4} parent=11 // pred_region
          _
        $region36: #{multi_scale_discriminator_forward.4} parent=11 // pred_fallthru
          _
        // Predicated region
        $region37: #{multi_scale_discriminator_forward.4} parent=11 // pred_check
          %p315 = pneg %p193
        $region38: #{multi_scale_discriminator_forward.4} parent=11 // pred_check_branch
          %317 = sbr.rel (%p315) target = $region40
        $region39: #{multi_scale_discriminator_forward.4} parent=11 // pred_region
          _
        $region40: #{multi_scale_discriminator_forward.4} parent=11 // pred_fallthru
          _
        // Predicated region
        $region41: #{multi_scale_discriminator_forward.4} parent=11 // pred_check
          %p318 = pneg %p214
        $region42: #{multi_scale_discriminator_forward.4} parent=11 // pred_check_branch
          %320 = sbr.rel (%p318) target = $region44
        $region43: #{multi_scale_discriminator_forward.4} parent=11 // pred_region
          _
        $region44: #{multi_scale_discriminator_forward.4} parent=11 // pred_fallthru
          _
        // Predicated region
        $region45: #{multi_scale_discriminator_forward.4} parent=11 // pred_check
          %p321 = pneg %p235
        $region46: #{multi_scale_discriminator_forward.4} parent=11 // pred_check_branch
          %323 = sbr.rel (%p321) target = $region48
        $region47: #{multi_scale_discriminator_forward.4} parent=11 // pred_region
          _
        $region48: #{multi_scale_discriminator_forward.4} parent=11 // pred_fallthru
          _
        // Predicated region
        $region49: #{multi_scale_discriminator_forward.4} parent=11 // pred_check
          %p324 = pneg %p256
        $region50: #{multi_scale_discriminator_forward.4} parent=11 // pred_check_branch
          %326 = sbr.rel (%p324) target = $region52
        $region51: #{multi_scale_discriminator_forward.4} parent=11 // pred_region
          _
        $region52: #{multi_scale_discriminator_forward.4} parent=11 // pred_fallthru
          _
      $region12: #{multi_scale_discriminator_forward.4} parent=5 // pred_fallthru
        _
      %p327 = scmp.lt.s32.totalorder %s20, 2
      // Predicated region
      $region53: #{multi_scale_discriminator_forward.4} parent=5 // pred_check
        %p328 = pneg %p327
      $region54: #{multi_scale_discriminator_forward.4} parent=5 // pred_check_branch
        %330 = sbr.rel (%p328) target = $region56
      $region55: #{multi_scale_discriminator_forward.4} parent=5 // pred_region
        // Predicated region
        $region57: #{multi_scale_discriminator_forward.4} parent=55 // pred_check
          %p331 = pneg %p40
        $region58: #{multi_scale_discriminator_forward.4} parent=55 // pred_check_branch
          %333 = sbr.rel (%p331) target = $region60
        $region59: #{multi_scale_discriminator_forward.4} parent=55 // pred_region
          %p334 = scmp.lt.s32.totalorder %s20, 1
          %s335 = scalar_select %p334, %s20, 1
          %s336 = smul.addr %s335, 7
          %s337 = smul.addr %s336, 8
          %s338 = scalar_lea.vmem %s0, %s337
        $region60: #{multi_scale_discriminator_forward.4} parent=55 // pred_fallthru
          _
      $region56: #{multi_scale_discriminator_forward.4} parent=5 // pred_fallthru
        _
      %p339 = scmp.le.s32.totalorder 1, %s20
      %p340 = scmp.lt.s32.totalorder %s20, 3
      %p341 = pnand %p339, %p340
      %p342 = pneg %p341
      // Predicated region
      $region61: #{multi_scale_discriminator_forward.4} parent=5 // pred_check
        _
      $region62: #{multi_scale_discriminator_forward.4} parent=5 // pred_check_branch
        %344 = sbr.rel (%p341) target = $region64
      $region63: #{multi_scale_discriminator_forward.4} parent=5 // pred_region
        %s345 = ssub.s32 %s20, 1
        %p346 = scmp.lt.s32.totalorder %s25, 1
        %s347 = scalar_select %p346, %s25, 1
        %s348 = smul.addr %s347, 7
        %s349 = smul.addr %s348, 8
        %s350 = scalar_lea.vmem %s0, %s349
        %p351 = pneg %p46
        %p352 = pneg %p43
        %p353 = pneg %p67
        %p354 = pneg %p64
        %p355 = pneg %p88
        %p356 = pneg %p85
        %p357 = pneg %p109
        %p358 = pneg %p106
        %p359 = pneg %p130
        %p360 = pneg %p127
        %p361 = pneg %p151
        %p362 = pneg %p148
        %p363 = pneg %p172
        %p364 = pneg %p169
        %p365 = pneg %p193
        %p366 = pneg %p190
        %p367 = pneg %p214
        %p368 = pneg %p211
        %p369 = pneg %p235
        %p370 = pneg %p232
        %p371 = pneg %p256
        %p372 = pneg %p253
        %p373 = pneg %p282
        %p374 = pneg %p279
        %s375 = sand.u32 %s269, 1
        %s376 = scalar_lea.sflag [#allocation8], %s375
        %s377 = sand.u32 %s269, 1
        %s378 = smul.addr %s377, 2
        %s379 = scalar_lea.vmem [#allocation7], %s378
        %p380 = scmp.lt.s32.totalorder %s25, 1
        %s381 = scalar_select %p380, %s25, 1
        %s382 = smul.addr %s381, 7
        %s383 = smul.addr %s382, 8
        %s384 = scalar_lea.vmem %s0, %s383
        %v386 = vld [vmem:[%s1] sm:$0xff]
        %v387 = vld [vmem:[%s1 + $0x8] sm:$0xff]
        %v388 = vld [vmem:[%s1 + $0x10] sm:$0x1]
        %v389 = vld [vmem:[%s384] sm:$0xff]
        %v390 = vld [vmem:[%s384 + $0x8] sm:$0xff]
        %v391 = vld [vmem:[%s384 + $0x10] sm:$0xff]
        %v392 = vld [vmem:[%s384 + $0x18] sm:$0xff]
        %v393 = vld [vmem:[%s384 + $0x20] sm:$0x1]
        %395 = vset.pattern.permute.xlu0 0
        %396 = vperm.xlu0 %395, %v389
        %v397 = vpop.permute.xlu0 %396
        %400 = vset.pattern.permute.xlu0 0
        %401 = vperm.xlu0 %400, %v390
        %v402 = vpop.permute.xlu0 %401
        %405 = vset.pattern.permute.xlu0 0
        %406 = vperm.xlu0 %405, %v391
        %v407 = vpop.permute.xlu0 %406
        %410 = vset.pattern.permute.xlu0 0
        %411 = vperm.xlu0 %410, %v392
        %v412 = vpop.permute.xlu0 %411
        %415 = vset.pattern.permute.xlu0 0
        %416 = vperm.xlu0 %415, %v393
        %v417 = vpop.permute.xlu0 %416
        %v419 = vperm.slane %v386, 0
        %v420 = vmul.f32 %v397, %v419
        %v421 = vmul.f32 %v402, %v419
        %v422 = vmul.f32 %v407, %v419
        %v423 = vmul.f32 %v412, %v419
        %v424 = vmul.f32 %v417, %v419
        %v425 = vadd.f32 %v420, 0.0
        %v426 = vadd.f32 %v421, 0.0
        %v427 = vadd.f32 %v422, 0.0
        %v428 = vadd.f32 %v423, 0.0
        %v429 = vadd.f32 %v424, 0.0
        %v430 = vld [vmem:[%s384 + $0x1] sm:$0xff]
        %v431 = vld [vmem:[%s384 + $0x9] sm:$0xff]
        %v432 = vld [vmem:[%s384 + $0x11] sm:$0xff]
        %v433 = vld [vmem:[%s384 + $0x19] sm:$0xff]
        %v434 = vld [vmem:[%s384 + $0x21] sm:$0x1]
        %436 = vset.pattern.permute.xlu0 0
        %437 = vperm.xlu0 %436, %v430
        %v438 = vpop.permute.xlu0 %437
        %441 = vset.pattern.permute.xlu0 0
        %442 = vperm.xlu0 %441, %v431
        %v443 = vpop.permute.xlu0 %442
        %446 = vset.pattern.permute.xlu0 0
        %447 = vperm.xlu0 %446, %v432
        %v448 = vpop.permute.xlu0 %447
        %451 = vset.pattern.permute.xlu0 0
        %452 = vperm.xlu0 %451, %v433
        %v453 = vpop.permute.xlu0 %452
        %456 = vset.pattern.permute.xlu0 0
        %457 = vperm.xlu0 %456, %v434
        %v458 = vpop.permute.xlu0 %457
        %v460 = vperm.slane %v386, 1
        %v461 = vmul.f32 %v438, %v460
        %v462 = vmul.f32 %v443, %v460
        %v463 = vmul.f32 %v448, %v460
        %v464 = vmul.f32 %v453, %v460
        %v465 = vmul.f32 %v458, %v460
        %v466 = vadd.f32 %v425, %v461
        %v467 = vadd.f32 %v426, %v462
        %v468 = vadd.f32 %v427, %v463
        %v469 = vadd.f32 %v428, %v464
        %v470 = vadd.f32 %v429, %v465
        %v471 = vld [vmem:[%s384 + $0x2] sm:$0xff]
        %v472 = vld [vmem:[%s384 + $0xa] sm:$0xff]
        %v473 = vld [vmem:[%s384 + $0x12] sm:$0xff]
        %v474 = vld [vmem:[%s384 + $0x1a] sm:$0xff]
        %v475 = vld [vmem:[%s384 + $0x22] sm:$0x1]
        %477 = vset.pattern.permute.xlu0 0
        %478 = vperm.xlu0 %477, %v471
        %v479 = vpop.permute.xlu0 %478
        %482 = vset.pattern.permute.xlu0 0
        %483 = vperm.xlu0 %482, %v472
        %v484 = vpop.permute.xlu0 %483
        %487 = vset.pattern.permute.xlu0 0
        %488 = vperm.xlu0 %487, %v473
        %v489 = vpop.permute.xlu0 %488
        %492 = vset.pattern.permute.xlu0 0
        %493 = vperm.xlu0 %492, %v474
        %v494 = vpop.permute.xlu0 %493
        %497 = vset.pattern.permute.xlu0 0
        %498 = vperm.xlu0 %497, %v475
        %v499 = vpop.permute.xlu0 %498
        %v501 = vperm.slane %v386, 2
        %v502 = vmul.f32 %v479, %v501
        %v503 = vmul.f32 %v484, %v501
        %v504 = vmul.f32 %v489, %v501
        %v505 = vmul.f32 %v494, %v501
        %v506 = vmul.f32 %v499, %v501
        %v507 = vadd.f32 %v466, %v502
        %v508 = vadd.f32 %v467, %v503
        %v509 = vadd.f32 %v468, %v504
        %v510 = vadd.f32 %v469, %v505
        %v511 = vadd.f32 %v470, %v506
        %v512 = vld [vmem:[%s384 + $0x3] sm:$0xff]
        %v513 = vld [vmem:[%s384 + $0xb] sm:$0xff]
        %v514 = vld [vmem:[%s384 + $0x13] sm:$0xff]
        %v515 = vld [vmem:[%s384 + $0x1b] sm:$0xff]
        %v516 = vld [vmem:[%s384 + $0x23] sm:$0x1]
        %518 = vset.pattern.permute.xlu0 0
        %519 = vperm.xlu0 %518, %v512
        %v520 = vpop.permute.xlu0 %519
        %523 = vset.pattern.permute.xlu0 0
        %524 = vperm.xlu0 %523, %v513
        %v525 = vpop.permute.xlu0 %524
        %528 = vset.pattern.permute.xlu0 0
        %529 = vperm.xlu0 %528, %v514
        %v530 = vpop.permute.xlu0 %529
        %533 = vset.pattern.permute.xlu0 0
        %534 = vperm.xlu0 %533, %v515
        %v535 = vpop.permute.xlu0 %534
        %538 = vset.pattern.permute.xlu0 0
        %539 = vperm.xlu0 %538, %v516
        %v540 = vpop.permute.xlu0 %539
        %v542 = vperm.slane %v386, 3
        %v543 = vmul.f32 %v520, %v542
        %v544 = vmul.f32 %v525, %v542
        %v545 = vmul.f32 %v530, %v542
        %v546 = vmul.f32 %v535, %v542
        %v547 = vmul.f32 %v540, %v542
        %v548 = vadd.f32 %v507, %v543
        %v549 = vadd.f32 %v508, %v544
        %v550 = vadd.f32 %v509, %v545
        %v551 = vadd.f32 %v510, %v546
        %v552 = vadd.f32 %v511, %v547
        %v553 = vld [vmem:[%s384 + $0x4] sm:$0xff]
        %v554 = vld [vmem:[%s384 + $0xc] sm:$0xff]
        %v555 = vld [vmem:[%s384 + $0x14] sm:$0xff]
        %v556 = vld [vmem:[%s384 + $0x1c] sm:$0xff]
        %v557 = vld [vmem:[%s384 + $0x24] sm:$0x1]
        %559 = vset.pattern.permute.xlu0 0
        %560 = vperm.xlu0 %559, %v553
        %v561 = vpop.permute.xlu0 %560
        %564 = vset.pattern.permute.xlu0 0
        %565 = vperm.xlu0 %564, %v554
        %v566 = vpop.permute.xlu0 %565
        %569 = vset.pattern.permute.xlu0 0
        %570 = vperm.xlu0 %569, %v555
        %v571 = vpop.permute.xlu0 %570
        %574 = vset.pattern.permute.xlu0 0
        %575 = vperm.xlu0 %574, %v556
        %v576 = vpop.permute.xlu0 %575
        %579 = vset.pattern.permute.xlu0 0
        %580 = vperm.xlu0 %579, %v557
        %v581 = vpop.permute.xlu0 %580
        %v583 = vperm.slane %v386, 4
        %v584 = vmul.f32 %v561, %v583
        %v585 = vmul.f32 %v566, %v583
        %v586 = vmul.f32 %v571, %v583
        %v587 = vmul.f32 %v576, %v583
        %v588 = vmul.f32 %v581, %v583
        %v589 = vadd.f32 %v548, %v584
        %v590 = vadd.f32 %v549, %v585
        %v591 = vadd.f32 %v550, %v586
        %v592 = vadd.f32 %v551, %v587
        %v593 = vadd.f32 %v552, %v588
        %v594 = vld [vmem:[%s384 + $0x5] sm:$0xff]
        %v595 = vld [vmem:[%s384 + $0xd] sm:$0xff]
        %v596 = vld [vmem:[%s384 + $0x15] sm:$0xff]
        %v597 = vld [vmem:[%s384 + $0x1d] sm:$0xff]
        %v598 = vld [vmem:[%s384 + $0x25] sm:$0x1]
        %600 = vset.pattern.permute.xlu0 0
        %601 = vperm.xlu0 %600, %v594
        %v602 = vpop.permute.xlu0 %601
        %605 = vset.pattern.permute.xlu0 0
        %606 = vperm.xlu0 %605, %v595
        %v607 = vpop.permute.xlu0 %606
        %610 = vset.pattern.permute.xlu0 0
        %611 = vperm.xlu0 %610, %v596
        %v612 = vpop.permute.xlu0 %611
        %615 = vset.pattern.permute.xlu0 0
        %616 = vperm.xlu0 %615, %v597
        %v617 = vpop.permute.xlu0 %616
        %620 = vset.pattern.permute.xlu0 0
        %621 = vperm.xlu0 %620, %v598
        %v622 = vpop.permute.xlu0 %621
        %v624 = vperm.slane %v386, 5
        %v625 = vmul.f32 %v602, %v624
        %v626 = vmul.f32 %v607, %v624
        %v627 = vmul.f32 %v612, %v624
        %v628 = vmul.f32 %v617, %v624
        %v629 = vmul.f32 %v622, %v624
        %v630 = vadd.f32 %v589, %v625
        %v631 = vadd.f32 %v590, %v626
        %v632 = vadd.f32 %v591, %v627
        %v633 = vadd.f32 %v592, %v628
        %v634 = vadd.f32 %v593, %v629
        %v635 = vld [vmem:[%s384 + $0x6] sm:$0xff]
        %v636 = vld [vmem:[%s384 + $0xe] sm:$0xff]
        %v637 = vld [vmem:[%s384 + $0x16] sm:$0xff]
        %v638 = vld [vmem:[%s384 + $0x1e] sm:$0xff]
        %v639 = vld [vmem:[%s384 + $0x26] sm:$0x1]
        %641 = vset.pattern.permute.xlu0 0
        %642 = vperm.xlu0 %641, %v635
        %v643 = vpop.permute.xlu0 %642
        %646 = vset.pattern.permute.xlu0 0
        %647 = vperm.xlu0 %646, %v636
        %v648 = vpop.permute.xlu0 %647
        %651 = vset.pattern.permute.xlu0 0
        %652 = vperm.xlu0 %651, %v637
        %v653 = vpop.permute.xlu0 %652
        %656 = vset.pattern.permute.xlu0 0
        %657 = vperm.xlu0 %656, %v638
        %v658 = vpop.permute.xlu0 %657
        %661 = vset.pattern.permute.xlu0 0
        %662 = vperm.xlu0 %661, %v639
        %v663 = vpop.permute.xlu0 %662
        %v665 = vperm.slane %v386, 6
        %v666 = vmul.f32 %v643, %v665
        %v667 = vmul.f32 %v648, %v665
        %v668 = vmul.f32 %v653, %v665
        %v669 = vmul.f32 %v658, %v665
        %v670 = vmul.f32 %v663, %v665
        %v671 = vadd.f32 %v630, %v666
        %v672 = vadd.f32 %v631, %v667
        %v673 = vadd.f32 %v632, %v668
        %v674 = vadd.f32 %v633, %v669
        %v675 = vadd.f32 %v634, %v670
        %v676 = vld [vmem:[%s384 + $0x7] sm:$0xff]
        %v677 = vld [vmem:[%s384 + $0xf] sm:$0xff]
        %v678 = vld [vmem:[%s384 + $0x17] sm:$0xff]
        %v679 = vld [vmem:[%s384 + $0x1f] sm:$0xff]
        %v680 = vld [vmem:[%s384 + $0x27] sm:$0x1]
        %682 = vset.pattern.permute.xlu0 0
        %683 = vperm.xlu0 %682, %v676
        %v684 = vpop.permute.xlu0 %683
        %687 = vset.pattern.permute.xlu0 0
        %688 = vperm.xlu0 %687, %v677
        %v689 = vpop.permute.xlu0 %688
        %692 = vset.pattern.permute.xlu0 0
        %693 = vperm.xlu0 %692, %v678
        %v694 = vpop.permute.xlu0 %693
        %697 = vset.pattern.permute.xlu0 0
        %698 = vperm.xlu0 %697, %v679
        %v699 = vpop.permute.xlu0 %698
        %702 = vset.pattern.permute.xlu0 0
        %703 = vperm.xlu0 %702, %v680
        %v704 = vpop.permute.xlu0 %703
        %v706 = vperm.slane %v386, 7
        %v707 = vmul.f32 %v684, %v706
        %v708 = vmul.f32 %v689, %v706
        %v709 = vmul.f32 %v694, %v706
        %v710 = vmul.f32 %v699, %v706
        %v711 = vmul.f32 %v704, %v706
        %v712 = vadd.f32 %v671, %v707
        %v713 = vadd.f32 %v672, %v708
        %v714 = vadd.f32 %v673, %v709
        %v715 = vadd.f32 %v674, %v710
        %v716 = vadd.f32 %v675, %v711
        %v717 = vld [vmem:[%s384 + $0x8] sm:$0xff]
        %v718 = vld [vmem:[%s384 + $0x10] sm:$0xff]
        %v719 = vld [vmem:[%s384 + $0x18] sm:$0xff]
        %v720 = vld [vmem:[%s384 + $0x20] sm:$0xff]
        %v721 = vld [vmem:[%s384 + $0x28] sm:$0x1]
        %723 = vset.pattern.permute.xlu0 0
        %724 = vperm.xlu0 %723, %v717
        %v725 = vpop.permute.xlu0 %724
        %728 = vset.pattern.permute.xlu0 0
        %729 = vperm.xlu0 %728, %v718
        %v730 = vpop.permute.xlu0 %729
        %733 = vset.pattern.permute.xlu0 0
        %734 = vperm.xlu0 %733, %v719
        %v735 = vpop.permute.xlu0 %734
        %738 = vset.pattern.permute.xlu0 0
        %739 = vperm.xlu0 %738, %v720
        %v740 = vpop.permute.xlu0 %739
        %743 = vset.pattern.permute.xlu0 0
        %744 = vperm.xlu0 %743, %v721
        %v745 = vpop.permute.xlu0 %744
        %v747 = vperm.slane %v387, 0
        %v748 = vmul.f32 %v725, %v747
        %v749 = vmul.f32 %v730, %v747
        %v750 = vmul.f32 %v735, %v747
        %v751 = vmul.f32 %v740, %v747
        %v752 = vmul.f32 %v745, %v747
        %v753 = vadd.f32 %v712, %v748
        %v754 = vadd.f32 %v713, %v749
        %v755 = vadd.f32 %v714, %v750
        %v756 = vadd.f32 %v715, %v751
        %v757 = vadd.f32 %v716, %v752
        %v758 = vld [vmem:[%s384 + $0x9] sm:$0xff]
        %v759 = vld [vmem:[%s384 + $0x11] sm:$0xff]
        %v760 = vld [vmem:[%s384 + $0x19] sm:$0xff]
        %v761 = vld [vmem:[%s384 + $0x21] sm:$0xff]
        %v762 = vld [vmem:[%s384 + $0x29] sm:$0x1]
        %764 = vset.pattern.permute.xlu0 0
        %765 = vperm.xlu0 %764, %v758
        %v766 = vpop.permute.xlu0 %765
        %769 = vset.pattern.permute.xlu0 0
        %770 = vperm.xlu0 %769, %v759
        %v771 = vpop.permute.xlu0 %770
        %774 = vset.pattern.permute.xlu0 0
        %775 = vperm.xlu0 %774, %v760
        %v776 = vpop.permute.xlu0 %775
        %779 = vset.pattern.permute.xlu0 0
        %780 = vperm.xlu0 %779, %v761
        %v781 = vpop.permute.xlu0 %780
        %784 = vset.pattern.permute.xlu0 0
        %785 = vperm.xlu0 %784, %v762
        %v786 = vpop.permute.xlu0 %785
        %v788 = vperm.slane %v387, 1
        %v789 = vmul.f32 %v766, %v788
        %v790 = vmul.f32 %v771, %v788
        %v791 = vmul.f32 %v776, %v788
        %v792 = vmul.f32 %v781, %v788
        %v793 = vmul.f32 %v786, %v788
        %v794 = vadd.f32 %v753, %v789
        %v795 = vadd.f32 %v754, %v790
        %v796 = vadd.f32 %v755, %v791
        %v797 = vadd.f32 %v756, %v792
        %v798 = vadd.f32 %v757, %v793
        %v799 = vld [vmem:[%s384 + $0xa] sm:$0xff]
        %v800 = vld [vmem:[%s384 + $0x12] sm:$0xff]
        %v801 = vld [vmem:[%s384 + $0x1a] sm:$0xff]
        %v802 = vld [vmem:[%s384 + $0x22] sm:$0xff]
        %v803 = vld [vmem:[%s384 + $0x2a] sm:$0x1]
        %805 = vset.pattern.permute.xlu0 0
        %806 = vperm.xlu0 %805, %v799
        %v807 = vpop.permute.xlu0 %806
        %810 = vset.pattern.permute.xlu0 0
        %811 = vperm.xlu0 %810, %v800
        %v812 = vpop.permute.xlu0 %811
        %815 = vset.pattern.permute.xlu0 0
        %816 = vperm.xlu0 %815, %v801
        %v817 = vpop.permute.xlu0 %816
        %820 = vset.pattern.permute.xlu0 0
        %821 = vperm.xlu0 %820, %v802
        %v822 = vpop.permute.xlu0 %821
        %825 = vset.pattern.permute.xlu0 0
        %826 = vperm.xlu0 %825, %v803
        %v827 = vpop.permute.xlu0 %826
        %v829 = vperm.slane %v387, 2
        %v830 = vmul.f32 %v807, %v829
        %v831 = vmul.f32 %v812, %v829
        %v832 = vmul.f32 %v817, %v829
        %v833 = vmul.f32 %v822, %v829
        %v834 = vmul.f32 %v827, %v829
        %v835 = vadd.f32 %v794, %v830
        %v836 = vadd.f32 %v795, %v831
        %v837 = vadd.f32 %v796, %v832
        %v838 = vadd.f32 %v797, %v833
        %v839 = vadd.f32 %v798, %v834
        %v840 = vld [vmem:[%s384 + $0xb] sm:$0xff]
        %v841 = vld [vmem:[%s384 + $0x13] sm:$0xff]
        %v842 = vld [vmem:[%s384 + $0x1b] sm:$0xff]
        %v843 = vld [vmem:[%s384 + $0x23] sm:$0xff]
        %v844 = vld [vmem:[%s384 + $0x2b] sm:$0x1]
        %846 = vset.pattern.permute.xlu0 0
        %847 = vperm.xlu0 %846, %v840
        %v848 = vpop.permute.xlu0 %847
        %851 = vset.pattern.permute.xlu0 0
        %852 = vperm.xlu0 %851, %v841
        %v853 = vpop.permute.xlu0 %852
        %856 = vset.pattern.permute.xlu0 0
        %857 = vperm.xlu0 %856, %v842
        %v858 = vpop.permute.xlu0 %857
        %861 = vset.pattern.permute.xlu0 0
        %862 = vperm.xlu0 %861, %v843
        %v863 = vpop.permute.xlu0 %862
        %866 = vset.pattern.permute.xlu0 0
        %867 = vperm.xlu0 %866, %v844
        %v868 = vpop.permute.xlu0 %867
        %v870 = vperm.slane %v387, 3
        %v871 = vmul.f32 %v848, %v870
        %v872 = vmul.f32 %v853, %v870
        %v873 = vmul.f32 %v858, %v870
        %v874 = vmul.f32 %v863, %v870
        %v875 = vmul.f32 %v868, %v870
        %v876 = vadd.f32 %v835, %v871
        %v877 = vadd.f32 %v836, %v872
        %v878 = vadd.f32 %v837, %v873
        %v879 = vadd.f32 %v838, %v874
        %v880 = vadd.f32 %v839, %v875
        %v881 = vld [vmem:[%s384 + $0xc] sm:$0xff]
        %v882 = vld [vmem:[%s384 + $0x14] sm:$0xff]
        %v883 = vld [vmem:[%s384 + $0x1c] sm:$0xff]
        %v884 = vld [vmem:[%s384 + $0x24] sm:$0xff]
        %v885 = vld [vmem:[%s384 + $0x2c] sm:$0x1]
        %887 = vset.pattern.permute.xlu0 0
        %888 = vperm.xlu0 %887, %v881
        %v889 = vpop.permute.xlu0 %888
        %892 = vset.pattern.permute.xlu0 0
        %893 = vperm.xlu0 %892, %v882
        %v894 = vpop.permute.xlu0 %893
        %897 = vset.pattern.permute.xlu0 0
        %898 = vperm.xlu0 %897, %v883
        %v899 = vpop.permute.xlu0 %898
        %902 = vset.pattern.permute.xlu0 0
        %903 = vperm.xlu0 %902, %v884
        %v904 = vpop.permute.xlu0 %903
        %907 = vset.pattern.permute.xlu0 0
        %908 = vperm.xlu0 %907, %v885
        %v909 = vpop.permute.xlu0 %908
        %v911 = vperm.slane %v387, 4
        %v912 = vmul.f32 %v889, %v911
        %v913 = vmul.f32 %v894, %v911
        %v914 = vmul.f32 %v899, %v911
        %v915 = vmul.f32 %v904, %v911
        %v916 = vmul.f32 %v909, %v911
        %v917 = vadd.f32 %v876, %v912
        %v918 = vadd.f32 %v877, %v913
        %v919 = vadd.f32 %v878, %v914
        %v920 = vadd.f32 %v879, %v915
        %v921 = vadd.f32 %v880, %v916
        %v922 = vld [vmem:[%s384 + $0xd] sm:$0xff]
        %v923 = vld [vmem:[%s384 + $0x15] sm:$0xff]
        %v924 = vld [vmem:[%s384 + $0x1d] sm:$0xff]
        %v925 = vld [vmem:[%s384 + $0x25] sm:$0xff]
        %v926 = vld [vmem:[%s384 + $0x2d] sm:$0x1]
        %928 = vset.pattern.permute.xlu0 0
        %929 = vperm.xlu0 %928, %v922
        %v930 = vpop.permute.xlu0 %929
        %933 = vset.pattern.permute.xlu0 0
        %934 = vperm.xlu0 %933, %v923
        %v935 = vpop.permute.xlu0 %934
        %938 = vset.pattern.permute.xlu0 0
        %939 = vperm.xlu0 %938, %v924
        %v940 = vpop.permute.xlu0 %939
        %943 = vset.pattern.permute.xlu0 0
        %944 = vperm.xlu0 %943, %v925
        %v945 = vpop.permute.xlu0 %944
        %948 = vset.pattern.permute.xlu0 0
        %949 = vperm.xlu0 %948, %v926
        %v950 = vpop.permute.xlu0 %949
        %v952 = vperm.slane %v387, 5
        %v953 = vmul.f32 %v930, %v952
        %v954 = vmul.f32 %v935, %v952
        %v955 = vmul.f32 %v940, %v952
        %v956 = vmul.f32 %v945, %v952
        %v957 = vmul.f32 %v950, %v952
        %v958 = vadd.f32 %v917, %v953
        %v959 = vadd.f32 %v918, %v954
        %v960 = vadd.f32 %v919, %v955
        %v961 = vadd.f32 %v920, %v956
        %v962 = vadd.f32 %v921, %v957
        %v963 = vld [vmem:[%s384 + $0xe] sm:$0xff]
        %v964 = vld [vmem:[%s384 + $0x16] sm:$0xff]
        %v965 = vld [vmem:[%s384 + $0x1e] sm:$0xff]
        %v966 = vld [vmem:[%s384 + $0x26] sm:$0xff]
        %v967 = vld [vmem:[%s384 + $0x2e] sm:$0x1]
        %969 = vset.pattern.permute.xlu0 0
        %970 = vperm.xlu0 %969, %v963
        %v971 = vpop.permute.xlu0 %970
        %974 = vset.pattern.permute.xlu0 0
        %975 = vperm.xlu0 %974, %v964
        %v976 = vpop.permute.xlu0 %975
        %979 = vset.pattern.permute.xlu0 0
        %980 = vperm.xlu0 %979, %v965
        %v981 = vpop.permute.xlu0 %980
        %984 = vset.pattern.permute.xlu0 0
        %985 = vperm.xlu0 %984, %v966
        %v986 = vpop.permute.xlu0 %985
        %989 = vset.pattern.permute.xlu0 0
        %990 = vperm.xlu0 %989, %v967
        %v991 = vpop.permute.xlu0 %990
        %v993 = vperm.slane %v387, 6
        %v994 = vmul.f32 %v971, %v993
        %v995 = vmul.f32 %v976, %v993
        %v996 = vmul.f32 %v981, %v993
        %v997 = vmul.f32 %v986, %v993
        %v998 = vmul.f32 %v991, %v993
        %v999 = vadd.f32 %v958, %v994
        %v1000 = vadd.f32 %v959, %v995
        %v1001 = vadd.f32 %v960, %v996
        %v1002 = vadd.f32 %v961, %v997
        %v1003 = vadd.f32 %v962, %v998
        %v1004 = vld [vmem:[%s384 + $0xf] sm:$0xff]
        %v1005 = vld [vmem:[%s384 + $0x17] sm:$0xff]
        %v1006 = vld [vmem:[%s384 + $0x1f] sm:$0xff]
        %v1007 = vld [vmem:[%s384 + $0x27] sm:$0xff]
        %v1008 = vld [vmem:[%s384 + $0x2f] sm:$0x1]
        %1010 = vset.pattern.permute.xlu0 0
        %1011 = vperm.xlu0 %1010, %v1004
        %v1012 = vpop.permute.xlu0 %1011
        %1015 = vset.pattern.permute.xlu0 0
        %1016 = vperm.xlu0 %1015, %v1005
        %v1017 = vpop.permute.xlu0 %1016
        %1020 = vset.pattern.permute.xlu0 0
        %1021 = vperm.xlu0 %1020, %v1006
        %v1022 = vpop.permute.xlu0 %1021
        %1025 = vset.pattern.permute.xlu0 0
        %1026 = vperm.xlu0 %1025, %v1007
        %v1027 = vpop.permute.xlu0 %1026
        %1030 = vset.pattern.permute.xlu0 0
        %1031 = vperm.xlu0 %1030, %v1008
        %v1032 = vpop.permute.xlu0 %1031
        %v1034 = vperm.slane %v387, 7
        %v1035 = vmul.f32 %v1012, %v1034
        %v1036 = vmul.f32 %v1017, %v1034
        %v1037 = vmul.f32 %v1022, %v1034
        %v1038 = vmul.f32 %v1027, %v1034
        %v1039 = vmul.f32 %v1032, %v1034
        %v1040 = vadd.f32 %v999, %v1035
        %v1041 = vadd.f32 %v1000, %v1036
        %v1042 = vadd.f32 %v1001, %v1037
        %v1043 = vadd.f32 %v1002, %v1038
        %v1044 = vadd.f32 %v1003, %v1039
        %v1045 = vld [vmem:[%s384 + $0x10] sm:$0xff]
        %v1046 = vld [vmem:[%s384 + $0x18] sm:$0xff]
        %v1047 = vld [vmem:[%s384 + $0x20] sm:$0xff]
        %v1048 = vld [vmem:[%s384 + $0x28] sm:$0xff]
        %v1049 = vld [vmem:[%s384 + $0x30] sm:$0x1]
        %1051 = vset.pattern.permute.xlu0 0
        %1052 = vperm.xlu0 %1051, %v1045
        %v1053 = vpop.permute.xlu0 %1052
        %1056 = vset.pattern.permute.xlu0 0
        %1057 = vperm.xlu0 %1056, %v1046
        %v1058 = vpop.permute.xlu0 %1057
        %1061 = vset.pattern.permute.xlu0 0
        %1062 = vperm.xlu0 %1061, %v1047
        %v1063 = vpop.permute.xlu0 %1062
        %1066 = vset.pattern.permute.xlu0 0
        %1067 = vperm.xlu0 %1066, %v1048
        %v1068 = vpop.permute.xlu0 %1067
        %1071 = vset.pattern.permute.xlu0 0
        %1072 = vperm.xlu0 %1071, %v1049
        %v1073 = vpop.permute.xlu0 %1072
        %v1075 = vperm.slane %v388, 0
        %v1076 = vmul.f32 %v1053, %v1075
        %v1077 = vmul.f32 %v1058, %v1075
        %v1078 = vmul.f32 %v1063, %v1075
        %v1079 = vmul.f32 %v1068, %v1075
        %v1080 = vmul.f32 %v1073, %v1075
        %v1081 = vadd.f32 %v1040, %v1076
        %v1082 = vadd.f32 %v1041, %v1077
        %v1083 = vadd.f32 %v1042, %v1078
        %v1084 = vadd.f32 %v1043, %v1079
        %v1085 = vadd.f32 %v1044, %v1080
        %v1086 = vld [vmem:[%s2] sm:$0x1]
        %v1088 = vperm.slane %v1086, 0
        %v1090 = vadd.f32 %v1081, %v1088
        %v1091 = vadd.f32 %v1082, %v1088
        %v1092 = vadd.f32 %v1083, %v1088
        %v1093 = vadd.f32 %v1084, %v1088
        %v1094 = vadd.f32 %v1085, %v1088
        %vm1095 = vcmp.ge.f32.partialorder %v1090, 0.0
        %vm1096 = vcmp.ge.f32.partialorder %v1091, 0.0
        %vm1097 = vcmp.ge.f32.partialorder %v1092, 0.0
        %vm1098 = vcmp.ge.f32.partialorder %v1093, 0.0
        %vm1099 = vcmp.ge.f32.partialorder %v1094, 0.0
        %v1100 = vmul.f32 %v1090, 0.1
        %v1101 = vmul.f32 %v1091, 0.1
        %v1102 = vmul.f32 %v1092, 0.1
        %v1103 = vmul.f32 %v1093, 0.1
        %v1104 = vmul.f32 %v1094, 0.1
        %v1105 = vsel %vm1095, %v1090, %v1100
        %v1106 = vsel %vm1096, %v1091, %v1101
        %v1107 = vsel %vm1097, %v1092, %v1102
        %v1108 = vsel %vm1098, %v1093, %v1103
        %v1109 = vsel %vm1099, %v1094, %v1104
        %vm1110 = vcmask 61440
        %1111 = vst.msk [vmem:[#allocation3] sm:$0x1f] %vm1110, 0.0
        %vm1112 = vcmask 64512
        %1113 = vst.msk [vmem:[#allocation3 + $0x5] sm:$0xff] %vm1112, %v1105
        %1114 = vst.msk [vmem:[#allocation3 + $0xd] sm:$0xff] %vm1112, %v1106
        %1115 = vst.msk [vmem:[#allocation3 + $0x15] sm:$0xff] %vm1112, %v1107
        %1116 = vst.msk [vmem:[#allocation3 + $0x1d] sm:$0xff] %vm1112, %v1108
        %vm1117 = vcmask 57344
        %1118 = vst.msk [vmem:[#allocation3 + $0x25] sm:$0x1] %vm1117, %v1109
        %vm1119 = vcmask 62464
        %1120 = vst.msk [vmem:[#allocation3 + $0x26] sm:$0x3f] %vm1119, 0.0
        %v1121 = vld [vmem:[#allocation3] ss:$2 sm:$0xff]
        %s1122 = scalar_lea.vmem [#allocation3], 16
        %v1123 = vld [vmem:[%s1122] ss:$2 sm:$0xff]
        %s1124 = scalar_lea.vmem [#allocation3], 32
        %v1125 = vld [vmem:[%s1124] ss:$2 sm:$0x1]
        %1126 = vst.msk [vmem:[#allocation2] sm:$0xff] %vm1112, %v1121
        %1127 = vst.msk [vmem:[#allocation2 + $0x10] sm:$0xff] %vm1112, %v1123
        %1128 = vst.msk [vmem:[#allocation2 + $0x20] sm:$0x1] %vm1117, %v1125
        %s1129 = scalar_lea.vmem [#allocation3], 1
        %v1130 = vld [vmem:[%s1129] ss:$2 sm:$0xff]
        %s1131 = scalar_lea.vmem [#allocation3], 17
        %v1132 = vld [vmem:[%s1131] ss:$2 sm:$0xff]
        %s1133 = scalar_lea.vmem [#allocation3], 33
        %v1134 = vld [vmem:[%s1133] ss:$2 sm:$0x1]
        %1138 = vrot.lane.b32.xlu0 %v1130, 8
        %v1139 = vpop.permute.xlu0 %1138
        %1140 = vrot.lane.b32.xlu0 %v1132, 8
        %v1141 = vpop.permute.xlu0 %1140
        %1142 = vrot.lane.b32.xlu0 %v1134, 8
        %v1143 = vpop.permute.xlu0 %1142
        %vm1147 = vcmask 130112
        %1148 = vst.msk [vmem:[#allocation2] sm:$0xff] %vm1147, %v1139
        %1149 = vst.msk [vmem:[#allocation2 + $0x10] sm:$0xff] %vm1147, %v1141
        %vm1150 = vcmask 122944
        %1151 = vst.msk [vmem:[#allocation2 + $0x20] sm:$0x1] %vm1150, %v1143
        %s1152 = scalar_lea.vmem [#allocation3], 2
        %v1153 = vld [vmem:[%s1152] ss:$2 sm:$0xff]
        %s1154 = scalar_lea.vmem [#allocation3], 18
        %v1155 = vld [vmem:[%s1154] ss:$2 sm:$0xff]
        %s1156 = scalar_lea.vmem [#allocation3], 34
        %v1157 = vld [vmem:[%s1156] ss:$2 sm:$0x1]
        %1161 = vrot.lane.b32.xlu0 %v1153, 16
        %v1162 = vpop.permute.xlu0 %1161
        %1163 = vrot.lane.b32.xlu0 %v1155, 16
        %v1164 = vpop.permute.xlu0 %1163
        %1165 = vrot.lane.b32.xlu0 %v1157, 16
        %v1166 = vpop.permute.xlu0 %1165
        %vm1170 = vcmask 195712
        %1171 = vst.msk [vmem:[#allocation2] sm:$0xff] %vm1170, %v1162
        %1172 = vst.msk [vmem:[#allocation2 + $0x10] sm:$0xff] %vm1170, %v1164
        %vm1173 = vcmask 188544
        %1174 = vst.msk [vmem:[#allocation2 + $0x20] sm:$0x1] %vm1173, %v1166
        %s1175 = scalar_lea.vmem [#allocation3], 3
        %v1176 = vld [vmem:[%s1175] ss:$2 sm:$0xff]
        %s1177 = scalar_lea.vmem [#allocation3], 19
        %v1178 = vld [vmem:[%s1177] ss:$2 sm:$0xff]
        %s1179 = scalar_lea.vmem [#allocation3], 35
        %v1180 = vld [vmem:[%s1179] ss:$2 sm:$0x1]
        %1184 = vrot.lane.b32.xlu0 %v1176, 24
        %v1185 = vpop.permute.xlu0 %1184
        %1186 = vrot.lane.b32.xlu0 %v1178, 24
        %v1187 = vpop.permute.xlu0 %1186
        %1188 = vrot.lane.b32.xlu0 %v1180, 24
        %v1189 = vpop.permute.xlu0 %1188
        %vm1193 = vcmask 261312
        %1194 = vst.msk [vmem:[#allocation2] sm:$0xff] %vm1193, %v1185
        %1195 = vst.msk [vmem:[#allocation2 + $0x10] sm:$0xff] %vm1193, %v1187
        %vm1196 = vcmask 254144
        %1197 = vst.msk [vmem:[#allocation2 + $0x20] sm:$0x1] %vm1196, %v1189
        %s1198 = scalar_lea.vmem [#allocation3], 4
        %v1199 = vld [vmem:[%s1198] ss:$2 sm:$0xff]
        %s1200 = scalar_lea.vmem [#allocation3], 20
        %v1201 = vld [vmem:[%s1200] ss:$2 sm:$0xff]
        %s1202 = scalar_lea.vmem [#allocation3], 36
        %v1203 = vld [vmem:[%s1202] ss:$2 sm:$0x1]
        %1207 = vrot.lane.b32.xlu0 %v1199, 32
        %v1208 = vpop.permute.xlu0 %1207
        %1209 = vrot.lane.b32.xlu0 %v1201, 32
        %v1210 = vpop.permute.xlu0 %1209
        %1211 = vrot.lane.b32.xlu0 %v1203, 32
        %v1212 = vpop.permute.xlu0 %1211
        %vm1216 = vcmask 326912
        %1217 = vst.msk [vmem:[#allocation2] sm:$0xff] %vm1216, %v1208
        %1218 = vst.msk [vmem:[#allocation2 + $0x10] sm:$0xff] %vm1216, %v1210
        %vm1219 = vcmask 319744
        %1220 = vst.msk [vmem:[#allocation2 + $0x20] sm:$0x1] %vm1219, %v1212
        %s1221 = scalar_lea.vmem [#allocation3], 5
        %v1222 = vld [vmem:[%s1221] ss:$2 sm:$0xff]
        %s1223 = scalar_lea.vmem [#allocation3], 21
        %v1224 = vld [vmem:[%s1223] ss:$2 sm:$0xff]
        %s1225 = scalar_lea.vmem [#allocation3], 37
        %v1226 = vld [vmem:[%s1225] ss:$2 sm:$0x1]
        %1230 = vrot.lane.b32.xlu0 %v1222, 40
        %v1231 = vpop.permute.xlu0 %1230
        %1232 = vrot.lane.b32.xlu0 %v1224, 40
        %v1233 = vpop.permute.xlu0 %1232
        %1234 = vrot.lane.b32.xlu0 %v1226, 40
        %v1235 = vpop.permute.xlu0 %1234
        %vm1239 = vcmask 392512
        %1240 = vst.msk [vmem:[#allocation2] sm:$0xff] %vm1239, %v1231
        %1241 = vst.msk [vmem:[#allocation2 + $0x10] sm:$0xff] %vm1239, %v1233
        %vm1242 = vcmask 385344
        %1243 = vst.msk [vmem:[#allocation2 + $0x20] sm:$0x1] %vm1242, %v1235
        %s1244 = scalar_lea.vmem [#allocation3], 6
        %v1245 = vld [vmem:[%s1244] ss:$2 sm:$0xff]
        %s1246 = scalar_lea.vmem [#allocation3], 22
        %v1247 = vld [vmem:[%s1246] ss:$2 sm:$0xff]
        %s1248 = scalar_lea.vmem [#allocation3], 38
        %v1249 = vld [vmem:[%s1248] ss:$2 sm:$0x1]
        %1253 = vrot.lane.b32.xlu0 %v1245, 48
        %v1254 = vpop.permute.xlu0 %1253
        %1255 = vrot.lane.b32.xlu0 %v1247, 48
        %v1256 = vpop.permute.xlu0 %1255
        %1257 = vrot.lane.b32.xlu0 %v1249, 48
        %v1258 = vpop.permute.xlu0 %1257
        %vm1262 = vcmask 458112
        %1263 = vst.msk [vmem:[#allocation2] sm:$0xff] %vm1262, %v1254
        %1264 = vst.msk [vmem:[#allocation2 + $0x10] sm:$0xff] %vm1262, %v1256
        %vm1265 = vcmask 450944
        %1266 = vst.msk [vmem:[#allocation2 + $0x20] sm:$0x1] %vm1265, %v1258
        %s1267 = scalar_lea.vmem [#allocation3], 7
        %v1268 = vld [vmem:[%s1267] ss:$2 sm:$0xff]
        %s1269 = scalar_lea.vmem [#allocation3], 23
        %v1270 = vld [vmem:[%s1269] ss:$2 sm:$0xff]
        %s1271 = scalar_lea.vmem [#allocation3], 39
        %v1272 = vld [vmem:[%s1271] ss:$2 sm:$0x1]
        %1276 = vrot.lane.b32.xlu0 %v1268, 56
        %v1277 = vpop.permute.xlu0 %1276
        %1278 = vrot.lane.b32.xlu0 %v1270, 56
        %v1279 = vpop.permute.xlu0 %1278
        %1280 = vrot.lane.b32.xlu0 %v1272, 56
        %v1281 = vpop.permute.xlu0 %1280
        %vm1285 = vcmask 523712
        %1286 = vst.msk [vmem:[#allocation2] sm:$0xff] %vm1285, %v1277
        %1287 = vst.msk [vmem:[#allocation2 + $0x10] sm:$0xff] %vm1285, %v1279
        %vm1288 = vcmask 516544
        %1289 = vst.msk [vmem:[#allocation2 + $0x20] sm:$0x1] %vm1288, %v1281
        %s1290 = scalar_lea.vmem [#allocation3], 8
        %v1291 = vld [vmem:[%s1290] ss:$2 sm:$0xff]
        %s1292 = scalar_lea.vmem [#allocation3], 24
        %v1293 = vld [vmem:[%s1292] ss:$2 sm:$0xff]
        %s1294 = scalar_lea.vmem [#allocation3], 40
        %v1295 = vld [vmem:[%s1294] ss:$2 sm:$0x1]
        %1299 = vrot.lane.b32.xlu0 %v1291, 64
        %v1300 = vpop.permute.xlu0 %1299
        %1301 = vrot.lane.b32.xlu0 %v1293, 64
        %v1302 = vpop.permute.xlu0 %1301
        %1303 = vrot.lane.b32.xlu0 %v1295, 64
        %v1304 = vpop.permute.xlu0 %1303
        %vm1308 = vcmask 589312
        %1309 = vst.msk [vmem:[#allocation2] sm:$0xff] %vm1308, %v1300
        %1310 = vst.msk [vmem:[#allocation2 + $0x10] sm:$0xff] %vm1308, %v1302
        %vm1311 = vcmask 582144
        %1312 = vst.msk [vmem:[#allocation2 + $0x20] sm:$0x1] %vm1311, %v1304
        %s1313 = scalar_lea.vmem [#allocation3], 9
        %v1314 = vld [vmem:[%s1313] ss:$2 sm:$0xff]
        %s1315 = scalar_lea.vmem [#allocation3], 25
        %v1316 = vld [vmem:[%s1315] ss:$2 sm:$0xff]
        %s1317 = scalar_lea.vmem [#allocation3], 41
        %v1318 = vld [vmem:[%s1317] ss:$2 sm:$0x1]
        %1322 = vrot.lane.b32.xlu0 %v1314, 72
        %v1323 = vpop.permute.xlu0 %1322
        %1324 = vrot.lane.b32.xlu0 %v1316, 72
        %v1325 = vpop.permute.xlu0 %1324
        %1326 = vrot.lane.b32.xlu0 %v1318, 72
        %v1327 = vpop.permute.xlu0 %1326
        %vm1331 = vcmask 654912
        %1332 = vst.msk [vmem:[#allocation2] sm:$0xff] %vm1331, %v1323
        %1333 = vst.msk [vmem:[#allocation2 + $0x10] sm:$0xff] %vm1331, %v1325
        %vm1334 = vcmask 647744
        %1335 = vst.msk [vmem:[#allocation2 + $0x20] sm:$0x1] %vm1334, %v1327
        %s1336 = scalar_lea.vmem [#allocation3], 10
        %v1337 = vld [vmem:[%s1336] ss:$2 sm:$0xff]
        %s1338 = scalar_lea.vmem [#allocation3], 26
        %v1339 = vld [vmem:[%s1338] ss:$2 sm:$0xff]
        %s1340 = scalar_lea.vmem [#allocation3], 42
        %v1341 = vld [vmem:[%s1340] ss:$2 sm:$0x1]
        %1345 = vrot.lane.b32.xlu0 %v1337, 80
        %v1346 = vpop.permute.xlu0 %1345
        %1347 = vrot.lane.b32.xlu0 %v1339, 80
        %v1348 = vpop.permute.xlu0 %1347
        %1349 = vrot.lane.b32.xlu0 %v1341, 80
        %v1350 = vpop.permute.xlu0 %1349
        %vm1354 = vcmask 720512
        %1355 = vst.msk [vmem:[#allocation2] sm:$0xff] %vm1354, %v1346
        %1356 = vst.msk [vmem:[#allocation2 + $0x10] sm:$0xff] %vm1354, %v1348
        %vm1357 = vcmask 713344
        %1358 = vst.msk [vmem:[#allocation2 + $0x20] sm:$0x1] %vm1357, %v1350
        %v1359 = vld [vmem:[#allocation2] sm:$0xff]
        %v1360 = vld [vmem:[#allocation2 + $0x10] sm:$0xff]
        %v1361 = vld [vmem:[#allocation2 + $0x20] sm:$0x1]
        %v1362 = vpack.c.bf16 %v1360, %v1359
        %v1363 = vpack.c.bf16 %v1361, %v1361
        %v1364 = vld [vmem:[%s3] sm:$0xff]
        %v1365 = vld [vmem:[%s3 + $0x8] sm:$0xff]
        %v1366 = vld [vmem:[%s3 + $0x10] sm:$0xff]
        %v1367 = vld [vmem:[%s3 + $0x18] sm:$0xff]
        %v1368 = vld [vmem:[%s3 + $0x20] sm:$0xff]
        %v1369 = vld [vmem:[%s3 + $0x28] sm:$0xff]
        %v1370 = vld [vmem:[%s3 + $0x30] sm:$0xff]
        %v1371 = vld [vmem:[%s3 + $0x38] sm:$0xff]
        %v1372 = vld [vmem:[%s3 + $0x40] sm:$0xff]
        %v1373 = vld [vmem:[%s3 + $0x48] sm:$0xff]
        %v1374 = vld [vmem:[%s3 + $0x50] sm:$0xff]
        %v1375 = vpack.c.bf16 %v1365, %v1364
        %v1376 = vpack.c.bf16 %v1367, %v1366
        %v1377 = vpack.c.bf16 %v1369, %v1368
        %v1378 = vpack.c.bf16 %v1371, %v1370
        %v1379 = vpack.c.bf16 %v1373, %v1372
        %v1380 = vpack.c.bf16 %v1374, %v1374
        %v1381 = vld [vmem:[%s4] sm:$0x1]
        %v1383 = vperm.slane %v1381, 0
        %vm1385 = vcmask 719872
        %v1387 = vsel %vm1385, %v1362, 0
        %v1390 = vsel %vm1385, %v1363, 0
        %vm1392 = vcmask 1043456
        %v1394 = vsel %vm1392, %v1380, 0
        %1396 = vmatpush.bf16.msra.mxu0 0
        %1397 = vmatpush.bf16.msra.mxu0 0
        %1398 = vmatpush.bf16.msra.mxu0 %v1394
        %1399 = vmatpush.bf16.msra.mxu0 %v1379
        %1400 = vmatpush.bf16.msra.mxu0 %v1378
        %1401 = vmatpush.bf16.msra.mxu0 %v1377
        %1402 = vmatpush.bf16.msra.mxu0 %v1376
        %1403 = vmatpush.bf16.msra.mxu0 %v1375
        %1404 = vmatmul.bf16.gmra.mxu0 %v1387
        %v1405 = vpop.f32.mrf.mxu0
        %v1406 = vadd.f32 %v1383, %v1405
        %v1407 = vpop.f32.mrf.mxu0
        %v1408 = vadd.f32 %v1383, %v1407
        %1409 = vmatmul.bf16.gmra.mxu0 %v1390
        %v1410 = vpop.f32.mrf.mxu0
        %v1411 = vadd.f32 %v1383, %v1410
        %v1412 = vpop.f32.mrf.mxu0
        %1413 = vdwg.mxu0
        %vm1414 = vcmp.ge.f32.partialorder %v1406, 0.0
        %vm1415 = vcmp.ge.f32.partialorder %v1408, 0.0
        %vm1416 = vcmp.ge.f32.partialorder %v1411, 0.0
        %v1417 = vmul.f32 %v1406, 0.1
        %v1418 = vmul.f32 %v1408, 0.1
        %v1419 = vmul.f32 %v1411, 0.1
        %v1420 = vsel %vm1414, %v1406, %v1417
        %v1421 = vsel %vm1415, %v1408, %v1418
        %v1422 = vsel %vm1416, %v1411, %v1419
        %vm1423 = vcmask 124928
        %1424 = vst.msk [vmem:[#allocation4] sm:$0x7] %vm1423, 0.0
        %vm1425 = vcmask 130048
        %1426 = vst.msk [vmem:[#allocation4 + $0x3] sm:$0xff] %vm1425, %v1420
        %1427 = vst.msk [vmem:[#allocation4 + $0xb] sm:$0xff] %vm1425, %v1421
        %vm1428 = vcmask 122880
        %1429 = vst.msk [vmem:[#allocation4 + $0x13] sm:$0x1] %vm1428, %v1422
        %vm1430 = vcmask 125952
        %1431 = vst.msk [vmem:[#allocation4 + $0x14] sm:$0xf] %vm1430, 0.0
        %v1432 = vld [vmem:[#allocation4] ss:$2 sm:$0xff]
        %s1433 = scalar_lea.vmem [#allocation4], 16
        %v1434 = vld [vmem:[%s1433] ss:$2 sm:$0x1]
        %1435 = vst.msk [vmem:[#allocation2] sm:$0xff] %vm1425, %v1432
        %1436 = vst.msk [vmem:[#allocation2 + $0x10] sm:$0x1] %vm1428, %v1434
        %s1437 = scalar_lea.vmem [#allocation4], 1
        %v1438 = vld [vmem:[%s1437] ss:$2 sm:$0xff]
        %s1439 = scalar_lea.vmem [#allocation4], 17
        %v1440 = vld [vmem:[%s1439] ss:$2 sm:$0x1]
        %1443 = vrot.lane.b32.xlu0 %v1438, 16
        %v1444 = vpop.permute.xlu0 %1443
        %1445 = vrot.lane.b32.xlu0 %v1440, 16
        %v1446 = vpop.permute.xlu0 %1445
        %vm1449 = vcmask 261248
        %1450 = vst.msk [vmem:[#allocation2] sm:$0xff] %vm1449, %v1444
        %vm1451 = vcmask 254080
        %1452 = vst.msk [vmem:[#allocation2 + $0x10] sm:$0x1] %vm1451, %v1446
        %s1453 = scalar_lea.vmem [#allocation4], 2
        %v1454 = vld [vmem:[%s1453] ss:$2 sm:$0xff]
        %s1455 = scalar_lea.vmem [#allocation4], 18
        %v1456 = vld [vmem:[%s1455] ss:$2 sm:$0x1]
        %1459 = vrot.lane.b32.xlu0 %v1454, 32
        %v1460 = vpop.permute.xlu0 %1459
        %1461 = vrot.lane.b32.xlu0 %v1456, 32
        %v1462 = vpop.permute.xlu0 %1461
        %vm1465 = vcmask 392448
        %1466 = vst.msk [vmem:[#allocation2] sm:$0xff] %vm1465, %v1460
        %vm1467 = vcmask 385280
        %1468 = vst.msk [vmem:[#allocation2 + $0x10] sm:$0x1] %vm1467, %v1462
        %s1469 = scalar_lea.vmem [#allocation4], 3
        %v1470 = vld [vmem:[%s1469] ss:$2 sm:$0xff]
        %s1471 = scalar_lea.vmem [#allocation4], 19
        %v1472 = vld [vmem:[%s1471] ss:$2 sm:$0x1]
        %1475 = vrot.lane.b32.xlu0 %v1470, 48
        %v1476 = vpop.permute.xlu0 %1475
        %1477 = vrot.lane.b32.xlu0 %v1472, 48
        %v1478 = vpop.permute.xlu0 %1477
        %vm1481 = vcmask 523648
        %1482 = vst.msk [vmem:[#allocation2] sm:$0xff] %vm1481, %v1476
        %vm1483 = vcmask 516480
        %1484 = vst.msk [vmem:[#allocation2 + $0x10] sm:$0x1] %vm1483, %v1478
        %s1485 = scalar_lea.vmem [#allocation4], 4
        %v1486 = vld [vmem:[%s1485] ss:$2 sm:$0xff]
        %s1487 = scalar_lea.vmem [#allocation4], 20
        %v1488 = vld [vmem:[%s1487] ss:$2 sm:$0x1]
        %1491 = vrot.lane.b32.xlu0 %v1486, 64
        %v1492 = vpop.permute.xlu0 %1491
        %1493 = vrot.lane.b32.xlu0 %v1488, 64
        %v1494 = vpop.permute.xlu0 %1493
        %vm1497 = vcmask 654848
        %1498 = vst.msk [vmem:[#allocation2] sm:$0xff] %vm1497, %v1492
        %vm1499 = vcmask 647680
        %1500 = vst.msk [vmem:[#allocation2 + $0x10] sm:$0x1] %vm1499, %v1494
        %s1501 = scalar_lea.vmem [#allocation4], 5
        %v1502 = vld [vmem:[%s1501] ss:$2 sm:$0xff]
        %s1503 = scalar_lea.vmem [#allocation4], 21
        %v1504 = vld [vmem:[%s1503] ss:$2 sm:$0x1]
        %1507 = vrot.lane.b32.xlu0 %v1502, 80
        %v1508 = vpop.permute.xlu0 %1507
        %1509 = vrot.lane.b32.xlu0 %v1504, 80
        %v1510 = vpop.permute.xlu0 %1509
        %vm1513 = vcmask 786048
        %1514 = vst.msk [vmem:[#allocation2] sm:$0xff] %vm1513, %v1508
        %vm1515 = vcmask 778880
        %1516 = vst.msk [vmem:[#allocation2 + $0x10] sm:$0x1] %vm1515, %v1510
        %s1517 = scalar_lea.vmem [#allocation4], 6
        %v1518 = vld [vmem:[%s1517] ss:$2 sm:$0xff]
        %s1519 = scalar_lea.vmem [#allocation4], 22
        %v1520 = vld [vmem:[%s1519] ss:$2 sm:$0x1]
        %1523 = vrot.lane.b32.xlu0 %v1518, 96
        %v1524 = vpop.permute.xlu0 %1523
        %1525 = vrot.lane.b32.xlu0 %v1520, 96
        %v1526 = vpop.permute.xlu0 %1525
        %vm1529 = vcmask 917248
        %1530 = vst.msk [vmem:[#allocation2] sm:$0xff] %vm1529, %v1524
        %vm1531 = vcmask 910080
        %1532 = vst.msk [vmem:[#allocation2 + $0x10] sm:$0x1] %vm1531, %v1526
        %v1533 = vld [vmem:[#allocation2] sm:$0xff]
        %v1534 = vld [vmem:[#allocation2 + $0x10] sm:$0x1]
        %v1535 = vpack.c.bf16 %v1534, %v1533
        %v1536 = vld [vmem:[%s5] sm:$0xff]
        %v1537 = vld [vmem:[%s5 + $0x8] sm:$0xff]
        %v1538 = vld [vmem:[%s5 + $0x10] sm:$0xff]
        %v1539 = vld [vmem:[%s5 + $0x18] sm:$0xff]
        %v1540 = vld [vmem:[%s5 + $0x20] sm:$0xff]
        %v1541 = vld [vmem:[%s5 + $0x28] sm:$0xff]
        %v1542 = vld [vmem:[%s5 + $0x30] sm:$0xff]
        %v1543 = vld [vmem:[%s5 + $0x38] sm:$0xff]
        %v1544 = vld [vmem:[%s5 + $0x40] sm:$0xff]
        %v1545 = vld [vmem:[%s5 + $0x48] sm:$0xff]
        %v1546 = vld [vmem:[%s5 + $0x50] sm:$0xff]
        %v1547 = vld [vmem:[%s5 + $0x58] sm:$0xff]
        %v1548 = vld [vmem:[%s5 + $0x60] sm:$0xff]
        %v1549 = vld [vmem:[%s5 + $0x68] sm:$0xff]
        %v1550 = vpack.c.bf16 %v1537, %v1536
        %v1551 = vpack.c.bf16 %v1539, %v1538
        %v1552 = vpack.c.bf16 %v1541, %v1540
        %v1553 = vpack.c.bf16 %v1543, %v1542
        %v1554 = vpack.c.bf16 %v1545, %v1544
        %v1555 = vpack.c.bf16 %v1547, %v1546
        %v1556 = vpack.c.bf16 %v1549, %v1548
        %v1557 = vld [vmem:[%s6] sm:$0x1]
        %v1559 = vperm.slane %v1557, 0
        %vm1561 = vcmask 916480
        %v1563 = vsel %vm1561, %v1535, 0
        %1565 = vmatpush.bf16.msra.mxu0 0
        %1566 = vmatpush.bf16.msra.mxu0 %v1556
        %1567 = vmatpush.bf16.msra.mxu0 %v1555
        %1568 = vmatpush.bf16.msra.mxu0 %v1554
        %1569 = vmatpush.bf16.msra.mxu0 %v1553
        %1570 = vmatpush.bf16.msra.mxu0 %v1552
        %1571 = vmatpush.bf16.msra.mxu0 %v1551
        %1572 = vmatpush.bf16.msra.mxu0 %v1550
        %1573 = vmatmul.bf16.gmra.mxu0 %v1563
        %v1574 = vpop.f32.mrf.mxu0
        %v1575 = vadd.f32 %v1559, %v1574
        %v1576 = vpop.f32.mrf.mxu0
        %v1577 = vadd.f32 %v1559, %v1576
        %1578 = vdwg.mxu0
        %vm1579 = vcmp.ge.f32.partialorder %v1575, 0.0
        %vm1580 = vcmp.ge.f32.partialorder %v1577, 0.0
        %v1581 = vmul.f32 %v1575, 0.1
        %v1582 = vmul.f32 %v1577, 0.1
        %v1583 = vsel %vm1579, %v1575, %v1581
        %v1584 = vsel %vm1580, %v1577, %v1582
        %vm1585 = vcmask 254976
        %1586 = vst.msk [vmem:[#allocation5] sm:$0x3] %vm1585, 0.0
        %vm1587 = vcmask 261120
        %1588 = vst.msk [vmem:[#allocation5 + $0x2] sm:$0xff] %vm1587, %v1583
        %vm1589 = vcmask 253952
        %1590 = vst.msk [vmem:[#allocation5 + $0xa] sm:$0x1] %vm1589, %v1584
        %vm1591 = vcmask 256000
        %1592 = vst.msk [vmem:[#allocation5 + $0xb] sm:$0x7] %vm1591, 0.0
        %v1593 = vld [vmem:[#allocation5] ss:$2 sm:$0x1f]
        %vm1594 = vcmask 258048
        %1595 = vst.msk [vmem:[#allocation2] sm:$0x1f] %vm1594, %v1593
        %s1596 = scalar_lea.vmem [#allocation5], 1
        %v1597 = vld [vmem:[%s1596] ss:$2 sm:$0x1f]
        %1599 = vrot.lane.b32.xlu0 %v1597, 32
        %v1600 = vpop.permute.xlu0 %1599
        %vm1602 = vcmask 520448
        %1603 = vst.msk [vmem:[#allocation2] sm:$0x1f] %vm1602, %v1600
        %s1604 = scalar_lea.vmem [#allocation5], 2
        %v1605 = vld [vmem:[%s1604] ss:$2 sm:$0x1f]
        %1607 = vrot.lane.b32.xlu0 %v1605, 64
        %v1608 = vpop.permute.xlu0 %1607
        %vm1610 = vcmask 782848
        %1611 = vst.msk [vmem:[#allocation2] sm:$0x1f] %vm1610, %v1608
        %s1612 = scalar_lea.vmem [#allocation5], 3
        %v1613 = vld [vmem:[%s1612] ss:$2 sm:$0x1f]
        %1615 = vrot.lane.b32.xlu0 %v1613, 96
        %v1616 = vpop.permute.xlu0 %1615
        %vm1618 = vcmask 1045248
        %1619 = vst.msk [vmem:[#allocation2] sm:$0x1f] %vm1618, %v1616
        %s1620 = scalar_lea.vmem [#allocation5], 4
        %v1621 = vld [vmem:[%s1620] ss:$2 sm:$0x1f]
        %1622 = vst.msk [vmem:[#allocation2 + $0x8] sm:$0x1f] %vm1594, %v1621
        %v1623 = vld [vmem:[#allocation2] sm:$0x1f]
        %v1624 = vld [vmem:[#allocation2 + $0x8] sm:$0x1f]
        %v1625 = vpack.c.bf16 %v1623, %v1623
        %v1626 = vpack.c.bf16 %v1624, %v1624
        %v1627 = vld [vmem:[%s7] sm:$0xff]
        %v1628 = vld [vmem:[%s7 + $0x8] sm:$0xff]
        %v1629 = vld [vmem:[%s7 + $0x10] sm:$0xff]
        %v1630 = vld [vmem:[%s7 + $0x18] sm:$0xff]
        %v1631 = vld [vmem:[%s7 + $0x20] sm:$0xff]
        %v1632 = vld [vmem:[%s7 + $0x28] sm:$0xff]
        %v1633 = vld [vmem:[%s7 + $0x30] sm:$0xff]
        %v1634 = vld [vmem:[%s7 + $0x38] sm:$0xff]
        %v1635 = vld [vmem:[%s7 + $0x40] sm:$0xff]
        %v1636 = vld [vmem:[%s7 + $0x48] sm:$0xff]
        %v1637 = vld [vmem:[%s7 + $0x50] sm:$0xff]
        %v1638 = vld [vmem:[%s7 + $0x58] sm:$0xff]
        %v1639 = vld [vmem:[%s7 + $0x60] sm:$0xff]
        %v1640 = vld [vmem:[%s7 + $0x68] sm:$0xff]
        %v1641 = vld [vmem:[%s7 + $0x70] sm:$0xff]
        %v1642 = vld [vmem:[%s7 + $0x78] sm:$0xff]
        %v1643 = vld [vmem:[%s7 + $0x80] sm:$0xff]
        %v1644 = vld [vmem:[%s7 + $0x88] sm:$0xff]
        %v1645 = vld [vmem:[%s7 + $0x90] sm:$0xff]
        %v1646 = vld [vmem:[%s7 + $0x98] sm:$0xff]
        %v1647 = vpack.c.bf16 %v1628, %v1627
        %v1648 = vpack.c.bf16 %v1630, %v1629
        %v1649 = vpack.c.bf16 %v1632, %v1631
        %v1650 = vpack.c.bf16 %v1634, %v1633
        %v1651 = vpack.c.bf16 %v1636, %v1635
        %v1652 = vpack.c.bf16 %v1638, %v1637
        %v1653 = vpack.c.bf16 %v1640, %v1639
        %v1654 = vpack.c.bf16 %v1642, %v1641
        %v1655 = vpack.c.bf16 %v1644, %v1643
        %v1656 = vpack.c.bf16 %v1646, %v1645
        %v1657 = vld [vmem:[%s8] sm:$0x1]
        %v1659 = vperm.slane %v1657, 0
        %v1662 = vsel %vm1587, %v1626, 0
        %1664 = vmatpush.bf16.msra.mxu0 %v1654
        %1665 = vmatpush.bf16.msra.mxu0 %v1653
        %1666 = vmatpush.bf16.msra.mxu0 %v1652
        %1667 = vmatpush.bf16.msra.mxu0 %v1651
        %1668 = vmatpush.bf16.msra.mxu0 %v1650
        %1669 = vmatpush.bf16.msra.mxu0 %v1649
        %1670 = vmatpush.bf16.msra.mxu0 %v1648
        %1671 = vmatpush.bf16.msra.mxu0 %v1647
        %1672 = vmatmul.bf16.gmra.mxu0 %v1625
        %v1673 = vpop.f32.mrf.mxu0
        %v1674 = vadd.f32 %v1659, %v1673
        %v1675 = vpop.f32.mrf.mxu0
        %1676 = vdwg.mxu0
        %1677 = vmatpush.bf16.msra.mxu0 0
        %1678 = vmatpush.bf16.msra.mxu0 0
        %1679 = vmatpush.bf16.msra.mxu0 0
        %1680 = vmatpush.bf16.msra.mxu0 0
        %1681 = vmatpush.bf16.msra.mxu0 0
        %1682 = vmatpush.bf16.msra.mxu0 0
        %1683 = vmatpush.bf16.msra.mxu0 %v1656
        %1684 = vmatpush.bf16.msra.mxu0 %v1655
        %1685 = vmatmul.bf16.gmra.mxu0 %v1662
        %v1686 = vpop.f32.mrf.mxu0
        %v1687 = vadd.f32 %v1674, %v1686
        %v1688 = vpop.f32.mrf.mxu0
        %1689 = vdwg.mxu0
        %vm1690 = vcmp.ge.f32.partialorder %v1687, 0.0
        %v1691 = vmul.f32 %v1687, 0.1
        %v1692 = vsel %vm1690, %v1687, %v1691
        %vm1693 = vcmask 516096
        %1694 = vst.msk [vmem:[#allocation6] sm:$0x1] %vm1693, 0.0
        %vm1695 = vcmask 520192
        %1696 = vst.msk [vmem:[#allocation6 + $0x1] sm:$0x1f] %vm1695, %v1692
        %vm1697 = vcmask 519168
        %1698 = vst.msk [vmem:[#allocation6 + $0x6] sm:$0xf] %vm1697, 0.0
        %v1699 = vld [vmem:[#allocation6] ss:$4 sm:$0x3]
        %vm1700 = vcmask 517120
        %1701 = vst.msk [vmem:[#allocation2] sm:$0x3] %vm1700, %v1699
        %s1702 = scalar_lea.vmem [#allocation6], 1
        %v1703 = vld [vmem:[%s1702] ss:$4 sm:$0x3]
        %1705 = vrot.lane.b32.xlu0 %v1703, 64
        %v1706 = vpop.permute.xlu0 %1705
        %vm1708 = vcmask 1041920
        %1709 = vst.msk [vmem:[#allocation2] sm:$0x3] %vm1708, %v1706
        %s1710 = scalar_lea.vmem [#allocation6], 2
        %v1711 = vld [vmem:[%s1710] ss:$4 sm:$0x3]
        %1712 = vst.msk [vmem:[#allocation2 + $0x8] sm:$0x3] %vm1700, %v1711
        %v1713 = vld [vmem:[#allocation2] sm:$0x3]
        %v1714 = vld [vmem:[#allocation2 + $0x8] sm:$0x3]
        %v1715 = vpack.c.bf16 %v1713, %v1713
        %v1716 = vpack.c.bf16 %v1714, %v1714
        %v1717 = vld [vmem:[%s9] sm:$0xff]
        %v1718 = vld [vmem:[%s9 + $0x8] sm:$0xff]
        %v1719 = vld [vmem:[%s9 + $0x10] sm:$0xff]
        %v1720 = vld [vmem:[%s9 + $0x18] sm:$0xff]
        %v1721 = vld [vmem:[%s9 + $0x20] sm:$0xff]
        %v1722 = vld [vmem:[%s9 + $0x28] sm:$0xff]
        %v1723 = vld [vmem:[%s9 + $0x30] sm:$0xff]
        %v1724 = vld [vmem:[%s9 + $0x38] sm:$0xff]
        %v1725 = vld [vmem:[%s9 + $0x40] sm:$0xff]
        %v1726 = vld [vmem:[%s9 + $0x48] sm:$0xff]
        %v1727 = vld [vmem:[%s9 + $0x50] sm:$0xff]
        %v1728 = vld [vmem:[%s9 + $0x58] sm:$0xff]
        %v1729 = vld [vmem:[%s9 + $0x60] sm:$0xff]
        %v1730 = vld [vmem:[%s9 + $0x68] sm:$0xff]
        %v1731 = vld [vmem:[%s9 + $0x70] sm:$0xff]
        %v1732 = vld [vmem:[%s9 + $0x78] sm:$0xff]
        %v1733 = vld [vmem:[%s9 + $0x80] sm:$0xff]
        %v1734 = vld [vmem:[%s9 + $0x88] sm:$0xff]
        %v1735 = vld [vmem:[%s9 + $0x90] sm:$0xff]
        %v1736 = vld [vmem:[%s9 + $0x98] sm:$0xff]
        %v1737 = vld [vmem:[%s9 + $0xa0] sm:$0xff]
        %v1738 = vld [vmem:[%s9 + $0xa8] sm:$0xff]
        %v1739 = vld [vmem:[%s9 + $0xb0] sm:$0xff]
        %v1740 = vld [vmem:[%s9 + $0xb8] sm:$0xff]
        %v1741 = vpack.c.bf16 %v1718, %v1717
        %v1742 = vpack.c.bf16 %v1720, %v1719
        %v1743 = vpack.c.bf16 %v1722, %v1721
        %v1744 = vpack.c.bf16 %v1724, %v1723
        %v1745 = vpack.c.bf16 %v1726, %v1725
        %v1746 = vpack.c.bf16 %v1728, %v1727
        %v1747 = vpack.c.bf16 %v1730, %v1729
        %v1748 = vpack.c.bf16 %v1732, %v1731
        %v1749 = vpack.c.bf16 %v1734, %v1733
        %v1750 = vpack.c.bf16 %v1736, %v1735
        %v1751 = vpack.c.bf16 %v1738, %v1737
        %v1752 = vpack.c.bf16 %v1740, %v1739
        %v1753 = vld [vmem:[%s10] sm:$0x1]
        %v1755 = vperm.slane %v1753, 0
        %vm1757 = vcmask 523264
        %v1759 = vsel %vm1757, %v1716, 0
        %1761 = vmatpush.bf16.msra.mxu0 %v1748
        %1762 = vmatpush.bf16.msra.mxu0 %v1747
        %1763 = vmatpush.bf16.msra.mxu0 %v1746
        %1764 = vmatpush.bf16.msra.mxu0 %v1745
        %1765 = vmatpush.bf16.msra.mxu0 %v1744
        %1766 = vmatpush.bf16.msra.mxu0 %v1743
        %1767 = vmatpush.bf16.msra.mxu0 %v1742
        %1768 = vmatpush.bf16.msra.mxu0 %v1741
        %1769 = vmatmul.bf16.gmra.mxu0 %v1715
        %v1770 = vpop.f32.mrf.mxu0
        %v1771 = vadd.f32 %v1755, %v1770
        %v1772 = vpop.f32.mrf.mxu0
        %1773 = vdwg.mxu0
        %1774 = vmatpush.bf16.msra.mxu0 0
        %1775 = vmatpush.bf16.msra.mxu0 0
        %1776 = vmatpush.bf16.msra.mxu0 0
        %1777 = vmatpush.bf16.msra.mxu0 0
        %1778 = vmatpush.bf16.msra.mxu0 %v1752
        %1779 = vmatpush.bf16.msra.mxu0 %v1751
        %1780 = vmatpush.bf16.msra.mxu0 %v1750
        %1781 = vmatpush.bf16.msra.mxu0 %v1749
        %1782 = vmatmul.bf16.gmra.mxu0 %v1759
        %v1783 = vpop.f32.mrf.mxu0
        %v1784 = vadd.f32 %v1771, %v1783
        %v1785 = vpop.f32.mrf.mxu0
        %1786 = vdwg.mxu0
        %vm1787 = vcmp.ge.f32.partialorder %v1784, 0.0
        %v1788 = vmul.f32 %v1784, 0.1
        %v1789 = vsel %vm1787, %v1784, %v1788
        %1790 = vst [vmem:[%s379] sm:$0x3] %v1789
        %s1791 = sand.u32 %s269, 1
        %s1792 = scalar_lea.sflag [#allocation8], %s1791
        %s1793 = sand.u32 %s269, 1
        %s1794 = smul.addr %s1793, 2
        %s1795 = scalar_lea.vmem [#allocation7], %s1794
        // Predicated region
        $region65: #{multi_scale_discriminator_forward.4} parent=63 // pred_check
          %p1796 = pneg %p279
        $region66: #{multi_scale_discriminator_forward.4} parent=63 // pred_check_branch
          %1798 = sbr.rel (%p1796) target = $region68
        $region67: #{multi_scale_discriminator_forward.4} parent=63 // pred_region
          %1800 = vsyncadd %s1792, 0
          %s1801 = smul.addr %s25, 2
          %s1802 = scalar_lea.hbm %s11, %s1801
          %s1804 = sshll.u32 %s1795, 4
          %s1805 = int_to_ptr.vmem [resolvable:$true] %s1804
          %s1806 = sshll.u32 %s1802, 4
          %s1807 = int_to_ptr.hbm [resolvable:$true] %s1806
          %1809 = dma.vmem_to_hbm [thread:$0]  %s1805, 32, %s1807, %s1792
        $region68: #{multi_scale_discriminator_forward.4} parent=63 // pred_fallthru
          _
      $region64: #{multi_scale_discriminator_forward.4} parent=5 // pred_fallthru
        _
      %p1810 = scmp.le.s32.totalorder 2, %s20
      // Predicated region
      $region69: #{multi_scale_discriminator_forward.4} parent=5 // pred_check
        %p1811 = pneg %p1810
      $region70: #{multi_scale_discriminator_forward.4} parent=5 // pred_check_branch
        %1813 = sbr.rel (%p1811) target = $region72
      $region71: #{multi_scale_discriminator_forward.4} parent=5 // pred_region
        %s1814 = ssub.s32 %s20, 2
        // Predicated region
        $region73: #{multi_scale_discriminator_forward.4} parent=71 // pred_check
          %p1815 = pneg %p285
        $region74: #{multi_scale_discriminator_forward.4} parent=71 // pred_check_branch
          %1817 = sbr.rel (%p1815) target = $region76
        $region75: #{multi_scale_discriminator_forward.4} parent=71 // pred_region
          %s1818 = sand.u32 %s270, 1
          %s1819 = scalar_lea.sflag [#allocation8], %s1818
          %s1820 = sand.u32 %s270, 1
          %s1821 = smul.addr %s1820, 2
          %s1822 = scalar_lea.vmem [#allocation7], %s1821
          %1824 = dma.done %s1819, 32
        $region76: #{multi_scale_discriminator_forward.4} parent=71 // pred_fallthru
          _
      $region72: #{multi_scale_discriminator_forward.4} parent=5 // pred_fallthru
        _
    $region6: #{multi_scale_discriminator_forward.4} parent=1 // loop_footer
      %s24 = sadd.s32 1, %s20
    $region7: #{multi_scale_discriminator_forward.4} parent=1 // loop_footer_branch
      %19 = sbr.rel target = $region3
    $region8: #{multi_scale_discriminator_forward.4} parent=1 // loop_exit
      _
    %1825 = vsyncpa [#allocation8], 1
    %s1826 = scalar_lea.sflag [#allocation8], 1
    %1827 = vsyncpa %s1826, 1

// kernel: multi_scale_discriminator_forward.3
$region0: #{multi_scale_discriminator_forward.3}
  #allocation0 [shape = 'u32[]', space=smem, size = 0x4, offset = 0x4, fixed_abs, tag = 'smem constant byte address 0x4 - core index']
  #allocation1 [shape = 'u32[72,128]{1,0:T(1,128)}', space=vmem, size = 0x9000, scoped, tag = 'internal scratch']
  #allocation2 [shape = 'f32[32,192]{1,0:T(8,128)}', space=vmem, size = 0x8000, scoped, tag = 'scratch operand']
  #allocation3 [shape = 'f32[75,8]{1,0:T(8,128)}', space=vmem, size = 0xa000, scoped, tag = 'scratch operand']
  #allocation4 [shape = 'f32[39,16]{1,0:T(8,128)}', space=vmem, size = 0x5000, scoped, tag = 'scratch operand']
  #allocation5 [shape = 'f32[21,32]{1,0:T(8,128)}', space=vmem, size = 0x3000, scoped, tag = 'scratch operand']
  #allocation6 [shape = 'f32[13,64]{1,0:T(8,128)}', space=vmem, size = 0x2000, scoped, tag = 'scratch operand']
  %s0 = inlined_call_operand.vmem [shape: f32[2,80,1], index: 0, kind: input, shape index: {}]
  %s1 = inlined_call_operand.vmem [shape: f32[17,8], index: 1, kind: input, shape index: {}]
  %s2 = inlined_call_operand.vmem [shape: f32[1,8], index: 2, kind: input, shape index: {}]
  %s3 = inlined_call_operand.vmem [shape: f32[88,16], index: 3, kind: input, shape index: {}]
  %s4 = inlined_call_operand.vmem [shape: f32[1,16], index: 4, kind: input, shape index: {}]
  %s5 = inlined_call_operand.vmem [shape: f32[112,32], index: 5, kind: input, shape index: {}]
  %s6 = inlined_call_operand.vmem [shape: f32[1,32], index: 6, kind: input, shape index: {}]
  %s7 = inlined_call_operand.vmem [shape: f32[160,64], index: 7, kind: input, shape index: {}]
  %s8 = inlined_call_operand.vmem [shape: f32[1,64], index: 8, kind: input, shape index: {}]
  %s9 = inlined_call_operand.vmem [shape: f32[192,128], index: 9, kind: input, shape index: {}]
  %s10 = inlined_call_operand.vmem [shape: f32[1,128], index: 10, kind: input, shape index: {}]
  %s11 = inlined_call_operand.hbm [shape: f32[2,2,128], index: 11, kind: output, shape index: {}]
  %s12 = sld [smem:[#allocation0]]
  $region77: #{multi_scale_discriminator_forward.3} parent=0
    _
  %s14 = ssub.s32 1, %s12
  %s15 = scalar_select 0, %s14, %s12
  $region1: #{multi_scale_discriminator_forward.3} parent=0
    #allocation7 [shape = 'u8[2048]{0}', space=vmem, size = 0x800, scoped, tag = 'output window, operand 0']
    #allocation8 [shape = 's32[2]{0}', space=sflag, size = 0x8, scoped, tag = 'scoped memory for multi_scale_discriminator_forward.3']
    %16 = vsyncpa [#allocation8], 0
    %s17 = scalar_lea.sflag [#allocation8], 1
    %18 = vsyncpa %s17, 0
    loop: start=0, step=1, limit=4
    $region2: #{multi_scale_discriminator_forward.3} parent=1 // loop_pre_header
      _
    $region3: #{multi_scale_discriminator_forward.3} parent=1 // loop_header
      %s20 = sphi 0, %s24
      %p21 = scmp.ge.s32.totalorder %s20, 4
      %s30 = sphi 0, %s32
      %s33 = sphi 0, %s30
      %s34 = sphi 0, %s33
      %s50 = sphi 0, %s34
      %s54 = sphi 0, %s54
      %s56 = sphi 0, %s54
      %s57 = sphi 0, %s56
      %s71 = sphi 0, %s57
      %s75 = sphi 0, %s75
      %s77 = sphi 0, %s75
      %s78 = sphi 0, %s77
      %s92 = sphi 0, %s78
      %s96 = sphi 0, %s96
      %s98 = sphi 0, %s96
      %s99 = sphi 0, %s98
      %s113 = sphi 0, %s99
      %s117 = sphi 0, %s117
      %s119 = sphi 0, %s117
      %s120 = sphi 0, %s119
      %s134 = sphi 0, %s120
      %s138 = sphi 0, %s138
      %s140 = sphi 0, %s138
      %s141 = sphi 0, %s140
      %s155 = sphi 0, %s141
      %s159 = sphi 0, %s159
      %s161 = sphi 0, %s159
      %s162 = sphi 0, %s161
      %s176 = sphi 0, %s162
      %s180 = sphi 0, %s180
      %s182 = sphi 0, %s180
      %s183 = sphi 0, %s182
      %s197 = sphi 0, %s183
      %s201 = sphi 0, %s201
      %s203 = sphi 0, %s201
      %s204 = sphi 0, %s203
      %s218 = sphi 0, %s204
      %s222 = sphi 0, %s222
      %s224 = sphi 0, %s222
      %s225 = sphi 0, %s224
      %s239 = sphi 0, %s225
      %s243 = sphi 0, %s243
      %s245 = sphi 0, %s243
      %s246 = sphi 0, %s245
      %s260 = sphi 0, %s246
      %s266 = sphi 0, %s268
      %s269 = sphi 0, %s266
      %s270 = sphi 0, %s269
      %s286 = sphi 0, %s270
    $region4: #{multi_scale_discriminator_forward.3} parent=1 // loop_header_branch
      %23 = sbr.rel (%p21) target = $region8
    $region5: #{multi_scale_discriminator_forward.3} parent=1 // loop_body
      %s25 = ssub.s32 %s20, 1
      %s26 = ssub.s32 %s20, 2
      %s27 = sadd.s32 %s20, 1
      %s28 = ssub.s32 %s20, %s27
      %p29 = scmp.eq.s32.totalorder %s28, 0
      %s31 = sadd.s32 %s30, 1
      %s32 = scalar_select %p29, %s30, %s31
      %p35 = pneg %p29
      %p36 = scmp.eq.s32.totalorder %s20, 1
      %p37 = por %p35, %p36
      %p38 = scmp.ne.s32.totalorder %s30, %s33
      %p39 = scmp.eq.s32.totalorder %s20, 0
      %p40 = por %p38, %p39
      %p41 = scmp.ne.s32.totalorder %s30, %s33
      %p42 = scmp.eq.s32.totalorder %s25, 1
      %p43 = por %p41, %p42
      %p44 = scmp.ne.s32.totalorder %s33, %s34
      %p45 = scmp.eq.s32.totalorder %s25, 0
      %p46 = por %p44, %p45
      %p47 = scmp.ne.s32.totalorder %s33, %s34
      %p48 = scmp.eq.s32.totalorder %s26, 1
      %p49 = por %p47, %p48
      %p51 = scmp.ne.s32.totalorder %s34, %s50
      %p52 = scmp.eq.s32.totalorder %s26, 0
      %p53 = por %p51, %p52
      %s55 = sadd.s32 %s54, 1
      %p58 = scmp.eq.s32.totalorder %s20, 1
      %p59 = scmp.ne.s32.totalorder %s54, %s56
      %p60 = scmp.eq.s32.totalorder %s20, 0
      %p61 = por %p59, %p60
      %p62 = scmp.ne.s32.totalorder %s54, %s56
      %p63 = scmp.eq.s32.totalorder %s25, 1
      %p64 = por %p62, %p63
      %p65 = scmp.ne.s32.totalorder %s56, %s57
      %p66 = scmp.eq.s32.totalorder %s25, 0
      %p67 = por %p65, %p66
      %p68 = scmp.ne.s32.totalorder %s56, %s57
      %p69 = scmp.eq.s32.totalorder %s26, 1
      %p70 = por %p68, %p69
      %p72 = scmp.ne.s32.totalorder %s57, %s71
      %p73 = scmp.eq.s32.totalorder %s26, 0
      %p74 = por %p72, %p73
      %s76 = sadd.s32 %s75, 1
      %p79 = scmp.eq.s32.totalorder %s20, 1
      %p80 = scmp.ne.s32.totalorder %s75, %s77
      %p81 = scmp.eq.s32.totalorder %s20, 0
      %p82 = por %p80, %p81
      %p83 = scmp.ne.s32.totalorder %s75, %s77
      %p84 = scmp.eq.s32.totalorder %s25, 1
      %p85 = por %p83, %p84
      %p86 = scmp.ne.s32.totalorder %s77, %s78
      %p87 = scmp.eq.s32.totalorder %s25, 0
      %p88 = por %p86, %p87
      %p89 = scmp.ne.s32.totalorder %s77, %s78
      %p90 = scmp.eq.s32.totalorder %s26, 1
      %p91 = por %p89, %p90
      %p93 = scmp.ne.s32.totalorder %s78, %s92
      %p94 = scmp.eq.s32.totalorder %s26, 0
      %p95 = por %p93, %p94
      %s97 = sadd.s32 %s96, 1
      %p100 = scmp.eq.s32.totalorder %s20, 1
      %p101 = scmp.ne.s32.totalorder %s96, %s98
      %p102 = scmp.eq.s32.totalorder %s20, 0
      %p103 = por %p101, %p102
      %p104 = scmp.ne.s32.totalorder %s96, %s98
      %p105 = scmp.eq.s32.totalorder %s25, 1
      %p106 = por %p104, %p105
      %p107 = scmp.ne.s32.totalorder %s98, %s99
      %p108 = scmp.eq.s32.totalorder %s25, 0
      %p109 = por %p107, %p108
      %p110 = scmp.ne.s32.totalorder %s98, %s99
      %p111 = scmp.eq.s32.totalorder %s26, 1
      %p112 = por %p110, %p111
      %p114 = scmp.ne.s32.totalorder %s99, %s113
      %p115 = scmp.eq.s32.totalorder %s26, 0
      %p116 = por %p114, %p115
      %s118 = sadd.s32 %s117, 1
      %p121 = scmp.eq.s32.totalorder %s20, 1
      %p122 = scmp.ne.s32.totalorder %s117, %s119
      %p123 = scmp.eq.s32.totalorder %s20, 0
      %p124 = por %p122, %p123
      %p125 = scmp.ne.s32.totalorder %s117, %s119
      %p126 = scmp.eq.s32.totalorder %s25, 1
      %p127 = por %p125, %p126
      %p128 = scmp.ne.s32.totalorder %s119, %s120
      %p129 = scmp.eq.s32.totalorder %s25, 0
      %p130 = por %p128, %p129
      %p131 = scmp.ne.s32.totalorder %s119, %s120
      %p132 = scmp.eq.s32.totalorder %s26, 1
      %p133 = por %p131, %p132
      %p135 = scmp.ne.s32.totalorder %s120, %s134
      %p136 = scmp.eq.s32.totalorder %s26, 0
      %p137 = por %p135, %p136
      %s139 = sadd.s32 %s138, 1
      %p142 = scmp.eq.s32.totalorder %s20, 1
      %p143 = scmp.ne.s32.totalorder %s138, %s140
      %p144 = scmp.eq.s32.totalorder %s20, 0
      %p145 = por %p143, %p144
      %p146 = scmp.ne.s32.totalorder %s138, %s140
      %p147 = scmp.eq.s32.totalorder %s25, 1
      %p148 = por %p146, %p147
      %p149 = scmp.ne.s32.totalorder %s140, %s141
      %p150 = scmp.eq.s32.totalorder %s25, 0
      %p151 = por %p149, %p150
      %p152 = scmp.ne.s32.totalorder %s140, %s141
      %p153 = scmp.eq.s32.totalorder %s26, 1
      %p154 = por %p152, %p153
      %p156 = scmp.ne.s32.totalorder %s141, %s155
      %p157 = scmp.eq.s32.totalorder %s26, 0
      %p158 = por %p156, %p157
      %s160 = sadd.s32 %s159, 1
      %p163 = scmp.eq.s32.totalorder %s20, 1
      %p164 = scmp.ne.s32.totalorder %s159, %s161
      %p165 = scmp.eq.s32.totalorder %s20, 0
      %p166 = por %p164, %p165
      %p167 = scmp.ne.s32.totalorder %s159, %s161
      %p168 = scmp.eq.s32.totalorder %s25, 1
      %p169 = por %p167, %p168
      %p170 = scmp.ne.s32.totalorder %s161, %s162
      %p171 = scmp.eq.s32.totalorder %s25, 0
      %p172 = por %p170, %p171
      %p173 = scmp.ne.s32.totalorder %s161, %s162
      %p174 = scmp.eq.s32.totalorder %s26, 1
      %p175 = por %p173, %p174
      %p177 = scmp.ne.s32.totalorder %s162, %s176
      %p178 = scmp.eq.s32.totalorder %s26, 0
      %p179 = por %p177, %p178
      %s181 = sadd.s32 %s180, 1
      %p184 = scmp.eq.s32.totalorder %s20, 1
      %p185 = scmp.ne.s32.totalorder %s180, %s182
      %p186 = scmp.eq.s32.totalorder %s20, 0
      %p187 = por %p185, %p186
      %p188 = scmp.ne.s32.totalorder %s180, %s182
      %p189 = scmp.eq.s32.totalorder %s25, 1
      %p190 = por %p188, %p189
      %p191 = scmp.ne.s32.totalorder %s182, %s183
      %p192 = scmp.eq.s32.totalorder %s25, 0
      %p193 = por %p191, %p192
      %p194 = scmp.ne.s32.totalorder %s182, %s183
      %p195 = scmp.eq.s32.totalorder %s26, 1
      %p196 = por %p194, %p195
      %p198 = scmp.ne.s32.totalorder %s183, %s197
      %p199 = scmp.eq.s32.totalorder %s26, 0
      %p200 = por %p198, %p199
      %s202 = sadd.s32 %s201, 1
      %p205 = scmp.eq.s32.totalorder %s20, 1
      %p206 = scmp.ne.s32.totalorder %s201, %s203
      %p207 = scmp.eq.s32.totalorder %s20, 0
      %p208 = por %p206, %p207
      %p209 = scmp.ne.s32.totalorder %s201, %s203
      %p210 = scmp.eq.s32.totalorder %s25, 1
      %p211 = por %p209, %p210
      %p212 = scmp.ne.s32.totalorder %s203, %s204
      %p213 = scmp.eq.s32.totalorder %s25, 0
      %p214 = por %p212, %p213
      %p215 = scmp.ne.s32.totalorder %s203, %s204
      %p216 = scmp.eq.s32.totalorder %s26, 1
      %p217 = por %p215, %p216
      %p219 = scmp.ne.s32.totalorder %s204, %s218
      %p220 = scmp.eq.s32.totalorder %s26, 0
      %p221 = por %p219, %p220
      %s223 = sadd.s32 %s222, 1
      %p226 = scmp.eq.s32.totalorder %s20, 1
      %p227 = scmp.ne.s32.totalorder %s222, %s224
      %p228 = scmp.eq.s32.totalorder %s20, 0
      %p229 = por %p227, %p228
      %p230 = scmp.ne.s32.totalorder %s222, %s224
      %p231 = scmp.eq.s32.totalorder %s25, 1
      %p232 = por %p230, %p231
      %p233 = scmp.ne.s32.totalorder %s224, %s225
      %p234 = scmp.eq.s32.totalorder %s25, 0
      %p235 = por %p233, %p234
      %p236 = scmp.ne.s32.totalorder %s224, %s225
      %p237 = scmp.eq.s32.totalorder %s26, 1
      %p238 = por %p236, %p237
      %p240 = scmp.ne.s32.totalorder %s225, %s239
      %p241 = scmp.eq.s32.totalorder %s26, 0
      %p242 = por %p240, %p241
      %s244 = sadd.s32 %s243, 1
      %p247 = scmp.eq.s32.totalorder %s20, 1
      %p248 = scmp.ne.s32.totalorder %s243, %s245
      %p249 = scmp.eq.s32.totalorder %s20, 0
      %p250 = por %p248, %p249
      %p251 = scmp.ne.s32.totalorder %s243, %s245
      %p252 = scmp.eq.s32.totalorder %s25, 1
      %p253 = por %p251, %p252
      %p254 = scmp.ne.s32.totalorder %s245, %s246
      %p255 = scmp.eq.s32.totalorder %s25, 0
      %p256 = por %p254, %p255
      %p257 = scmp.ne.s32.totalorder %s245, %s246
      %p258 = scmp.eq.s32.totalorder %s26, 1
      %p259 = por %p257, %p258
      %p261 = scmp.ne.s32.totalorder %s246, %s260
      %p262 = scmp.eq.s32.totalorder %s26, 0
      %p263 = por %p261, %p262
      %s264 = ssub.s32 %s20, %s27
      %p265 = scmp.eq.s32.totalorder %s264, 0
      %s267 = sadd.s32 %s266, 1
      %s268 = scalar_select %p265, %s266, %s267
      %p271 = pneg %p265
      %p272 = scmp.eq.s32.totalorder %s20, 1
      %p273 = por %p271, %p272
      %p274 = scmp.ne.s32.totalorder %s266, %s269
      %p275 = scmp.eq.s32.totalorder %s20, 0
      %p276 = por %p274, %p275
      %p277 = scmp.ne.s32.totalorder %s266, %s269
      %p278 = scmp.eq.s32.totalorder %s25, 1
      %p279 = por %p277, %p278
      %p280 = scmp.ne.s32.totalorder %s269, %s270
      %p281 = scmp.eq.s32.totalorder %s25, 0
      %p282 = por %p280, %p281
      %p283 = scmp.ne.s32.totalorder %s269, %s270
      %p284 = scmp.eq.s32.totalorder %s26, 1
      %p285 = por %p283, %p284
      %p287 = scmp.ne.s32.totalorder %s270, %s286
      %p288 = scmp.eq.s32.totalorder %s26, 0
      %p289 = por %p287, %p288
      %p290 = scmp.le.s32.totalorder 1, %s20
      %p291 = scmp.lt.s32.totalorder %s20, 3
      %p292 = pnand %p290, %p291
      %p293 = pneg %p292
      // Predicated region
      $region9: #{multi_scale_discriminator_forward.3} parent=5 // pred_check
        _
      $region10: #{multi_scale_discriminator_forward.3} parent=5 // pred_check_branch
        %295 = sbr.rel (%p292) target = $region12
      $region11: #{multi_scale_discriminator_forward.3} parent=5 // pred_region
        %s296 = ssub.s32 %s20, 1
        // Predicated region
        $region13: #{multi_scale_discriminator_forward.3} parent=11 // pred_check
          %p297 = pneg %p67
        $region14: #{multi_scale_discriminator_forward.3} parent=11 // pred_check_branch
          %299 = sbr.rel (%p297) target = $region16
        $region15: #{multi_scale_discriminator_forward.3} parent=11 // pred_region
          _
        $region16: #{multi_scale_discriminator_forward.3} parent=11 // pred_fallthru
          _
        // Predicated region
        $region17: #{multi_scale_discriminator_forward.3} parent=11 // pred_check
          %p300 = pneg %p88
        $region18: #{multi_scale_discriminator_forward.3} parent=11 // pred_check_branch
          %302 = sbr.rel (%p300) target = $region20
        $region19: #{multi_scale_discriminator_forward.3} parent=11 // pred_region
          _
        $region20: #{multi_scale_discriminator_forward.3} parent=11 // pred_fallthru
          _
        // Predicated region
        $region21: #{multi_scale_discriminator_forward.3} parent=11 // pred_check
          %p303 = pneg %p109
        $region22: #{multi_scale_discriminator_forward.3} parent=11 // pred_check_branch
          %305 = sbr.rel (%p303) target = $region24
        $region23: #{multi_scale_discriminator_forward.3} parent=11 // pred_region
          _
        $region24: #{multi_scale_discriminator_forward.3} parent=11 // pred_fallthru
          _
        // Predicated region
        $region25: #{multi_scale_discriminator_forward.3} parent=11 // pred_check
          %p306 = pneg %p130
        $region26: #{multi_scale_discriminator_forward.3} parent=11 // pred_check_branch
          %308 = sbr.rel (%p306) target = $region28
        $region27: #{multi_scale_discriminator_forward.3} parent=11 // pred_region
          _
        $region28: #{multi_scale_discriminator_forward.3} parent=11 // pred_fallthru
          _
        // Predicated region
        $region29: #{multi_scale_discriminator_forward.3} parent=11 // pred_check
          %p309 = pneg %p151
        $region30: #{multi_scale_discriminator_forward.3} parent=11 // pred_check_branch
          %311 = sbr.rel (%p309) target = $region32
        $region31: #{multi_scale_discriminator_forward.3} parent=11 // pred_region
          _
        $region32: #{multi_scale_discriminator_forward.3} parent=11 // pred_fallthru
          _
        // Predicated region
        $region33: #{multi_scale_discriminator_forward.3} parent=11 // pred_check
          %p312 = pneg %p172
        $region34: #{multi_scale_discriminator_forward.3} parent=11 // pred_check_branch
          %314 = sbr.rel (%p312) target = $region36
        $region35: #{multi_scale_discriminator_forward.3} parent=11 // pred_region
          _
        $region36: #{multi_scale_discriminator_forward.3} parent=11 // pred_fallthru
          _
        // Predicated region
        $region37: #{multi_scale_discriminator_forward.3} parent=11 // pred_check
          %p315 = pneg %p193
        $region38: #{multi_scale_discriminator_forward.3} parent=11 // pred_check_branch
          %317 = sbr.rel (%p315) target = $region40
        $region39: #{multi_scale_discriminator_forward.3} parent=11 // pred_region
          _
        $region40: #{multi_scale_discriminator_forward.3} parent=11 // pred_fallthru
          _
        // Predicated region
        $region41: #{multi_scale_discriminator_forward.3} parent=11 // pred_check
          %p318 = pneg %p214
        $region42: #{multi_scale_discriminator_forward.3} parent=11 // pred_check_branch
          %320 = sbr.rel (%p318) target = $region44
        $region43: #{multi_scale_discriminator_forward.3} parent=11 // pred_region
          _
        $region44: #{multi_scale_discriminator_forward.3} parent=11 // pred_fallthru
          _
        // Predicated region
        $region45: #{multi_scale_discriminator_forward.3} parent=11 // pred_check
          %p321 = pneg %p235
        $region46: #{multi_scale_discriminator_forward.3} parent=11 // pred_check_branch
          %323 = sbr.rel (%p321) target = $region48
        $region47: #{multi_scale_discriminator_forward.3} parent=11 // pred_region
          _
        $region48: #{multi_scale_discriminator_forward.3} parent=11 // pred_fallthru
          _
        // Predicated region
        $region49: #{multi_scale_discriminator_forward.3} parent=11 // pred_check
          %p324 = pneg %p256
        $region50: #{multi_scale_discriminator_forward.3} parent=11 // pred_check_branch
          %326 = sbr.rel (%p324) target = $region52
        $region51: #{multi_scale_discriminator_forward.3} parent=11 // pred_region
          _
        $region52: #{multi_scale_discriminator_forward.3} parent=11 // pred_fallthru
          _
      $region12: #{multi_scale_discriminator_forward.3} parent=5 // pred_fallthru
        _
      %p327 = scmp.lt.s32.totalorder %s20, 2
      // Predicated region
      $region53: #{multi_scale_discriminator_forward.3} parent=5 // pred_check
        %p328 = pneg %p327
      $region54: #{multi_scale_discriminator_forward.3} parent=5 // pred_check_branch
        %330 = sbr.rel (%p328) target = $region56
      $region55: #{multi_scale_discriminator_forward.3} parent=5 // pred_region
        // Predicated region
        $region57: #{multi_scale_discriminator_forward.3} parent=55 // pred_check
          %p331 = pneg %p40
        $region58: #{multi_scale_discriminator_forward.3} parent=55 // pred_check_branch
          %333 = sbr.rel (%p331) target = $region60
        $region59: #{multi_scale_discriminator_forward.3} parent=55 // pred_region
          %p334 = scmp.lt.s32.totalorder %s20, 1
          %s335 = scalar_select %p334, %s20, 1
          %s336 = smul.addr %s335, 10
          %s337 = smul.addr %s336, 8
          %s338 = scalar_lea.vmem %s0, %s337
        $region60: #{multi_scale_discriminator_forward.3} parent=55 // pred_fallthru
          _
      $region56: #{multi_scale_discriminator_forward.3} parent=5 // pred_fallthru
        _
      %p339 = scmp.le.s32.totalorder 1, %s20
      %p340 = scmp.lt.s32.totalorder %s20, 3
      %p341 = pnand %p339, %p340
      %p342 = pneg %p341
      // Predicated region
      $region61: #{multi_scale_discriminator_forward.3} parent=5 // pred_check
        _
      $region62: #{multi_scale_discriminator_forward.3} parent=5 // pred_check_branch
        %344 = sbr.rel (%p341) target = $region64
      $region63: #{multi_scale_discriminator_forward.3} parent=5 // pred_region
        %s345 = ssub.s32 %s20, 1
        %p346 = scmp.lt.s32.totalorder %s25, 1
        %s347 = scalar_select %p346, %s25, 1
        %s348 = smul.addr %s347, 10
        %s349 = smul.addr %s348, 8
        %s350 = scalar_lea.vmem %s0, %s349
        %p351 = pneg %p46
        %p352 = pneg %p43
        %p353 = pneg %p67
        %p354 = pneg %p64
        %p355 = pneg %p88
        %p356 = pneg %p85
        %p357 = pneg %p109
        %p358 = pneg %p106
        %p359 = pneg %p130
        %p360 = pneg %p127
        %p361 = pneg %p151
        %p362 = pneg %p148
        %p363 = pneg %p172
        %p364 = pneg %p169
        %p365 = pneg %p193
        %p366 = pneg %p190
        %p367 = pneg %p214
        %p368 = pneg %p211
        %p369 = pneg %p235
        %p370 = pneg %p232
        %p371 = pneg %p256
        %p372 = pneg %p253
        %p373 = pneg %p282
        %p374 = pneg %p279
        %s375 = sand.u32 %s269, 1
        %s376 = scalar_lea.sflag [#allocation8], %s375
        %s377 = sand.u32 %s269, 1
        %s378 = smul.addr %s377, 2
        %s379 = scalar_lea.vmem [#allocation7], %s378
        %p380 = scmp.lt.s32.totalorder %s25, 1
        %s381 = scalar_select %p380, %s25, 1
        %s382 = smul.addr %s381, 10
        %s383 = smul.addr %s382, 8
        %s384 = scalar_lea.vmem %s0, %s383
        %v386 = vld [vmem:[%s1] sm:$0xff]
        %v387 = vld [vmem:[%s1 + $0x8] sm:$0xff]
        %v388 = vld [vmem:[%s1 + $0x10] sm:$0x1]
        %v389 = vld [vmem:[%s384] sm:$0xff]
        %v390 = vld [vmem:[%s384 + $0x8] sm:$0xff]
        %v391 = vld [vmem:[%s384 + $0x10] sm:$0xff]
        %v392 = vld [vmem:[%s384 + $0x18] sm:$0xff]
        %v393 = vld [vmem:[%s384 + $0x20] sm:$0xff]
        %v394 = vld [vmem:[%s384 + $0x28] sm:$0xff]
        %v395 = vld [vmem:[%s384 + $0x30] sm:$0xff]
        %v396 = vld [vmem:[%s384 + $0x38] sm:$0xff]
        %398 = vset.pattern.permute.xlu0 0
        %399 = vperm.xlu0 %398, %v389
        %v400 = vpop.permute.xlu0 %399
        %403 = vset.pattern.permute.xlu0 0
        %404 = vperm.xlu0 %403, %v390
        %v405 = vpop.permute.xlu0 %404
        %408 = vset.pattern.permute.xlu0 0
        %409 = vperm.xlu0 %408, %v391
        %v410 = vpop.permute.xlu0 %409
        %413 = vset.pattern.permute.xlu0 0
        %414 = vperm.xlu0 %413, %v392
        %v415 = vpop.permute.xlu0 %414
        %418 = vset.pattern.permute.xlu0 0
        %419 = vperm.xlu0 %418, %v393
        %v420 = vpop.permute.xlu0 %419
        %423 = vset.pattern.permute.xlu0 0
        %424 = vperm.xlu0 %423, %v394
        %v425 = vpop.permute.xlu0 %424
        %428 = vset.pattern.permute.xlu0 0
        %429 = vperm.xlu0 %428, %v395
        %v430 = vpop.permute.xlu0 %429
        %433 = vset.pattern.permute.xlu0 0
        %434 = vperm.xlu0 %433, %v396
        %v435 = vpop.permute.xlu0 %434
        %v437 = vperm.slane %v386, 0
        %v438 = vmul.f32 %v400, %v437
        %v439 = vmul.f32 %v405, %v437
        %v440 = vmul.f32 %v410, %v437
        %v441 = vmul.f32 %v415, %v437
        %v442 = vmul.f32 %v420, %v437
        %v443 = vmul.f32 %v425, %v437
        %v444 = vmul.f32 %v430, %v437
        %v445 = vmul.f32 %v435, %v437
        %v446 = vadd.f32 %v438, 0.0
        %v447 = vadd.f32 %v439, 0.0
        %v448 = vadd.f32 %v440, 0.0
        %v449 = vadd.f32 %v441, 0.0
        %v450 = vadd.f32 %v442, 0.0
        %v451 = vadd.f32 %v443, 0.0
        %v452 = vadd.f32 %v444, 0.0
        %v453 = vadd.f32 %v445, 0.0
        %v454 = vld [vmem:[%s384 + $0x1] sm:$0xff]
        %v455 = vld [vmem:[%s384 + $0x9] sm:$0xff]
        %v456 = vld [vmem:[%s384 + $0x11] sm:$0xff]
        %v457 = vld [vmem:[%s384 + $0x19] sm:$0xff]
        %v458 = vld [vmem:[%s384 + $0x21] sm:$0xff]
        %v459 = vld [vmem:[%s384 + $0x29] sm:$0xff]
        %v460 = vld [vmem:[%s384 + $0x31] sm:$0xff]
        %v461 = vld [vmem:[%s384 + $0x39] sm:$0xff]
        %463 = vset.pattern.permute.xlu0 0
        %464 = vperm.xlu0 %463, %v454
        %v465 = vpop.permute.xlu0 %464
        %468 = vset.pattern.permute.xlu0 0
        %469 = vperm.xlu0 %468, %v455
        %v470 = vpop.permute.xlu0 %469
        %473 = vset.pattern.permute.xlu0 0
        %474 = vperm.xlu0 %473, %v456
        %v475 = vpop.permute.xlu0 %474
        %478 = vset.pattern.permute.xlu0 0
        %479 = vperm.xlu0 %478, %v457
        %v480 = vpop.permute.xlu0 %479
        %483 = vset.pattern.permute.xlu0 0
        %484 = vperm.xlu0 %483, %v458
        %v485 = vpop.permute.xlu0 %484
        %488 = vset.pattern.permute.xlu0 0
        %489 = vperm.xlu0 %488, %v459
        %v490 = vpop.permute.xlu0 %489
        %493 = vset.pattern.permute.xlu0 0
        %494 = vperm.xlu0 %493, %v460
        %v495 = vpop.permute.xlu0 %494
        %498 = vset.pattern.permute.xlu0 0
        %499 = vperm.xlu0 %498, %v461
        %v500 = vpop.permute.xlu0 %499
        %v502 = vperm.slane %v386, 1
        %v503 = vmul.f32 %v465, %v502
        %v504 = vmul.f32 %v470, %v502
        %v505 = vmul.f32 %v475, %v502
        %v506 = vmul.f32 %v480, %v502
        %v507 = vmul.f32 %v485, %v502
        %v508 = vmul.f32 %v490, %v502
        %v509 = vmul.f32 %v495, %v502
        %v510 = vmul.f32 %v500, %v502
        %v511 = vadd.f32 %v446, %v503
        %v512 = vadd.f32 %v447, %v504
        %v513 = vadd.f32 %v448, %v505
        %v514 = vadd.f32 %v449, %v506
        %v515 = vadd.f32 %v450, %v507
        %v516 = vadd.f32 %v451, %v508
        %v517 = vadd.f32 %v452, %v509
        %v518 = vadd.f32 %v453, %v510
        %v519 = vld [vmem:[%s384 + $0x2] sm:$0xff]
        %v520 = vld [vmem:[%s384 + $0xa] sm:$0xff]
        %v521 = vld [vmem:[%s384 + $0x12] sm:$0xff]
        %v522 = vld [vmem:[%s384 + $0x1a] sm:$0xff]
        %v523 = vld [vmem:[%s384 + $0x22] sm:$0xff]
        %v524 = vld [vmem:[%s384 + $0x2a] sm:$0xff]
        %v525 = vld [vmem:[%s384 + $0x32] sm:$0xff]
        %v526 = vld [vmem:[%s384 + $0x3a] sm:$0xff]
        %528 = vset.pattern.permute.xlu0 0
        %529 = vperm.xlu0 %528, %v519
        %v530 = vpop.permute.xlu0 %529
        %533 = vset.pattern.permute.xlu0 0
        %534 = vperm.xlu0 %533, %v520
        %v535 = vpop.permute.xlu0 %534
        %538 = vset.pattern.permute.xlu0 0
        %539 = vperm.xlu0 %538, %v521
        %v540 = vpop.permute.xlu0 %539
        %543 = vset.pattern.permute.xlu0 0
        %544 = vperm.xlu0 %543, %v522
        %v545 = vpop.permute.xlu0 %544
        %548 = vset.pattern.permute.xlu0 0
        %549 = vperm.xlu0 %548, %v523
        %v550 = vpop.permute.xlu0 %549
        %553 = vset.pattern.permute.xlu0 0
        %554 = vperm.xlu0 %553, %v524
        %v555 = vpop.permute.xlu0 %554
        %558 = vset.pattern.permute.xlu0 0
        %559 = vperm.xlu0 %558, %v525
        %v560 = vpop.permute.xlu0 %559
        %563 = vset.pattern.permute.xlu0 0
        %564 = vperm.xlu0 %563, %v526
        %v565 = vpop.permute.xlu0 %564
        %v567 = vperm.slane %v386, 2
        %v568 = vmul.f32 %v530, %v567
        %v569 = vmul.f32 %v535, %v567
        %v570 = vmul.f32 %v540, %v567
        %v571 = vmul.f32 %v545, %v567
        %v572 = vmul.f32 %v550, %v567
        %v573 = vmul.f32 %v555, %v567
        %v574 = vmul.f32 %v560, %v567
        %v575 = vmul.f32 %v565, %v567
        %v576 = vadd.f32 %v511, %v568
        %v577 = vadd.f32 %v512, %v569
        %v578 = vadd.f32 %v513, %v570
        %v579 = vadd.f32 %v514, %v571
        %v580 = vadd.f32 %v515, %v572
        %v581 = vadd.f32 %v516, %v573
        %v582 = vadd.f32 %v517, %v574
        %v583 = vadd.f32 %v518, %v575
        %v584 = vld [vmem:[%s384 + $0x3] sm:$0xff]
        %v585 = vld [vmem:[%s384 + $0xb] sm:$0xff]
        %v586 = vld [vmem:[%s384 + $0x13] sm:$0xff]
        %v587 = vld [vmem:[%s384 + $0x1b] sm:$0xff]
        %v588 = vld [vmem:[%s384 + $0x23] sm:$0xff]
        %v589 = vld [vmem:[%s384 + $0x2b] sm:$0xff]
        %v590 = vld [vmem:[%s384 + $0x33] sm:$0xff]
        %v591 = vld [vmem:[%s384 + $0x3b] sm:$0xff]
        %593 = vset.pattern.permute.xlu0 0
        %594 = vperm.xlu0 %593, %v584
        %v595 = vpop.permute.xlu0 %594
        %598 = vset.pattern.permute.xlu0 0
        %599 = vperm.xlu0 %598, %v585
        %v600 = vpop.permute.xlu0 %599
        %603 = vset.pattern.permute.xlu0 0
        %604 = vperm.xlu0 %603, %v586
        %v605 = vpop.permute.xlu0 %604
        %608 = vset.pattern.permute.xlu0 0
        %609 = vperm.xlu0 %608, %v587
        %v610 = vpop.permute.xlu0 %609
        %613 = vset.pattern.permute.xlu0 0
        %614 = vperm.xlu0 %613, %v588
        %v615 = vpop.permute.xlu0 %614
        %618 = vset.pattern.permute.xlu0 0
        %619 = vperm.xlu0 %618, %v589
        %v620 = vpop.permute.xlu0 %619
        %623 = vset.pattern.permute.xlu0 0
        %624 = vperm.xlu0 %623, %v590
        %v625 = vpop.permute.xlu0 %624
        %628 = vset.pattern.permute.xlu0 0
        %629 = vperm.xlu0 %628, %v591
        %v630 = vpop.permute.xlu0 %629
        %v632 = vperm.slane %v386, 3
        %v633 = vmul.f32 %v595, %v632
        %v634 = vmul.f32 %v600, %v632
        %v635 = vmul.f32 %v605, %v632
        %v636 = vmul.f32 %v610, %v632
        %v637 = vmul.f32 %v615, %v632
        %v638 = vmul.f32 %v620, %v632
        %v639 = vmul.f32 %v625, %v632
        %v640 = vmul.f32 %v630, %v632
        %v641 = vadd.f32 %v576, %v633
        %v642 = vadd.f32 %v577, %v634
        %v643 = vadd.f32 %v578, %v635
        %v644 = vadd.f32 %v579, %v636
        %v645 = vadd.f32 %v580, %v637
        %v646 = vadd.f32 %v581, %v638
        %v647 = vadd.f32 %v582, %v639
        %v648 = vadd.f32 %v583, %v640
        %v649 = vld [vmem:[%s384 + $0x4] sm:$0xff]
        %v650 = vld [vmem:[%s384 + $0xc] sm:$0xff]
        %v651 = vld [vmem:[%s384 + $0x14] sm:$0xff]
        %v652 = vld [vmem:[%s384 + $0x1c] sm:$0xff]
        %v653 = vld [vmem:[%s384 + $0x24] sm:$0xff]
        %v654 = vld [vmem:[%s384 + $0x2c] sm:$0xff]
        %v655 = vld [vmem:[%s384 + $0x34] sm:$0xff]
        %v656 = vld [vmem:[%s384 + $0x3c] sm:$0xff]
        %658 = vset.pattern.permute.xlu0 0
        %659 = vperm.xlu0 %658, %v649
        %v660 = vpop.permute.xlu0 %659
        %663 = vset.pattern.permute.xlu0 0
        %664 = vperm.xlu0 %663, %v650
        %v665 = vpop.permute.xlu0 %664
        %668 = vset.pattern.permute.xlu0 0
        %669 = vperm.xlu0 %668, %v651
        %v670 = vpop.permute.xlu0 %669
        %673 = vset.pattern.permute.xlu0 0
        %674 = vperm.xlu0 %673, %v652
        %v675 = vpop.permute.xlu0 %674
        %678 = vset.pattern.permute.xlu0 0
        %679 = vperm.xlu0 %678, %v653
        %v680 = vpop.permute.xlu0 %679
        %683 = vset.pattern.permute.xlu0 0
        %684 = vperm.xlu0 %683, %v654
        %v685 = vpop.permute.xlu0 %684
        %688 = vset.pattern.permute.xlu0 0
        %689 = vperm.xlu0 %688, %v655
        %v690 = vpop.permute.xlu0 %689
        %693 = vset.pattern.permute.xlu0 0
        %694 = vperm.xlu0 %693, %v656
        %v695 = vpop.permute.xlu0 %694
        %v697 = vperm.slane %v386, 4
        %v698 = vmul.f32 %v660, %v697
        %v699 = vmul.f32 %v665, %v697
        %v700 = vmul.f32 %v670, %v697
        %v701 = vmul.f32 %v675, %v697
        %v702 = vmul.f32 %v680, %v697
        %v703 = vmul.f32 %v685, %v697
        %v704 = vmul.f32 %v690, %v697
        %v705 = vmul.f32 %v695, %v697
        %v706 = vadd.f32 %v641, %v698
        %v707 = vadd.f32 %v642, %v699
        %v708 = vadd.f32 %v643, %v700
        %v709 = vadd.f32 %v644, %v701
        %v710 = vadd.f32 %v645, %v702
        %v711 = vadd.f32 %v646, %v703
        %v712 = vadd.f32 %v647, %v704
        %v713 = vadd.f32 %v648, %v705
        %v714 = vld [vmem:[%s384 + $0x5] sm:$0xff]
        %v715 = vld [vmem:[%s384 + $0xd] sm:$0xff]
        %v716 = vld [vmem:[%s384 + $0x15] sm:$0xff]
        %v717 = vld [vmem:[%s384 + $0x1d] sm:$0xff]
        %v718 = vld [vmem:[%s384 + $0x25] sm:$0xff]
        %v719 = vld [vmem:[%s384 + $0x2d] sm:$0xff]
        %v720 = vld [vmem:[%s384 + $0x35] sm:$0xff]
        %v721 = vld [vmem:[%s384 + $0x3d] sm:$0xff]
        %723 = vset.pattern.permute.xlu0 0
        %724 = vperm.xlu0 %723, %v714
        %v725 = vpop.permute.xlu0 %724
        %728 = vset.pattern.permute.xlu0 0
        %729 = vperm.xlu0 %728, %v715
        %v730 = vpop.permute.xlu0 %729
        %733 = vset.pattern.permute.xlu0 0
        %734 = vperm.xlu0 %733, %v716
        %v735 = vpop.permute.xlu0 %734
        %738 = vset.pattern.permute.xlu0 0
        %739 = vperm.xlu0 %738, %v717
        %v740 = vpop.permute.xlu0 %739
        %743 = vset.pattern.permute.xlu0 0
        %744 = vperm.xlu0 %743, %v718
        %v745 = vpop.permute.xlu0 %744
        %748 = vset.pattern.permute.xlu0 0
        %749 = vperm.xlu0 %748, %v719
        %v750 = vpop.permute.xlu0 %749
        %753 = vset.pattern.permute.xlu0 0
        %754 = vperm.xlu0 %753, %v720
        %v755 = vpop.permute.xlu0 %754
        %758 = vset.pattern.permute.xlu0 0
        %759 = vperm.xlu0 %758, %v721
        %v760 = vpop.permute.xlu0 %759
        %v762 = vperm.slane %v386, 5
        %v763 = vmul.f32 %v725, %v762
        %v764 = vmul.f32 %v730, %v762
        %v765 = vmul.f32 %v735, %v762
        %v766 = vmul.f32 %v740, %v762
        %v767 = vmul.f32 %v745, %v762
        %v768 = vmul.f32 %v750, %v762
        %v769 = vmul.f32 %v755, %v762
        %v770 = vmul.f32 %v760, %v762
        %v771 = vadd.f32 %v706, %v763
        %v772 = vadd.f32 %v707, %v764
        %v773 = vadd.f32 %v708, %v765
        %v774 = vadd.f32 %v709, %v766
        %v775 = vadd.f32 %v710, %v767
        %v776 = vadd.f32 %v711, %v768
        %v777 = vadd.f32 %v712, %v769
        %v778 = vadd.f32 %v713, %v770
        %v779 = vld [vmem:[%s384 + $0x6] sm:$0xff]
        %v780 = vld [vmem:[%s384 + $0xe] sm:$0xff]
        %v781 = vld [vmem:[%s384 + $0x16] sm:$0xff]
        %v782 = vld [vmem:[%s384 + $0x1e] sm:$0xff]
        %v783 = vld [vmem:[%s384 + $0x26] sm:$0xff]
        %v784 = vld [vmem:[%s384 + $0x2e] sm:$0xff]
        %v785 = vld [vmem:[%s384 + $0x36] sm:$0xff]
        %v786 = vld [vmem:[%s384 + $0x3e] sm:$0xff]
        %788 = vset.pattern.permute.xlu0 0
        %789 = vperm.xlu0 %788, %v779
        %v790 = vpop.permute.xlu0 %789
        %793 = vset.pattern.permute.xlu0 0
        %794 = vperm.xlu0 %793, %v780
        %v795 = vpop.permute.xlu0 %794
        %798 = vset.pattern.permute.xlu0 0
        %799 = vperm.xlu0 %798, %v781
        %v800 = vpop.permute.xlu0 %799
        %803 = vset.pattern.permute.xlu0 0
        %804 = vperm.xlu0 %803, %v782
        %v805 = vpop.permute.xlu0 %804
        %808 = vset.pattern.permute.xlu0 0
        %809 = vperm.xlu0 %808, %v783
        %v810 = vpop.permute.xlu0 %809
        %813 = vset.pattern.permute.xlu0 0
        %814 = vperm.xlu0 %813, %v784
        %v815 = vpop.permute.xlu0 %814
        %818 = vset.pattern.permute.xlu0 0
        %819 = vperm.xlu0 %818, %v785
        %v820 = vpop.permute.xlu0 %819
        %823 = vset.pattern.permute.xlu0 0
        %824 = vperm.xlu0 %823, %v786
        %v825 = vpop.permute.xlu0 %824
        %v827 = vperm.slane %v386, 6
        %v828 = vmul.f32 %v790, %v827
        %v829 = vmul.f32 %v795, %v827
        %v830 = vmul.f32 %v800, %v827
        %v831 = vmul.f32 %v805, %v827
        %v832 = vmul.f32 %v810, %v827
        %v833 = vmul.f32 %v815, %v827
        %v834 = vmul.f32 %v820, %v827
        %v835 = vmul.f32 %v825, %v827
        %v836 = vadd.f32 %v771, %v828
        %v837 = vadd.f32 %v772, %v829
        %v838 = vadd.f32 %v773, %v830
        %v839 = vadd.f32 %v774, %v831
        %v840 = vadd.f32 %v775, %v832
        %v841 = vadd.f32 %v776, %v833
        %v842 = vadd.f32 %v777, %v834
        %v843 = vadd.f32 %v778, %v835
        %v844 = vld [vmem:[%s384 + $0x7] sm:$0xff]
        %v845 = vld [vmem:[%s384 + $0xf] sm:$0xff]
        %v846 = vld [vmem:[%s384 + $0x17] sm:$0xff]
        %v847 = vld [vmem:[%s384 + $0x1f] sm:$0xff]
        %v848 = vld [vmem:[%s384 + $0x27] sm:$0xff]
        %v849 = vld [vmem:[%s384 + $0x2f] sm:$0xff]
        %v850 = vld [vmem:[%s384 + $0x37] sm:$0xff]
        %v851 = vld [vmem:[%s384 + $0x3f] sm:$0xff]
        %853 = vset.pattern.permute.xlu0 0
        %854 = vperm.xlu0 %853, %v844
        %v855 = vpop.permute.xlu0 %854
        %858 = vset.pattern.permute.xlu0 0
        %859 = vperm.xlu0 %858, %v845
        %v860 = vpop.permute.xlu0 %859
        %863 = vset.pattern.permute.xlu0 0
        %864 = vperm.xlu0 %863, %v846
        %v865 = vpop.permute.xlu0 %864
        %868 = vset.pattern.permute.xlu0 0
        %869 = vperm.xlu0 %868, %v847
        %v870 = vpop.permute.xlu0 %869
        %873 = vset.pattern.permute.xlu0 0
        %874 = vperm.xlu0 %873, %v848
        %v875 = vpop.permute.xlu0 %874
        %878 = vset.pattern.permute.xlu0 0
        %879 = vperm.xlu0 %878, %v849
        %v880 = vpop.permute.xlu0 %879
        %883 = vset.pattern.permute.xlu0 0
        %884 = vperm.xlu0 %883, %v850
        %v885 = vpop.permute.xlu0 %884
        %888 = vset.pattern.permute.xlu0 0
        %889 = vperm.xlu0 %888, %v851
        %v890 = vpop.permute.xlu0 %889
        %v892 = vperm.slane %v386, 7
        %v893 = vmul.f32 %v855, %v892
        %v894 = vmul.f32 %v860, %v892
        %v895 = vmul.f32 %v865, %v892
        %v896 = vmul.f32 %v870, %v892
        %v897 = vmul.f32 %v875, %v892
        %v898 = vmul.f32 %v880, %v892
        %v899 = vmul.f32 %v885, %v892
        %v900 = vmul.f32 %v890, %v892
        %v901 = vadd.f32 %v836, %v893
        %v902 = vadd.f32 %v837, %v894
        %v903 = vadd.f32 %v838, %v895
        %v904 = vadd.f32 %v839, %v896
        %v905 = vadd.f32 %v840, %v897
        %v906 = vadd.f32 %v841, %v898
        %v907 = vadd.f32 %v842, %v899
        %v908 = vadd.f32 %v843, %v900
        %v909 = vld [vmem:[%s384 + $0x8] sm:$0xff]
        %v910 = vld [vmem:[%s384 + $0x10] sm:$0xff]
        %v911 = vld [vmem:[%s384 + $0x18] sm:$0xff]
        %v912 = vld [vmem:[%s384 + $0x20] sm:$0xff]
        %v913 = vld [vmem:[%s384 + $0x28] sm:$0xff]
        %v914 = vld [vmem:[%s384 + $0x30] sm:$0xff]
        %v915 = vld [vmem:[%s384 + $0x38] sm:$0xff]
        %v916 = vld [vmem:[%s384 + $0x40] sm:$0xff]
        %918 = vset.pattern.permute.xlu0 0
        %919 = vperm.xlu0 %918, %v909
        %v920 = vpop.permute.xlu0 %919
        %923 = vset.pattern.permute.xlu0 0
        %924 = vperm.xlu0 %923, %v910
        %v925 = vpop.permute.xlu0 %924
        %928 = vset.pattern.permute.xlu0 0
        %929 = vperm.xlu0 %928, %v911
        %v930 = vpop.permute.xlu0 %929
        %933 = vset.pattern.permute.xlu0 0
        %934 = vperm.xlu0 %933, %v912
        %v935 = vpop.permute.xlu0 %934
        %938 = vset.pattern.permute.xlu0 0
        %939 = vperm.xlu0 %938, %v913
        %v940 = vpop.permute.xlu0 %939
        %943 = vset.pattern.permute.xlu0 0
        %944 = vperm.xlu0 %943, %v914
        %v945 = vpop.permute.xlu0 %944
        %948 = vset.pattern.permute.xlu0 0
        %949 = vperm.xlu0 %948, %v915
        %v950 = vpop.permute.xlu0 %949
        %953 = vset.pattern.permute.xlu0 0
        %954 = vperm.xlu0 %953, %v916
        %v955 = vpop.permute.xlu0 %954
        %v957 = vperm.slane %v387, 0
        %v958 = vmul.f32 %v920, %v957
        %v959 = vmul.f32 %v925, %v957
        %v960 = vmul.f32 %v930, %v957
        %v961 = vmul.f32 %v935, %v957
        %v962 = vmul.f32 %v940, %v957
        %v963 = vmul.f32 %v945, %v957
        %v964 = vmul.f32 %v950, %v957
        %v965 = vmul.f32 %v955, %v957
        %v966 = vadd.f32 %v901, %v958
        %v967 = vadd.f32 %v902, %v959
        %v968 = vadd.f32 %v903, %v960
        %v969 = vadd.f32 %v904, %v961
        %v970 = vadd.f32 %v905, %v962
        %v971 = vadd.f32 %v906, %v963
        %v972 = vadd.f32 %v907, %v964
        %v973 = vadd.f32 %v908, %v965
        %v974 = vld [vmem:[%s384 + $0x9] sm:$0xff]
        %v975 = vld [vmem:[%s384 + $0x11] sm:$0xff]
        %v976 = vld [vmem:[%s384 + $0x19] sm:$0xff]
        %v977 = vld [vmem:[%s384 + $0x21] sm:$0xff]
        %v978 = vld [vmem:[%s384 + $0x29] sm:$0xff]
        %v979 = vld [vmem:[%s384 + $0x31] sm:$0xff]
        %v980 = vld [vmem:[%s384 + $0x39] sm:$0xff]
        %v981 = vld [vmem:[%s384 + $0x41] sm:$0xff]
        %983 = vset.pattern.permute.xlu0 0
        %984 = vperm.xlu0 %983, %v974
        %v985 = vpop.permute.xlu0 %984
        %988 = vset.pattern.permute.xlu0 0
        %989 = vperm.xlu0 %988, %v975
        %v990 = vpop.permute.xlu0 %989
        %993 = vset.pattern.permute.xlu0 0
        %994 = vperm.xlu0 %993, %v976
        %v995 = vpop.permute.xlu0 %994
        %998 = vset.pattern.permute.xlu0 0
        %999 = vperm.xlu0 %998, %v977
        %v1000 = vpop.permute.xlu0 %999
        %1003 = vset.pattern.permute.xlu0 0
        %1004 = vperm.xlu0 %1003, %v978
        %v1005 = vpop.permute.xlu0 %1004
        %1008 = vset.pattern.permute.xlu0 0
        %1009 = vperm.xlu0 %1008, %v979
        %v1010 = vpop.permute.xlu0 %1009
        %1013 = vset.pattern.permute.xlu0 0
        %1014 = vperm.xlu0 %1013, %v980
        %v1015 = vpop.permute.xlu0 %1014
        %1018 = vset.pattern.permute.xlu0 0
        %1019 = vperm.xlu0 %1018, %v981
        %v1020 = vpop.permute.xlu0 %1019
        %v1022 = vperm.slane %v387, 1
        %v1023 = vmul.f32 %v985, %v1022
        %v1024 = vmul.f32 %v990, %v1022
        %v1025 = vmul.f32 %v995, %v1022
        %v1026 = vmul.f32 %v1000, %v1022
        %v1027 = vmul.f32 %v1005, %v1022
        %v1028 = vmul.f32 %v1010, %v1022
        %v1029 = vmul.f32 %v1015, %v1022
        %v1030 = vmul.f32 %v1020, %v1022
        %v1031 = vadd.f32 %v966, %v1023
        %v1032 = vadd.f32 %v967, %v1024
        %v1033 = vadd.f32 %v968, %v1025
        %v1034 = vadd.f32 %v969, %v1026
        %v1035 = vadd.f32 %v970, %v1027
        %v1036 = vadd.f32 %v971, %v1028
        %v1037 = vadd.f32 %v972, %v1029
        %v1038 = vadd.f32 %v973, %v1030
        %v1039 = vld [vmem:[%s384 + $0xa] sm:$0xff]
        %v1040 = vld [vmem:[%s384 + $0x12] sm:$0xff]
        %v1041 = vld [vmem:[%s384 + $0x1a] sm:$0xff]
        %v1042 = vld [vmem:[%s384 + $0x22] sm:$0xff]
        %v1043 = vld [vmem:[%s384 + $0x2a] sm:$0xff]
        %v1044 = vld [vmem:[%s384 + $0x32] sm:$0xff]
        %v1045 = vld [vmem:[%s384 + $0x3a] sm:$0xff]
        %v1046 = vld [vmem:[%s384 + $0x42] sm:$0xff]
        %1048 = vset.pattern.permute.xlu0 0
        %1049 = vperm.xlu0 %1048, %v1039
        %v1050 = vpop.permute.xlu0 %1049
        %1053 = vset.pattern.permute.xlu0 0
        %1054 = vperm.xlu0 %1053, %v1040
        %v1055 = vpop.permute.xlu0 %1054
        %1058 = vset.pattern.permute.xlu0 0
        %1059 = vperm.xlu0 %1058, %v1041
        %v1060 = vpop.permute.xlu0 %1059
        %1063 = vset.pattern.permute.xlu0 0
        %1064 = vperm.xlu0 %1063, %v1042
        %v1065 = vpop.permute.xlu0 %1064
        %1068 = vset.pattern.permute.xlu0 0
        %1069 = vperm.xlu0 %1068, %v1043
        %v1070 = vpop.permute.xlu0 %1069
        %1073 = vset.pattern.permute.xlu0 0
        %1074 = vperm.xlu0 %1073, %v1044
        %v1075 = vpop.permute.xlu0 %1074
        %1078 = vset.pattern.permute.xlu0 0
        %1079 = vperm.xlu0 %1078, %v1045
        %v1080 = vpop.permute.xlu0 %1079
        %1083 = vset.pattern.permute.xlu0 0
        %1084 = vperm.xlu0 %1083, %v1046
        %v1085 = vpop.permute.xlu0 %1084
        %v1087 = vperm.slane %v387, 2
        %v1088 = vmul.f32 %v1050, %v1087
        %v1089 = vmul.f32 %v1055, %v1087
        %v1090 = vmul.f32 %v1060, %v1087
        %v1091 = vmul.f32 %v1065, %v1087
        %v1092 = vmul.f32 %v1070, %v1087
        %v1093 = vmul.f32 %v1075, %v1087
        %v1094 = vmul.f32 %v1080, %v1087
        %v1095 = vmul.f32 %v1085, %v1087
        %v1096 = vadd.f32 %v1031, %v1088
        %v1097 = vadd.f32 %v1032, %v1089
        %v1098 = vadd.f32 %v1033, %v1090
        %v1099 = vadd.f32 %v1034, %v1091
        %v1100 = vadd.f32 %v1035, %v1092
        %v1101 = vadd.f32 %v1036, %v1093
        %v1102 = vadd.f32 %v1037, %v1094
        %v1103 = vadd.f32 %v1038, %v1095
        %v1104 = vld [vmem:[%s384 + $0xb] sm:$0xff]
        %v1105 = vld [vmem:[%s384 + $0x13] sm:$0xff]
        %v1106 = vld [vmem:[%s384 + $0x1b] sm:$0xff]
        %v1107 = vld [vmem:[%s384 + $0x23] sm:$0xff]
        %v1108 = vld [vmem:[%s384 + $0x2b] sm:$0xff]
        %v1109 = vld [vmem:[%s384 + $0x33] sm:$0xff]
        %v1110 = vld [vmem:[%s384 + $0x3b] sm:$0xff]
        %v1111 = vld [vmem:[%s384 + $0x43] sm:$0xff]
        %1113 = vset.pattern.permute.xlu0 0
        %1114 = vperm.xlu0 %1113, %v1104
        %v1115 = vpop.permute.xlu0 %1114
        %1118 = vset.pattern.permute.xlu0 0
        %1119 = vperm.xlu0 %1118, %v1105
        %v1120 = vpop.permute.xlu0 %1119
        %1123 = vset.pattern.permute.xlu0 0
        %1124 = vperm.xlu0 %1123, %v1106
        %v1125 = vpop.permute.xlu0 %1124
        %1128 = vset.pattern.permute.xlu0 0
        %1129 = vperm.xlu0 %1128, %v1107
        %v1130 = vpop.permute.xlu0 %1129
        %1133 = vset.pattern.permute.xlu0 0
        %1134 = vperm.xlu0 %1133, %v1108
        %v1135 = vpop.permute.xlu0 %1134
        %1138 = vset.pattern.permute.xlu0 0
        %1139 = vperm.xlu0 %1138, %v1109
        %v1140 = vpop.permute.xlu0 %1139
        %1143 = vset.pattern.permute.xlu0 0
        %1144 = vperm.xlu0 %1143, %v1110
        %v1145 = vpop.permute.xlu0 %1144
        %1148 = vset.pattern.permute.xlu0 0
        %1149 = vperm.xlu0 %1148, %v1111
        %v1150 = vpop.permute.xlu0 %1149
        %v1152 = vperm.slane %v387, 3
        %v1153 = vmul.f32 %v1115, %v1152
        %v1154 = vmul.f32 %v1120, %v1152
        %v1155 = vmul.f32 %v1125, %v1152
        %v1156 = vmul.f32 %v1130, %v1152
        %v1157 = vmul.f32 %v1135, %v1152
        %v1158 = vmul.f32 %v1140, %v1152
        %v1159 = vmul.f32 %v1145, %v1152
        %v1160 = vmul.f32 %v1150, %v1152
        %v1161 = vadd.f32 %v1096, %v1153
        %v1162 = vadd.f32 %v1097, %v1154
        %v1163 = vadd.f32 %v1098, %v1155
        %v1164 = vadd.f32 %v1099, %v1156
        %v1165 = vadd.f32 %v1100, %v1157
        %v1166 = vadd.f32 %v1101, %v1158
        %v1167 = vadd.f32 %v1102, %v1159
        %v1168 = vadd.f32 %v1103, %v1160
        %v1169 = vld [vmem:[%s384 + $0xc] sm:$0xff]
        %v1170 = vld [vmem:[%s384 + $0x14] sm:$0xff]
        %v1171 = vld [vmem:[%s384 + $0x1c] sm:$0xff]
        %v1172 = vld [vmem:[%s384 + $0x24] sm:$0xff]
        %v1173 = vld [vmem:[%s384 + $0x2c] sm:$0xff]
        %v1174 = vld [vmem:[%s384 + $0x34] sm:$0xff]
        %v1175 = vld [vmem:[%s384 + $0x3c] sm:$0xff]
        %v1176 = vld [vmem:[%s384 + $0x44] sm:$0xff]
        %1178 = vset.pattern.permute.xlu0 0
        %1179 = vperm.xlu0 %1178, %v1169
        %v1180 = vpop.permute.xlu0 %1179
        %1183 = vset.pattern.permute.xlu0 0
        %1184 = vperm.xlu0 %1183, %v1170
        %v1185 = vpop.permute.xlu0 %1184
        %1188 = vset.pattern.permute.xlu0 0
        %1189 = vperm.xlu0 %1188, %v1171
        %v1190 = vpop.permute.xlu0 %1189
        %1193 = vset.pattern.permute.xlu0 0
        %1194 = vperm.xlu0 %1193, %v1172
        %v1195 = vpop.permute.xlu0 %1194
        %1198 = vset.pattern.permute.xlu0 0
        %1199 = vperm.xlu0 %1198, %v1173
        %v1200 = vpop.permute.xlu0 %1199
        %1203 = vset.pattern.permute.xlu0 0
        %1204 = vperm.xlu0 %1203, %v1174
        %v1205 = vpop.permute.xlu0 %1204
        %1208 = vset.pattern.permute.xlu0 0
        %1209 = vperm.xlu0 %1208, %v1175
        %v1210 = vpop.permute.xlu0 %1209
        %1213 = vset.pattern.permute.xlu0 0
        %1214 = vperm.xlu0 %1213, %v1176
        %v1215 = vpop.permute.xlu0 %1214
        %v1217 = vperm.slane %v387, 4
        %v1218 = vmul.f32 %v1180, %v1217
        %v1219 = vmul.f32 %v1185, %v1217
        %v1220 = vmul.f32 %v1190, %v1217
        %v1221 = vmul.f32 %v1195, %v1217
        %v1222 = vmul.f32 %v1200, %v1217
        %v1223 = vmul.f32 %v1205, %v1217
        %v1224 = vmul.f32 %v1210, %v1217
        %v1225 = vmul.f32 %v1215, %v1217
        %v1226 = vadd.f32 %v1161, %v1218
        %v1227 = vadd.f32 %v1162, %v1219
        %v1228 = vadd.f32 %v1163, %v1220
        %v1229 = vadd.f32 %v1164, %v1221
        %v1230 = vadd.f32 %v1165, %v1222
        %v1231 = vadd.f32 %v1166, %v1223
        %v1232 = vadd.f32 %v1167, %v1224
        %v1233 = vadd.f32 %v1168, %v1225
        %v1234 = vld [vmem:[%s384 + $0xd] sm:$0xff]
        %v1235 = vld [vmem:[%s384 + $0x15] sm:$0xff]
        %v1236 = vld [vmem:[%s384 + $0x1d] sm:$0xff]
        %v1237 = vld [vmem:[%s384 + $0x25] sm:$0xff]
        %v1238 = vld [vmem:[%s384 + $0x2d] sm:$0xff]
        %v1239 = vld [vmem:[%s384 + $0x35] sm:$0xff]
        %v1240 = vld [vmem:[%s384 + $0x3d] sm:$0xff]
        %v1241 = vld [vmem:[%s384 + $0x45] sm:$0xff]
        %1243 = vset.pattern.permute.xlu0 0
        %1244 = vperm.xlu0 %1243, %v1234
        %v1245 = vpop.permute.xlu0 %1244
        %1248 = vset.pattern.permute.xlu0 0
        %1249 = vperm.xlu0 %1248, %v1235
        %v1250 = vpop.permute.xlu0 %1249
        %1253 = vset.pattern.permute.xlu0 0
        %1254 = vperm.xlu0 %1253, %v1236
        %v1255 = vpop.permute.xlu0 %1254
        %1258 = vset.pattern.permute.xlu0 0
        %1259 = vperm.xlu0 %1258, %v1237
        %v1260 = vpop.permute.xlu0 %1259
        %1263 = vset.pattern.permute.xlu0 0
        %1264 = vperm.xlu0 %1263, %v1238
        %v1265 = vpop.permute.xlu0 %1264
        %1268 = vset.pattern.permute.xlu0 0
        %1269 = vperm.xlu0 %1268, %v1239
        %v1270 = vpop.permute.xlu0 %1269
        %1273 = vset.pattern.permute.xlu0 0
        %1274 = vperm.xlu0 %1273, %v1240
        %v1275 = vpop.permute.xlu0 %1274
        %1278 = vset.pattern.permute.xlu0 0
        %1279 = vperm.xlu0 %1278, %v1241
        %v1280 = vpop.permute.xlu0 %1279
        %v1282 = vperm.slane %v387, 5
        %v1283 = vmul.f32 %v1245, %v1282
        %v1284 = vmul.f32 %v1250, %v1282
        %v1285 = vmul.f32 %v1255, %v1282
        %v1286 = vmul.f32 %v1260, %v1282
        %v1287 = vmul.f32 %v1265, %v1282
        %v1288 = vmul.f32 %v1270, %v1282
        %v1289 = vmul.f32 %v1275, %v1282
        %v1290 = vmul.f32 %v1280, %v1282
        %v1291 = vadd.f32 %v1226, %v1283
        %v1292 = vadd.f32 %v1227, %v1284
        %v1293 = vadd.f32 %v1228, %v1285
        %v1294 = vadd.f32 %v1229, %v1286
        %v1295 = vadd.f32 %v1230, %v1287
        %v1296 = vadd.f32 %v1231, %v1288
        %v1297 = vadd.f32 %v1232, %v1289
        %v1298 = vadd.f32 %v1233, %v1290
        %v1299 = vld [vmem:[%s384 + $0xe] sm:$0xff]
        %v1300 = vld [vmem:[%s384 + $0x16] sm:$0xff]
        %v1301 = vld [vmem:[%s384 + $0x1e] sm:$0xff]
        %v1302 = vld [vmem:[%s384 + $0x26] sm:$0xff]
        %v1303 = vld [vmem:[%s384 + $0x2e] sm:$0xff]
        %v1304 = vld [vmem:[%s384 + $0x36] sm:$0xff]
        %v1305 = vld [vmem:[%s384 + $0x3e] sm:$0xff]
        %v1306 = vld [vmem:[%s384 + $0x46] sm:$0xff]
        %1308 = vset.pattern.permute.xlu0 0
        %1309 = vperm.xlu0 %1308, %v1299
        %v1310 = vpop.permute.xlu0 %1309
        %1313 = vset.pattern.permute.xlu0 0
        %1314 = vperm.xlu0 %1313, %v1300
        %v1315 = vpop.permute.xlu0 %1314
        %1318 = vset.pattern.permute.xlu0 0
        %1319 = vperm.xlu0 %1318, %v1301
        %v1320 = vpop.permute.xlu0 %1319
        %1323 = vset.pattern.permute.xlu0 0
        %1324 = vperm.xlu0 %1323, %v1302
        %v1325 = vpop.permute.xlu0 %1324
        %1328 = vset.pattern.permute.xlu0 0
        %1329 = vperm.xlu0 %1328, %v1303
        %v1330 = vpop.permute.xlu0 %1329
        %1333 = vset.pattern.permute.xlu0 0
        %1334 = vperm.xlu0 %1333, %v1304
        %v1335 = vpop.permute.xlu0 %1334
        %1338 = vset.pattern.permute.xlu0 0
        %1339 = vperm.xlu0 %1338, %v1305
        %v1340 = vpop.permute.xlu0 %1339
        %1343 = vset.pattern.permute.xlu0 0
        %1344 = vperm.xlu0 %1343, %v1306
        %v1345 = vpop.permute.xlu0 %1344
        %v1347 = vperm.slane %v387, 6
        %v1348 = vmul.f32 %v1310, %v1347
        %v1349 = vmul.f32 %v1315, %v1347
        %v1350 = vmul.f32 %v1320, %v1347
        %v1351 = vmul.f32 %v1325, %v1347
        %v1352 = vmul.f32 %v1330, %v1347
        %v1353 = vmul.f32 %v1335, %v1347
        %v1354 = vmul.f32 %v1340, %v1347
        %v1355 = vmul.f32 %v1345, %v1347
        %v1356 = vadd.f32 %v1291, %v1348
        %v1357 = vadd.f32 %v1292, %v1349
        %v1358 = vadd.f32 %v1293, %v1350
        %v1359 = vadd.f32 %v1294, %v1351
        %v1360 = vadd.f32 %v1295, %v1352
        %v1361 = vadd.f32 %v1296, %v1353
        %v1362 = vadd.f32 %v1297, %v1354
        %v1363 = vadd.f32 %v1298, %v1355
        %v1364 = vld [vmem:[%s384 + $0xf] sm:$0xff]
        %v1365 = vld [vmem:[%s384 + $0x17] sm:$0xff]
        %v1366 = vld [vmem:[%s384 + $0x1f] sm:$0xff]
        %v1367 = vld [vmem:[%s384 + $0x27] sm:$0xff]
        %v1368 = vld [vmem:[%s384 + $0x2f] sm:$0xff]
        %v1369 = vld [vmem:[%s384 + $0x37] sm:$0xff]
        %v1370 = vld [vmem:[%s384 + $0x3f] sm:$0xff]
        %v1371 = vld [vmem:[%s384 + $0x47] sm:$0xff]
        %1373 = vset.pattern.permute.xlu0 0
        %1374 = vperm.xlu0 %1373, %v1364
        %v1375 = vpop.permute.xlu0 %1374
        %1378 = vset.pattern.permute.xlu0 0
        %1379 = vperm.xlu0 %1378, %v1365
        %v1380 = vpop.permute.xlu0 %1379
        %1383 = vset.pattern.permute.xlu0 0
        %1384 = vperm.xlu0 %1383, %v1366
        %v1385 = vpop.permute.xlu0 %1384
        %1388 = vset.pattern.permute.xlu0 0
        %1389 = vperm.xlu0 %1388, %v1367
        %v1390 = vpop.permute.xlu0 %1389
        %1393 = vset.pattern.permute.xlu0 0
        %1394 = vperm.xlu0 %1393, %v1368
        %v1395 = vpop.permute.xlu0 %1394
        %1398 = vset.pattern.permute.xlu0 0
        %1399 = vperm.xlu0 %1398, %v1369
        %v1400 = vpop.permute.xlu0 %1399
        %1403 = vset.pattern.permute.xlu0 0
        %1404 = vperm.xlu0 %1403, %v1370
        %v1405 = vpop.permute.xlu0 %1404
        %1408 = vset.pattern.permute.xlu0 0
        %1409 = vperm.xlu0 %1408, %v1371
        %v1410 = vpop.permute.xlu0 %1409
        %v1412 = vperm.slane %v387, 7
        %v1413 = vmul.f32 %v1375, %v1412
        %v1414 = vmul.f32 %v1380, %v1412
        %v1415 = vmul.f32 %v1385, %v1412
        %v1416 = vmul.f32 %v1390, %v1412
        %v1417 = vmul.f32 %v1395, %v1412
        %v1418 = vmul.f32 %v1400, %v1412
        %v1419 = vmul.f32 %v1405, %v1412
        %v1420 = vmul.f32 %v1410, %v1412
        %v1421 = vadd.f32 %v1356, %v1413
        %v1422 = vadd.f32 %v1357, %v1414
        %v1423 = vadd.f32 %v1358, %v1415
        %v1424 = vadd.f32 %v1359, %v1416
        %v1425 = vadd.f32 %v1360, %v1417
        %v1426 = vadd.f32 %v1361, %v1418
        %v1427 = vadd.f32 %v1362, %v1419
        %v1428 = vadd.f32 %v1363, %v1420
        %v1429 = vld [vmem:[%s384 + $0x10] sm:$0xff]
        %v1430 = vld [vmem:[%s384 + $0x18] sm:$0xff]
        %v1431 = vld [vmem:[%s384 + $0x20] sm:$0xff]
        %v1432 = vld [vmem:[%s384 + $0x28] sm:$0xff]
        %v1433 = vld [vmem:[%s384 + $0x30] sm:$0xff]
        %v1434 = vld [vmem:[%s384 + $0x38] sm:$0xff]
        %v1435 = vld [vmem:[%s384 + $0x40] sm:$0xff]
        %v1436 = vld [vmem:[%s384 + $0x48] sm:$0xff]
        %1438 = vset.pattern.permute.xlu0 0
        %1439 = vperm.xlu0 %1438, %v1429
        %v1440 = vpop.permute.xlu0 %1439
        %1443 = vset.pattern.permute.xlu0 0
        %1444 = vperm.xlu0 %1443, %v1430
        %v1445 = vpop.permute.xlu0 %1444
        %1448 = vset.pattern.permute.xlu0 0
        %1449 = vperm.xlu0 %1448, %v1431
        %v1450 = vpop.permute.xlu0 %1449
        %1453 = vset.pattern.permute.xlu0 0
        %1454 = vperm.xlu0 %1453, %v1432
        %v1455 = vpop.permute.xlu0 %1454
        %1458 = vset.pattern.permute.xlu0 0
        %1459 = vperm.xlu0 %1458, %v1433
        %v1460 = vpop.permute.xlu0 %1459
        %1463 = vset.pattern.permute.xlu0 0
        %1464 = vperm.xlu0 %1463, %v1434
        %v1465 = vpop.permute.xlu0 %1464
        %1468 = vset.pattern.permute.xlu0 0
        %1469 = vperm.xlu0 %1468, %v1435
        %v1470 = vpop.permute.xlu0 %1469
        %1473 = vset.pattern.permute.xlu0 0
        %1474 = vperm.xlu0 %1473, %v1436
        %v1475 = vpop.permute.xlu0 %1474
        %v1477 = vperm.slane %v388, 0
        %v1478 = vmul.f32 %v1440, %v1477
        %v1479 = vmul.f32 %v1445, %v1477
        %v1480 = vmul.f32 %v1450, %v1477
        %v1481 = vmul.f32 %v1455, %v1477
        %v1482 = vmul.f32 %v1460, %v1477
        %v1483 = vmul.f32 %v1465, %v1477
        %v1484 = vmul.f32 %v1470, %v1477
        %v1485 = vmul.f32 %v1475, %v1477
        %v1486 = vadd.f32 %v1421, %v1478
        %v1487 = vadd.f32 %v1422, %v1479
        %v1488 = vadd.f32 %v1423, %v1480
        %v1489 = vadd.f32 %v1424, %v1481
        %v1490 = vadd.f32 %v1425, %v1482
        %v1491 = vadd.f32 %v1426, %v1483
        %v1492 = vadd.f32 %v1427, %v1484
        %v1493 = vadd.f32 %v1428, %v1485
        %v1494 = vld [vmem:[%s2] sm:$0x1]
        %v1496 = vperm.slane %v1494, 0
        %v1498 = vadd.f32 %v1486, %v1496
        %v1499 = vadd.f32 %v1487, %v1496
        %v1500 = vadd.f32 %v1488, %v1496
        %v1501 = vadd.f32 %v1489, %v1496
        %v1502 = vadd.f32 %v1490, %v1496
        %v1503 = vadd.f32 %v1491, %v1496
        %v1504 = vadd.f32 %v1492, %v1496
        %v1505 = vadd.f32 %v1493, %v1496
        %vm1506 = vcmp.ge.f32.partialorder %v1498, 0.0
        %vm1507 = vcmp.ge.f32.partialorder %v1499, 0.0
        %vm1508 = vcmp.ge.f32.partialorder %v1500, 0.0
        %vm1509 = vcmp.ge.f32.partialorder %v1501, 0.0
        %vm1510 = vcmp.ge.f32.partialorder %v1502, 0.0
        %vm1511 = vcmp.ge.f32.partialorder %v1503, 0.0
        %vm1512 = vcmp.ge.f32.partialorder %v1504, 0.0
        %vm1513 = vcmp.ge.f32.partialorder %v1505, 0.0
        %v1514 = vmul.f32 %v1498, 0.1
        %v1515 = vmul.f32 %v1499, 0.1
        %v1516 = vmul.f32 %v1500, 0.1
        %v1517 = vmul.f32 %v1501, 0.1
        %v1518 = vmul.f32 %v1502, 0.1
        %v1519 = vmul.f32 %v1503, 0.1
        %v1520 = vmul.f32 %v1504, 0.1
        %v1521 = vmul.f32 %v1505, 0.1
        %v1522 = vsel %vm1506, %v1498, %v1514
        %v1523 = vsel %vm1507, %v1499, %v1515
        %v1524 = vsel %vm1508, %v1500, %v1516
        %v1525 = vsel %vm1509, %v1501, %v1517
        %v1526 = vsel %vm1510, %v1502, %v1518
        %v1527 = vsel %vm1511, %v1503, %v1519
        %v1528 = vsel %vm1512, %v1504, %v1520
        %v1529 = vsel %vm1513, %v1505, %v1521
        %vm1530 = vcmask 61440
        %1531 = vst.msk [vmem:[#allocation3] sm:$0x1f] %vm1530, 0.0
        %vm1532 = vcmask 64512
        %1533 = vst.msk [vmem:[#allocation3 + $0x5] sm:$0xff] %vm1532, %v1522
        %1534 = vst.msk [vmem:[#allocation3 + $0xd] sm:$0xff] %vm1532, %v1523
        %1535 = vst.msk [vmem:[#allocation3 + $0x15] sm:$0xff] %vm1532, %v1524
        %1536 = vst.msk [vmem:[#allocation3 + $0x1d] sm:$0xff] %vm1532, %v1525
        %1537 = vst.msk [vmem:[#allocation3 + $0x25] sm:$0xff] %vm1532, %v1526
        %1538 = vst.msk [vmem:[#allocation3 + $0x2d] sm:$0xff] %vm1532, %v1527
        %1539 = vst.msk [vmem:[#allocation3 + $0x35] sm:$0xff] %vm1532, %v1528
        %1540 = vst.msk [vmem:[#allocation3 + $0x3d] sm:$0xff] %vm1532, %v1529
        %vm1541 = vcmask 62464
        %1542 = vst.msk [vmem:[#allocation3 + $0x45] sm:$0x3f] %vm1541, 0.0
        %v1543 = vld [vmem:[#allocation3] ss:$2 sm:$0xff]
        %s1544 = scalar_lea.vmem [#allocation3], 16
        %v1545 = vld [vmem:[%s1544] ss:$2 sm:$0xff]
        %s1546 = scalar_lea.vmem [#allocation3], 32
        %v1547 = vld [vmem:[%s1546] ss:$2 sm:$0xff]
        %s1548 = scalar_lea.vmem [#allocation3], 48
        %v1549 = vld [vmem:[%s1548] ss:$2 sm:$0xff]
        %1550 = vst.msk [vmem:[#allocation2] sm:$0xff] %vm1532, %v1543
        %1551 = vst.msk [vmem:[#allocation2 + $0x10] sm:$0xff] %vm1532, %v1545
        %1552 = vst.msk [vmem:[#allocation2 + $0x20] sm:$0xff] %vm1532, %v1547
        %1553 = vst.msk [vmem:[#allocation2 + $0x30] sm:$0xff] %vm1532, %v1549
        %s1554 = scalar_lea.vmem [#allocation3], 1
        %v1555 = vld [vmem:[%s1554] ss:$2 sm:$0xff]
        %s1556 = scalar_lea.vmem [#allocation3], 17
        %v1557 = vld [vmem:[%s1556] ss:$2 sm:$0xff]
        %s1558 = scalar_lea.vmem [#allocation3], 33
        %v1559 = vld [vmem:[%s1558] ss:$2 sm:$0xff]
        %s1560 = scalar_lea.vmem [#allocation3], 49
        %v1561 = vld [vmem:[%s1560] ss:$2 sm:$0xff]
        %1566 = vrot.lane.b32.xlu0 %v1555, 8
        %v1567 = vpop.permute.xlu0 %1566
        %1568 = vrot.lane.b32.xlu0 %v1557, 8
        %v1569 = vpop.permute.xlu0 %1568
        %1570 = vrot.lane.b32.xlu0 %v1559, 8
        %v1571 = vpop.permute.xlu0 %1570
        %1572 = vrot.lane.b32.xlu0 %v1561, 8
        %v1573 = vpop.permute.xlu0 %1572
        %vm1578 = vcmask 130112
        %1579 = vst.msk [vmem:[#allocation2] sm:$0xff] %vm1578, %v1567
        %1580 = vst.msk [vmem:[#allocation2 + $0x10] sm:$0xff] %vm1578, %v1569
        %1581 = vst.msk [vmem:[#allocation2 + $0x20] sm:$0xff] %vm1578, %v1571
        %1582 = vst.msk [vmem:[#allocation2 + $0x30] sm:$0xff] %vm1578, %v1573
        %s1583 = scalar_lea.vmem [#allocation3], 2
        %v1584 = vld [vmem:[%s1583] ss:$2 sm:$0xff]
        %s1585 = scalar_lea.vmem [#allocation3], 18
        %v1586 = vld [vmem:[%s1585] ss:$2 sm:$0xff]
        %s1587 = scalar_lea.vmem [#allocation3], 34
        %v1588 = vld [vmem:[%s1587] ss:$2 sm:$0xff]
        %s1589 = scalar_lea.vmem [#allocation3], 50
        %v1590 = vld [vmem:[%s1589] ss:$2 sm:$0xff]
        %1595 = vrot.lane.b32.xlu0 %v1584, 16
        %v1596 = vpop.permute.xlu0 %1595
        %1597 = vrot.lane.b32.xlu0 %v1586, 16
        %v1598 = vpop.permute.xlu0 %1597
        %1599 = vrot.lane.b32.xlu0 %v1588, 16
        %v1600 = vpop.permute.xlu0 %1599
        %1601 = vrot.lane.b32.xlu0 %v1590, 16
        %v1602 = vpop.permute.xlu0 %1601
        %vm1607 = vcmask 195712
        %1608 = vst.msk [vmem:[#allocation2] sm:$0xff] %vm1607, %v1596
        %1609 = vst.msk [vmem:[#allocation2 + $0x10] sm:$0xff] %vm1607, %v1598
        %1610 = vst.msk [vmem:[#allocation2 + $0x20] sm:$0xff] %vm1607, %v1600
        %1611 = vst.msk [vmem:[#allocation2 + $0x30] sm:$0xff] %vm1607, %v1602
        %s1612 = scalar_lea.vmem [#allocation3], 3
        %v1613 = vld [vmem:[%s1612] ss:$2 sm:$0xff]
        %s1614 = scalar_lea.vmem [#allocation3], 19
        %v1615 = vld [vmem:[%s1614] ss:$2 sm:$0xff]
        %s1616 = scalar_lea.vmem [#allocation3], 35
        %v1617 = vld [vmem:[%s1616] ss:$2 sm:$0xff]
        %s1618 = scalar_lea.vmem [#allocation3], 51
        %v1619 = vld [vmem:[%s1618] ss:$2 sm:$0xff]
        %1624 = vrot.lane.b32.xlu0 %v1613, 24
        %v1625 = vpop.permute.xlu0 %1624
        %1626 = vrot.lane.b32.xlu0 %v1615, 24
        %v1627 = vpop.permute.xlu0 %1626
        %1628 = vrot.lane.b32.xlu0 %v1617, 24
        %v1629 = vpop.permute.xlu0 %1628
        %1630 = vrot.lane.b32.xlu0 %v1619, 24
        %v1631 = vpop.permute.xlu0 %1630
        %vm1636 = vcmask 261312
        %1637 = vst.msk [vmem:[#allocation2] sm:$0xff] %vm1636, %v1625
        %1638 = vst.msk [vmem:[#allocation2 + $0x10] sm:$0xff] %vm1636, %v1627
        %1639 = vst.msk [vmem:[#allocation2 + $0x20] sm:$0xff] %vm1636, %v1629
        %1640 = vst.msk [vmem:[#allocation2 + $0x30] sm:$0xff] %vm1636, %v1631
        %s1641 = scalar_lea.vmem [#allocation3], 4
        %v1642 = vld [vmem:[%s1641] ss:$2 sm:$0xff]
        %s1643 = scalar_lea.vmem [#allocation3], 20
        %v1644 = vld [vmem:[%s1643] ss:$2 sm:$0xff]
        %s1645 = scalar_lea.vmem [#allocation3], 36
        %v1646 = vld [vmem:[%s1645] ss:$2 sm:$0xff]
        %s1647 = scalar_lea.vmem [#allocation3], 52
        %v1648 = vld [vmem:[%s1647] ss:$2 sm:$0xff]
        %1653 = vrot.lane.b32.xlu0 %v1642, 32
        %v1654 = vpop.permute.xlu0 %1653
        %1655 = vrot.lane.b32.xlu0 %v1644, 32
        %v1656 = vpop.permute.xlu0 %1655
        %1657 = vrot.lane.b32.xlu0 %v1646, 32
        %v1658 = vpop.permute.xlu0 %1657
        %1659 = vrot.lane.b32.xlu0 %v1648, 32
        %v1660 = vpop.permute.xlu0 %1659
        %vm1665 = vcmask 326912
        %1666 = vst.msk [vmem:[#allocation2] sm:$0xff] %vm1665, %v1654
        %1667 = vst.msk [vmem:[#allocation2 + $0x10] sm:$0xff] %vm1665, %v1656
        %1668 = vst.msk [vmem:[#allocation2 + $0x20] sm:$0xff] %vm1665, %v1658
        %1669 = vst.msk [vmem:[#allocation2 + $0x30] sm:$0xff] %vm1665, %v1660
        %s1670 = scalar_lea.vmem [#allocation3], 5
        %v1671 = vld [vmem:[%s1670] ss:$2 sm:$0xff]
        %s1672 = scalar_lea.vmem [#allocation3], 21
        %v1673 = vld [vmem:[%s1672] ss:$2 sm:$0xff]
        %s1674 = scalar_lea.vmem [#allocation3], 37
        %v1675 = vld [vmem:[%s1674] ss:$2 sm:$0xff]
        %s1676 = scalar_lea.vmem [#allocation3], 53
        %v1677 = vld [vmem:[%s1676] ss:$2 sm:$0xff]
        %1682 = vrot.lane.b32.xlu0 %v1671, 40
        %v1683 = vpop.permute.xlu0 %1682
        %1684 = vrot.lane.b32.xlu0 %v1673, 40
        %v1685 = vpop.permute.xlu0 %1684
        %1686 = vrot.lane.b32.xlu0 %v1675, 40
        %v1687 = vpop.permute.xlu0 %1686
        %1688 = vrot.lane.b32.xlu0 %v1677, 40
        %v1689 = vpop.permute.xlu0 %1688
        %vm1694 = vcmask 392512
        %1695 = vst.msk [vmem:[#allocation2] sm:$0xff] %vm1694, %v1683
        %1696 = vst.msk [vmem:[#allocation2 + $0x10] sm:$0xff] %vm1694, %v1685
        %1697 = vst.msk [vmem:[#allocation2 + $0x20] sm:$0xff] %vm1694, %v1687
        %1698 = vst.msk [vmem:[#allocation2 + $0x30] sm:$0xff] %vm1694, %v1689
        %s1699 = scalar_lea.vmem [#allocation3], 6
        %v1700 = vld [vmem:[%s1699] ss:$2 sm:$0xff]
        %s1701 = scalar_lea.vmem [#allocation3], 22
        %v1702 = vld [vmem:[%s1701] ss:$2 sm:$0xff]
        %s1703 = scalar_lea.vmem [#allocation3], 38
        %v1704 = vld [vmem:[%s1703] ss:$2 sm:$0xff]
        %s1705 = scalar_lea.vmem [#allocation3], 54
        %v1706 = vld [vmem:[%s1705] ss:$2 sm:$0xff]
        %1711 = vrot.lane.b32.xlu0 %v1700, 48
        %v1712 = vpop.permute.xlu0 %1711
        %1713 = vrot.lane.b32.xlu0 %v1702, 48
        %v1714 = vpop.permute.xlu0 %1713
        %1715 = vrot.lane.b32.xlu0 %v1704, 48
        %v1716 = vpop.permute.xlu0 %1715
        %1717 = vrot.lane.b32.xlu0 %v1706, 48
        %v1718 = vpop.permute.xlu0 %1717
        %vm1723 = vcmask 458112
        %1724 = vst.msk [vmem:[#allocation2] sm:$0xff] %vm1723, %v1712
        %1725 = vst.msk [vmem:[#allocation2 + $0x10] sm:$0xff] %vm1723, %v1714
        %1726 = vst.msk [vmem:[#allocation2 + $0x20] sm:$0xff] %vm1723, %v1716
        %1727 = vst.msk [vmem:[#allocation2 + $0x30] sm:$0xff] %vm1723, %v1718
        %s1728 = scalar_lea.vmem [#allocation3], 7
        %v1729 = vld [vmem:[%s1728] ss:$2 sm:$0xff]
        %s1730 = scalar_lea.vmem [#allocation3], 23
        %v1731 = vld [vmem:[%s1730] ss:$2 sm:$0xff]
        %s1732 = scalar_lea.vmem [#allocation3], 39
        %v1733 = vld [vmem:[%s1732] ss:$2 sm:$0xff]
        %s1734 = scalar_lea.vmem [#allocation3], 55
        %v1735 = vld [vmem:[%s1734] ss:$2 sm:$0xff]
        %1740 = vrot.lane.b32.xlu0 %v1729, 56
        %v1741 = vpop.permute.xlu0 %1740
        %1742 = vrot.lane.b32.xlu0 %v1731, 56
        %v1743 = vpop.permute.xlu0 %1742
        %1744 = vrot.lane.b32.xlu0 %v1733, 56
        %v1745 = vpop.permute.xlu0 %1744
        %1746 = vrot.lane.b32.xlu0 %v1735, 56
        %v1747 = vpop.permute.xlu0 %1746
        %vm1752 = vcmask 523712
        %1753 = vst.msk [vmem:[#allocation2] sm:$0xff] %vm1752, %v1741
        %1754 = vst.msk [vmem:[#allocation2 + $0x10] sm:$0xff] %vm1752, %v1743
        %1755 = vst.msk [vmem:[#allocation2 + $0x20] sm:$0xff] %vm1752, %v1745
        %1756 = vst.msk [vmem:[#allocation2 + $0x30] sm:$0xff] %vm1752, %v1747
        %s1757 = scalar_lea.vmem [#allocation3], 8
        %v1758 = vld [vmem:[%s1757] ss:$2 sm:$0xff]
        %s1759 = scalar_lea.vmem [#allocation3], 24
        %v1760 = vld [vmem:[%s1759] ss:$2 sm:$0xff]
        %s1761 = scalar_lea.vmem [#allocation3], 40
        %v1762 = vld [vmem:[%s1761] ss:$2 sm:$0xff]
        %s1763 = scalar_lea.vmem [#allocation3], 56
        %v1764 = vld [vmem:[%s1763] ss:$2 sm:$0xff]
        %1769 = vrot.lane.b32.xlu0 %v1758, 64
        %v1770 = vpop.permute.xlu0 %1769
        %1771 = vrot.lane.b32.xlu0 %v1760, 64
        %v1772 = vpop.permute.xlu0 %1771
        %1773 = vrot.lane.b32.xlu0 %v1762, 64
        %v1774 = vpop.permute.xlu0 %1773
        %1775 = vrot.lane.b32.xlu0 %v1764, 64
        %v1776 = vpop.permute.xlu0 %1775
        %vm1781 = vcmask 589312
        %1782 = vst.msk [vmem:[#allocation2] sm:$0xff] %vm1781, %v1770
        %1783 = vst.msk [vmem:[#allocation2 + $0x10] sm:$0xff] %vm1781, %v1772
        %1784 = vst.msk [vmem:[#allocation2 + $0x20] sm:$0xff] %vm1781, %v1774
        %1785 = vst.msk [vmem:[#allocation2 + $0x30] sm:$0xff] %vm1781, %v1776
        %s1786 = scalar_lea.vmem [#allocation3], 9
        %v1787 = vld [vmem:[%s1786] ss:$2 sm:$0xff]
        %s1788 = scalar_lea.vmem [#allocation3], 25
        %v1789 = vld [vmem:[%s1788] ss:$2 sm:$0xff]
        %s1790 = scalar_lea.vmem [#allocation3], 41
        %v1791 = vld [vmem:[%s1790] ss:$2 sm:$0xff]
        %s1792 = scalar_lea.vmem [#allocation3], 57
        %v1793 = vld [vmem:[%s1792] ss:$2 sm:$0xff]
        %1798 = vrot.lane.b32.xlu0 %v1787, 72
        %v1799 = vpop.permute.xlu0 %1798
        %1800 = vrot.lane.b32.xlu0 %v1789, 72
        %v1801 = vpop.permute.xlu0 %1800
        %1802 = vrot.lane.b32.xlu0 %v1791, 72
        %v1803 = vpop.permute.xlu0 %1802
        %1804 = vrot.lane.b32.xlu0 %v1793, 72
        %v1805 = vpop.permute.xlu0 %1804
        %vm1810 = vcmask 654912
        %1811 = vst.msk [vmem:[#allocation2] sm:$0xff] %vm1810, %v1799
        %1812 = vst.msk [vmem:[#allocation2 + $0x10] sm:$0xff] %vm1810, %v1801
        %1813 = vst.msk [vmem:[#allocation2 + $0x20] sm:$0xff] %vm1810, %v1803
        %1814 = vst.msk [vmem:[#allocation2 + $0x30] sm:$0xff] %vm1810, %v1805
        %s1815 = scalar_lea.vmem [#allocation3], 10
        %v1816 = vld [vmem:[%s1815] ss:$2 sm:$0xff]
        %s1817 = scalar_lea.vmem [#allocation3], 26
        %v1818 = vld [vmem:[%s1817] ss:$2 sm:$0xff]
        %s1819 = scalar_lea.vmem [#allocation3], 42
        %v1820 = vld [vmem:[%s1819] ss:$2 sm:$0xff]
        %s1821 = scalar_lea.vmem [#allocation3], 58
        %v1822 = vld [vmem:[%s1821] ss:$2 sm:$0xff]
        %1827 = vrot.lane.b32.xlu0 %v1816, 80
        %v1828 = vpop.permute.xlu0 %1827
        %1829 = vrot.lane.b32.xlu0 %v1818, 80
        %v1830 = vpop.permute.xlu0 %1829
        %1831 = vrot.lane.b32.xlu0 %v1820, 80
        %v1832 = vpop.permute.xlu0 %1831
        %1833 = vrot.lane.b32.xlu0 %v1822, 80
        %v1834 = vpop.permute.xlu0 %1833
        %vm1839 = vcmask 720512
        %1840 = vst.msk [vmem:[#allocation2] sm:$0xff] %vm1839, %v1828
        %1841 = vst.msk [vmem:[#allocation2 + $0x10] sm:$0xff] %vm1839, %v1830
        %1842 = vst.msk [vmem:[#allocation2 + $0x20] sm:$0xff] %vm1839, %v1832
        %1843 = vst.msk [vmem:[#allocation2 + $0x30] sm:$0xff] %vm1839, %v1834
        %v1844 = vld [vmem:[#allocation2] sm:$0xff]
        %v1845 = vld [vmem:[#allocation2 + $0x10] sm:$0xff]
        %v1846 = vld [vmem:[#allocation2 + $0x20] sm:$0xff]
        %v1847 = vld [vmem:[#allocation2 + $0x30] sm:$0xff]
        %v1848 = vpack.c.bf16 %v1845, %v1844
        %v1849 = vpack.c.bf16 %v1847, %v1846
        %v1850 = vld [vmem:[%s3] sm:$0xff]
        %v1851 = vld [vmem:[%s3 + $0x8] sm:$0xff]
        %v1852 = vld [vmem:[%s3 + $0x10] sm:$0xff]
        %v1853 = vld [vmem:[%s3 + $0x18] sm:$0xff]
        %v1854 = vld [vmem:[%s3 + $0x20] sm:$0xff]
        %v1855 = vld [vmem:[%s3 + $0x28] sm:$0xff]
        %v1856 = vld [vmem:[%s3 + $0x30] sm:$0xff]
        %v1857 = vld [vmem:[%s3 + $0x38] sm:$0xff]
        %v1858 = vld [vmem:[%s3 + $0x40] sm:$0xff]
        %v1859 = vld [vmem:[%s3 + $0x48] sm:$0xff]
        %v1860 = vld [vmem:[%s3 + $0x50] sm:$0xff]
        %v1861 = vpack.c.bf16 %v1851, %v1850
        %v1862 = vpack.c.bf16 %v1853, %v1852
        %v1863 = vpack.c.bf16 %v1855, %v1854
        %v1864 = vpack.c.bf16 %v1857, %v1856
        %v1865 = vpack.c.bf16 %v1859, %v1858
        %v1866 = vpack.c.bf16 %v1860, %v1860
        %v1867 = vld [vmem:[%s4] sm:$0x1]
        %v1869 = vperm.slane %v1867, 0
        %vm1871 = vcmask 719872
        %v1873 = vsel %vm1871, %v1848, 0
        %v1876 = vsel %vm1871, %v1849, 0
        %vm1878 = vcmask 1043456
        %v1880 = vsel %vm1878, %v1866, 0
        %1882 = vmatpush.bf16.msra.mxu0 0
        %1883 = vmatpush.bf16.msra.mxu0 0
        %1884 = vmatpush.bf16.msra.mxu0 %v1880
        %1885 = vmatpush.bf16.msra.mxu0 %v1865
        %1886 = vmatpush.bf16.msra.mxu0 %v1864
        %1887 = vmatpush.bf16.msra.mxu0 %v1863
        %1888 = vmatpush.bf16.msra.mxu0 %v1862
        %1889 = vmatpush.bf16.msra.mxu0 %v1861
        %1890 = vmatmul.bf16.gmra.mxu0 %v1873
        %v1891 = vpop.f32.mrf.mxu0
        %v1892 = vadd.f32 %v1869, %v1891
        %v1893 = vpop.f32.mrf.mxu0
        %v1894 = vadd.f32 %v1869, %v1893
        %1895 = vmatmul.bf16.gmra.mxu0 %v1876
        %v1896 = vpop.f32.mrf.mxu0
        %v1897 = vadd.f32 %v1869, %v1896
        %v1898 = vpop.f32.mrf.mxu0
        %v1899 = vadd.f32 %v1869, %v1898
        %1900 = vdwg.mxu0
        %vm1901 = vcmp.ge.f32.partialorder %v1892, 0.0
        %vm1902 = vcmp.ge.f32.partialorder %v1894, 0.0
        %vm1903 = vcmp.ge.f32.partialorder %v1897, 0.0
        %vm1904 = vcmp.ge.f32.partialorder %v1899, 0.0
        %v1905 = vmul.f32 %v1892, 0.1
        %v1906 = vmul.f32 %v1894, 0.1
        %v1907 = vmul.f32 %v1897, 0.1
        %v1908 = vmul.f32 %v1899, 0.1
        %v1909 = vsel %vm1901, %v1892, %v1905
        %v1910 = vsel %vm1902, %v1894, %v1906
        %v1911 = vsel %vm1903, %v1897, %v1907
        %v1912 = vsel %vm1904, %v1899, %v1908
        %vm1913 = vcmask 124928
        %1914 = vst.msk [vmem:[#allocation4] sm:$0x7] %vm1913, 0.0
        %vm1915 = vcmask 130048
        %1916 = vst.msk [vmem:[#allocation4 + $0x3] sm:$0xff] %vm1915, %v1909
        %1917 = vst.msk [vmem:[#allocation4 + $0xb] sm:$0xff] %vm1915, %v1910
        %1918 = vst.msk [vmem:[#allocation4 + $0x13] sm:$0xff] %vm1915, %v1911
        %1919 = vst.msk [vmem:[#allocation4 + $0x1b] sm:$0xff] %vm1915, %v1912
        %vm1920 = vcmask 125952
        %1921 = vst.msk [vmem:[#allocation4 + $0x23] sm:$0xf] %vm1920, 0.0
        %v1922 = vld [vmem:[#allocation4] ss:$2 sm:$0xff]
        %s1923 = scalar_lea.vmem [#allocation4], 16
        %v1924 = vld [vmem:[%s1923] ss:$2 sm:$0xff]
        %1925 = vst.msk [vmem:[#allocation2] sm:$0xff] %vm1915, %v1922
        %1926 = vst.msk [vmem:[#allocation2 + $0x10] sm:$0xff] %vm1915, %v1924
        %s1927 = scalar_lea.vmem [#allocation4], 1
        %v1928 = vld [vmem:[%s1927] ss:$2 sm:$0xff]
        %s1929 = scalar_lea.vmem [#allocation4], 17
        %v1930 = vld [vmem:[%s1929] ss:$2 sm:$0xff]
        %1933 = vrot.lane.b32.xlu0 %v1928, 16
        %v1934 = vpop.permute.xlu0 %1933
        %1935 = vrot.lane.b32.xlu0 %v1930, 16
        %v1936 = vpop.permute.xlu0 %1935
        %vm1939 = vcmask 261248
        %1940 = vst.msk [vmem:[#allocation2] sm:$0xff] %vm1939, %v1934
        %1941 = vst.msk [vmem:[#allocation2 + $0x10] sm:$0xff] %vm1939, %v1936
        %s1942 = scalar_lea.vmem [#allocation4], 2
        %v1943 = vld [vmem:[%s1942] ss:$2 sm:$0xff]
        %s1944 = scalar_lea.vmem [#allocation4], 18
        %v1945 = vld [vmem:[%s1944] ss:$2 sm:$0xff]
        %1948 = vrot.lane.b32.xlu0 %v1943, 32
        %v1949 = vpop.permute.xlu0 %1948
        %1950 = vrot.lane.b32.xlu0 %v1945, 32
        %v1951 = vpop.permute.xlu0 %1950
        %vm1954 = vcmask 392448
        %1955 = vst.msk [vmem:[#allocation2] sm:$0xff] %vm1954, %v1949
        %1956 = vst.msk [vmem:[#allocation2 + $0x10] sm:$0xff] %vm1954, %v1951
        %s1957 = scalar_lea.vmem [#allocation4], 3
        %v1958 = vld [vmem:[%s1957] ss:$2 sm:$0xff]
        %s1959 = scalar_lea.vmem [#allocation4], 19
        %v1960 = vld [vmem:[%s1959] ss:$2 sm:$0xff]
        %1963 = vrot.lane.b32.xlu0 %v1958, 48
        %v1964 = vpop.permute.xlu0 %1963
        %1965 = vrot.lane.b32.xlu0 %v1960, 48
        %v1966 = vpop.permute.xlu0 %1965
        %vm1969 = vcmask 523648
        %1970 = vst.msk [vmem:[#allocation2] sm:$0xff] %vm1969, %v1964
        %1971 = vst.msk [vmem:[#allocation2 + $0x10] sm:$0xff] %vm1969, %v1966
        %s1972 = scalar_lea.vmem [#allocation4], 4
        %v1973 = vld [vmem:[%s1972] ss:$2 sm:$0xff]
        %s1974 = scalar_lea.vmem [#allocation4], 20
        %v1975 = vld [vmem:[%s1974] ss:$2 sm:$0xff]
        %1978 = vrot.lane.b32.xlu0 %v1973, 64
        %v1979 = vpop.permute.xlu0 %1978
        %1980 = vrot.lane.b32.xlu0 %v1975, 64
        %v1981 = vpop.permute.xlu0 %1980
        %vm1984 = vcmask 654848
        %1985 = vst.msk [vmem:[#allocation2] sm:$0xff] %vm1984, %v1979
        %1986 = vst.msk [vmem:[#allocation2 + $0x10] sm:$0xff] %vm1984, %v1981
        %s1987 = scalar_lea.vmem [#allocation4], 5
        %v1988 = vld [vmem:[%s1987] ss:$2 sm:$0xff]
        %s1989 = scalar_lea.vmem [#allocation4], 21
        %v1990 = vld [vmem:[%s1989] ss:$2 sm:$0xff]
        %1993 = vrot.lane.b32.xlu0 %v1988, 80
        %v1994 = vpop.permute.xlu0 %1993
        %1995 = vrot.lane.b32.xlu0 %v1990, 80
        %v1996 = vpop.permute.xlu0 %1995
        %vm1999 = vcmask 786048
        %2000 = vst.msk [vmem:[#allocation2] sm:$0xff] %vm1999, %v1994
        %2001 = vst.msk [vmem:[#allocation2 + $0x10] sm:$0xff] %vm1999, %v1996
        %s2002 = scalar_lea.vmem [#allocation4], 6
        %v2003 = vld [vmem:[%s2002] ss:$2 sm:$0xff]
        %s2004 = scalar_lea.vmem [#allocation4], 22
        %v2005 = vld [vmem:[%s2004] ss:$2 sm:$0xff]
        %2008 = vrot.lane.b32.xlu0 %v2003, 96
        %v2009 = vpop.permute.xlu0 %2008
        %2010 = vrot.lane.b32.xlu0 %v2005, 96
        %v2011 = vpop.permute.xlu0 %2010
        %vm2014 = vcmask 917248
        %2015 = vst.msk [vmem:[#allocation2] sm:$0xff] %vm2014, %v2009
        %2016 = vst.msk [vmem:[#allocation2 + $0x10] sm:$0xff] %vm2014, %v2011
        %v2017 = vld [vmem:[#allocation2] sm:$0xff]
        %v2018 = vld [vmem:[#allocation2 + $0x10] sm:$0xff]
        %v2019 = vpack.c.bf16 %v2018, %v2017
        %v2020 = vld [vmem:[%s5] sm:$0xff]
        %v2021 = vld [vmem:[%s5 + $0x8] sm:$0xff]
        %v2022 = vld [vmem:[%s5 + $0x10] sm:$0xff]
        %v2023 = vld [vmem:[%s5 + $0x18] sm:$0xff]
        %v2024 = vld [vmem:[%s5 + $0x20] sm:$0xff]
        %v2025 = vld [vmem:[%s5 + $0x28] sm:$0xff]
        %v2026 = vld [vmem:[%s5 + $0x30] sm:$0xff]
        %v2027 = vld [vmem:[%s5 + $0x38] sm:$0xff]
        %v2028 = vld [vmem:[%s5 + $0x40] sm:$0xff]
        %v2029 = vld [vmem:[%s5 + $0x48] sm:$0xff]
        %v2030 = vld [vmem:[%s5 + $0x50] sm:$0xff]
        %v2031 = vld [vmem:[%s5 + $0x58] sm:$0xff]
        %v2032 = vld [vmem:[%s5 + $0x60] sm:$0xff]
        %v2033 = vld [vmem:[%s5 + $0x68] sm:$0xff]
        %v2034 = vpack.c.bf16 %v2021, %v2020
        %v2035 = vpack.c.bf16 %v2023, %v2022
        %v2036 = vpack.c.bf16 %v2025, %v2024
        %v2037 = vpack.c.bf16 %v2027, %v2026
        %v2038 = vpack.c.bf16 %v2029, %v2028
        %v2039 = vpack.c.bf16 %v2031, %v2030
        %v2040 = vpack.c.bf16 %v2033, %v2032
        %v2041 = vld [vmem:[%s6] sm:$0x1]
        %v2043 = vperm.slane %v2041, 0
        %vm2045 = vcmask 916480
        %v2047 = vsel %vm2045, %v2019, 0
        %2049 = vmatpush.bf16.msra.mxu0 0
        %2050 = vmatpush.bf16.msra.mxu0 %v2040
        %2051 = vmatpush.bf16.msra.mxu0 %v2039
        %2052 = vmatpush.bf16.msra.mxu0 %v2038
        %2053 = vmatpush.bf16.msra.mxu0 %v2037
        %2054 = vmatpush.bf16.msra.mxu0 %v2036
        %2055 = vmatpush.bf16.msra.mxu0 %v2035
        %2056 = vmatpush.bf16.msra.mxu0 %v2034
        %2057 = vmatmul.bf16.gmra.mxu0 %v2047
        %v2058 = vpop.f32.mrf.mxu0
        %v2059 = vadd.f32 %v2043, %v2058
        %v2060 = vpop.f32.mrf.mxu0
        %v2061 = vadd.f32 %v2043, %v2060
        %2062 = vdwg.mxu0
        %vm2063 = vcmp.ge.f32.partialorder %v2059, 0.0
        %vm2064 = vcmp.ge.f32.partialorder %v2061, 0.0
        %v2065 = vmul.f32 %v2059, 0.1
        %v2066 = vmul.f32 %v2061, 0.1
        %v2067 = vsel %vm2063, %v2059, %v2065
        %v2068 = vsel %vm2064, %v2061, %v2066
        %vm2069 = vcmask 254976
        %2070 = vst.msk [vmem:[#allocation5] sm:$0x3] %vm2069, 0.0
        %vm2071 = vcmask 261120
        %2072 = vst.msk [vmem:[#allocation5 + $0x2] sm:$0xff] %vm2071, %v2067
        %2073 = vst.msk [vmem:[#allocation5 + $0xa] sm:$0xff] %vm2071, %v2068
        %vm2074 = vcmask 256000
        %2075 = vst.msk [vmem:[#allocation5 + $0x12] sm:$0x7] %vm2074, 0.0
        %v2076 = vld [vmem:[#allocation5] ss:$2 sm:$0xff]
        %2077 = vst.msk [vmem:[#allocation2] sm:$0xff] %vm2071, %v2076
        %s2078 = scalar_lea.vmem [#allocation5], 1
        %v2079 = vld [vmem:[%s2078] ss:$2 sm:$0xff]
        %2081 = vrot.lane.b32.xlu0 %v2079, 32
        %v2082 = vpop.permute.xlu0 %2081
        %vm2084 = vcmask 523520
        %2085 = vst.msk [vmem:[#allocation2] sm:$0xff] %vm2084, %v2082
        %s2086 = scalar_lea.vmem [#allocation5], 2
        %v2087 = vld [vmem:[%s2086] ss:$2 sm:$0xff]
        %2089 = vrot.lane.b32.xlu0 %v2087, 64
        %v2090 = vpop.permute.xlu0 %2089
        %vm2092 = vcmask 785920
        %2093 = vst.msk [vmem:[#allocation2] sm:$0xff] %vm2092, %v2090
        %s2094 = scalar_lea.vmem [#allocation5], 3
        %v2095 = vld [vmem:[%s2094] ss:$2 sm:$0xff]
        %2097 = vrot.lane.b32.xlu0 %v2095, 96
        %v2098 = vpop.permute.xlu0 %2097
        %vm2100 = vcmask 1048320
        %2101 = vst.msk [vmem:[#allocation2] sm:$0xff] %vm2100, %v2098
        %s2102 = scalar_lea.vmem [#allocation5], 4
        %v2103 = vld [vmem:[%s2102] ss:$2 sm:$0xff]
        %2104 = vst.msk [vmem:[#allocation2 + $0x8] sm:$0xff] %vm2071, %v2103
        %v2105 = vld [vmem:[#allocation2] sm:$0xff]
        %v2106 = vld [vmem:[#allocation2 + $0x8] sm:$0xff]
        %v2107 = vpack.c.bf16 %v2105, %v2105
        %v2108 = vpack.c.bf16 %v2106, %v2106
        %v2109 = vld [vmem:[%s7] sm:$0xff]
        %v2110 = vld [vmem:[%s7 + $0x8] sm:$0xff]
        %v2111 = vld [vmem:[%s7 + $0x10] sm:$0xff]
        %v2112 = vld [vmem:[%s7 + $0x18] sm:$0xff]
        %v2113 = vld [vmem:[%s7 + $0x20] sm:$0xff]
        %v2114 = vld [vmem:[%s7 + $0x28] sm:$0xff]
        %v2115 = vld [vmem:[%s7 + $0x30] sm:$0xff]
        %v2116 = vld [vmem:[%s7 + $0x38] sm:$0xff]
        %v2117 = vld [vmem:[%s7 + $0x40] sm:$0xff]
        %v2118 = vld [vmem:[%s7 + $0x48] sm:$0xff]
        %v2119 = vld [vmem:[%s7 + $0x50] sm:$0xff]
        %v2120 = vld [vmem:[%s7 + $0x58] sm:$0xff]
        %v2121 = vld [vmem:[%s7 + $0x60] sm:$0xff]
        %v2122 = vld [vmem:[%s7 + $0x68] sm:$0xff]
        %v2123 = vld [vmem:[%s7 + $0x70] sm:$0xff]
        %v2124 = vld [vmem:[%s7 + $0x78] sm:$0xff]
        %v2125 = vld [vmem:[%s7 + $0x80] sm:$0xff]
        %v2126 = vld [vmem:[%s7 + $0x88] sm:$0xff]
        %v2127 = vld [vmem:[%s7 + $0x90] sm:$0xff]
        %v2128 = vld [vmem:[%s7 + $0x98] sm:$0xff]
        %v2129 = vpack.c.bf16 %v2110, %v2109
        %v2130 = vpack.c.bf16 %v2112, %v2111
        %v2131 = vpack.c.bf16 %v2114, %v2113
        %v2132 = vpack.c.bf16 %v2116, %v2115
        %v2133 = vpack.c.bf16 %v2118, %v2117
        %v2134 = vpack.c.bf16 %v2120, %v2119
        %v2135 = vpack.c.bf16 %v2122, %v2121
        %v2136 = vpack.c.bf16 %v2124, %v2123
        %v2137 = vpack.c.bf16 %v2126, %v2125
        %v2138 = vpack.c.bf16 %v2128, %v2127
        %v2139 = vld [vmem:[%s8] sm:$0x1]
        %v2141 = vperm.slane %v2139, 0
        %v2144 = vsel %vm2071, %v2108, 0
        %2146 = vmatpush.bf16.msra.mxu0 %v2136
        %2147 = vmatpush.bf16.msra.mxu0 %v2135
        %2148 = vmatpush.bf16.msra.mxu0 %v2134
        %2149 = vmatpush.bf16.msra.mxu0 %v2133
        %2150 = vmatpush.bf16.msra.mxu0 %v2132
        %2151 = vmatpush.bf16.msra.mxu0 %v2131
        %2152 = vmatpush.bf16.msra.mxu0 %v2130
        %2153 = vmatpush.bf16.msra.mxu0 %v2129
        %2154 = vmatmul.bf16.gmra.mxu0 %v2107
        %v2155 = vpop.f32.mrf.mxu0
        %v2156 = vadd.f32 %v2141, %v2155
        %v2157 = vpop.f32.mrf.mxu0
        %2158 = vdwg.mxu0
        %2159 = vmatpush.bf16.msra.mxu0 0
        %2160 = vmatpush.bf16.msra.mxu0 0
        %2161 = vmatpush.bf16.msra.mxu0 0
        %2162 = vmatpush.bf16.msra.mxu0 0
        %2163 = vmatpush.bf16.msra.mxu0 0
        %2164 = vmatpush.bf16.msra.mxu0 0
        %2165 = vmatpush.bf16.msra.mxu0 %v2138
        %2166 = vmatpush.bf16.msra.mxu0 %v2137
        %2167 = vmatmul.bf16.gmra.mxu0 %v2144
        %v2168 = vpop.f32.mrf.mxu0
        %v2169 = vadd.f32 %v2156, %v2168
        %v2170 = vpop.f32.mrf.mxu0
        %2171 = vdwg.mxu0
        %vm2172 = vcmp.ge.f32.partialorder %v2169, 0.0
        %v2173 = vmul.f32 %v2169, 0.1
        %v2174 = vsel %vm2172, %v2169, %v2173
        %vm2175 = vcmask 516096
        %2176 = vst.msk [vmem:[#allocation6] sm:$0x1] %vm2175, 0.0
        %vm2177 = vcmask 523264
        %2178 = vst.msk [vmem:[#allocation6 + $0x1] sm:$0xff] %vm2177, %v2174
        %vm2179 = vcmask 519168
        %2180 = vst.msk [vmem:[#allocation6 + $0x9] sm:$0xf] %vm2179, 0.0
        %v2181 = vld [vmem:[#allocation6] ss:$4 sm:$0x3]
        %vm2182 = vcmask 517120
        %2183 = vst.msk [vmem:[#allocation2] sm:$0x3] %vm2182, %v2181
        %s2184 = scalar_lea.vmem [#allocation6], 1
        %v2185 = vld [vmem:[%s2184] ss:$4 sm:$0x3]
        %2187 = vrot.lane.b32.xlu0 %v2185, 64
        %v2188 = vpop.permute.xlu0 %2187
        %vm2190 = vcmask 1041920
        %2191 = vst.msk [vmem:[#allocation2] sm:$0x3] %vm2190, %v2188
        %s2192 = scalar_lea.vmem [#allocation6], 2
        %v2193 = vld [vmem:[%s2192] ss:$4 sm:$0x3]
        %2194 = vst.msk [vmem:[#allocation2 + $0x8] sm:$0x3] %vm2182, %v2193
        %v2195 = vld [vmem:[#allocation2] sm:$0x3]
        %v2196 = vld [vmem:[#allocation2 + $0x8] sm:$0x3]
        %v2197 = vpack.c.bf16 %v2195, %v2195
        %v2198 = vpack.c.bf16 %v2196, %v2196
        %v2199 = vld [vmem:[%s9] sm:$0xff]
        %v2200 = vld [vmem:[%s9 + $0x8] sm:$0xff]
        %v2201 = vld [vmem:[%s9 + $0x10] sm:$0xff]
        %v2202 = vld [vmem:[%s9 + $0x18] sm:$0xff]
        %v2203 = vld [vmem:[%s9 + $0x20] sm:$0xff]
        %v2204 = vld [vmem:[%s9 + $0x28] sm:$0xff]
        %v2205 = vld [vmem:[%s9 + $0x30] sm:$0xff]
        %v2206 = vld [vmem:[%s9 + $0x38] sm:$0xff]
        %v2207 = vld [vmem:[%s9 + $0x40] sm:$0xff]
        %v2208 = vld [vmem:[%s9 + $0x48] sm:$0xff]
        %v2209 = vld [vmem:[%s9 + $0x50] sm:$0xff]
        %v2210 = vld [vmem:[%s9 + $0x58] sm:$0xff]
        %v2211 = vld [vmem:[%s9 + $0x60] sm:$0xff]
        %v2212 = vld [vmem:[%s9 + $0x68] sm:$0xff]
        %v2213 = vld [vmem:[%s9 + $0x70] sm:$0xff]
        %v2214 = vld [vmem:[%s9 + $0x78] sm:$0xff]
        %v2215 = vld [vmem:[%s9 + $0x80] sm:$0xff]
        %v2216 = vld [vmem:[%s9 + $0x88] sm:$0xff]
        %v2217 = vld [vmem:[%s9 + $0x90] sm:$0xff]
        %v2218 = vld [vmem:[%s9 + $0x98] sm:$0xff]
        %v2219 = vld [vmem:[%s9 + $0xa0] sm:$0xff]
        %v2220 = vld [vmem:[%s9 + $0xa8] sm:$0xff]
        %v2221 = vld [vmem:[%s9 + $0xb0] sm:$0xff]
        %v2222 = vld [vmem:[%s9 + $0xb8] sm:$0xff]
        %v2223 = vpack.c.bf16 %v2200, %v2199
        %v2224 = vpack.c.bf16 %v2202, %v2201
        %v2225 = vpack.c.bf16 %v2204, %v2203
        %v2226 = vpack.c.bf16 %v2206, %v2205
        %v2227 = vpack.c.bf16 %v2208, %v2207
        %v2228 = vpack.c.bf16 %v2210, %v2209
        %v2229 = vpack.c.bf16 %v2212, %v2211
        %v2230 = vpack.c.bf16 %v2214, %v2213
        %v2231 = vpack.c.bf16 %v2216, %v2215
        %v2232 = vpack.c.bf16 %v2218, %v2217
        %v2233 = vpack.c.bf16 %v2220, %v2219
        %v2234 = vpack.c.bf16 %v2222, %v2221
        %v2235 = vld [vmem:[%s10] sm:$0x1]
        %v2237 = vperm.slane %v2235, 0
        %v2240 = vsel %vm2177, %v2198, 0
        %2242 = vmatpush.bf16.msra.mxu0 %v2230
        %2243 = vmatpush.bf16.msra.mxu0 %v2229
        %2244 = vmatpush.bf16.msra.mxu0 %v2228
        %2245 = vmatpush.bf16.msra.mxu0 %v2227
        %2246 = vmatpush.bf16.msra.mxu0 %v2226
        %2247 = vmatpush.bf16.msra.mxu0 %v2225
        %2248 = vmatpush.bf16.msra.mxu0 %v2224
        %2249 = vmatpush.bf16.msra.mxu0 %v2223
        %2250 = vmatmul.bf16.gmra.mxu0 %v2197
        %v2251 = vpop.f32.mrf.mxu0
        %v2252 = vadd.f32 %v2237, %v2251
        %v2253 = vpop.f32.mrf.mxu0
        %2254 = vdwg.mxu0
        %2255 = vmatpush.bf16.msra.mxu0 0
        %2256 = vmatpush.bf16.msra.mxu0 0
        %2257 = vmatpush.bf16.msra.mxu0 0
        %2258 = vmatpush.bf16.msra.mxu0 0
        %2259 = vmatpush.bf16.msra.mxu0 %v2234
        %2260 = vmatpush.bf16.msra.mxu0 %v2233
        %2261 = vmatpush.bf16.msra.mxu0 %v2232
        %2262 = vmatpush.bf16.msra.mxu0 %v2231
        %2263 = vmatmul.bf16.gmra.mxu0 %v2240
        %v2264 = vpop.f32.mrf.mxu0
        %v2265 = vadd.f32 %v2252, %v2264
        %v2266 = vpop.f32.mrf.mxu0
        %2267 = vdwg.mxu0
        %vm2268 = vcmp.ge.f32.partialorder %v2265, 0.0
        %v2269 = vmul.f32 %v2265, 0.1
        %v2270 = vsel %vm2268, %v2265, %v2269
        %2271 = vst [vmem:[%s379] sm:$0x3] %v2270
        %s2272 = sand.u32 %s269, 1
        %s2273 = scalar_lea.sflag [#allocation8], %s2272
        %s2274 = sand.u32 %s269, 1
        %s2275 = smul.addr %s2274, 2
        %s2276 = scalar_lea.vmem [#allocation7], %s2275
        // Predicated region
        $region65: #{multi_scale_discriminator_forward.3} parent=63 // pred_check
          %p2277 = pneg %p279
        $region66: #{multi_scale_discriminator_forward.3} parent=63 // pred_check_branch
          %2279 = sbr.rel (%p2277) target = $region68
        $region67: #{multi_scale_discriminator_forward.3} parent=63 // pred_region
          %2281 = vsyncadd %s2273, 0
          %s2282 = smul.addr %s25, 2
          %s2283 = scalar_lea.hbm %s11, %s2282
          %s2285 = sshll.u32 %s2276, 4
          %s2286 = int_to_ptr.vmem [resolvable:$true] %s2285
          %s2287 = sshll.u32 %s2283, 4
          %s2288 = int_to_ptr.hbm [resolvable:$true] %s2287
          %2290 = dma.vmem_to_hbm [thread:$0]  %s2286, 32, %s2288, %s2273
        $region68: #{multi_scale_discriminator_forward.3} parent=63 // pred_fallthru
          _
      $region64: #{multi_scale_discriminator_forward.3} parent=5 // pred_fallthru
        _
      %p2291 = scmp.le.s32.totalorder 2, %s20
      // Predicated region
      $region69: #{multi_scale_discriminator_forward.3} parent=5 // pred_check
        %p2292 = pneg %p2291
      $region70: #{multi_scale_discriminator_forward.3} parent=5 // pred_check_branch
        %2294 = sbr.rel (%p2292) target = $region72
      $region71: #{multi_scale_discriminator_forward.3} parent=5 // pred_region
        %s2295 = ssub.s32 %s20, 2
        // Predicated region
        $region73: #{multi_scale_discriminator_forward.3} parent=71 // pred_check
          %p2296 = pneg %p285
        $region74: #{multi_scale_discriminator_forward.3} parent=71 // pred_check_branch
          %2298 = sbr.rel (%p2296) target = $region76
        $region75: #{multi_scale_discriminator_forward.3} parent=71 // pred_region
          %s2299 = sand.u32 %s270, 1
          %s2300 = scalar_lea.sflag [#allocation8], %s2299
          %s2301 = sand.u32 %s270, 1
          %s2302 = smul.addr %s2301, 2
          %s2303 = scalar_lea.vmem [#allocation7], %s2302
          %2305 = dma.done %s2300, 32
        $region76: #{multi_scale_discriminator_forward.3} parent=71 // pred_fallthru
          _
      $region72: #{multi_scale_discriminator_forward.3} parent=5 // pred_fallthru
        _
    $region6: #{multi_scale_discriminator_forward.3} parent=1 // loop_footer
      %s24 = sadd.s32 1, %s20
    $region7: #{multi_scale_discriminator_forward.3} parent=1 // loop_footer_branch
      %19 = sbr.rel target = $region3
    $region8: #{multi_scale_discriminator_forward.3} parent=1 // loop_exit
      _
    %2306 = vsyncpa [#allocation8], 1
    %s2307 = scalar_lea.sflag [#allocation8], 1
    %2308 = vsyncpa %s2307, 1

// kernel: multi_scale_discriminator_forward.5
$region0: #{multi_scale_discriminator_forward.5}
  #allocation0 [shape = 'u32[]', space=smem, size = 0x4, offset = 0x4, fixed_abs, tag = 'smem constant byte address 0x4 - core index']
  #allocation1 [shape = 'u32[72,128]{1,0:T(1,128)}', space=vmem, size = 0x9000, scoped, tag = 'internal scratch']
  #allocation2 [shape = 'f32[9,192]{1,0:T(8,128)}', space=vmem, size = 0x4000, scoped, tag = 'scratch operand']
  #allocation3 [shape = 'f32[28,8]{1,0:T(8,128)}', space=vmem, size = 0x4000, scoped, tag = 'scratch operand']
  #allocation4 [shape = 'f32[16,16]{1,0:T(8,128)}', space=vmem, size = 0x2000, scoped, tag = 'scratch operand']
  #allocation5 [shape = 'f32[10,32]{1,0:T(8,128)}', space=vmem, size = 0x2000, scoped, tag = 'scratch operand']
  #allocation6 [shape = 'f32[8,64]{1,0:T(8,128)}', space=vmem, size = 0x1000, scoped, tag = 'scratch operand']
  %s0 = inlined_call_operand.vmem [shape: f32[2,33,1], index: 0, kind: input, shape index: {}]
  %s1 = inlined_call_operand.vmem [shape: f32[17,8], index: 1, kind: input, shape index: {}]
  %s2 = inlined_call_operand.vmem [shape: f32[1,8], index: 2, kind: input, shape index: {}]
  %s3 = inlined_call_operand.vmem [shape: f32[88,16], index: 3, kind: input, shape index: {}]
  %s4 = inlined_call_operand.vmem [shape: f32[1,16], index: 4, kind: input, shape index: {}]
  %s5 = inlined_call_operand.vmem [shape: f32[112,32], index: 5, kind: input, shape index: {}]
  %s6 = inlined_call_operand.vmem [shape: f32[1,32], index: 6, kind: input, shape index: {}]
  %s7 = inlined_call_operand.vmem [shape: f32[160,64], index: 7, kind: input, shape index: {}]
  %s8 = inlined_call_operand.vmem [shape: f32[1,64], index: 8, kind: input, shape index: {}]
  %s9 = inlined_call_operand.vmem [shape: f32[192,128], index: 9, kind: input, shape index: {}]
  %s10 = inlined_call_operand.vmem [shape: f32[1,128], index: 10, kind: input, shape index: {}]
  %s11 = inlined_call_operand.hbm [shape: f32[2,1,128], index: 11, kind: output, shape index: {}]
  %s12 = sld [smem:[#allocation0]]
  $region77: #{multi_scale_discriminator_forward.5} parent=0
    _
  %s14 = ssub.s32 1, %s12
  %s15 = scalar_select 0, %s14, %s12
  $region1: #{multi_scale_discriminator_forward.5} parent=0
    #allocation7 [shape = 'u8[1024]{0}', space=vmem, size = 0x400, scoped, tag = 'output window, operand 0']
    #allocation8 [shape = 's32[2]{0}', space=sflag, size = 0x8, scoped, tag = 'scoped memory for multi_scale_discriminator_forward.5']
    %16 = vsyncpa [#allocation8], 0
    %s17 = scalar_lea.sflag [#allocation8], 1
    %18 = vsyncpa %s17, 0
    loop: start=0, step=1, limit=4
    $region2: #{multi_scale_discriminator_forward.5} parent=1 // loop_pre_header
      _
    $region3: #{multi_scale_discriminator_forward.5} parent=1 // loop_header
      %s20 = sphi 0, %s24
      %p21 = scmp.ge.s32.totalorder %s20, 4
      %s30 = sphi 0, %s32
      %s33 = sphi 0, %s30
      %s34 = sphi 0, %s33
      %s50 = sphi 0, %s34
      %s54 = sphi 0, %s54
      %s56 = sphi 0, %s54
      %s57 = sphi 0, %s56
      %s71 = sphi 0, %s57
      %s75 = sphi 0, %s75
      %s77 = sphi 0, %s75
      %s78 = sphi 0, %s77
      %s92 = sphi 0, %s78
      %s96 = sphi 0, %s96
      %s98 = sphi 0, %s96
      %s99 = sphi 0, %s98
      %s113 = sphi 0, %s99
      %s117 = sphi 0, %s117
      %s119 = sphi 0, %s117
      %s120 = sphi 0, %s119
      %s134 = sphi 0, %s120
      %s138 = sphi 0, %s138
      %s140 = sphi 0, %s138
      %s141 = sphi 0, %s140
      %s155 = sphi 0, %s141
      %s159 = sphi 0, %s159
      %s161 = sphi 0, %s159
      %s162 = sphi 0, %s161
      %s176 = sphi 0, %s162
      %s180 = sphi 0, %s180
      %s182 = sphi 0, %s180
      %s183 = sphi 0, %s182
      %s197 = sphi 0, %s183
      %s201 = sphi 0, %s201
      %s203 = sphi 0, %s201
      %s204 = sphi 0, %s203
      %s218 = sphi 0, %s204
      %s222 = sphi 0, %s222
      %s224 = sphi 0, %s222
      %s225 = sphi 0, %s224
      %s239 = sphi 0, %s225
      %s243 = sphi 0, %s243
      %s245 = sphi 0, %s243
      %s246 = sphi 0, %s245
      %s260 = sphi 0, %s246
      %s266 = sphi 0, %s268
      %s269 = sphi 0, %s266
      %s270 = sphi 0, %s269
      %s286 = sphi 0, %s270
    $region4: #{multi_scale_discriminator_forward.5} parent=1 // loop_header_branch
      %23 = sbr.rel (%p21) target = $region8
    $region5: #{multi_scale_discriminator_forward.5} parent=1 // loop_body
      %s25 = ssub.s32 %s20, 1
      %s26 = ssub.s32 %s20, 2
      %s27 = sadd.s32 %s20, 1
      %s28 = ssub.s32 %s20, %s27
      %p29 = scmp.eq.s32.totalorder %s28, 0
      %s31 = sadd.s32 %s30, 1
      %s32 = scalar_select %p29, %s30, %s31
      %p35 = pneg %p29
      %p36 = scmp.eq.s32.totalorder %s20, 1
      %p37 = por %p35, %p36
      %p38 = scmp.ne.s32.totalorder %s30, %s33
      %p39 = scmp.eq.s32.totalorder %s20, 0
      %p40 = por %p38, %p39
      %p41 = scmp.ne.s32.totalorder %s30, %s33
      %p42 = scmp.eq.s32.totalorder %s25, 1
      %p43 = por %p41, %p42
      %p44 = scmp.ne.s32.totalorder %s33, %s34
      %p45 = scmp.eq.s32.totalorder %s25, 0
      %p46 = por %p44, %p45
      %p47 = scmp.ne.s32.totalorder %s33, %s34
      %p48 = scmp.eq.s32.totalorder %s26, 1
      %p49 = por %p47, %p48
      %p51 = scmp.ne.s32.totalorder %s34, %s50
      %p52 = scmp.eq.s32.totalorder %s26, 0
      %p53 = por %p51, %p52
      %s55 = sadd.s32 %s54, 1
      %p58 = scmp.eq.s32.totalorder %s20, 1
      %p59 = scmp.ne.s32.totalorder %s54, %s56
      %p60 = scmp.eq.s32.totalorder %s20, 0
      %p61 = por %p59, %p60
      %p62 = scmp.ne.s32.totalorder %s54, %s56
      %p63 = scmp.eq.s32.totalorder %s25, 1
      %p64 = por %p62, %p63
      %p65 = scmp.ne.s32.totalorder %s56, %s57
      %p66 = scmp.eq.s32.totalorder %s25, 0
      %p67 = por %p65, %p66
      %p68 = scmp.ne.s32.totalorder %s56, %s57
      %p69 = scmp.eq.s32.totalorder %s26, 1
      %p70 = por %p68, %p69
      %p72 = scmp.ne.s32.totalorder %s57, %s71
      %p73 = scmp.eq.s32.totalorder %s26, 0
      %p74 = por %p72, %p73
      %s76 = sadd.s32 %s75, 1
      %p79 = scmp.eq.s32.totalorder %s20, 1
      %p80 = scmp.ne.s32.totalorder %s75, %s77
      %p81 = scmp.eq.s32.totalorder %s20, 0
      %p82 = por %p80, %p81
      %p83 = scmp.ne.s32.totalorder %s75, %s77
      %p84 = scmp.eq.s32.totalorder %s25, 1
      %p85 = por %p83, %p84
      %p86 = scmp.ne.s32.totalorder %s77, %s78
      %p87 = scmp.eq.s32.totalorder %s25, 0
      %p88 = por %p86, %p87
      %p89 = scmp.ne.s32.totalorder %s77, %s78
      %p90 = scmp.eq.s32.totalorder %s26, 1
      %p91 = por %p89, %p90
      %p93 = scmp.ne.s32.totalorder %s78, %s92
      %p94 = scmp.eq.s32.totalorder %s26, 0
      %p95 = por %p93, %p94
      %s97 = sadd.s32 %s96, 1
      %p100 = scmp.eq.s32.totalorder %s20, 1
      %p101 = scmp.ne.s32.totalorder %s96, %s98
      %p102 = scmp.eq.s32.totalorder %s20, 0
      %p103 = por %p101, %p102
      %p104 = scmp.ne.s32.totalorder %s96, %s98
      %p105 = scmp.eq.s32.totalorder %s25, 1
      %p106 = por %p104, %p105
      %p107 = scmp.ne.s32.totalorder %s98, %s99
      %p108 = scmp.eq.s32.totalorder %s25, 0
      %p109 = por %p107, %p108
      %p110 = scmp.ne.s32.totalorder %s98, %s99
      %p111 = scmp.eq.s32.totalorder %s26, 1
      %p112 = por %p110, %p111
      %p114 = scmp.ne.s32.totalorder %s99, %s113
      %p115 = scmp.eq.s32.totalorder %s26, 0
      %p116 = por %p114, %p115
      %s118 = sadd.s32 %s117, 1
      %p121 = scmp.eq.s32.totalorder %s20, 1
      %p122 = scmp.ne.s32.totalorder %s117, %s119
      %p123 = scmp.eq.s32.totalorder %s20, 0
      %p124 = por %p122, %p123
      %p125 = scmp.ne.s32.totalorder %s117, %s119
      %p126 = scmp.eq.s32.totalorder %s25, 1
      %p127 = por %p125, %p126
      %p128 = scmp.ne.s32.totalorder %s119, %s120
      %p129 = scmp.eq.s32.totalorder %s25, 0
      %p130 = por %p128, %p129
      %p131 = scmp.ne.s32.totalorder %s119, %s120
      %p132 = scmp.eq.s32.totalorder %s26, 1
      %p133 = por %p131, %p132
      %p135 = scmp.ne.s32.totalorder %s120, %s134
      %p136 = scmp.eq.s32.totalorder %s26, 0
      %p137 = por %p135, %p136
      %s139 = sadd.s32 %s138, 1
      %p142 = scmp.eq.s32.totalorder %s20, 1
      %p143 = scmp.ne.s32.totalorder %s138, %s140
      %p144 = scmp.eq.s32.totalorder %s20, 0
      %p145 = por %p143, %p144
      %p146 = scmp.ne.s32.totalorder %s138, %s140
      %p147 = scmp.eq.s32.totalorder %s25, 1
      %p148 = por %p146, %p147
      %p149 = scmp.ne.s32.totalorder %s140, %s141
      %p150 = scmp.eq.s32.totalorder %s25, 0
      %p151 = por %p149, %p150
      %p152 = scmp.ne.s32.totalorder %s140, %s141
      %p153 = scmp.eq.s32.totalorder %s26, 1
      %p154 = por %p152, %p153
      %p156 = scmp.ne.s32.totalorder %s141, %s155
      %p157 = scmp.eq.s32.totalorder %s26, 0
      %p158 = por %p156, %p157
      %s160 = sadd.s32 %s159, 1
      %p163 = scmp.eq.s32.totalorder %s20, 1
      %p164 = scmp.ne.s32.totalorder %s159, %s161
      %p165 = scmp.eq.s32.totalorder %s20, 0
      %p166 = por %p164, %p165
      %p167 = scmp.ne.s32.totalorder %s159, %s161
      %p168 = scmp.eq.s32.totalorder %s25, 1
      %p169 = por %p167, %p168
      %p170 = scmp.ne.s32.totalorder %s161, %s162
      %p171 = scmp.eq.s32.totalorder %s25, 0
      %p172 = por %p170, %p171
      %p173 = scmp.ne.s32.totalorder %s161, %s162
      %p174 = scmp.eq.s32.totalorder %s26, 1
      %p175 = por %p173, %p174
      %p177 = scmp.ne.s32.totalorder %s162, %s176
      %p178 = scmp.eq.s32.totalorder %s26, 0
      %p179 = por %p177, %p178
      %s181 = sadd.s32 %s180, 1
      %p184 = scmp.eq.s32.totalorder %s20, 1
      %p185 = scmp.ne.s32.totalorder %s180, %s182
      %p186 = scmp.eq.s32.totalorder %s20, 0
      %p187 = por %p185, %p186
      %p188 = scmp.ne.s32.totalorder %s180, %s182
      %p189 = scmp.eq.s32.totalorder %s25, 1
      %p190 = por %p188, %p189
      %p191 = scmp.ne.s32.totalorder %s182, %s183
      %p192 = scmp.eq.s32.totalorder %s25, 0
      %p193 = por %p191, %p192
      %p194 = scmp.ne.s32.totalorder %s182, %s183
      %p195 = scmp.eq.s32.totalorder %s26, 1
      %p196 = por %p194, %p195
      %p198 = scmp.ne.s32.totalorder %s183, %s197
      %p199 = scmp.eq.s32.totalorder %s26, 0
      %p200 = por %p198, %p199
      %s202 = sadd.s32 %s201, 1
      %p205 = scmp.eq.s32.totalorder %s20, 1
      %p206 = scmp.ne.s32.totalorder %s201, %s203
      %p207 = scmp.eq.s32.totalorder %s20, 0
      %p208 = por %p206, %p207
      %p209 = scmp.ne.s32.totalorder %s201, %s203
      %p210 = scmp.eq.s32.totalorder %s25, 1
      %p211 = por %p209, %p210
      %p212 = scmp.ne.s32.totalorder %s203, %s204
      %p213 = scmp.eq.s32.totalorder %s25, 0
      %p214 = por %p212, %p213
      %p215 = scmp.ne.s32.totalorder %s203, %s204
      %p216 = scmp.eq.s32.totalorder %s26, 1
      %p217 = por %p215, %p216
      %p219 = scmp.ne.s32.totalorder %s204, %s218
      %p220 = scmp.eq.s32.totalorder %s26, 0
      %p221 = por %p219, %p220
      %s223 = sadd.s32 %s222, 1
      %p226 = scmp.eq.s32.totalorder %s20, 1
      %p227 = scmp.ne.s32.totalorder %s222, %s224
      %p228 = scmp.eq.s32.totalorder %s20, 0
      %p229 = por %p227, %p228
      %p230 = scmp.ne.s32.totalorder %s222, %s224
      %p231 = scmp.eq.s32.totalorder %s25, 1
      %p232 = por %p230, %p231
      %p233 = scmp.ne.s32.totalorder %s224, %s225
      %p234 = scmp.eq.s32.totalorder %s25, 0
      %p235 = por %p233, %p234
      %p236 = scmp.ne.s32.totalorder %s224, %s225
      %p237 = scmp.eq.s32.totalorder %s26, 1
      %p238 = por %p236, %p237
      %p240 = scmp.ne.s32.totalorder %s225, %s239
      %p241 = scmp.eq.s32.totalorder %s26, 0
      %p242 = por %p240, %p241
      %s244 = sadd.s32 %s243, 1
      %p247 = scmp.eq.s32.totalorder %s20, 1
      %p248 = scmp.ne.s32.totalorder %s243, %s245
      %p249 = scmp.eq.s32.totalorder %s20, 0
      %p250 = por %p248, %p249
      %p251 = scmp.ne.s32.totalorder %s243, %s245
      %p252 = scmp.eq.s32.totalorder %s25, 1
      %p253 = por %p251, %p252
      %p254 = scmp.ne.s32.totalorder %s245, %s246
      %p255 = scmp.eq.s32.totalorder %s25, 0
      %p256 = por %p254, %p255
      %p257 = scmp.ne.s32.totalorder %s245, %s246
      %p258 = scmp.eq.s32.totalorder %s26, 1
      %p259 = por %p257, %p258
      %p261 = scmp.ne.s32.totalorder %s246, %s260
      %p262 = scmp.eq.s32.totalorder %s26, 0
      %p263 = por %p261, %p262
      %s264 = ssub.s32 %s20, %s27
      %p265 = scmp.eq.s32.totalorder %s264, 0
      %s267 = sadd.s32 %s266, 1
      %s268 = scalar_select %p265, %s266, %s267
      %p271 = pneg %p265
      %p272 = scmp.eq.s32.totalorder %s20, 1
      %p273 = por %p271, %p272
      %p274 = scmp.ne.s32.totalorder %s266, %s269
      %p275 = scmp.eq.s32.totalorder %s20, 0
      %p276 = por %p274, %p275
      %p277 = scmp.ne.s32.totalorder %s266, %s269
      %p278 = scmp.eq.s32.totalorder %s25, 1
      %p279 = por %p277, %p278
      %p280 = scmp.ne.s32.totalorder %s269, %s270
      %p281 = scmp.eq.s32.totalorder %s25, 0
      %p282 = por %p280, %p281
      %p283 = scmp.ne.s32.totalorder %s269, %s270
      %p284 = scmp.eq.s32.totalorder %s26, 1
      %p285 = por %p283, %p284
      %p287 = scmp.ne.s32.totalorder %s270, %s286
      %p288 = scmp.eq.s32.totalorder %s26, 0
      %p289 = por %p287, %p288
      %p290 = scmp.le.s32.totalorder 1, %s20
      %p291 = scmp.lt.s32.totalorder %s20, 3
      %p292 = pnand %p290, %p291
      %p293 = pneg %p292
      // Predicated region
      $region9: #{multi_scale_discriminator_forward.5} parent=5 // pred_check
        _
      $region10: #{multi_scale_discriminator_forward.5} parent=5 // pred_check_branch
        %295 = sbr.rel (%p292) target = $region12
      $region11: #{multi_scale_discriminator_forward.5} parent=5 // pred_region
        %s296 = ssub.s32 %s20, 1
        // Predicated region
        $region13: #{multi_scale_discriminator_forward.5} parent=11 // pred_check
          %p297 = pneg %p67
        $region14: #{multi_scale_discriminator_forward.5} parent=11 // pred_check_branch
          %299 = sbr.rel (%p297) target = $region16
        $region15: #{multi_scale_discriminator_forward.5} parent=11 // pred_region
          _
        $region16: #{multi_scale_discriminator_forward.5} parent=11 // pred_fallthru
          _
        // Predicated region
        $region17: #{multi_scale_discriminator_forward.5} parent=11 // pred_check
          %p300 = pneg %p88
        $region18: #{multi_scale_discriminator_forward.5} parent=11 // pred_check_branch
          %302 = sbr.rel (%p300) target = $region20
        $region19: #{multi_scale_discriminator_forward.5} parent=11 // pred_region
          _
        $region20: #{multi_scale_discriminator_forward.5} parent=11 // pred_fallthru
          _
        // Predicated region
        $region21: #{multi_scale_discriminator_forward.5} parent=11 // pred_check
          %p303 = pneg %p109
        $region22: #{multi_scale_discriminator_forward.5} parent=11 // pred_check_branch
          %305 = sbr.rel (%p303) target = $region24
        $region23: #{multi_scale_discriminator_forward.5} parent=11 // pred_region
          _
        $region24: #{multi_scale_discriminator_forward.5} parent=11 // pred_fallthru
          _
        // Predicated region
        $region25: #{multi_scale_discriminator_forward.5} parent=11 // pred_check
          %p306 = pneg %p130
        $region26: #{multi_scale_discriminator_forward.5} parent=11 // pred_check_branch
          %308 = sbr.rel (%p306) target = $region28
        $region27: #{multi_scale_discriminator_forward.5} parent=11 // pred_region
          _
        $region28: #{multi_scale_discriminator_forward.5} parent=11 // pred_fallthru
          _
        // Predicated region
        $region29: #{multi_scale_discriminator_forward.5} parent=11 // pred_check
          %p309 = pneg %p151
        $region30: #{multi_scale_discriminator_forward.5} parent=11 // pred_check_branch
          %311 = sbr.rel (%p309) target = $region32
        $region31: #{multi_scale_discriminator_forward.5} parent=11 // pred_region
          _
        $region32: #{multi_scale_discriminator_forward.5} parent=11 // pred_fallthru
          _
        // Predicated region
        $region33: #{multi_scale_discriminator_forward.5} parent=11 // pred_check
          %p312 = pneg %p172
        $region34: #{multi_scale_discriminator_forward.5} parent=11 // pred_check_branch
          %314 = sbr.rel (%p312) target = $region36
        $region35: #{multi_scale_discriminator_forward.5} parent=11 // pred_region
          _
        $region36: #{multi_scale_discriminator_forward.5} parent=11 // pred_fallthru
          _
        // Predicated region
        $region37: #{multi_scale_discriminator_forward.5} parent=11 // pred_check
          %p315 = pneg %p193
        $region38: #{multi_scale_discriminator_forward.5} parent=11 // pred_check_branch
          %317 = sbr.rel (%p315) target = $region40
        $region39: #{multi_scale_discriminator_forward.5} parent=11 // pred_region
          _
        $region40: #{multi_scale_discriminator_forward.5} parent=11 // pred_fallthru
          _
        // Predicated region
        $region41: #{multi_scale_discriminator_forward.5} parent=11 // pred_check
          %p318 = pneg %p214
        $region42: #{multi_scale_discriminator_forward.5} parent=11 // pred_check_branch
          %320 = sbr.rel (%p318) target = $region44
        $region43: #{multi_scale_discriminator_forward.5} parent=11 // pred_region
          _
        $region44: #{multi_scale_discriminator_forward.5} parent=11 // pred_fallthru
          _
        // Predicated region
        $region45: #{multi_scale_discriminator_forward.5} parent=11 // pred_check
          %p321 = pneg %p235
        $region46: #{multi_scale_discriminator_forward.5} parent=11 // pred_check_branch
          %323 = sbr.rel (%p321) target = $region48
        $region47: #{multi_scale_discriminator_forward.5} parent=11 // pred_region
          _
        $region48: #{multi_scale_discriminator_forward.5} parent=11 // pred_fallthru
          _
        // Predicated region
        $region49: #{multi_scale_discriminator_forward.5} parent=11 // pred_check
          %p324 = pneg %p256
        $region50: #{multi_scale_discriminator_forward.5} parent=11 // pred_check_branch
          %326 = sbr.rel (%p324) target = $region52
        $region51: #{multi_scale_discriminator_forward.5} parent=11 // pred_region
          _
        $region52: #{multi_scale_discriminator_forward.5} parent=11 // pred_fallthru
          _
      $region12: #{multi_scale_discriminator_forward.5} parent=5 // pred_fallthru
        _
      %p327 = scmp.lt.s32.totalorder %s20, 2
      // Predicated region
      $region53: #{multi_scale_discriminator_forward.5} parent=5 // pred_check
        %p328 = pneg %p327
      $region54: #{multi_scale_discriminator_forward.5} parent=5 // pred_check_branch
        %330 = sbr.rel (%p328) target = $region56
      $region55: #{multi_scale_discriminator_forward.5} parent=5 // pred_region
        // Predicated region
        $region57: #{multi_scale_discriminator_forward.5} parent=55 // pred_check
          %p331 = pneg %p40
        $region58: #{multi_scale_discriminator_forward.5} parent=55 // pred_check_branch
          %333 = sbr.rel (%p331) target = $region60
        $region59: #{multi_scale_discriminator_forward.5} parent=55 // pred_region
          %p334 = scmp.lt.s32.totalorder %s20, 1
          %s335 = scalar_select %p334, %s20, 1
          %s336 = smul.addr %s335, 5
          %s337 = smul.addr %s336, 8
          %s338 = scalar_lea.vmem %s0, %s337
        $region60: #{multi_scale_discriminator_forward.5} parent=55 // pred_fallthru
          _
      $region56: #{multi_scale_discriminator_forward.5} parent=5 // pred_fallthru
        _
      %p339 = scmp.le.s32.totalorder 1, %s20
      %p340 = scmp.lt.s32.totalorder %s20, 3
      %p341 = pnand %p339, %p340
      %p342 = pneg %p341
      // Predicated region
      $region61: #{multi_scale_discriminator_forward.5} parent=5 // pred_check
        _
      $region62: #{multi_scale_discriminator_forward.5} parent=5 // pred_check_branch
        %344 = sbr.rel (%p341) target = $region64
      $region63: #{multi_scale_discriminator_forward.5} parent=5 // pred_region
        %s345 = ssub.s32 %s20, 1
        %p346 = scmp.lt.s32.totalorder %s25, 1
        %s347 = scalar_select %p346, %s25, 1
        %s348 = smul.addr %s347, 5
        %s349 = smul.addr %s348, 8
        %s350 = scalar_lea.vmem %s0, %s349
        %p351 = pneg %p46
        %p352 = pneg %p43
        %p353 = pneg %p67
        %p354 = pneg %p64
        %p355 = pneg %p88
        %p356 = pneg %p85
        %p357 = pneg %p109
        %p358 = pneg %p106
        %p359 = pneg %p130
        %p360 = pneg %p127
        %p361 = pneg %p151
        %p362 = pneg %p148
        %p363 = pneg %p172
        %p364 = pneg %p169
        %p365 = pneg %p193
        %p366 = pneg %p190
        %p367 = pneg %p214
        %p368 = pneg %p211
        %p369 = pneg %p235
        %p370 = pneg %p232
        %p371 = pneg %p256
        %p372 = pneg %p253
        %p373 = pneg %p282
        %p374 = pneg %p279
        %s375 = sand.u32 %s269, 1
        %s376 = scalar_lea.sflag [#allocation8], %s375
        %s377 = sand.u32 %s269, 1
        %s378 = scalar_lea.vmem [#allocation7], %s377
        %p379 = scmp.lt.s32.totalorder %s25, 1
        %s380 = scalar_select %p379, %s25, 1
        %s381 = smul.addr %s380, 5
        %s382 = smul.addr %s381, 8
        %s383 = scalar_lea.vmem %s0, %s382
        %v385 = vld [vmem:[%s1] sm:$0xff]
        %v386 = vld [vmem:[%s1 + $0x8] sm:$0xff]
        %v387 = vld [vmem:[%s1 + $0x10] sm:$0x1]
        %v388 = vld [vmem:[%s383] sm:$0xff]
        %v389 = vld [vmem:[%s383 + $0x8] sm:$0xff]
        %v390 = vld [vmem:[%s383 + $0x10] sm:$0x1]
        %392 = vset.pattern.permute.xlu0 0
        %393 = vperm.xlu0 %392, %v388
        %v394 = vpop.permute.xlu0 %393
        %397 = vset.pattern.permute.xlu0 0
        %398 = vperm.xlu0 %397, %v389
        %v399 = vpop.permute.xlu0 %398
        %402 = vset.pattern.permute.xlu0 0
        %403 = vperm.xlu0 %402, %v390
        %v404 = vpop.permute.xlu0 %403
        %v406 = vperm.slane %v385, 0
        %v407 = vmul.f32 %v394, %v406
        %v408 = vmul.f32 %v399, %v406
        %v409 = vmul.f32 %v404, %v406
        %v410 = vadd.f32 %v407, 0.0
        %v411 = vadd.f32 %v408, 0.0
        %v412 = vadd.f32 %v409, 0.0
        %v413 = vld [vmem:[%s383 + $0x1] sm:$0xff]
        %v414 = vld [vmem:[%s383 + $0x9] sm:$0xff]
        %v415 = vld [vmem:[%s383 + $0x11] sm:$0x1]
        %417 = vset.pattern.permute.xlu0 0
        %418 = vperm.xlu0 %417, %v413
        %v419 = vpop.permute.xlu0 %418
        %422 = vset.pattern.permute.xlu0 0
        %423 = vperm.xlu0 %422, %v414
        %v424 = vpop.permute.xlu0 %423
        %427 = vset.pattern.permute.xlu0 0
        %428 = vperm.xlu0 %427, %v415
        %v429 = vpop.permute.xlu0 %428
        %v431 = vperm.slane %v385, 1
        %v432 = vmul.f32 %v419, %v431
        %v433 = vmul.f32 %v424, %v431
        %v434 = vmul.f32 %v429, %v431
        %v435 = vadd.f32 %v410, %v432
        %v436 = vadd.f32 %v411, %v433
        %v437 = vadd.f32 %v412, %v434
        %v438 = vld [vmem:[%s383 + $0x2] sm:$0xff]
        %v439 = vld [vmem:[%s383 + $0xa] sm:$0xff]
        %v440 = vld [vmem:[%s383 + $0x12] sm:$0x1]
        %442 = vset.pattern.permute.xlu0 0
        %443 = vperm.xlu0 %442, %v438
        %v444 = vpop.permute.xlu0 %443
        %447 = vset.pattern.permute.xlu0 0
        %448 = vperm.xlu0 %447, %v439
        %v449 = vpop.permute.xlu0 %448
        %452 = vset.pattern.permute.xlu0 0
        %453 = vperm.xlu0 %452, %v440
        %v454 = vpop.permute.xlu0 %453
        %v456 = vperm.slane %v385, 2
        %v457 = vmul.f32 %v444, %v456
        %v458 = vmul.f32 %v449, %v456
        %v459 = vmul.f32 %v454, %v456
        %v460 = vadd.f32 %v435, %v457
        %v461 = vadd.f32 %v436, %v458
        %v462 = vadd.f32 %v437, %v459
        %v463 = vld [vmem:[%s383 + $0x3] sm:$0xff]
        %v464 = vld [vmem:[%s383 + $0xb] sm:$0xff]
        %v465 = vld [vmem:[%s383 + $0x13] sm:$0x1]
        %467 = vset.pattern.permute.xlu0 0
        %468 = vperm.xlu0 %467, %v463
        %v469 = vpop.permute.xlu0 %468
        %472 = vset.pattern.permute.xlu0 0
        %473 = vperm.xlu0 %472, %v464
        %v474 = vpop.permute.xlu0 %473
        %477 = vset.pattern.permute.xlu0 0
        %478 = vperm.xlu0 %477, %v465
        %v479 = vpop.permute.xlu0 %478
        %v481 = vperm.slane %v385, 3
        %v482 = vmul.f32 %v469, %v481
        %v483 = vmul.f32 %v474, %v481
        %v484 = vmul.f32 %v479, %v481
        %v485 = vadd.f32 %v460, %v482
        %v486 = vadd.f32 %v461, %v483
        %v487 = vadd.f32 %v462, %v484
        %v488 = vld [vmem:[%s383 + $0x4] sm:$0xff]
        %v489 = vld [vmem:[%s383 + $0xc] sm:$0xff]
        %v490 = vld [vmem:[%s383 + $0x14] sm:$0x1]
        %492 = vset.pattern.permute.xlu0 0
        %493 = vperm.xlu0 %492, %v488
        %v494 = vpop.permute.xlu0 %493
        %497 = vset.pattern.permute.xlu0 0
        %498 = vperm.xlu0 %497, %v489
        %v499 = vpop.permute.xlu0 %498
        %502 = vset.pattern.permute.xlu0 0
        %503 = vperm.xlu0 %502, %v490
        %v504 = vpop.permute.xlu0 %503
        %v506 = vperm.slane %v385, 4
        %v507 = vmul.f32 %v494, %v506
        %v508 = vmul.f32 %v499, %v506
        %v509 = vmul.f32 %v504, %v506
        %v510 = vadd.f32 %v485, %v507
        %v511 = vadd.f32 %v486, %v508
        %v512 = vadd.f32 %v487, %v509
        %v513 = vld [vmem:[%s383 + $0x5] sm:$0xff]
        %v514 = vld [vmem:[%s383 + $0xd] sm:$0xff]
        %v515 = vld [vmem:[%s383 + $0x15] sm:$0x1]
        %517 = vset.pattern.permute.xlu0 0
        %518 = vperm.xlu0 %517, %v513
        %v519 = vpop.permute.xlu0 %518
        %522 = vset.pattern.permute.xlu0 0
        %523 = vperm.xlu0 %522, %v514
        %v524 = vpop.permute.xlu0 %523
        %527 = vset.pattern.permute.xlu0 0
        %528 = vperm.xlu0 %527, %v515
        %v529 = vpop.permute.xlu0 %528
        %v531 = vperm.slane %v385, 5
        %v532 = vmul.f32 %v519, %v531
        %v533 = vmul.f32 %v524, %v531
        %v534 = vmul.f32 %v529, %v531
        %v535 = vadd.f32 %v510, %v532
        %v536 = vadd.f32 %v511, %v533
        %v537 = vadd.f32 %v512, %v534
        %v538 = vld [vmem:[%s383 + $0x6] sm:$0xff]
        %v539 = vld [vmem:[%s383 + $0xe] sm:$0xff]
        %v540 = vld [vmem:[%s383 + $0x16] sm:$0x1]
        %542 = vset.pattern.permute.xlu0 0
        %543 = vperm.xlu0 %542, %v538
        %v544 = vpop.permute.xlu0 %543
        %547 = vset.pattern.permute.xlu0 0
        %548 = vperm.xlu0 %547, %v539
        %v549 = vpop.permute.xlu0 %548
        %552 = vset.pattern.permute.xlu0 0
        %553 = vperm.xlu0 %552, %v540
        %v554 = vpop.permute.xlu0 %553
        %v556 = vperm.slane %v385, 6
        %v557 = vmul.f32 %v544, %v556
        %v558 = vmul.f32 %v549, %v556
        %v559 = vmul.f32 %v554, %v556
        %v560 = vadd.f32 %v535, %v557
        %v561 = vadd.f32 %v536, %v558
        %v562 = vadd.f32 %v537, %v559
        %v563 = vld [vmem:[%s383 + $0x7] sm:$0xff]
        %v564 = vld [vmem:[%s383 + $0xf] sm:$0xff]
        %v565 = vld [vmem:[%s383 + $0x17] sm:$0x1]
        %567 = vset.pattern.permute.xlu0 0
        %568 = vperm.xlu0 %567, %v563
        %v569 = vpop.permute.xlu0 %568
        %572 = vset.pattern.permute.xlu0 0
        %573 = vperm.xlu0 %572, %v564
        %v574 = vpop.permute.xlu0 %573
        %577 = vset.pattern.permute.xlu0 0
        %578 = vperm.xlu0 %577, %v565
        %v579 = vpop.permute.xlu0 %578
        %v581 = vperm.slane %v385, 7
        %v582 = vmul.f32 %v569, %v581
        %v583 = vmul.f32 %v574, %v581
        %v584 = vmul.f32 %v579, %v581
        %v585 = vadd.f32 %v560, %v582
        %v586 = vadd.f32 %v561, %v583
        %v587 = vadd.f32 %v562, %v584
        %v588 = vld [vmem:[%s383 + $0x8] sm:$0xff]
        %v589 = vld [vmem:[%s383 + $0x10] sm:$0xff]
        %v590 = vld [vmem:[%s383 + $0x18] sm:$0x1]
        %592 = vset.pattern.permute.xlu0 0
        %593 = vperm.xlu0 %592, %v588
        %v594 = vpop.permute.xlu0 %593
        %597 = vset.pattern.permute.xlu0 0
        %598 = vperm.xlu0 %597, %v589
        %v599 = vpop.permute.xlu0 %598
        %602 = vset.pattern.permute.xlu0 0
        %603 = vperm.xlu0 %602, %v590
        %v604 = vpop.permute.xlu0 %603
        %v606 = vperm.slane %v386, 0
        %v607 = vmul.f32 %v594, %v606
        %v608 = vmul.f32 %v599, %v606
        %v609 = vmul.f32 %v604, %v606
        %v610 = vadd.f32 %v585, %v607
        %v611 = vadd.f32 %v586, %v608
        %v612 = vadd.f32 %v587, %v609
        %v613 = vld [vmem:[%s383 + $0x9] sm:$0xff]
        %v614 = vld [vmem:[%s383 + $0x11] sm:$0xff]
        %v615 = vld [vmem:[%s383 + $0x19] sm:$0x1]
        %617 = vset.pattern.permute.xlu0 0
        %618 = vperm.xlu0 %617, %v613
        %v619 = vpop.permute.xlu0 %618
        %622 = vset.pattern.permute.xlu0 0
        %623 = vperm.xlu0 %622, %v614
        %v624 = vpop.permute.xlu0 %623
        %627 = vset.pattern.permute.xlu0 0
        %628 = vperm.xlu0 %627, %v615
        %v629 = vpop.permute.xlu0 %628
        %v631 = vperm.slane %v386, 1
        %v632 = vmul.f32 %v619, %v631
        %v633 = vmul.f32 %v624, %v631
        %v634 = vmul.f32 %v629, %v631
        %v635 = vadd.f32 %v610, %v632
        %v636 = vadd.f32 %v611, %v633
        %v637 = vadd.f32 %v612, %v634
        %v638 = vld [vmem:[%s383 + $0xa] sm:$0xff]
        %v639 = vld [vmem:[%s383 + $0x12] sm:$0xff]
        %v640 = vld [vmem:[%s383 + $0x1a] sm:$0x1]
        %642 = vset.pattern.permute.xlu0 0
        %643 = vperm.xlu0 %642, %v638
        %v644 = vpop.permute.xlu0 %643
        %647 = vset.pattern.permute.xlu0 0
        %648 = vperm.xlu0 %647, %v639
        %v649 = vpop.permute.xlu0 %648
        %652 = vset.pattern.permute.xlu0 0
        %653 = vperm.xlu0 %652, %v640
        %v654 = vpop.permute.xlu0 %653
        %v656 = vperm.slane %v386, 2
        %v657 = vmul.f32 %v644, %v656
        %v658 = vmul.f32 %v649, %v656
        %v659 = vmul.f32 %v654, %v656
        %v660 = vadd.f32 %v635, %v657
        %v661 = vadd.f32 %v636, %v658
        %v662 = vadd.f32 %v637, %v659
        %v663 = vld [vmem:[%s383 + $0xb] sm:$0xff]
        %v664 = vld [vmem:[%s383 + $0x13] sm:$0xff]
        %v665 = vld [vmem:[%s383 + $0x1b] sm:$0x1]
        %667 = vset.pattern.permute.xlu0 0
        %668 = vperm.xlu0 %667, %v663
        %v669 = vpop.permute.xlu0 %668
        %672 = vset.pattern.permute.xlu0 0
        %673 = vperm.xlu0 %672, %v664
        %v674 = vpop.permute.xlu0 %673
        %677 = vset.pattern.permute.xlu0 0
        %678 = vperm.xlu0 %677, %v665
        %v679 = vpop.permute.xlu0 %678
        %v681 = vperm.slane %v386, 3
        %v682 = vmul.f32 %v669, %v681
        %v683 = vmul.f32 %v674, %v681
        %v684 = vmul.f32 %v679, %v681
        %v685 = vadd.f32 %v660, %v682
        %v686 = vadd.f32 %v661, %v683
        %v687 = vadd.f32 %v662, %v684
        %v688 = vld [vmem:[%s383 + $0xc] sm:$0xff]
        %v689 = vld [vmem:[%s383 + $0x14] sm:$0xff]
        %v690 = vld [vmem:[%s383 + $0x1c] sm:$0x1]
        %692 = vset.pattern.permute.xlu0 0
        %693 = vperm.xlu0 %692, %v688
        %v694 = vpop.permute.xlu0 %693
        %697 = vset.pattern.permute.xlu0 0
        %698 = vperm.xlu0 %697, %v689
        %v699 = vpop.permute.xlu0 %698
        %702 = vset.pattern.permute.xlu0 0
        %703 = vperm.xlu0 %702, %v690
        %v704 = vpop.permute.xlu0 %703
        %v706 = vperm.slane %v386, 4
        %v707 = vmul.f32 %v694, %v706
        %v708 = vmul.f32 %v699, %v706
        %v709 = vmul.f32 %v704, %v706
        %v710 = vadd.f32 %v685, %v707
        %v711 = vadd.f32 %v686, %v708
        %v712 = vadd.f32 %v687, %v709
        %v713 = vld [vmem:[%s383 + $0xd] sm:$0xff]
        %v714 = vld [vmem:[%s383 + $0x15] sm:$0xff]
        %v715 = vld [vmem:[%s383 + $0x1d] sm:$0x1]
        %717 = vset.pattern.permute.xlu0 0
        %718 = vperm.xlu0 %717, %v713
        %v719 = vpop.permute.xlu0 %718
        %722 = vset.pattern.permute.xlu0 0
        %723 = vperm.xlu0 %722, %v714
        %v724 = vpop.permute.xlu0 %723
        %727 = vset.pattern.permute.xlu0 0
        %728 = vperm.xlu0 %727, %v715
        %v729 = vpop.permute.xlu0 %728
        %v731 = vperm.slane %v386, 5
        %v732 = vmul.f32 %v719, %v731
        %v733 = vmul.f32 %v724, %v731
        %v734 = vmul.f32 %v729, %v731
        %v735 = vadd.f32 %v710, %v732
        %v736 = vadd.f32 %v711, %v733
        %v737 = vadd.f32 %v712, %v734
        %v738 = vld [vmem:[%s383 + $0xe] sm:$0xff]
        %v739 = vld [vmem:[%s383 + $0x16] sm:$0xff]
        %v740 = vld [vmem:[%s383 + $0x1e] sm:$0x1]
        %742 = vset.pattern.permute.xlu0 0
        %743 = vperm.xlu0 %742, %v738
        %v744 = vpop.permute.xlu0 %743
        %747 = vset.pattern.permute.xlu0 0
        %748 = vperm.xlu0 %747, %v739
        %v749 = vpop.permute.xlu0 %748
        %752 = vset.pattern.permute.xlu0 0
        %753 = vperm.xlu0 %752, %v740
        %v754 = vpop.permute.xlu0 %753
        %v756 = vperm.slane %v386, 6
        %v757 = vmul.f32 %v744, %v756
        %v758 = vmul.f32 %v749, %v756
        %v759 = vmul.f32 %v754, %v756
        %v760 = vadd.f32 %v735, %v757
        %v761 = vadd.f32 %v736, %v758
        %v762 = vadd.f32 %v737, %v759
        %v763 = vld [vmem:[%s383 + $0xf] sm:$0xff]
        %v764 = vld [vmem:[%s383 + $0x17] sm:$0xff]
        %v765 = vld [vmem:[%s383 + $0x1f] sm:$0x1]
        %767 = vset.pattern.permute.xlu0 0
        %768 = vperm.xlu0 %767, %v763
        %v769 = vpop.permute.xlu0 %768
        %772 = vset.pattern.permute.xlu0 0
        %773 = vperm.xlu0 %772, %v764
        %v774 = vpop.permute.xlu0 %773
        %777 = vset.pattern.permute.xlu0 0
        %778 = vperm.xlu0 %777, %v765
        %v779 = vpop.permute.xlu0 %778
        %v781 = vperm.slane %v386, 7
        %v782 = vmul.f32 %v769, %v781
        %v783 = vmul.f32 %v774, %v781
        %v784 = vmul.f32 %v779, %v781
        %v785 = vadd.f32 %v760, %v782
        %v786 = vadd.f32 %v761, %v783
        %v787 = vadd.f32 %v762, %v784
        %v788 = vld [vmem:[%s383 + $0x10] sm:$0xff]
        %v789 = vld [vmem:[%s383 + $0x18] sm:$0xff]
        %v790 = vld [vmem:[%s383 + $0x20] sm:$0x1]
        %792 = vset.pattern.permute.xlu0 0
        %793 = vperm.xlu0 %792, %v788
        %v794 = vpop.permute.xlu0 %793
        %797 = vset.pattern.permute.xlu0 0
        %798 = vperm.xlu0 %797, %v789
        %v799 = vpop.permute.xlu0 %798
        %802 = vset.pattern.permute.xlu0 0
        %803 = vperm.xlu0 %802, %v790
        %v804 = vpop.permute.xlu0 %803
        %v806 = vperm.slane %v387, 0
        %v807 = vmul.f32 %v794, %v806
        %v808 = vmul.f32 %v799, %v806
        %v809 = vmul.f32 %v804, %v806
        %v810 = vadd.f32 %v785, %v807
        %v811 = vadd.f32 %v786, %v808
        %v812 = vadd.f32 %v787, %v809
        %v813 = vld [vmem:[%s2] sm:$0x1]
        %v815 = vperm.slane %v813, 0
        %v817 = vadd.f32 %v810, %v815
        %v818 = vadd.f32 %v811, %v815
        %v819 = vadd.f32 %v812, %v815
        %vm820 = vcmp.ge.f32.partialorder %v817, 0.0
        %vm821 = vcmp.ge.f32.partialorder %v818, 0.0
        %vm822 = vcmp.ge.f32.partialorder %v819, 0.0
        %v823 = vmul.f32 %v817, 0.1
        %v824 = vmul.f32 %v818, 0.1
        %v825 = vmul.f32 %v819, 0.1
        %v826 = vsel %vm820, %v817, %v823
        %v827 = vsel %vm821, %v818, %v824
        %v828 = vsel %vm822, %v819, %v825
        %vm829 = vcmask 61440
        %830 = vst.msk [vmem:[#allocation3] sm:$0x1f] %vm829, 0.0
        %vm831 = vcmask 64512
        %832 = vst.msk [vmem:[#allocation3 + $0x5] sm:$0xff] %vm831, %v826
        %833 = vst.msk [vmem:[#allocation3 + $0xd] sm:$0xff] %vm831, %v827
        %vm834 = vcmask 57344
        %835 = vst.msk [vmem:[#allocation3 + $0x15] sm:$0x1] %vm834, %v828
        %vm836 = vcmask 62464
        %837 = vst.msk [vmem:[#allocation3 + $0x16] sm:$0x3f] %vm836, 0.0
        %v838 = vld [vmem:[#allocation3] ss:$2 sm:$0xff]
        %s839 = scalar_lea.vmem [#allocation3], 16
        %v840 = vld [vmem:[%s839] ss:$2 sm:$0x1]
        %841 = vst.msk [vmem:[#allocation2] sm:$0xff] %vm831, %v838
        %842 = vst.msk [vmem:[#allocation2 + $0x10] sm:$0x1] %vm834, %v840
        %s843 = scalar_lea.vmem [#allocation3], 1
        %v844 = vld [vmem:[%s843] ss:$2 sm:$0xff]
        %s845 = scalar_lea.vmem [#allocation3], 17
        %v846 = vld [vmem:[%s845] ss:$2 sm:$0x1]
        %849 = vrot.lane.b32.xlu0 %v844, 8
        %v850 = vpop.permute.xlu0 %849
        %851 = vrot.lane.b32.xlu0 %v846, 8
        %v852 = vpop.permute.xlu0 %851
        %vm855 = vcmask 130112
        %856 = vst.msk [vmem:[#allocation2] sm:$0xff] %vm855, %v850
        %vm857 = vcmask 122944
        %858 = vst.msk [vmem:[#allocation2 + $0x10] sm:$0x1] %vm857, %v852
        %s859 = scalar_lea.vmem [#allocation3], 2
        %v860 = vld [vmem:[%s859] ss:$2 sm:$0xff]
        %s861 = scalar_lea.vmem [#allocation3], 18
        %v862 = vld [vmem:[%s861] ss:$2 sm:$0x1]
        %865 = vrot.lane.b32.xlu0 %v860, 16
        %v866 = vpop.permute.xlu0 %865
        %867 = vrot.lane.b32.xlu0 %v862, 16
        %v868 = vpop.permute.xlu0 %867
        %vm871 = vcmask 195712
        %872 = vst.msk [vmem:[#allocation2] sm:$0xff] %vm871, %v866
        %vm873 = vcmask 188544
        %874 = vst.msk [vmem:[#allocation2 + $0x10] sm:$0x1] %vm873, %v868
        %s875 = scalar_lea.vmem [#allocation3], 3
        %v876 = vld [vmem:[%s875] ss:$2 sm:$0xff]
        %s877 = scalar_lea.vmem [#allocation3], 19
        %v878 = vld [vmem:[%s877] ss:$2 sm:$0x1]
        %881 = vrot.lane.b32.xlu0 %v876, 24
        %v882 = vpop.permute.xlu0 %881
        %883 = vrot.lane.b32.xlu0 %v878, 24
        %v884 = vpop.permute.xlu0 %883
        %vm887 = vcmask 261312
        %888 = vst.msk [vmem:[#allocation2] sm:$0xff] %vm887, %v882
        %vm889 = vcmask 254144
        %890 = vst.msk [vmem:[#allocation2 + $0x10] sm:$0x1] %vm889, %v884
        %s891 = scalar_lea.vmem [#allocation3], 4
        %v892 = vld [vmem:[%s891] ss:$2 sm:$0xff]
        %s893 = scalar_lea.vmem [#allocation3], 20
        %v894 = vld [vmem:[%s893] ss:$2 sm:$0x1]
        %897 = vrot.lane.b32.xlu0 %v892, 32
        %v898 = vpop.permute.xlu0 %897
        %899 = vrot.lane.b32.xlu0 %v894, 32
        %v900 = vpop.permute.xlu0 %899
        %vm903 = vcmask 326912
        %904 = vst.msk [vmem:[#allocation2] sm:$0xff] %vm903, %v898
        %vm905 = vcmask 319744
        %906 = vst.msk [vmem:[#allocation2 + $0x10] sm:$0x1] %vm905, %v900
        %s907 = scalar_lea.vmem [#allocation3], 5
        %v908 = vld [vmem:[%s907] ss:$2 sm:$0xff]
        %s909 = scalar_lea.vmem [#allocation3], 21
        %v910 = vld [vmem:[%s909] ss:$2 sm:$0x1]
        %913 = vrot.lane.b32.xlu0 %v908, 40
        %v914 = vpop.permute.xlu0 %913
        %915 = vrot.lane.b32.xlu0 %v910, 40
        %v916 = vpop.permute.xlu0 %915
        %vm919 = vcmask 392512
        %920 = vst.msk [vmem:[#allocation2] sm:$0xff] %vm919, %v914
        %vm921 = vcmask 385344
        %922 = vst.msk [vmem:[#allocation2 + $0x10] sm:$0x1] %vm921, %v916
        %s923 = scalar_lea.vmem [#allocation3], 6
        %v924 = vld [vmem:[%s923] ss:$2 sm:$0xff]
        %s925 = scalar_lea.vmem [#allocation3], 22
        %v926 = vld [vmem:[%s925] ss:$2 sm:$0x1]
        %929 = vrot.lane.b32.xlu0 %v924, 48
        %v930 = vpop.permute.xlu0 %929
        %931 = vrot.lane.b32.xlu0 %v926, 48
        %v932 = vpop.permute.xlu0 %931
        %vm935 = vcmask 458112
        %936 = vst.msk [vmem:[#allocation2] sm:$0xff] %vm935, %v930
        %vm937 = vcmask 450944
        %938 = vst.msk [vmem:[#allocation2 + $0x10] sm:$0x1] %vm937, %v932
        %s939 = scalar_lea.vmem [#allocation3], 7
        %v940 = vld [vmem:[%s939] ss:$2 sm:$0xff]
        %s941 = scalar_lea.vmem [#allocation3], 23
        %v942 = vld [vmem:[%s941] ss:$2 sm:$0x1]
        %945 = vrot.lane.b32.xlu0 %v940, 56
        %v946 = vpop.permute.xlu0 %945
        %947 = vrot.lane.b32.xlu0 %v942, 56
        %v948 = vpop.permute.xlu0 %947
        %vm951 = vcmask 523712
        %952 = vst.msk [vmem:[#allocation2] sm:$0xff] %vm951, %v946
        %vm953 = vcmask 516544
        %954 = vst.msk [vmem:[#allocation2 + $0x10] sm:$0x1] %vm953, %v948
        %s955 = scalar_lea.vmem [#allocation3], 8
        %v956 = vld [vmem:[%s955] ss:$2 sm:$0xff]
        %s957 = scalar_lea.vmem [#allocation3], 24
        %v958 = vld [vmem:[%s957] ss:$2 sm:$0x1]
        %961 = vrot.lane.b32.xlu0 %v956, 64
        %v962 = vpop.permute.xlu0 %961
        %963 = vrot.lane.b32.xlu0 %v958, 64
        %v964 = vpop.permute.xlu0 %963
        %vm967 = vcmask 589312
        %968 = vst.msk [vmem:[#allocation2] sm:$0xff] %vm967, %v962
        %vm969 = vcmask 582144
        %970 = vst.msk [vmem:[#allocation2 + $0x10] sm:$0x1] %vm969, %v964
        %s971 = scalar_lea.vmem [#allocation3], 9
        %v972 = vld [vmem:[%s971] ss:$2 sm:$0xff]
        %s973 = scalar_lea.vmem [#allocation3], 25
        %v974 = vld [vmem:[%s973] ss:$2 sm:$0x1]
        %977 = vrot.lane.b32.xlu0 %v972, 72
        %v978 = vpop.permute.xlu0 %977
        %979 = vrot.lane.b32.xlu0 %v974, 72
        %v980 = vpop.permute.xlu0 %979
        %vm983 = vcmask 654912
        %984 = vst.msk [vmem:[#allocation2] sm:$0xff] %vm983, %v978
        %vm985 = vcmask 647744
        %986 = vst.msk [vmem:[#allocation2 + $0x10] sm:$0x1] %vm985, %v980
        %s987 = scalar_lea.vmem [#allocation3], 10
        %v988 = vld [vmem:[%s987] ss:$2 sm:$0xff]
        %s989 = scalar_lea.vmem [#allocation3], 26
        %v990 = vld [vmem:[%s989] ss:$2 sm:$0x1]
        %993 = vrot.lane.b32.xlu0 %v988, 80
        %v994 = vpop.permute.xlu0 %993
        %995 = vrot.lane.b32.xlu0 %v990, 80
        %v996 = vpop.permute.xlu0 %995
        %vm999 = vcmask 720512
        %1000 = vst.msk [vmem:[#allocation2] sm:$0xff] %vm999, %v994
        %vm1001 = vcmask 713344
        %1002 = vst.msk [vmem:[#allocation2 + $0x10] sm:$0x1] %vm1001, %v996
        %v1003 = vld [vmem:[#allocation2] sm:$0xff]
        %v1004 = vld [vmem:[#allocation2 + $0x10] sm:$0x1]
        %v1005 = vpack.c.bf16 %v1004, %v1003
        %v1006 = vld [vmem:[%s3] sm:$0xff]
        %v1007 = vld [vmem:[%s3 + $0x8] sm:$0xff]
        %v1008 = vld [vmem:[%s3 + $0x10] sm:$0xff]
        %v1009 = vld [vmem:[%s3 + $0x18] sm:$0xff]
        %v1010 = vld [vmem:[%s3 + $0x20] sm:$0xff]
        %v1011 = vld [vmem:[%s3 + $0x28] sm:$0xff]
        %v1012 = vld [vmem:[%s3 + $0x30] sm:$0xff]
        %v1013 = vld [vmem:[%s3 + $0x38] sm:$0xff]
        %v1014 = vld [vmem:[%s3 + $0x40] sm:$0xff]
        %v1015 = vld [vmem:[%s3 + $0x48] sm:$0xff]
        %v1016 = vld [vmem:[%s3 + $0x50] sm:$0xff]
        %v1017 = vpack.c.bf16 %v1007, %v1006
        %v1018 = vpack.c.bf16 %v1009, %v1008
        %v1019 = vpack.c.bf16 %v1011, %v1010
        %v1020 = vpack.c.bf16 %v1013, %v1012
        %v1021 = vpack.c.bf16 %v1015, %v1014
        %v1022 = vpack.c.bf16 %v1016, %v1016
        %v1023 = vld [vmem:[%s4] sm:$0x1]
        %v1025 = vperm.slane %v1023, 0
        %vm1027 = vcmask 719872
        %v1029 = vsel %vm1027, %v1005, 0
        %vm1031 = vcmask 1043456
        %v1033 = vsel %vm1031, %v1022, 0
        %1035 = vmatpush.bf16.msra.mxu0 0
        %1036 = vmatpush.bf16.msra.mxu0 0
        %1037 = vmatpush.bf16.msra.mxu0 %v1033
        %1038 = vmatpush.bf16.msra.mxu0 %v1021
        %1039 = vmatpush.bf16.msra.mxu0 %v1020
        %1040 = vmatpush.bf16.msra.mxu0 %v1019
        %1041 = vmatpush.bf16.msra.mxu0 %v1018
        %1042 = vmatpush.bf16.msra.mxu0 %v1017
        %1043 = vmatmul.bf16.gmra.mxu0 %v1029
        %v1044 = vpop.f32.mrf.mxu0
        %v1045 = vadd.f32 %v1025, %v1044
        %v1046 = vpop.f32.mrf.mxu0
        %v1047 = vadd.f32 %v1025, %v1046
        %1048 = vdwg.mxu0
        %vm1049 = vcmp.ge.f32.partialorder %v1045, 0.0
        %vm1050 = vcmp.ge.f32.partialorder %v1047, 0.0
        %v1051 = vmul.f32 %v1045, 0.1
        %v1052 = vmul.f32 %v1047, 0.1
        %v1053 = vsel %vm1049, %v1045, %v1051
        %v1054 = vsel %vm1050, %v1047, %v1052
        %vm1055 = vcmask 124928
        %1056 = vst.msk [vmem:[#allocation4] sm:$0x7] %vm1055, 0.0
        %vm1057 = vcmask 130048
        %1058 = vst.msk [vmem:[#allocation4 + $0x3] sm:$0xff] %vm1057, %v1053
        %vm1059 = vcmask 122880
        %1060 = vst.msk [vmem:[#allocation4 + $0xb] sm:$0x1] %vm1059, %v1054
        %vm1061 = vcmask 125952
        %1062 = vst.msk [vmem:[#allocation4 + $0xc] sm:$0xf] %vm1061, 0.0
        %v1063 = vld [vmem:[#allocation4] ss:$2 sm:$0x1f]
        %vm1064 = vcmask 126976
        %1065 = vst.msk [vmem:[#allocation2] sm:$0x1f] %vm1064, %v1063
        %s1066 = scalar_lea.vmem [#allocation4], 1
        %v1067 = vld [vmem:[%s1066] ss:$2 sm:$0x1f]
        %1069 = vrot.lane.b32.xlu0 %v1067, 16
        %v1070 = vpop.permute.xlu0 %1069
        %vm1072 = vcmask 258176
        %1073 = vst.msk [vmem:[#allocation2] sm:$0x1f] %vm1072, %v1070
        %s1074 = scalar_lea.vmem [#allocation4], 2
        %v1075 = vld [vmem:[%s1074] ss:$2 sm:$0x1f]
        %1077 = vrot.lane.b32.xlu0 %v1075, 32
        %v1078 = vpop.permute.xlu0 %1077
        %vm1080 = vcmask 389376
        %1081 = vst.msk [vmem:[#allocation2] sm:$0x1f] %vm1080, %v1078
        %s1082 = scalar_lea.vmem [#allocation4], 3
        %v1083 = vld [vmem:[%s1082] ss:$2 sm:$0x1f]
        %1085 = vrot.lane.b32.xlu0 %v1083, 48
        %v1086 = vpop.permute.xlu0 %1085
        %vm1088 = vcmask 520576
        %1089 = vst.msk [vmem:[#allocation2] sm:$0x1f] %vm1088, %v1086
        %s1090 = scalar_lea.vmem [#allocation4], 4
        %v1091 = vld [vmem:[%s1090] ss:$2 sm:$0x1f]
        %1093 = vrot.lane.b32.xlu0 %v1091, 64
        %v1094 = vpop.permute.xlu0 %1093
        %vm1096 = vcmask 651776
        %1097 = vst.msk [vmem:[#allocation2] sm:$0x1f] %vm1096, %v1094
        %s1098 = scalar_lea.vmem [#allocation4], 5
        %v1099 = vld [vmem:[%s1098] ss:$2 sm:$0x1f]
        %1101 = vrot.lane.b32.xlu0 %v1099, 80
        %v1102 = vpop.permute.xlu0 %1101
        %vm1104 = vcmask 782976
        %1105 = vst.msk [vmem:[#allocation2] sm:$0x1f] %vm1104, %v1102
        %s1106 = scalar_lea.vmem [#allocation4], 6
        %v1107 = vld [vmem:[%s1106] ss:$2 sm:$0x1f]
        %1109 = vrot.lane.b32.xlu0 %v1107, 96
        %v1110 = vpop.permute.xlu0 %1109
        %vm1112 = vcmask 914176
        %1113 = vst.msk [vmem:[#allocation2] sm:$0x1f] %vm1112, %v1110
        %v1114 = vld [vmem:[#allocation2] sm:$0x1f]
        %v1115 = vpack.c.bf16 %v1114, %v1114
        %v1116 = vld [vmem:[%s5] sm:$0xff]
        %v1117 = vld [vmem:[%s5 + $0x8] sm:$0xff]
        %v1118 = vld [vmem:[%s5 + $0x10] sm:$0xff]
        %v1119 = vld [vmem:[%s5 + $0x18] sm:$0xff]
        %v1120 = vld [vmem:[%s5 + $0x20] sm:$0xff]
        %v1121 = vld [vmem:[%s5 + $0x28] sm:$0xff]
        %v1122 = vld [vmem:[%s5 + $0x30] sm:$0xff]
        %v1123 = vld [vmem:[%s5 + $0x38] sm:$0xff]
        %v1124 = vld [vmem:[%s5 + $0x40] sm:$0xff]
        %v1125 = vld [vmem:[%s5 + $0x48] sm:$0xff]
        %v1126 = vld [vmem:[%s5 + $0x50] sm:$0xff]
        %v1127 = vld [vmem:[%s5 + $0x58] sm:$0xff]
        %v1128 = vld [vmem:[%s5 + $0x60] sm:$0xff]
        %v1129 = vld [vmem:[%s5 + $0x68] sm:$0xff]
        %v1130 = vpack.c.bf16 %v1117, %v1116
        %v1131 = vpack.c.bf16 %v1119, %v1118
        %v1132 = vpack.c.bf16 %v1121, %v1120
        %v1133 = vpack.c.bf16 %v1123, %v1122
        %v1134 = vpack.c.bf16 %v1125, %v1124
        %v1135 = vpack.c.bf16 %v1127, %v1126
        %v1136 = vpack.c.bf16 %v1129, %v1128
        %v1137 = vld [vmem:[%s6] sm:$0x1]
        %v1139 = vperm.slane %v1137, 0
        %vm1141 = vcmask 916480
        %v1143 = vsel %vm1141, %v1115, 0
        %1145 = vmatpush.bf16.msra.mxu0 0
        %1146 = vmatpush.bf16.msra.mxu0 %v1136
        %1147 = vmatpush.bf16.msra.mxu0 %v1135
        %1148 = vmatpush.bf16.msra.mxu0 %v1134
        %1149 = vmatpush.bf16.msra.mxu0 %v1133
        %1150 = vmatpush.bf16.msra.mxu0 %v1132
        %1151 = vmatpush.bf16.msra.mxu0 %v1131
        %1152 = vmatpush.bf16.msra.mxu0 %v1130
        %1153 = vmatmul.bf16.gmra.mxu0 %v1143
        %v1154 = vpop.f32.mrf.mxu0
        %v1155 = vadd.f32 %v1139, %v1154
        %v1156 = vpop.f32.mrf.mxu0
        %1157 = vdwg.mxu0
        %vm1158 = vcmp.ge.f32.partialorder %v1155, 0.0
        %v1159 = vmul.f32 %v1155, 0.1
        %v1160 = vsel %vm1158, %v1155, %v1159
        %vm1161 = vcmask 254976
        %1162 = vst.msk [vmem:[#allocation5] sm:$0x3] %vm1161, 0.0
        %vm1163 = vcmask 258048
        %1164 = vst.msk [vmem:[#allocation5 + $0x2] sm:$0x1f] %vm1163, %v1160
        %vm1165 = vcmask 256000
        %1166 = vst.msk [vmem:[#allocation5 + $0x7] sm:$0x7] %vm1165, 0.0
        %v1167 = vld [vmem:[#allocation5] ss:$2 sm:$0x7]
        %1168 = vst.msk [vmem:[#allocation2] sm:$0x7] %vm1165, %v1167
        %s1169 = scalar_lea.vmem [#allocation5], 1
        %v1170 = vld [vmem:[%s1169] ss:$2 sm:$0x7]
        %1172 = vrot.lane.b32.xlu0 %v1170, 32
        %v1173 = vpop.permute.xlu0 %1172
        %vm1175 = vcmask 518400
        %1176 = vst.msk [vmem:[#allocation2] sm:$0x7] %vm1175, %v1173
        %s1177 = scalar_lea.vmem [#allocation5], 2
        %v1178 = vld [vmem:[%s1177] ss:$2 sm:$0x7]
        %1180 = vrot.lane.b32.xlu0 %v1178, 64
        %v1181 = vpop.permute.xlu0 %1180
        %vm1183 = vcmask 780800
        %1184 = vst.msk [vmem:[#allocation2] sm:$0x7] %vm1183, %v1181
        %s1185 = scalar_lea.vmem [#allocation5], 3
        %v1186 = vld [vmem:[%s1185] ss:$2 sm:$0x7]
        %1188 = vrot.lane.b32.xlu0 %v1186, 96
        %v1189 = vpop.permute.xlu0 %1188
        %vm1191 = vcmask 1043200
        %1192 = vst.msk [vmem:[#allocation2] sm:$0x7] %vm1191, %v1189
        %s1193 = scalar_lea.vmem [#allocation5], 4
        %v1194 = vld [vmem:[%s1193] ss:$2 sm:$0x7]
        %1195 = vst.msk [vmem:[#allocation2 + $0x8] sm:$0x7] %vm1165, %v1194
        %v1196 = vld [vmem:[#allocation2] sm:$0x7]
        %v1197 = vld [vmem:[#allocation2 + $0x8] sm:$0x7]
        %v1198 = vpack.c.bf16 %v1196, %v1196
        %v1199 = vpack.c.bf16 %v1197, %v1197
        %v1200 = vld [vmem:[%s7] sm:$0xff]
        %v1201 = vld [vmem:[%s7 + $0x8] sm:$0xff]
        %v1202 = vld [vmem:[%s7 + $0x10] sm:$0xff]
        %v1203 = vld [vmem:[%s7 + $0x18] sm:$0xff]
        %v1204 = vld [vmem:[%s7 + $0x20] sm:$0xff]
        %v1205 = vld [vmem:[%s7 + $0x28] sm:$0xff]
        %v1206 = vld [vmem:[%s7 + $0x30] sm:$0xff]
        %v1207 = vld [vmem:[%s7 + $0x38] sm:$0xff]
        %v1208 = vld [vmem:[%s7 + $0x40] sm:$0xff]
        %v1209 = vld [vmem:[%s7 + $0x48] sm:$0xff]
        %v1210 = vld [vmem:[%s7 + $0x50] sm:$0xff]
        %v1211 = vld [vmem:[%s7 + $0x58] sm:$0xff]
        %v1212 = vld [vmem:[%s7 + $0x60] sm:$0xff]
        %v1213 = vld [vmem:[%s7 + $0x68] sm:$0xff]
        %v1214 = vld [vmem:[%s7 + $0x70] sm:$0xff]
        %v1215 = vld [vmem:[%s7 + $0x78] sm:$0xff]
        %v1216 = vld [vmem:[%s7 + $0x80] sm:$0xff]
        %v1217 = vld [vmem:[%s7 + $0x88] sm:$0xff]
        %v1218 = vld [vmem:[%s7 + $0x90] sm:$0xff]
        %v1219 = vld [vmem:[%s7 + $0x98] sm:$0xff]
        %v1220 = vpack.c.bf16 %v1201, %v1200
        %v1221 = vpack.c.bf16 %v1203, %v1202
        %v1222 = vpack.c.bf16 %v1205, %v1204
        %v1223 = vpack.c.bf16 %v1207, %v1206
        %v1224 = vpack.c.bf16 %v1209, %v1208
        %v1225 = vpack.c.bf16 %v1211, %v1210
        %v1226 = vpack.c.bf16 %v1213, %v1212
        %v1227 = vpack.c.bf16 %v1215, %v1214
        %v1228 = vpack.c.bf16 %v1217, %v1216
        %v1229 = vpack.c.bf16 %v1219, %v1218
        %v1230 = vld [vmem:[%s8] sm:$0x1]
        %v1232 = vperm.slane %v1230, 0
        %vm1234 = vcmask 261120
        %v1236 = vsel %vm1234, %v1199, 0
        %1238 = vmatpush.bf16.msra.mxu0 %v1227
        %1239 = vmatpush.bf16.msra.mxu0 %v1226
        %1240 = vmatpush.bf16.msra.mxu0 %v1225
        %1241 = vmatpush.bf16.msra.mxu0 %v1224
        %1242 = vmatpush.bf16.msra.mxu0 %v1223
        %1243 = vmatpush.bf16.msra.mxu0 %v1222
        %1244 = vmatpush.bf16.msra.mxu0 %v1221
        %1245 = vmatpush.bf16.msra.mxu0 %v1220
        %1246 = vmatmul.bf16.gmra.mxu0 %v1198
        %v1247 = vpop.f32.mrf.mxu0
        %v1248 = vadd.f32 %v1232, %v1247
        %v1249 = vpop.f32.mrf.mxu0
        %1250 = vdwg.mxu0
        %1251 = vmatpush.bf16.msra.mxu0 0
        %1252 = vmatpush.bf16.msra.mxu0 0
        %1253 = vmatpush.bf16.msra.mxu0 0
        %1254 = vmatpush.bf16.msra.mxu0 0
        %1255 = vmatpush.bf16.msra.mxu0 0
        %1256 = vmatpush.bf16.msra.mxu0 0
        %1257 = vmatpush.bf16.msra.mxu0 %v1229
        %1258 = vmatpush.bf16.msra.mxu0 %v1228
        %1259 = vmatmul.bf16.gmra.mxu0 %v1236
        %v1260 = vpop.f32.mrf.mxu0
        %v1261 = vadd.f32 %v1248, %v1260
        %v1262 = vpop.f32.mrf.mxu0
        %1263 = vdwg.mxu0
        %vm1264 = vcmp.ge.f32.partialorder %v1261, 0.0
        %v1265 = vmul.f32 %v1261, 0.1
        %v1266 = vsel %vm1264, %v1261, %v1265
        %vm1267 = vcmask 516096
        %1268 = vst.msk [vmem:[#allocation6] sm:$0x1] %vm1267, 0.0
        %vm1269 = vcmask 518144
        %1270 = vst.msk [vmem:[#allocation6 + $0x1] sm:$0x7] %vm1269, %v1266
        %vm1271 = vcmask 519168
        %1272 = vst.msk [vmem:[#allocation6 + $0x4] sm:$0xf] %vm1271, 0.0
        %v1273 = vld [vmem:[#allocation6] sm:$0x1]
        %1274 = vst.msk [vmem:[#allocation2] sm:$0x1] %vm1267, %v1273
        %v1275 = vld [vmem:[#allocation6 + $0x1] sm:$0x1]
        %1277 = vrot.lane.b32.xlu0 %v1275, 64
        %v1278 = vpop.permute.xlu0 %1277
        %vm1280 = vcmask 1040896
        %1281 = vst.msk [vmem:[#allocation2] sm:$0x1] %vm1280, %v1278
        %v1282 = vld [vmem:[#allocation6 + $0x2] sm:$0x1]
        %1283 = vst.msk [vmem:[#allocation2 + $0x8] sm:$0x1] %vm1267, %v1282
        %v1284 = vld [vmem:[#allocation2] ss:$8 sm:$0x3]
        %v1286 = vperm.slane %v1284, 0
        %v1287 = vperm.slane %v1284, 1
        %v1290 = vpack.c.bf16 %v1286, %v1286
        %v1291 = vpack.c.bf16 %v1287, %v1287
        %v1292 = vld [vmem:[%s9] sm:$0xff]
        %v1293 = vld [vmem:[%s9 + $0x8] sm:$0xff]
        %v1294 = vld [vmem:[%s9 + $0x10] sm:$0xff]
        %v1295 = vld [vmem:[%s9 + $0x18] sm:$0xff]
        %v1296 = vld [vmem:[%s9 + $0x20] sm:$0xff]
        %v1297 = vld [vmem:[%s9 + $0x28] sm:$0xff]
        %v1298 = vld [vmem:[%s9 + $0x30] sm:$0xff]
        %v1299 = vld [vmem:[%s9 + $0x38] sm:$0xff]
        %v1300 = vld [vmem:[%s9 + $0x40] sm:$0xff]
        %v1301 = vld [vmem:[%s9 + $0x48] sm:$0xff]
        %v1302 = vld [vmem:[%s9 + $0x50] sm:$0xff]
        %v1303 = vld [vmem:[%s9 + $0x58] sm:$0xff]
        %v1304 = vld [vmem:[%s9 + $0x60] sm:$0xff]
        %v1305 = vld [vmem:[%s9 + $0x68] sm:$0xff]
        %v1306 = vld [vmem:[%s9 + $0x70] sm:$0xff]
        %v1307 = vld [vmem:[%s9 + $0x78] sm:$0xff]
        %v1308 = vld [vmem:[%s9 + $0x80] sm:$0xff]
        %v1309 = vld [vmem:[%s9 + $0x88] sm:$0xff]
        %v1310 = vld [vmem:[%s9 + $0x90] sm:$0xff]
        %v1311 = vld [vmem:[%s9 + $0x98] sm:$0xff]
        %v1312 = vld [vmem:[%s9 + $0xa0] sm:$0xff]
        %v1313 = vld [vmem:[%s9 + $0xa8] sm:$0xff]
        %v1314 = vld [vmem:[%s9 + $0xb0] sm:$0xff]
        %v1315 = vld [vmem:[%s9 + $0xb8] sm:$0xff]
        %v1316 = vpack.c.bf16 %v1293, %v1292
        %v1317 = vpack.c.bf16 %v1295, %v1294
        %v1318 = vpack.c.bf16 %v1297, %v1296
        %v1319 = vpack.c.bf16 %v1299, %v1298
        %v1320 = vpack.c.bf16 %v1301, %v1300
        %v1321 = vpack.c.bf16 %v1303, %v1302
        %v1322 = vpack.c.bf16 %v1305, %v1304
        %v1323 = vpack.c.bf16 %v1307, %v1306
        %v1324 = vpack.c.bf16 %v1309, %v1308
        %v1325 = vpack.c.bf16 %v1311, %v1310
        %v1326 = vpack.c.bf16 %v1313, %v1312
        %v1327 = vpack.c.bf16 %v1315, %v1314
        %v1328 = vld [vmem:[%s10] sm:$0x1]
        %vm1329 = vcmask 523264
        %v1331 = vsel %vm1329, %v1291, 0
        %1333 = vmatpush.bf16.msra.mxu0 %v1323
        %1334 = vmatpush.bf16.msra.mxu0 %v1322
        %1335 = vmatpush.bf16.msra.mxu0 %v1321
        %1336 = vmatpush.bf16.msra.mxu0 %v1320
        %1337 = vmatpush.bf16.msra.mxu0 %v1319
        %1338 = vmatpush.bf16.msra.mxu0 %v1318
        %1339 = vmatpush.bf16.msra.mxu0 %v1317
        %1340 = vmatpush.bf16.msra.mxu0 %v1316
        %1341 = vmatmul.bf16.gmra.mxu0 %v1290
        %v1342 = vpop.f32.mrf.mxu0
        %v1343 = vadd.f32 %v1328, %v1342
        %v1344 = vpop.f32.mrf.mxu0
        %1345 = vdwg.mxu0
        %1346 = vmatpush.bf16.msra.mxu0 0
        %1347 = vmatpush.bf16.msra.mxu0 0
        %1348 = vmatpush.bf16.msra.mxu0 0
        %1349 = vmatpush.bf16.msra.mxu0 0
        %1350 = vmatpush.bf16.msra.mxu0 %v1327
        %1351 = vmatpush.bf16.msra.mxu0 %v1326
        %1352 = vmatpush.bf16.msra.mxu0 %v1325
        %1353 = vmatpush.bf16.msra.mxu0 %v1324
        %1354 = vmatmul.bf16.gmra.mxu0 %v1331
        %v1355 = vpop.f32.mrf.mxu0
        %v1356 = vadd.f32 %v1343, %v1355
        %v1357 = vpop.f32.mrf.mxu0
        %1358 = vdwg.mxu0
        %vm1359 = vcmp.ge.f32.partialorder %v1356, 0.0
        %v1360 = vmul.f32 %v1356, 0.1
        %v1361 = vsel %vm1359, %v1356, %v1360
        %1362 = vst [vmem:[%s378] sm:$0x1] %v1361
        %s1363 = sand.u32 %s269, 1
        %s1364 = scalar_lea.sflag [#allocation8], %s1363
        %s1365 = sand.u32 %s269, 1
        %s1366 = scalar_lea.vmem [#allocation7], %s1365
        // Predicated region
        $region65: #{multi_scale_discriminator_forward.5} parent=63 // pred_check
          %p1367 = pneg %p279
        $region66: #{multi_scale_discriminator_forward.5} parent=63 // pred_check_branch
          %1369 = sbr.rel (%p1367) target = $region68
        $region67: #{multi_scale_discriminator_forward.5} parent=63 // pred_region
          %1371 = vsyncadd %s1364, 0
          %s1372 = scalar_lea.hbm %s11, %s25
          %s1374 = sshll.u32 %s1366, 4
          %s1375 = int_to_ptr.vmem [resolvable:$true] %s1374
          %s1376 = sshll.u32 %s1372, 4
          %s1377 = int_to_ptr.hbm [resolvable:$true] %s1376
          %1379 = dma.vmem_to_hbm [thread:$0]  %s1375, 16, %s1377, %s1364
        $region68: #{multi_scale_discriminator_forward.5} parent=63 // pred_fallthru
          _
      $region64: #{multi_scale_discriminator_forward.5} parent=5 // pred_fallthru
        _
      %p1380 = scmp.le.s32.totalorder 2, %s20
      // Predicated region
      $region69: #{multi_scale_discriminator_forward.5} parent=5 // pred_check
        %p1381 = pneg %p1380
      $region70: #{multi_scale_discriminator_forward.5} parent=5 // pred_check_branch
        %1383 = sbr.rel (%p1381) target = $region72
      $region71: #{multi_scale_discriminator_forward.5} parent=5 // pred_region
        %s1384 = ssub.s32 %s20, 2
        // Predicated region
        $region73: #{multi_scale_discriminator_forward.5} parent=71 // pred_check
          %p1385 = pneg %p285
        $region74: #{multi_scale_discriminator_forward.5} parent=71 // pred_check_branch
          %1387 = sbr.rel (%p1385) target = $region76
        $region75: #{multi_scale_discriminator_forward.5} parent=71 // pred_region
          %s1388 = sand.u32 %s270, 1
          %s1389 = scalar_lea.sflag [#allocation8], %s1388
          %s1390 = sand.u32 %s270, 1
          %s1391 = scalar_lea.vmem [#allocation7], %s1390
          %1393 = dma.done %s1389, 16
        $region76: #{multi_scale_discriminator_forward.5} parent=71 // pred_fallthru
          _
      $region72: #{multi_scale_discriminator_forward.5} parent=5 // pred_fallthru
        _
    $region6: #{multi_scale_discriminator_forward.5} parent=1 // loop_footer
      %s24 = sadd.s32 1, %s20
    $region7: #{multi_scale_discriminator_forward.5} parent=1 // loop_footer_branch
      %19 = sbr.rel target = $region3
    $region8: #{multi_scale_discriminator_forward.5} parent=1 // loop_exit
      _
    %1394 = vsyncpa [#allocation8], 1
    %s1395 = scalar_lea.sflag [#allocation8], 1
    %1396 = vsyncpa %s1395, 1

</llo_original>
